<compile_context>
chip_gen: v7x
topology: tpu7x:2x2x1
jax: 0.10.0
libtpu: 0.0.40
codegen_flags: <defaults>
</compile_context>

<pallas_src>
import jax
import jax.numpy as jnp
from jax import lax
from jax.experimental import pallas as pl
from jax.experimental.pallas import tpu as pltpu

KSIZE = 5  # both conv kernels are 5x5


# --------------------------------- helpers ---------------------------------

def _bcast_spec(shape):
    """Full-array block whose index never changes across the batch grid."""
    n = len(shape)
    return pl.BlockSpec(shape, lambda i, _n=n: (0,) * _n)


def _shift_cols(x, s):
    """result[:, p] = x[:, p + s] for p < L - s (the wrapped tail is never used).

    Two static lane slices + one lane concatenate.  (pltpu.roll would hit the
    XLU rotate directly; slice+concat keeps the shift semantics explicit and is
    equally cheap at these sizes.)
    """
    if s == 0:
        return x
    return jnp.concatenate([x[:, s:], x[:, :s]], axis=1)


# ------------------------------ fused kernel -------------------------------

def _make_net_kernel(hp1, wp1, ksize):
    """Build the fused forward kernel for a pooled-conv1 grid of (hp1, wp1)."""
    s1 = hp1 * wp1  # 256 pooled-conv1 positions per sample (16x16)

    def kernel(p1_ref, w1_ref, b1_ref, w2_ref, b2_ref, w3_ref, b3_ref,
               w4_ref, b4_ref, o_ref):
        # ---- conv1 + 2x2 maxpool + relu (one GEMM over all four pool phases) ----
        # p1_ref[0]: (C1*k*k, 4*S1) im2col patches; the four pool phases are four
        # lane-aligned 256-wide column blocks, so the maxpool is an elementwise max.
        g1 = jnp.dot(w1_ref[...], p1_ref[0],
                     preferred_element_type=jnp.float32)            # (C1, 4*S1)
        pool1 = jnp.maximum(
            jnp.maximum(g1[:, 0 * s1:1 * s1], g1[:, 1 * s1:2 * s1]),
            jnp.maximum(g1[:, 2 * s1:3 * s1], g1[:, 3 * s1:4 * s1]))
        a1 = jnp.maximum(pool1 + b1_ref[...], 0.0)                  # (C1, S1)
        # (per-channel bias commutes with max, so it is added once after pooling)

        # ---- conv2 as shifted-matmul accumulation (in-kernel im2col) ------------
        # out2[co, h*wp1 + w] = sum_{i,j} (w2_tap[i*k+j] @ a1 shifted by i*wp1+j).
        # All shifts are static; valid positions never touch the wrapped tail.
        c2 = w2_ref.shape[1]
        acc = jnp.zeros((c2, s1), jnp.float32)
        for idx in range(ksize * ksize):      # static 25-step unroll; live set is
            di, dj = divmod(idx, ksize)       # just {a1, acc} (~10 vregs), no spill
            acc = acc + jnp.dot(w2_ref[idx], _shift_cols(a1, di * wp1 + dj),
                                preferred_element_type=jnp.float32)
        z2 = acc + b2_ref[...]                                      # (C2, S1)
        # Dropout2d is the identity in eval mode.

        # 2x2 maxpool on the strided (hp1 x wp1) grid: pooled anchors live at
        # p = 2hp*wp1 + 2wp and take the max of {p, p+1, p+wp1, p+wp1+1}.
        pool2 = jnp.maximum(jnp.maximum(z2, _shift_cols(z2, 1)),
                            jnp.maximum(_shift_cols(z2, wp1),
                                        _shift_cols(z2, wp1 + 1)))
        a2 = jnp.maximum(pool2, 0.0)                                # (C2, S1)

        # ---- fc1 as ONE GEMM + relu ----------------------------------------------
        # PyTorch's (C,H,W) flatten = 20 lane-aligned row copies -> (1, C2*S1).
        # w3 was pre-scattered onto the pool-anchor columns (zeros elsewhere), so
        # the non-anchor (garbage) columns of a2 never contribute.
        a2_flat = jnp.concatenate([a2[c:c + 1, :] for c in range(c2)], axis=1)
        y1 = jnp.dot(a2_flat, w3_ref[...],
                     preferred_element_type=jnp.float32) + b3_ref[...]
        y1 = jnp.maximum(y1, 0.0)                                   # (1, F1)
        # F.dropout(training=False) is the identity.

        # ---- fc2 + numerically-safe log_softmax ------------------------------------
        logits = jnp.dot(y1, w4_ref[...],
                         preferred_element_type=jnp.float32) + b4_ref[...]
        m = jnp.max(logits, axis=-1, keepdims=True)
        z = logits - m
        lse = jnp.log(jnp.sum(jnp.exp(z), axis=-1, keepdims=True))
        o_ref[0] = (z - lse).astype(o_ref.dtype)

    return kernel


# ------------------------------ jitted wrapper ------------------------------

def _phased_patches(x, k):
    """Per-sample im2col for a valid stride-1 kxk conv followed by a 2x2 maxpool.

    x: (N, C, H, W) -> (N, C*k*k, 4*Hp*Wp).  Rows ordered (c, i, j); the four
    pooling phases are concatenated as four lane-aligned column blocks, each in
    (hp, wp) order, so the in-kernel 2x2 maxpool is an elementwise max of four
    equal 128-multiple-wide column blocks.
    """
    n, c, h, w = x.shape
    ho, wo = h - k + 1, w - k + 1
    hp, wp = ho // 2, wo // 2
    shifted = jnp.stack([x[:, :, i:i + ho, j:j + wo]
                         for i in range(k) for j in range(k)], axis=2)  # (N,C,k*k,Ho,Wo)
    blocks = []
    for a in range(2):
        for b in range(2):
            ph = shifted[:, :, :, a::2, b::2]                            # (N,C,k*k,Hp,Wp)
            blocks.append(ph.reshape(n, c * k * k, hp * wp))
    return jnp.concatenate(blocks, axis=2)                               # (N,C*k*k,4*Hp*Wp)


@jax.jit
def net_forward(x_nchw, p):
    """Inference-mode forward of `Net` with pre-packed params `p` (ONE pallas_call)."""
    x = x_nchw.astype(jnp.float32)
    n, _, h, w = x.shape
    assert (h - KSIZE + 1) % 2 == 0 and (w - KSIZE + 1) % 2 == 0
    hp1, wp1 = (h - KSIZE + 1) // 2, (w - KSIZE + 1) // 2               # 16, 16
    assert (hp1 - KSIZE + 1) % 2 == 0 and (wp1 - KSIZE + 1) % 2 == 0

    # Stage-1 im2col on the raw input (cheap one-shot XLA glue); everything
    # downstream of it stays inside the single fused kernel.
    patches1 = _phased_patches(x, KSIZE)                                 # (N, 75, 1024)
    n_classes = p["w4"].shape[1]

    out = pl.pallas_call(
        _make_net_kernel(hp1, wp1, KSIZE),
        grid=(n,),                                        # one grid step per sample
        in_specs=[
            pl.BlockSpec((1,) + patches1.shape[1:], lambda i: (i, 0, 0)),
            _bcast_spec(p["w1"].shape), _bcast_spec(p["b1"].shape),
            _bcast_spec(p["w2"].shape), _bcast_spec(p["b2"].shape),
            _bcast_spec(p["w3"].shape), _bcast_spec(p["b3"].shape),
            _bcast_spec(p["w4"].shape), _bcast_spec(p["b4"].shape),
        ],
        out_specs=pl.BlockSpec((1, 1, n_classes), lambda i: (i, 0, 0)),
        out_shape=jax.ShapeDtypeStruct((n, 1, n_classes), jnp.float32),
        compiler_params=pltpu.CompilerParams(
            dimension_semantics=("parallel",),            # batch across v7x's 2 TCs
            vmem_limit_bytes=32 * 1024 * 1024),
    )(patches1, p["w1"], p["b1"], p["w2"], p["b2"], p["w3"], p["b3"],
      p["w4"], p["b4"])
    return out.reshape(n, n_classes)


# ------------------------- params (PyTorch layout) --------------------------

def init_params(key, *, flat_dim, fc1_out, n_classes):
    def uniform(k, shape, fan_in):
        bound = 1.0 / jnp.sqrt(jnp.float32(fan_in))
        return jax.random.uniform(k, shape, jnp.float32, -bound, bound)

    ks = jax.random.split(key, 8)
    return {
        "conv1_w": uniform(ks[0], (10, 3, 5, 5), 3 * 5 * 5),
        "conv1_b": uniform(ks[1], (10,), 3 * 5 * 5),
        "conv2_w": uniform(ks[2], (20, 10, 5, 5), 10 * 5 * 5),
        "conv2_b": uniform(ks[3], (20,), 10 * 5 * 5),
        "fc1_w": uniform(ks[4], (fc1_out, flat_dim), flat_dim),    # (out, in)
        "fc1_b": uniform(ks[5], (fc1_out,), flat_dim),
        "fc2_w": uniform(ks[6], (n_classes, fc1_out), fc1_out),    # (out, in)
        "fc2_b": uniform(ks[7], (n_classes,), fc1_out),
    }


def pack_params(params, *, pooled1_hw, pooled2_hw):
    """One-time repack of PyTorch-layout weights into kernel-ready layouts."""
    c1 = params["conv1_w"].shape[0]
    c2, _, k, _ = params["conv2_w"].shape
    f1, flat = params["fc1_w"].shape
    hp1, wp1 = pooled1_hw
    hp2, wp2 = pooled2_hw
    assert flat == c2 * hp2 * wp2

    # fc1 weight: (F1, C2*hp2*wp2) scattered onto the pool-anchor columns of the
    # (C2, hp1, wp1) grid the kernel's conv2/pool pipeline works on, flattened 2D
    # in the same (c, p) order the kernel's lane-aligned flatten produces.
    # TODO(synk): at the real fc1 (56180x9000) scale do NOT zero-pad (7x bytes);
    # stream a compact bf16 weight through a tiled grid instead.
    w3 = params["fc1_w"].reshape(f1, c2, hp2, wp2).transpose(1, 2, 3, 0)  # (C2,h2,w2,F1)
    w3_pad = jnp.zeros((c2, hp1, wp1, f1), jnp.float32)
    w3_pad = w3_pad.at[:, 0:2 * hp2:2, 0:2 * wp2:2, :].set(w3)
    w3_pad = w3_pad.reshape(c2 * hp1 * wp1, f1)                           # (5120, 256)

    return {
        "w1": params["conv1_w"].reshape(c1, -1),                          # (10, 75)
        "b1": params["conv1_b"].reshape(-1, 1),                           # (10, 1)
        # conv2 packed per tap: w2[i*k+j] = conv2_w[:, :, i, j]           # (25, 20, 10)
        "w2": params["conv2_w"].transpose(2, 3, 0, 1).reshape(k * k, c2, c1),
        "b2": params["conv2_b"].reshape(-1, 1),                           # (20, 1)
        "w3": w3_pad,                                                     # (C2*S1, F1)
        "b3": params["fc1_b"].reshape(1, -1),                             # (1, F1)
        "w4": params["fc2_w"].T,                                          # (F1, n_cls)
        "b4": params["fc2_b"].reshape(1, -1),                             # (1, n_cls)
    }


# ---------------------------- pure-XLA reference ----------------------------

def reference_forward(x, params):
    """Independent (no Pallas) reference for correctness checking."""
    def conv(a, w, b):
        y = lax.conv_general_dilated(a, w, (1, 1), "VALID",
                                     dimension_numbers=("NCHW", "OIHW", "NCHW"))
        return y + b.reshape(1, -1, 1, 1)

    def pool(a):
        return lax.reduce_window(a, -jnp.inf, lax.max,
                                 (1, 1, 2, 2), (1, 1, 2, 2), "VALID")

    a = jax.nn.relu(pool(conv(x, params["conv1_w"], params["conv1_b"])))
    a = jax.nn.relu(pool(conv(a, params["conv2_w"], params["conv2_b"])))
    a = a.reshape(a.shape[0], -1)
    a = jax.nn.relu(a @ params["fc1_w"].T + params["fc1_b"])
    a = a @ params["fc2_w"].T + params["fc2_b"]
    return jax.nn.log_softmax(a, axis=1)


if __name__ == "__main__":
    key = jax.random.PRNGKey(0)
    k_x, k_p = jax.random.split(key)

    # Small input consistent with the module's structure: 3x36x36 ->
    # conv1(k5)->32x32 -> pool->16x16 -> conv2(k5)->12x12 -> pool->6x6,
    # flatten = 20*6*6 = 720, fc sizes 720->256->43.
    B, C, H, W = 2, 3, 36, 36
    fc1_out, n_classes = 256, 43
    hp1, wp1 = (H - KSIZE + 1) // 2, (W - KSIZE + 1) // 2      # 16, 16
    hp2, wp2 = (hp1 - KSIZE + 1) // 2, (wp1 - KSIZE + 1) // 2  # 6, 6
    flat_dim = 20 * hp2 * wp2

    x = jax.random.normal(k_x, (B, C, H, W), jnp.float32)
    params = init_params(k_p, flat_dim=flat_dim, fc1_out=fc1_out,
                         n_classes=n_classes)
    packed = pack_params(params, pooled1_hw=(hp1, wp1), pooled2_hw=(hp2, wp2))

    out = jax.block_until_ready(net_forward(x, packed))

    assert out.shape == (B, n_classes), out.shape
    # log_softmax rows must exponentiate-sum to 1.
    row_sums = jnp.exp(out).sum(axis=1)
    assert bool(jnp.all(jnp.abs(row_sums - 1.0) < 1e-3)), row_sums

    # Cross-check against an independent pure-XLA reference.
    ref = jax.block_until_ready(reference_forward(x, params))
    max_err = float(jnp.max(jnp.abs(out - ref)))
    assert max_err < 2e-2, max_err

    print("KERNEL_OK")
</pallas_src>

<mosaic_0001>
module attributes {stable_mosaic.version = 11 : i64} {
  func.func @kernel(%arg0: i32, %arg1: memref<1x75x1024xf32, #tpu.memory_space<vmem>>, %arg2: memref<10x75xf32, #tpu.memory_space<vmem>>, %arg3: memref<10x1xf32, #tpu.memory_space<vmem>>, %arg4: memref<25x20x10xf32, #tpu.memory_space<vmem>>, %arg5: memref<20x1xf32, #tpu.memory_space<vmem>>, %arg6: memref<5120x256xf32, #tpu.memory_space<vmem>>, %arg7: memref<1x256xf32, #tpu.memory_space<vmem>>, %arg8: memref<256x43xf32, #tpu.memory_space<vmem>>, %arg9: memref<1x43xf32, #tpu.memory_space<vmem>>, %arg10: memref<1x1x43xf32, #tpu.memory_space<vmem>>) attributes {dimension_semantics = [#tpu.dimension_semantics<parallel>], iteration_bounds = array<i64: 2>, scalar_prefetch = 0 : i64, scratch_operands = 0 : i64, tpu.core_type = #tpu.core_type<tc>, window_params = [{transform_indices = @transform_0, window_bounds = array<i64: 1, 75, 1024>}, {pipeline_mode = #tpu.pipeline_mode<synchronous>, transform_indices = @transform_1, window_bounds = array<i64: 10, 75>}, {pipeline_mode = #tpu.pipeline_mode<synchronous>, transform_indices = @transform_2, window_bounds = array<i64: 10, 1>}, {pipeline_mode = #tpu.pipeline_mode<synchronous>, transform_indices = @transform_3, window_bounds = array<i64: 25, 20, 10>}, {pipeline_mode = #tpu.pipeline_mode<synchronous>, transform_indices = @transform_4, window_bounds = array<i64: 20, 1>}, {pipeline_mode = #tpu.pipeline_mode<synchronous>, transform_indices = @transform_5, window_bounds = array<i64: 5120, 256>}, {pipeline_mode = #tpu.pipeline_mode<synchronous>, transform_indices = @transform_6, window_bounds = array<i64: 1, 256>}, {pipeline_mode = #tpu.pipeline_mode<synchronous>, transform_indices = @transform_7, window_bounds = array<i64: 256, 43>}, {pipeline_mode = #tpu.pipeline_mode<synchronous>, transform_indices = @transform_8, window_bounds = array<i64: 1, 43>}, {transform_indices = @transform_9, window_bounds = array<i64: 1, 1, 43>}]} {
    %c0 = arith.constant 0 : index
    %c0_0 = arith.constant 0 : index
    %0 = vector.load %arg2[%c0, %c0_0] : memref<10x75xf32, #tpu.memory_space<vmem>>, vector<10x75xf32>
    %c0_1 = arith.constant 0 : index
    %c0_2 = arith.constant 0 : index
    %c0_3 = arith.constant 0 : index
    %1 = vector.load %arg1[%c0_1, %c0_2, %c0_3] : memref<1x75x1024xf32, #tpu.memory_space<vmem>>, vector<1x75x1024xf32>
    %2 = vector.shape_cast %1 : vector<1x75x1024xf32> to vector<75x1024xf32>
    %cst = arith.constant dense<0.000000e+00> : vector<10x1024xf32>
    %3 = tpu.matmul %0, %2, %cst {dimension_numbers = #tpu.dot_dimension_numbers<[1], [0], [0], [1], [0, 0, 1, 1], [], []>} : vector<10x75xf32>, vector<75x1024xf32>, vector<10x1024xf32> -> vector<10x1024xf32>
    %4 = vector.extract_strided_slice %3 {offsets = [0, 0], sizes = [10, 256], strides = [1, 1]} : vector<10x1024xf32> to vector<10x256xf32>
    %5 = vector.extract_strided_slice %3 {offsets = [0, 256], sizes = [10, 256], strides = [1, 1]} : vector<10x1024xf32> to vector<10x256xf32>
    %6 = arith.maximumf %4, %5 : vector<10x256xf32>
    %7 = vector.extract_strided_slice %3 {offsets = [0, 512], sizes = [10, 256], strides = [1, 1]} : vector<10x1024xf32> to vector<10x256xf32>
    %8 = vector.extract_strided_slice %3 {offsets = [0, 768], sizes = [10, 256], strides = [1, 1]} : vector<10x1024xf32> to vector<10x256xf32>
    %9 = arith.maximumf %7, %8 : vector<10x256xf32>
    %10 = arith.maximumf %6, %9 : vector<10x256xf32>
    %c0_4 = arith.constant 0 : index
    %c0_5 = arith.constant 0 : index
    %11 = vector.load %arg3[%c0_4, %c0_5] : memref<10x1xf32, #tpu.memory_space<vmem>>, vector<10x1xf32>
    %12 = vector.broadcast %11 : vector<10x1xf32> to vector<10x256xf32>
    %13 = arith.addf %10, %12 : vector<10x256xf32>
    %cst_6 = arith.constant 0.000000e+00 : f32
    %14 = vector.broadcast %cst_6 : f32 to vector<10x256xf32>
    %15 = arith.maximumf %13, %14 : vector<10x256xf32>
    %cst_7 = arith.constant 0.000000e+00 : f32
    %16 = vector.broadcast %cst_7 : f32 to vector<20x256xf32>
    %c0_8 = arith.constant 0 : index
    %c0_9 = arith.constant 0 : index
    %c0_10 = arith.constant 0 : index
    %17 = vector.load %arg4[%c0_8, %c0_9, %c0_10] : memref<25x20x10xf32, #tpu.memory_space<vmem>>, vector<1x20x10xf32>
    %18 = vector.shape_cast %17 : vector<1x20x10xf32> to vector<20x10xf32>
    %cst_11 = arith.constant dense<0.000000e+00> : vector<20x256xf32>
    %19 = tpu.matmul %18, %15, %cst_11 {dimension_numbers = #tpu.dot_dimension_numbers<[1], [0], [0], [1], [0, 0, 1, 1], [], []>} : vector<20x10xf32>, vector<10x256xf32>, vector<20x256xf32> -> vector<20x256xf32>
    %20 = arith.addf %16, %19 : vector<20x256xf32>
    %c1 = arith.constant 1 : index
    %c0_12 = arith.constant 0 : index
    %c0_13 = arith.constant 0 : index
    %21 = vector.load %arg4[%c1, %c0_12, %c0_13] : memref<25x20x10xf32, #tpu.memory_space<vmem>>, vector<1x20x10xf32>
    %22 = vector.shape_cast %21 : vector<1x20x10xf32> to vector<20x10xf32>
    %23 = vector.extract_strided_slice %15 {offsets = [0, 1], sizes = [10, 255], strides = [1, 1]} : vector<10x256xf32> to vector<10x255xf32>
    %24 = vector.extract_strided_slice %15 {offsets = [0, 0], sizes = [10, 1], strides = [1, 1]} : vector<10x256xf32> to vector<10x1xf32>
    %25 = tpu.concatenate %23, %24 in 1 : vector<10x255xf32>, vector<10x1xf32> -> vector<10x256xf32>
    %cst_14 = arith.constant dense<0.000000e+00> : vector<20x256xf32>
    %26 = tpu.matmul %22, %25, %cst_14 {dimension_numbers = #tpu.dot_dimension_numbers<[1], [0], [0], [1], [0, 0, 1, 1], [], []>} : vector<20x10xf32>, vector<10x256xf32>, vector<20x256xf32> -> vector<20x256xf32>
    %27 = arith.addf %20, %26 : vector<20x256xf32>
    %c2 = arith.constant 2 : index
    %c0_15 = arith.constant 0 : index
    %c0_16 = arith.constant 0 : index
    %28 = vector.load %arg4[%c2, %c0_15, %c0_16] : memref<25x20x10xf32, #tpu.memory_space<vmem>>, vector<1x20x10xf32>
    %29 = vector.shape_cast %28 : vector<1x20x10xf32> to vector<20x10xf32>
    %30 = vector.extract_strided_slice %15 {offsets = [0, 2], sizes = [10, 254], strides = [1, 1]} : vector<10x256xf32> to vector<10x254xf32>
    %31 = vector.extract_strided_slice %15 {offsets = [0, 0], sizes = [10, 2], strides = [1, 1]} : vector<10x256xf32> to vector<10x2xf32>
    %32 = tpu.concatenate %30, %31 in 1 : vector<10x254xf32>, vector<10x2xf32> -> vector<10x256xf32>
    %cst_17 = arith.constant dense<0.000000e+00> : vector<20x256xf32>
    %33 = tpu.matmul %29, %32, %cst_17 {dimension_numbers = #tpu.dot_dimension_numbers<[1], [0], [0], [1], [0, 0, 1, 1], [], []>} : vector<20x10xf32>, vector<10x256xf32>, vector<20x256xf32> -> vector<20x256xf32>
    %34 = arith.addf %27, %33 : vector<20x256xf32>
    %c3 = arith.constant 3 : index
    %c0_18 = arith.constant 0 : index
    %c0_19 = arith.constant 0 : index
    %35 = vector.load %arg4[%c3, %c0_18, %c0_19] : memref<25x20x10xf32, #tpu.memory_space<vmem>>, vector<1x20x10xf32>
    %36 = vector.shape_cast %35 : vector<1x20x10xf32> to vector<20x10xf32>
    %37 = vector.extract_strided_slice %15 {offsets = [0, 3], sizes = [10, 253], strides = [1, 1]} : vector<10x256xf32> to vector<10x253xf32>
    %38 = vector.extract_strided_slice %15 {offsets = [0, 0], sizes = [10, 3], strides = [1, 1]} : vector<10x256xf32> to vector<10x3xf32>
    %39 = tpu.concatenate %37, %38 in 1 : vector<10x253xf32>, vector<10x3xf32> -> vector<10x256xf32>
    %cst_20 = arith.constant dense<0.000000e+00> : vector<20x256xf32>
    %40 = tpu.matmul %36, %39, %cst_20 {dimension_numbers = #tpu.dot_dimension_numbers<[1], [0], [0], [1], [0, 0, 1, 1], [], []>} : vector<20x10xf32>, vector<10x256xf32>, vector<20x256xf32> -> vector<20x256xf32>
    %41 = arith.addf %34, %40 : vector<20x256xf32>
    %c4 = arith.constant 4 : index
    %c0_21 = arith.constant 0 : index
    %c0_22 = arith.constant 0 : index
    %42 = vector.load %arg4[%c4, %c0_21, %c0_22] : memref<25x20x10xf32, #tpu.memory_space<vmem>>, vector<1x20x10xf32>
    %43 = vector.shape_cast %42 : vector<1x20x10xf32> to vector<20x10xf32>
    %44 = vector.extract_strided_slice %15 {offsets = [0, 4], sizes = [10, 252], strides = [1, 1]} : vector<10x256xf32> to vector<10x252xf32>
    %45 = vector.extract_strided_slice %15 {offsets = [0, 0], sizes = [10, 4], strides = [1, 1]} : vector<10x256xf32> to vector<10x4xf32>
    %46 = tpu.concatenate %44, %45 in 1 : vector<10x252xf32>, vector<10x4xf32> -> vector<10x256xf32>
    %cst_23 = arith.constant dense<0.000000e+00> : vector<20x256xf32>
    %47 = tpu.matmul %43, %46, %cst_23 {dimension_numbers = #tpu.dot_dimension_numbers<[1], [0], [0], [1], [0, 0, 1, 1], [], []>} : vector<20x10xf32>, vector<10x256xf32>, vector<20x256xf32> -> vector<20x256xf32>
    %48 = arith.addf %41, %47 : vector<20x256xf32>
    %c5 = arith.constant 5 : index
    %c0_24 = arith.constant 0 : index
    %c0_25 = arith.constant 0 : index
    %49 = vector.load %arg4[%c5, %c0_24, %c0_25] : memref<25x20x10xf32, #tpu.memory_space<vmem>>, vector<1x20x10xf32>
    %50 = vector.shape_cast %49 : vector<1x20x10xf32> to vector<20x10xf32>
    %51 = vector.extract_strided_slice %15 {offsets = [0, 16], sizes = [10, 240], strides = [1, 1]} : vector<10x256xf32> to vector<10x240xf32>
    %52 = vector.extract_strided_slice %15 {offsets = [0, 0], sizes = [10, 16], strides = [1, 1]} : vector<10x256xf32> to vector<10x16xf32>
    %53 = tpu.concatenate %51, %52 in 1 : vector<10x240xf32>, vector<10x16xf32> -> vector<10x256xf32>
    %cst_26 = arith.constant dense<0.000000e+00> : vector<20x256xf32>
    %54 = tpu.matmul %50, %53, %cst_26 {dimension_numbers = #tpu.dot_dimension_numbers<[1], [0], [0], [1], [0, 0, 1, 1], [], []>} : vector<20x10xf32>, vector<10x256xf32>, vector<20x256xf32> -> vector<20x256xf32>
    %55 = arith.addf %48, %54 : vector<20x256xf32>
    %c6 = arith.constant 6 : index
    %c0_27 = arith.constant 0 : index
    %c0_28 = arith.constant 0 : index
    %56 = vector.load %arg4[%c6, %c0_27, %c0_28] : memref<25x20x10xf32, #tpu.memory_space<vmem>>, vector<1x20x10xf32>
    %57 = vector.shape_cast %56 : vector<1x20x10xf32> to vector<20x10xf32>
    %58 = vector.extract_strided_slice %15 {offsets = [0, 17], sizes = [10, 239], strides = [1, 1]} : vector<10x256xf32> to vector<10x239xf32>
    %59 = vector.extract_strided_slice %15 {offsets = [0, 0], sizes = [10, 17], strides = [1, 1]} : vector<10x256xf32> to vector<10x17xf32>
    %60 = tpu.concatenate %58, %59 in 1 : vector<10x239xf32>, vector<10x17xf32> -> vector<10x256xf32>
    %cst_29 = arith.constant dense<0.000000e+00> : vector<20x256xf32>
    %61 = tpu.matmul %57, %60, %cst_29 {dimension_numbers = #tpu.dot_dimension_numbers<[1], [0], [0], [1], [0, 0, 1, 1], [], []>} : vector<20x10xf32>, vector<10x256xf32>, vector<20x256xf32> -> vector<20x256xf32>
    %62 = arith.addf %55, %61 : vector<20x256xf32>
    %c7 = arith.constant 7 : index
    %c0_30 = arith.constant 0 : index
    %c0_31 = arith.constant 0 : index
    %63 = vector.load %arg4[%c7, %c0_30, %c0_31] : memref<25x20x10xf32, #tpu.memory_space<vmem>>, vector<1x20x10xf32>
    %64 = vector.shape_cast %63 : vector<1x20x10xf32> to vector<20x10xf32>
    %65 = vector.extract_strided_slice %15 {offsets = [0, 18], sizes = [10, 238], strides = [1, 1]} : vector<10x256xf32> to vector<10x238xf32>
    %66 = vector.extract_strided_slice %15 {offsets = [0, 0], sizes = [10, 18], strides = [1, 1]} : vector<10x256xf32> to vector<10x18xf32>
    %67 = tpu.concatenate %65, %66 in 1 : vector<10x238xf32>, vector<10x18xf32> -> vector<10x256xf32>
    %cst_32 = arith.constant dense<0.000000e+00> : vector<20x256xf32>
    %68 = tpu.matmul %64, %67, %cst_32 {dimension_numbers = #tpu.dot_dimension_numbers<[1], [0], [0], [1], [0, 0, 1, 1], [], []>} : vector<20x10xf32>, vector<10x256xf32>, vector<20x256xf32> -> vector<20x256xf32>
    %69 = arith.addf %62, %68 : vector<20x256xf32>
    %c8 = arith.constant 8 : index
    %c0_33 = arith.constant 0 : index
    %c0_34 = arith.constant 0 : index
    %70 = vector.load %arg4[%c8, %c0_33, %c0_34] : memref<25x20x10xf32, #tpu.memory_space<vmem>>, vector<1x20x10xf32>
    %71 = vector.shape_cast %70 : vector<1x20x10xf32> to vector<20x10xf32>
    %72 = vector.extract_strided_slice %15 {offsets = [0, 19], sizes = [10, 237], strides = [1, 1]} : vector<10x256xf32> to vector<10x237xf32>
    %73 = vector.extract_strided_slice %15 {offsets = [0, 0], sizes = [10, 19], strides = [1, 1]} : vector<10x256xf32> to vector<10x19xf32>
    %74 = tpu.concatenate %72, %73 in 1 : vector<10x237xf32>, vector<10x19xf32> -> vector<10x256xf32>
    %cst_35 = arith.constant dense<0.000000e+00> : vector<20x256xf32>
    %75 = tpu.matmul %71, %74, %cst_35 {dimension_numbers = #tpu.dot_dimension_numbers<[1], [0], [0], [1], [0, 0, 1, 1], [], []>} : vector<20x10xf32>, vector<10x256xf32>, vector<20x256xf32> -> vector<20x256xf32>
    %76 = arith.addf %69, %75 : vector<20x256xf32>
    %c9 = arith.constant 9 : index
    %c0_36 = arith.constant 0 : index
    %c0_37 = arith.constant 0 : index
    %77 = vector.load %arg4[%c9, %c0_36, %c0_37] : memref<25x20x10xf32, #tpu.memory_space<vmem>>, vector<1x20x10xf32>
    %78 = vector.shape_cast %77 : vector<1x20x10xf32> to vector<20x10xf32>
    %79 = vector.extract_strided_slice %15 {offsets = [0, 20], sizes = [10, 236], strides = [1, 1]} : vector<10x256xf32> to vector<10x236xf32>
    %80 = vector.extract_strided_slice %15 {offsets = [0, 0], sizes = [10, 20], strides = [1, 1]} : vector<10x256xf32> to vector<10x20xf32>
    %81 = tpu.concatenate %79, %80 in 1 : vector<10x236xf32>, vector<10x20xf32> -> vector<10x256xf32>
    %cst_38 = arith.constant dense<0.000000e+00> : vector<20x256xf32>
    %82 = tpu.matmul %78, %81, %cst_38 {dimension_numbers = #tpu.dot_dimension_numbers<[1], [0], [0], [1], [0, 0, 1, 1], [], []>} : vector<20x10xf32>, vector<10x256xf32>, vector<20x256xf32> -> vector<20x256xf32>
    %83 = arith.addf %76, %82 : vector<20x256xf32>
    %c10 = arith.constant 10 : index
    %c0_39 = arith.constant 0 : index
    %c0_40 = arith.constant 0 : index
    %84 = vector.load %arg4[%c10, %c0_39, %c0_40] : memref<25x20x10xf32, #tpu.memory_space<vmem>>, vector<1x20x10xf32>
    %85 = vector.shape_cast %84 : vector<1x20x10xf32> to vector<20x10xf32>
    %86 = vector.extract_strided_slice %15 {offsets = [0, 32], sizes = [10, 224], strides = [1, 1]} : vector<10x256xf32> to vector<10x224xf32>
    %87 = vector.extract_strided_slice %15 {offsets = [0, 0], sizes = [10, 32], strides = [1, 1]} : vector<10x256xf32> to vector<10x32xf32>
    %88 = tpu.concatenate %86, %87 in 1 : vector<10x224xf32>, vector<10x32xf32> -> vector<10x256xf32>
    %cst_41 = arith.constant dense<0.000000e+00> : vector<20x256xf32>
    %89 = tpu.matmul %85, %88, %cst_41 {dimension_numbers = #tpu.dot_dimension_numbers<[1], [0], [0], [1], [0, 0, 1, 1], [], []>} : vector<20x10xf32>, vector<10x256xf32>, vector<20x256xf32> -> vector<20x256xf32>
    %90 = arith.addf %83, %89 : vector<20x256xf32>
    %c11 = arith.constant 11 : index
    %c0_42 = arith.constant 0 : index
    %c0_43 = arith.constant 0 : index
    %91 = vector.load %arg4[%c11, %c0_42, %c0_43] : memref<25x20x10xf32, #tpu.memory_space<vmem>>, vector<1x20x10xf32>
    %92 = vector.shape_cast %91 : vector<1x20x10xf32> to vector<20x10xf32>
    %93 = vector.extract_strided_slice %15 {offsets = [0, 33], sizes = [10, 223], strides = [1, 1]} : vector<10x256xf32> to vector<10x223xf32>
    %94 = vector.extract_strided_slice %15 {offsets = [0, 0], sizes = [10, 33], strides = [1, 1]} : vector<10x256xf32> to vector<10x33xf32>
    %95 = tpu.concatenate %93, %94 in 1 : vector<10x223xf32>, vector<10x33xf32> -> vector<10x256xf32>
    %cst_44 = arith.constant dense<0.000000e+00> : vector<20x256xf32>
    %96 = tpu.matmul %92, %95, %cst_44 {dimension_numbers = #tpu.dot_dimension_numbers<[1], [0], [0], [1], [0, 0, 1, 1], [], []>} : vector<20x10xf32>, vector<10x256xf32>, vector<20x256xf32> -> vector<20x256xf32>
    %97 = arith.addf %90, %96 : vector<20x256xf32>
    %c12 = arith.constant 12 : index
    %c0_45 = arith.constant 0 : index
    %c0_46 = arith.constant 0 : index
    %98 = vector.load %arg4[%c12, %c0_45, %c0_46] : memref<25x20x10xf32, #tpu.memory_space<vmem>>, vector<1x20x10xf32>
    %99 = vector.shape_cast %98 : vector<1x20x10xf32> to vector<20x10xf32>
    %100 = vector.extract_strided_slice %15 {offsets = [0, 34], sizes = [10, 222], strides = [1, 1]} : vector<10x256xf32> to vector<10x222xf32>
    %101 = vector.extract_strided_slice %15 {offsets = [0, 0], sizes = [10, 34], strides = [1, 1]} : vector<10x256xf32> to vector<10x34xf32>
    %102 = tpu.concatenate %100, %101 in 1 : vector<10x222xf32>, vector<10x34xf32> -> vector<10x256xf32>
    %cst_47 = arith.constant dense<0.000000e+00> : vector<20x256xf32>
    %103 = tpu.matmul %99, %102, %cst_47 {dimension_numbers = #tpu.dot_dimension_numbers<[1], [0], [0], [1], [0, 0, 1, 1], [], []>} : vector<20x10xf32>, vector<10x256xf32>, vector<20x256xf32> -> vector<20x256xf32>
    %104 = arith.addf %97, %103 : vector<20x256xf32>
    %c13 = arith.constant 13 : index
    %c0_48 = arith.constant 0 : index
    %c0_49 = arith.constant 0 : index
    %105 = vector.load %arg4[%c13, %c0_48, %c0_49] : memref<25x20x10xf32, #tpu.memory_space<vmem>>, vector<1x20x10xf32>
    %106 = vector.shape_cast %105 : vector<1x20x10xf32> to vector<20x10xf32>
    %107 = vector.extract_strided_slice %15 {offsets = [0, 35], sizes = [10, 221], strides = [1, 1]} : vector<10x256xf32> to vector<10x221xf32>
    %108 = vector.extract_strided_slice %15 {offsets = [0, 0], sizes = [10, 35], strides = [1, 1]} : vector<10x256xf32> to vector<10x35xf32>
    %109 = tpu.concatenate %107, %108 in 1 : vector<10x221xf32>, vector<10x35xf32> -> vector<10x256xf32>
    %cst_50 = arith.constant dense<0.000000e+00> : vector<20x256xf32>
    %110 = tpu.matmul %106, %109, %cst_50 {dimension_numbers = #tpu.dot_dimension_numbers<[1], [0], [0], [1], [0, 0, 1, 1], [], []>} : vector<20x10xf32>, vector<10x256xf32>, vector<20x256xf32> -> vector<20x256xf32>
    %111 = arith.addf %104, %110 : vector<20x256xf32>
    %c14 = arith.constant 14 : index
    %c0_51 = arith.constant 0 : index
    %c0_52 = arith.constant 0 : index
    %112 = vector.load %arg4[%c14, %c0_51, %c0_52] : memref<25x20x10xf32, #tpu.memory_space<vmem>>, vector<1x20x10xf32>
    %113 = vector.shape_cast %112 : vector<1x20x10xf32> to vector<20x10xf32>
    %114 = vector.extract_strided_slice %15 {offsets = [0, 36], sizes = [10, 220], strides = [1, 1]} : vector<10x256xf32> to vector<10x220xf32>
    %115 = vector.extract_strided_slice %15 {offsets = [0, 0], sizes = [10, 36], strides = [1, 1]} : vector<10x256xf32> to vector<10x36xf32>
    %116 = tpu.concatenate %114, %115 in 1 : vector<10x220xf32>, vector<10x36xf32> -> vector<10x256xf32>
    %cst_53 = arith.constant dense<0.000000e+00> : vector<20x256xf32>
    %117 = tpu.matmul %113, %116, %cst_53 {dimension_numbers = #tpu.dot_dimension_numbers<[1], [0], [0], [1], [0, 0, 1, 1], [], []>} : vector<20x10xf32>, vector<10x256xf32>, vector<20x256xf32> -> vector<20x256xf32>
    %118 = arith.addf %111, %117 : vector<20x256xf32>
    %c15 = arith.constant 15 : index
    %c0_54 = arith.constant 0 : index
    %c0_55 = arith.constant 0 : index
    %119 = vector.load %arg4[%c15, %c0_54, %c0_55] : memref<25x20x10xf32, #tpu.memory_space<vmem>>, vector<1x20x10xf32>
    %120 = vector.shape_cast %119 : vector<1x20x10xf32> to vector<20x10xf32>
    %121 = vector.extract_strided_slice %15 {offsets = [0, 48], sizes = [10, 208], strides = [1, 1]} : vector<10x256xf32> to vector<10x208xf32>
    %122 = vector.extract_strided_slice %15 {offsets = [0, 0], sizes = [10, 48], strides = [1, 1]} : vector<10x256xf32> to vector<10x48xf32>
    %123 = tpu.concatenate %121, %122 in 1 : vector<10x208xf32>, vector<10x48xf32> -> vector<10x256xf32>
    %cst_56 = arith.constant dense<0.000000e+00> : vector<20x256xf32>
    %124 = tpu.matmul %120, %123, %cst_56 {dimension_numbers = #tpu.dot_dimension_numbers<[1], [0], [0], [1], [0, 0, 1, 1], [], []>} : vector<20x10xf32>, vector<10x256xf32>, vector<20x256xf32> -> vector<20x256xf32>
    %125 = arith.addf %118, %124 : vector<20x256xf32>
    %c16 = arith.constant 16 : index
    %c0_57 = arith.constant 0 : index
    %c0_58 = arith.constant 0 : index
    %126 = vector.load %arg4[%c16, %c0_57, %c0_58] : memref<25x20x10xf32, #tpu.memory_space<vmem>>, vector<1x20x10xf32>
    %127 = vector.shape_cast %126 : vector<1x20x10xf32> to vector<20x10xf32>
    %128 = vector.extract_strided_slice %15 {offsets = [0, 49], sizes = [10, 207], strides = [1, 1]} : vector<10x256xf32> to vector<10x207xf32>
    %129 = vector.extract_strided_slice %15 {offsets = [0, 0], sizes = [10, 49], strides = [1, 1]} : vector<10x256xf32> to vector<10x49xf32>
    %130 = tpu.concatenate %128, %129 in 1 : vector<10x207xf32>, vector<10x49xf32> -> vector<10x256xf32>
    %cst_59 = arith.constant dense<0.000000e+00> : vector<20x256xf32>
    %131 = tpu.matmul %127, %130, %cst_59 {dimension_numbers = #tpu.dot_dimension_numbers<[1], [0], [0], [1], [0, 0, 1, 1], [], []>} : vector<20x10xf32>, vector<10x256xf32>, vector<20x256xf32> -> vector<20x256xf32>
    %132 = arith.addf %125, %131 : vector<20x256xf32>
    %c17 = arith.constant 17 : index
    %c0_60 = arith.constant 0 : index
    %c0_61 = arith.constant 0 : index
    %133 = vector.load %arg4[%c17, %c0_60, %c0_61] : memref<25x20x10xf32, #tpu.memory_space<vmem>>, vector<1x20x10xf32>
    %134 = vector.shape_cast %133 : vector<1x20x10xf32> to vector<20x10xf32>
    %135 = vector.extract_strided_slice %15 {offsets = [0, 50], sizes = [10, 206], strides = [1, 1]} : vector<10x256xf32> to vector<10x206xf32>
    %136 = vector.extract_strided_slice %15 {offsets = [0, 0], sizes = [10, 50], strides = [1, 1]} : vector<10x256xf32> to vector<10x50xf32>
    %137 = tpu.concatenate %135, %136 in 1 : vector<10x206xf32>, vector<10x50xf32> -> vector<10x256xf32>
    %cst_62 = arith.constant dense<0.000000e+00> : vector<20x256xf32>
    %138 = tpu.matmul %134, %137, %cst_62 {dimension_numbers = #tpu.dot_dimension_numbers<[1], [0], [0], [1], [0, 0, 1, 1], [], []>} : vector<20x10xf32>, vector<10x256xf32>, vector<20x256xf32> -> vector<20x256xf32>
    %139 = arith.addf %132, %138 : vector<20x256xf32>
    %c18 = arith.constant 18 : index
    %c0_63 = arith.constant 0 : index
    %c0_64 = arith.constant 0 : index
    %140 = vector.load %arg4[%c18, %c0_63, %c0_64] : memref<25x20x10xf32, #tpu.memory_space<vmem>>, vector<1x20x10xf32>
    %141 = vector.shape_cast %140 : vector<1x20x10xf32> to vector<20x10xf32>
    %142 = vector.extract_strided_slice %15 {offsets = [0, 51], sizes = [10, 205], strides = [1, 1]} : vector<10x256xf32> to vector<10x205xf32>
    %143 = vector.extract_strided_slice %15 {offsets = [0, 0], sizes = [10, 51], strides = [1, 1]} : vector<10x256xf32> to vector<10x51xf32>
    %144 = tpu.concatenate %142, %143 in 1 : vector<10x205xf32>, vector<10x51xf32> -> vector<10x256xf32>
    %cst_65 = arith.constant dense<0.000000e+00> : vector<20x256xf32>
    %145 = tpu.matmul %141, %144, %cst_65 {dimension_numbers = #tpu.dot_dimension_numbers<[1], [0], [0], [1], [0, 0, 1, 1], [], []>} : vector<20x10xf32>, vector<10x256xf32>, vector<20x256xf32> -> vector<20x256xf32>
    %146 = arith.addf %139, %145 : vector<20x256xf32>
    %c19 = arith.constant 19 : index
    %c0_66 = arith.constant 0 : index
    %c0_67 = arith.constant 0 : index
    %147 = vector.load %arg4[%c19, %c0_66, %c0_67] : memref<25x20x10xf32, #tpu.memory_space<vmem>>, vector<1x20x10xf32>
    %148 = vector.shape_cast %147 : vector<1x20x10xf32> to vector<20x10xf32>
    %149 = vector.extract_strided_slice %15 {offsets = [0, 52], sizes = [10, 204], strides = [1, 1]} : vector<10x256xf32> to vector<10x204xf32>
    %150 = vector.extract_strided_slice %15 {offsets = [0, 0], sizes = [10, 52], strides = [1, 1]} : vector<10x256xf32> to vector<10x52xf32>
    %151 = tpu.concatenate %149, %150 in 1 : vector<10x204xf32>, vector<10x52xf32> -> vector<10x256xf32>
    %cst_68 = arith.constant dense<0.000000e+00> : vector<20x256xf32>
    %152 = tpu.matmul %148, %151, %cst_68 {dimension_numbers = #tpu.dot_dimension_numbers<[1], [0], [0], [1], [0, 0, 1, 1], [], []>} : vector<20x10xf32>, vector<10x256xf32>, vector<20x256xf32> -> vector<20x256xf32>
    %153 = arith.addf %146, %152 : vector<20x256xf32>
    %c20 = arith.constant 20 : index
    %c0_69 = arith.constant 0 : index
    %c0_70 = arith.constant 0 : index
    %154 = vector.load %arg4[%c20, %c0_69, %c0_70] : memref<25x20x10xf32, #tpu.memory_space<vmem>>, vector<1x20x10xf32>
    %155 = vector.shape_cast %154 : vector<1x20x10xf32> to vector<20x10xf32>
    %156 = vector.extract_strided_slice %15 {offsets = [0, 64], sizes = [10, 192], strides = [1, 1]} : vector<10x256xf32> to vector<10x192xf32>
    %157 = vector.extract_strided_slice %15 {offsets = [0, 0], sizes = [10, 64], strides = [1, 1]} : vector<10x256xf32> to vector<10x64xf32>
    %158 = tpu.concatenate %156, %157 in 1 : vector<10x192xf32>, vector<10x64xf32> -> vector<10x256xf32>
    %cst_71 = arith.constant dense<0.000000e+00> : vector<20x256xf32>
    %159 = tpu.matmul %155, %158, %cst_71 {dimension_numbers = #tpu.dot_dimension_numbers<[1], [0], [0], [1], [0, 0, 1, 1], [], []>} : vector<20x10xf32>, vector<10x256xf32>, vector<20x256xf32> -> vector<20x256xf32>
    %160 = arith.addf %153, %159 : vector<20x256xf32>
    %c21 = arith.constant 21 : index
    %c0_72 = arith.constant 0 : index
    %c0_73 = arith.constant 0 : index
    %161 = vector.load %arg4[%c21, %c0_72, %c0_73] : memref<25x20x10xf32, #tpu.memory_space<vmem>>, vector<1x20x10xf32>
    %162 = vector.shape_cast %161 : vector<1x20x10xf32> to vector<20x10xf32>
    %163 = vector.extract_strided_slice %15 {offsets = [0, 65], sizes = [10, 191], strides = [1, 1]} : vector<10x256xf32> to vector<10x191xf32>
    %164 = vector.extract_strided_slice %15 {offsets = [0, 0], sizes = [10, 65], strides = [1, 1]} : vector<10x256xf32> to vector<10x65xf32>
    %165 = tpu.concatenate %163, %164 in 1 : vector<10x191xf32>, vector<10x65xf32> -> vector<10x256xf32>
    %cst_74 = arith.constant dense<0.000000e+00> : vector<20x256xf32>
    %166 = tpu.matmul %162, %165, %cst_74 {dimension_numbers = #tpu.dot_dimension_numbers<[1], [0], [0], [1], [0, 0, 1, 1], [], []>} : vector<20x10xf32>, vector<10x256xf32>, vector<20x256xf32> -> vector<20x256xf32>
    %167 = arith.addf %160, %166 : vector<20x256xf32>
    %c22 = arith.constant 22 : index
    %c0_75 = arith.constant 0 : index
    %c0_76 = arith.constant 0 : index
    %168 = vector.load %arg4[%c22, %c0_75, %c0_76] : memref<25x20x10xf32, #tpu.memory_space<vmem>>, vector<1x20x10xf32>
    %169 = vector.shape_cast %168 : vector<1x20x10xf32> to vector<20x10xf32>
    %170 = vector.extract_strided_slice %15 {offsets = [0, 66], sizes = [10, 190], strides = [1, 1]} : vector<10x256xf32> to vector<10x190xf32>
    %171 = vector.extract_strided_slice %15 {offsets = [0, 0], sizes = [10, 66], strides = [1, 1]} : vector<10x256xf32> to vector<10x66xf32>
    %172 = tpu.concatenate %170, %171 in 1 : vector<10x190xf32>, vector<10x66xf32> -> vector<10x256xf32>
    %cst_77 = arith.constant dense<0.000000e+00> : vector<20x256xf32>
    %173 = tpu.matmul %169, %172, %cst_77 {dimension_numbers = #tpu.dot_dimension_numbers<[1], [0], [0], [1], [0, 0, 1, 1], [], []>} : vector<20x10xf32>, vector<10x256xf32>, vector<20x256xf32> -> vector<20x256xf32>
    %174 = arith.addf %167, %173 : vector<20x256xf32>
    %c23 = arith.constant 23 : index
    %c0_78 = arith.constant 0 : index
    %c0_79 = arith.constant 0 : index
    %175 = vector.load %arg4[%c23, %c0_78, %c0_79] : memref<25x20x10xf32, #tpu.memory_space<vmem>>, vector<1x20x10xf32>
    %176 = vector.shape_cast %175 : vector<1x20x10xf32> to vector<20x10xf32>
    %177 = vector.extract_strided_slice %15 {offsets = [0, 67], sizes = [10, 189], strides = [1, 1]} : vector<10x256xf32> to vector<10x189xf32>
    %178 = vector.extract_strided_slice %15 {offsets = [0, 0], sizes = [10, 67], strides = [1, 1]} : vector<10x256xf32> to vector<10x67xf32>
    %179 = tpu.concatenate %177, %178 in 1 : vector<10x189xf32>, vector<10x67xf32> -> vector<10x256xf32>
    %cst_80 = arith.constant dense<0.000000e+00> : vector<20x256xf32>
    %180 = tpu.matmul %176, %179, %cst_80 {dimension_numbers = #tpu.dot_dimension_numbers<[1], [0], [0], [1], [0, 0, 1, 1], [], []>} : vector<20x10xf32>, vector<10x256xf32>, vector<20x256xf32> -> vector<20x256xf32>
    %181 = arith.addf %174, %180 : vector<20x256xf32>
    %c24 = arith.constant 24 : index
    %c0_81 = arith.constant 0 : index
    %c0_82 = arith.constant 0 : index
    %182 = vector.load %arg4[%c24, %c0_81, %c0_82] : memref<25x20x10xf32, #tpu.memory_space<vmem>>, vector<1x20x10xf32>
    %183 = vector.shape_cast %182 : vector<1x20x10xf32> to vector<20x10xf32>
    %184 = vector.extract_strided_slice %15 {offsets = [0, 68], sizes = [10, 188], strides = [1, 1]} : vector<10x256xf32> to vector<10x188xf32>
    %185 = vector.extract_strided_slice %15 {offsets = [0, 0], sizes = [10, 68], strides = [1, 1]} : vector<10x256xf32> to vector<10x68xf32>
    %186 = tpu.concatenate %184, %185 in 1 : vector<10x188xf32>, vector<10x68xf32> -> vector<10x256xf32>
    %cst_83 = arith.constant dense<0.000000e+00> : vector<20x256xf32>
    %187 = tpu.matmul %183, %186, %cst_83 {dimension_numbers = #tpu.dot_dimension_numbers<[1], [0], [0], [1], [0, 0, 1, 1], [], []>} : vector<20x10xf32>, vector<10x256xf32>, vector<20x256xf32> -> vector<20x256xf32>
    %188 = arith.addf %181, %187 : vector<20x256xf32>
    %c0_84 = arith.constant 0 : index
    %c0_85 = arith.constant 0 : index
    %189 = vector.load %arg5[%c0_84, %c0_85] : memref<20x1xf32, #tpu.memory_space<vmem>>, vector<20x1xf32>
    %190 = vector.broadcast %189 : vector<20x1xf32> to vector<20x256xf32>
    %191 = arith.addf %188, %190 : vector<20x256xf32>
    %192 = vector.extract_strided_slice %191 {offsets = [0, 1], sizes = [20, 255], strides = [1, 1]} : vector<20x256xf32> to vector<20x255xf32>
    %193 = vector.extract_strided_slice %191 {offsets = [0, 0], sizes = [20, 1], strides = [1, 1]} : vector<20x256xf32> to vector<20x1xf32>
    %194 = tpu.concatenate %192, %193 in 1 : vector<20x255xf32>, vector<20x1xf32> -> vector<20x256xf32>
    %195 = arith.maximumf %191, %194 : vector<20x256xf32>
    %196 = vector.extract_strided_slice %191 {offsets = [0, 16], sizes = [20, 240], strides = [1, 1]} : vector<20x256xf32> to vector<20x240xf32>
    %197 = vector.extract_strided_slice %191 {offsets = [0, 0], sizes = [20, 16], strides = [1, 1]} : vector<20x256xf32> to vector<20x16xf32>
    %198 = tpu.concatenate %196, %197 in 1 : vector<20x240xf32>, vector<20x16xf32> -> vector<20x256xf32>
    %199 = vector.extract_strided_slice %191 {offsets = [0, 17], sizes = [20, 239], strides = [1, 1]} : vector<20x256xf32> to vector<20x239xf32>
    %200 = vector.extract_strided_slice %191 {offsets = [0, 0], sizes = [20, 17], strides = [1, 1]} : vector<20x256xf32> to vector<20x17xf32>
    %201 = tpu.concatenate %199, %200 in 1 : vector<20x239xf32>, vector<20x17xf32> -> vector<20x256xf32>
    %202 = arith.maximumf %198, %201 : vector<20x256xf32>
    %203 = arith.maximumf %195, %202 : vector<20x256xf32>
    %cst_86 = arith.constant 0.000000e+00 : f32
    %204 = vector.broadcast %cst_86 : f32 to vector<20x256xf32>
    %205 = arith.maximumf %203, %204 : vector<20x256xf32>
    %206 = vector.extract_strided_slice %205 {offsets = [0, 0], sizes = [1, 256], strides = [1, 1]} : vector<20x256xf32> to vector<1x256xf32>
    %207 = vector.extract_strided_slice %205 {offsets = [1, 0], sizes = [1, 256], strides = [1, 1]} : vector<20x256xf32> to vector<1x256xf32>
    %208 = vector.extract_strided_slice %205 {offsets = [2, 0], sizes = [1, 256], strides = [1, 1]} : vector<20x256xf32> to vector<1x256xf32>
    %209 = vector.extract_strided_slice %205 {offsets = [3, 0], sizes = [1, 256], strides = [1, 1]} : vector<20x256xf32> to vector<1x256xf32>
    %210 = vector.extract_strided_slice %205 {offsets = [4, 0], sizes = [1, 256], strides = [1, 1]} : vector<20x256xf32> to vector<1x256xf32>
    %211 = vector.extract_strided_slice %205 {offsets = [5, 0], sizes = [1, 256], strides = [1, 1]} : vector<20x256xf32> to vector<1x256xf32>
    %212 = vector.extract_strided_slice %205 {offsets = [6, 0], sizes = [1, 256], strides = [1, 1]} : vector<20x256xf32> to vector<1x256xf32>
    %213 = vector.extract_strided_slice %205 {offsets = [7, 0], sizes = [1, 256], strides = [1, 1]} : vector<20x256xf32> to vector<1x256xf32>
    %214 = vector.extract_strided_slice %205 {offsets = [8, 0], sizes = [1, 256], strides = [1, 1]} : vector<20x256xf32> to vector<1x256xf32>
    %215 = vector.extract_strided_slice %205 {offsets = [9, 0], sizes = [1, 256], strides = [1, 1]} : vector<20x256xf32> to vector<1x256xf32>
    %216 = vector.extract_strided_slice %205 {offsets = [10, 0], sizes = [1, 256], strides = [1, 1]} : vector<20x256xf32> to vector<1x256xf32>
    %217 = vector.extract_strided_slice %205 {offsets = [11, 0], sizes = [1, 256], strides = [1, 1]} : vector<20x256xf32> to vector<1x256xf32>
    %218 = vector.extract_strided_slice %205 {offsets = [12, 0], sizes = [1, 256], strides = [1, 1]} : vector<20x256xf32> to vector<1x256xf32>
    %219 = vector.extract_strided_slice %205 {offsets = [13, 0], sizes = [1, 256], strides = [1, 1]} : vector<20x256xf32> to vector<1x256xf32>
    %220 = vector.extract_strided_slice %205 {offsets = [14, 0], sizes = [1, 256], strides = [1, 1]} : vector<20x256xf32> to vector<1x256xf32>
    %221 = vector.extract_strided_slice %205 {offsets = [15, 0], sizes = [1, 256], strides = [1, 1]} : vector<20x256xf32> to vector<1x256xf32>
    %222 = vector.extract_strided_slice %205 {offsets = [16, 0], sizes = [1, 256], strides = [1, 1]} : vector<20x256xf32> to vector<1x256xf32>
    %223 = vector.extract_strided_slice %205 {offsets = [17, 0], sizes = [1, 256], strides = [1, 1]} : vector<20x256xf32> to vector<1x256xf32>
    %224 = vector.extract_strided_slice %205 {offsets = [18, 0], sizes = [1, 256], strides = [1, 1]} : vector<20x256xf32> to vector<1x256xf32>
    %225 = vector.extract_strided_slice %205 {offsets = [19, 0], sizes = [1, 256], strides = [1, 1]} : vector<20x256xf32> to vector<1x256xf32>
    %226 = tpu.concatenate %206, %207, %208, %209, %210, %211, %212, %213, %214, %215, %216, %217, %218, %219, %220, %221 in 1 : vector<1x256xf32>, vector<1x256xf32>, vector<1x256xf32>, vector<1x256xf32>, vector<1x256xf32>, vector<1x256xf32>, vector<1x256xf32>, vector<1x256xf32>, vector<1x256xf32>, vector<1x256xf32>, vector<1x256xf32>, vector<1x256xf32>, vector<1x256xf32>, vector<1x256xf32>, vector<1x256xf32>, vector<1x256xf32> -> vector<1x4096xf32>
    %227 = tpu.concatenate %222, %223, %224, %225 in 1 : vector<1x256xf32>, vector<1x256xf32>, vector<1x256xf32>, vector<1x256xf32> -> vector<1x1024xf32>
    %228 = tpu.concatenate %226, %227 in 1 : vector<1x4096xf32>, vector<1x1024xf32> -> vector<1x5120xf32>
    %c0_87 = arith.constant 0 : index
    %c0_88 = arith.constant 0 : index
    %229 = vector.load %arg6[%c0_87, %c0_88] : memref<5120x256xf32, #tpu.memory_space<vmem>>, vector<5120x256xf32>
    %cst_89 = arith.constant dense<0.000000e+00> : vector<1x256xf32>
    %230 = tpu.matmul %228, %229, %cst_89 {dimension_numbers = #tpu.dot_dimension_numbers<[1], [0], [0], [1], [0, 0, 1, 1], [], []>} : vector<1x5120xf32>, vector<5120x256xf32>, vector<1x256xf32> -> vector<1x256xf32>
    %c0_90 = arith.constant 0 : index
    %c0_91 = arith.constant 0 : index
    %231 = vector.load %arg7[%c0_90, %c0_91] : memref<1x256xf32, #tpu.memory_space<vmem>>, vector<1x256xf32>
    %232 = arith.addf %230, %231 : vector<1x256xf32>
    %cst_92 = arith.constant 0.000000e+00 : f32
    %233 = vector.broadcast %cst_92 : f32 to vector<1x256xf32>
    %234 = arith.maximumf %232, %233 : vector<1x256xf32>
    %c0_93 = arith.constant 0 : index
    %c0_94 = arith.constant 0 : index
    %235 = vector.load %arg8[%c0_93, %c0_94] : memref<256x43xf32, #tpu.memory_space<vmem>>, vector<256x43xf32>
    %cst_95 = arith.constant dense<0.000000e+00> : vector<1x43xf32>
    %236 = tpu.matmul %234, %235, %cst_95 {dimension_numbers = #tpu.dot_dimension_numbers<[1], [0], [0], [1], [0, 0, 1, 1], [], []>} : vector<1x256xf32>, vector<256x43xf32>, vector<1x43xf32> -> vector<1x43xf32>
    %c0_96 = arith.constant 0 : index
    %c0_97 = arith.constant 0 : index
    %237 = vector.load %arg9[%c0_96, %c0_97] : memref<1x43xf32, #tpu.memory_space<vmem>>, vector<1x43xf32>
    %238 = arith.addf %236, %237 : vector<1x43xf32>
    %cst_98 = arith.constant dense<0xFF800000> : vector<1xf32>
    %239 = vector.multi_reduction <maximumf>, %238, %cst_98 [1] : vector<1x43xf32> to vector<1xf32>
    %240 = vector.shape_cast %239 : vector<1xf32> to vector<1x1xf32>
    %241 = vector.broadcast %240 : vector<1x1xf32> to vector<1x43xf32>
    %242 = arith.subf %238, %241 : vector<1x43xf32>
    %243 = math.exp %242 : vector<1x43xf32>
    %cst_99 = arith.constant dense<0.000000e+00> : vector<1xf32>
    %244 = vector.multi_reduction <add>, %243, %cst_99 [1] : vector<1x43xf32> to vector<1xf32>
    %245 = vector.shape_cast %244 : vector<1xf32> to vector<1x1xf32>
    %246 = math.log %245 : vector<1x1xf32>
    %247 = vector.broadcast %246 : vector<1x1xf32> to vector<1x43xf32>
    %248 = arith.subf %242, %247 : vector<1x43xf32>
    %c0_100 = arith.constant 0 : index
    %c0_101 = arith.constant 0 : index
    %c0_102 = arith.constant 0 : index
    %249 = vector.load %arg10[%c0_100, %c0_101, %c0_102] : memref<1x1x43xf32, #tpu.memory_space<vmem>>, vector<1x1x43xf32>
    %250 = vector.shape_cast %249 : vector<1x1x43xf32> to vector<1x43xf32>
    %251 = vector.shape_cast %248 : vector<1x43xf32> to vector<1x1x43xf32>
    tpu.vector_store %arg10[%c0_100, %c0_101, %c0_102], %251 {strides = array<i32>} : memref<1x1x43xf32, #tpu.memory_space<vmem>>, vector<1x1x43xf32>,
    return
  }
  func.func @transform_0(%arg0: i32) -> (i32, i32, i32) {
    %c0_i32 = arith.constant 0 : i32
    %c0_i32_0 = arith.constant 0 : i32
    %c0_i32_1 = arith.constant 0 : i32
    return %arg0, %c0_i32, %c0_i32_0 : i32, i32, i32
  }
  func.func @transform_1(%arg0: i32) -> (i32, i32) {
    %c0_i32 = arith.constant 0 : i32
    %c0_i32_0 = arith.constant 0 : i32
    %c0_i32_1 = arith.constant 0 : i32
    return %c0_i32, %c0_i32_0 : i32, i32
  }
  func.func @transform_2(%arg0: i32) -> (i32, i32) {
    %c0_i32 = arith.constant 0 : i32
    %c0_i32_0 = arith.constant 0 : i32
    %c0_i32_1 = arith.constant 0 : i32
    return %c0_i32, %c0_i32_0 : i32, i32
  }
  func.func @transform_3(%arg0: i32) -> (i32, i32, i32) {
    %c0_i32 = arith.constant 0 : i32
    %c0_i32_0 = arith.constant 0 : i32
    %c0_i32_1 = arith.constant 0 : i32
    %c0_i32_2 = arith.constant 0 : i32
    return %c0_i32, %c0_i32_0, %c0_i32_1 : i32, i32, i32
  }
  func.func @transform_4(%arg0: i32) -> (i32, i32) {
    %c0_i32 = arith.constant 0 : i32
    %c0_i32_0 = arith.constant 0 : i32
    %c0_i32_1 = arith.constant 0 : i32
    return %c0_i32, %c0_i32_0 : i32, i32
  }
  func.func @transform_5(%arg0: i32) -> (i32, i32) {
    %c0_i32 = arith.constant 0 : i32
    %c0_i32_0 = arith.constant 0 : i32
    %c0_i32_1 = arith.constant 0 : i32
    return %c0_i32, %c0_i32_0 : i32, i32
  }
  func.func @transform_6(%arg0: i32) -> (i32, i32) {
    %c0_i32 = arith.constant 0 : i32
    %c0_i32_0 = arith.constant 0 : i32
    %c0_i32_1 = arith.constant 0 : i32
    return %c0_i32, %c0_i32_0 : i32, i32
  }
  func.func @transform_7(%arg0: i32) -> (i32, i32) {
    %c0_i32 = arith.constant 0 : i32
    %c0_i32_0 = arith.constant 0 : i32
    %c0_i32_1 = arith.constant 0 : i32
    return %c0_i32, %c0_i32_0 : i32, i32
  }
  func.func @transform_8(%arg0: i32) -> (i32, i32) {
    %c0_i32 = arith.constant 0 : i32
    %c0_i32_0 = arith.constant 0 : i32
    %c0_i32_1 = arith.constant 0 : i32
    return %c0_i32, %c0_i32_0 : i32, i32
  }
  func.func @transform_9(%arg0: i32) -> (i32, i32, i32) {
    %c0_i32 = arith.constant 0 : i32
    %c0_i32_0 = arith.constant 0 : i32
    %c0_i32_1 = arith.constant 0 : i32
    return %arg0, %c0_i32, %c0_i32_0 : i32, i32, i32
  }
}

</mosaic_0001>

<llo_original>
// kernel: net_forward.1
$region0: #{net_forward.1}
  #allocation0 [shape = 'u32[]', space=smem, size = 0x4, offset = 0x4, fixed_abs, tag = 'smem constant byte address 0x4 - core index']
  #allocation1 [shape = 'u32[144,128]{1,0:T(1,128)}', space=vmem, size = 0x12000, scoped, tag = 'internal scratch']
  %s0 = inlined_call_operand.vmem [shape: f32[2,75,1024], index: 0, kind: input, shape index: {}]
  %s1 = inlined_call_operand.vmem [shape: f32[10,75], index: 1, kind: input, shape index: {}]
  %s2 = inlined_call_operand.vmem [shape: f32[10,1], index: 2, kind: input, shape index: {}]
  %s3 = inlined_call_operand.vmem [shape: f32[25,20,10], index: 3, kind: input, shape index: {}]
  %s4 = inlined_call_operand.vmem [shape: f32[20,1], index: 4, kind: input, shape index: {}]
  %s5 = inlined_call_operand.vmem [shape: f32[5120,256], index: 5, kind: input, shape index: {}]
  %s6 = inlined_call_operand.vmem [shape: f32[1,256], index: 6, kind: input, shape index: {}]
  %s7 = inlined_call_operand.vmem [shape: f32[256,43], index: 7, kind: input, shape index: {}]
  %s8 = inlined_call_operand.vmem [shape: f32[1,43], index: 8, kind: input, shape index: {}]
  %s9 = inlined_call_operand.hbm [shape: f32[2,1,43], index: 9, kind: output, shape index: {}]
  %s10 = sld [smem:[#allocation0]]
  $region69: #{net_forward.1} parent=0
    _
  %s12 = ssub.s32 1, %s10
  %s13 = scalar_select 0, %s12, %s10
  $region1: #{net_forward.1} parent=0
    #allocation2 [shape = 'u8[1024]{0}', space=vmem, size = 0x400, scoped, tag = 'output window, operand 0']
    #allocation3 [shape = 's32[2]{0}', space=sflag, size = 0x8, scoped, tag = 'scoped memory for net_forward.1']
    %14 = vsyncpa [#allocation3], 0
    %s15 = scalar_lea.sflag [#allocation3], 1
    %16 = vsyncpa %s15, 0
    loop: start=0, step=1, limit=4
    $region2: #{net_forward.1} parent=1 // loop_pre_header
      _
    $region3: #{net_forward.1} parent=1 // loop_header
      %s18 = sphi 0, %s22
      %p19 = scmp.ge.s32.totalorder %s18, 4
      %s28 = sphi 0, %s30
      %s31 = sphi 0, %s28
      %s32 = sphi 0, %s31
      %s48 = sphi 0, %s32
      %s52 = sphi 0, %s52
      %s54 = sphi 0, %s52
      %s55 = sphi 0, %s54
      %s69 = sphi 0, %s55
      %s73 = sphi 0, %s73
      %s75 = sphi 0, %s73
      %s76 = sphi 0, %s75
      %s90 = sphi 0, %s76
      %s94 = sphi 0, %s94
      %s96 = sphi 0, %s94
      %s97 = sphi 0, %s96
      %s111 = sphi 0, %s97
      %s115 = sphi 0, %s115
      %s117 = sphi 0, %s115
      %s118 = sphi 0, %s117
      %s132 = sphi 0, %s118
      %s136 = sphi 0, %s136
      %s138 = sphi 0, %s136
      %s139 = sphi 0, %s138
      %s153 = sphi 0, %s139
      %s157 = sphi 0, %s157
      %s159 = sphi 0, %s157
      %s160 = sphi 0, %s159
      %s174 = sphi 0, %s160
      %s178 = sphi 0, %s178
      %s180 = sphi 0, %s178
      %s181 = sphi 0, %s180
      %s195 = sphi 0, %s181
      %s199 = sphi 0, %s199
      %s201 = sphi 0, %s199
      %s202 = sphi 0, %s201
      %s216 = sphi 0, %s202
      %s222 = sphi 0, %s224
      %s225 = sphi 0, %s222
      %s226 = sphi 0, %s225
      %s242 = sphi 0, %s226
    $region4: #{net_forward.1} parent=1 // loop_header_branch
      %21 = sbr.rel (%p19) target = $region8
    $region5: #{net_forward.1} parent=1 // loop_body
      %s23 = ssub.s32 %s18, 1
      %s24 = ssub.s32 %s18, 2
      %s25 = sadd.s32 %s18, 1
      %s26 = ssub.s32 %s18, %s25
      %p27 = scmp.eq.s32.totalorder %s26, 0
      %s29 = sadd.s32 %s28, 1
      %s30 = scalar_select %p27, %s28, %s29
      %p33 = pneg %p27
      %p34 = scmp.eq.s32.totalorder %s18, 1
      %p35 = por %p33, %p34
      %p36 = scmp.ne.s32.totalorder %s28, %s31
      %p37 = scmp.eq.s32.totalorder %s18, 0
      %p38 = por %p36, %p37
      %p39 = scmp.ne.s32.totalorder %s28, %s31
      %p40 = scmp.eq.s32.totalorder %s23, 1
      %p41 = por %p39, %p40
      %p42 = scmp.ne.s32.totalorder %s31, %s32
      %p43 = scmp.eq.s32.totalorder %s23, 0
      %p44 = por %p42, %p43
      %p45 = scmp.ne.s32.totalorder %s31, %s32
      %p46 = scmp.eq.s32.totalorder %s24, 1
      %p47 = por %p45, %p46
      %p49 = scmp.ne.s32.totalorder %s32, %s48
      %p50 = scmp.eq.s32.totalorder %s24, 0
      %p51 = por %p49, %p50
      %s53 = sadd.s32 %s52, 1
      %p56 = scmp.eq.s32.totalorder %s18, 1
      %p57 = scmp.ne.s32.totalorder %s52, %s54
      %p58 = scmp.eq.s32.totalorder %s18, 0
      %p59 = por %p57, %p58
      %p60 = scmp.ne.s32.totalorder %s52, %s54
      %p61 = scmp.eq.s32.totalorder %s23, 1
      %p62 = por %p60, %p61
      %p63 = scmp.ne.s32.totalorder %s54, %s55
      %p64 = scmp.eq.s32.totalorder %s23, 0
      %p65 = por %p63, %p64
      %p66 = scmp.ne.s32.totalorder %s54, %s55
      %p67 = scmp.eq.s32.totalorder %s24, 1
      %p68 = por %p66, %p67
      %p70 = scmp.ne.s32.totalorder %s55, %s69
      %p71 = scmp.eq.s32.totalorder %s24, 0
      %p72 = por %p70, %p71
      %s74 = sadd.s32 %s73, 1
      %p77 = scmp.eq.s32.totalorder %s18, 1
      %p78 = scmp.ne.s32.totalorder %s73, %s75
      %p79 = scmp.eq.s32.totalorder %s18, 0
      %p80 = por %p78, %p79
      %p81 = scmp.ne.s32.totalorder %s73, %s75
      %p82 = scmp.eq.s32.totalorder %s23, 1
      %p83 = por %p81, %p82
      %p84 = scmp.ne.s32.totalorder %s75, %s76
      %p85 = scmp.eq.s32.totalorder %s23, 0
      %p86 = por %p84, %p85
      %p87 = scmp.ne.s32.totalorder %s75, %s76
      %p88 = scmp.eq.s32.totalorder %s24, 1
      %p89 = por %p87, %p88
      %p91 = scmp.ne.s32.totalorder %s76, %s90
      %p92 = scmp.eq.s32.totalorder %s24, 0
      %p93 = por %p91, %p92
      %s95 = sadd.s32 %s94, 1
      %p98 = scmp.eq.s32.totalorder %s18, 1
      %p99 = scmp.ne.s32.totalorder %s94, %s96
      %p100 = scmp.eq.s32.totalorder %s18, 0
      %p101 = por %p99, %p100
      %p102 = scmp.ne.s32.totalorder %s94, %s96
      %p103 = scmp.eq.s32.totalorder %s23, 1
      %p104 = por %p102, %p103
      %p105 = scmp.ne.s32.totalorder %s96, %s97
      %p106 = scmp.eq.s32.totalorder %s23, 0
      %p107 = por %p105, %p106
      %p108 = scmp.ne.s32.totalorder %s96, %s97
      %p109 = scmp.eq.s32.totalorder %s24, 1
      %p110 = por %p108, %p109
      %p112 = scmp.ne.s32.totalorder %s97, %s111
      %p113 = scmp.eq.s32.totalorder %s24, 0
      %p114 = por %p112, %p113
      %s116 = sadd.s32 %s115, 1
      %p119 = scmp.eq.s32.totalorder %s18, 1
      %p120 = scmp.ne.s32.totalorder %s115, %s117
      %p121 = scmp.eq.s32.totalorder %s18, 0
      %p122 = por %p120, %p121
      %p123 = scmp.ne.s32.totalorder %s115, %s117
      %p124 = scmp.eq.s32.totalorder %s23, 1
      %p125 = por %p123, %p124
      %p126 = scmp.ne.s32.totalorder %s117, %s118
      %p127 = scmp.eq.s32.totalorder %s23, 0
      %p128 = por %p126, %p127
      %p129 = scmp.ne.s32.totalorder %s117, %s118
      %p130 = scmp.eq.s32.totalorder %s24, 1
      %p131 = por %p129, %p130
      %p133 = scmp.ne.s32.totalorder %s118, %s132
      %p134 = scmp.eq.s32.totalorder %s24, 0
      %p135 = por %p133, %p134
      %s137 = sadd.s32 %s136, 1
      %p140 = scmp.eq.s32.totalorder %s18, 1
      %p141 = scmp.ne.s32.totalorder %s136, %s138
      %p142 = scmp.eq.s32.totalorder %s18, 0
      %p143 = por %p141, %p142
      %p144 = scmp.ne.s32.totalorder %s136, %s138
      %p145 = scmp.eq.s32.totalorder %s23, 1
      %p146 = por %p144, %p145
      %p147 = scmp.ne.s32.totalorder %s138, %s139
      %p148 = scmp.eq.s32.totalorder %s23, 0
      %p149 = por %p147, %p148
      %p150 = scmp.ne.s32.totalorder %s138, %s139
      %p151 = scmp.eq.s32.totalorder %s24, 1
      %p152 = por %p150, %p151
      %p154 = scmp.ne.s32.totalorder %s139, %s153
      %p155 = scmp.eq.s32.totalorder %s24, 0
      %p156 = por %p154, %p155
      %s158 = sadd.s32 %s157, 1
      %p161 = scmp.eq.s32.totalorder %s18, 1
      %p162 = scmp.ne.s32.totalorder %s157, %s159
      %p163 = scmp.eq.s32.totalorder %s18, 0
      %p164 = por %p162, %p163
      %p165 = scmp.ne.s32.totalorder %s157, %s159
      %p166 = scmp.eq.s32.totalorder %s23, 1
      %p167 = por %p165, %p166
      %p168 = scmp.ne.s32.totalorder %s159, %s160
      %p169 = scmp.eq.s32.totalorder %s23, 0
      %p170 = por %p168, %p169
      %p171 = scmp.ne.s32.totalorder %s159, %s160
      %p172 = scmp.eq.s32.totalorder %s24, 1
      %p173 = por %p171, %p172
      %p175 = scmp.ne.s32.totalorder %s160, %s174
      %p176 = scmp.eq.s32.totalorder %s24, 0
      %p177 = por %p175, %p176
      %s179 = sadd.s32 %s178, 1
      %p182 = scmp.eq.s32.totalorder %s18, 1
      %p183 = scmp.ne.s32.totalorder %s178, %s180
      %p184 = scmp.eq.s32.totalorder %s18, 0
      %p185 = por %p183, %p184
      %p186 = scmp.ne.s32.totalorder %s178, %s180
      %p187 = scmp.eq.s32.totalorder %s23, 1
      %p188 = por %p186, %p187
      %p189 = scmp.ne.s32.totalorder %s180, %s181
      %p190 = scmp.eq.s32.totalorder %s23, 0
      %p191 = por %p189, %p190
      %p192 = scmp.ne.s32.totalorder %s180, %s181
      %p193 = scmp.eq.s32.totalorder %s24, 1
      %p194 = por %p192, %p193
      %p196 = scmp.ne.s32.totalorder %s181, %s195
      %p197 = scmp.eq.s32.totalorder %s24, 0
      %p198 = por %p196, %p197
      %s200 = sadd.s32 %s199, 1
      %p203 = scmp.eq.s32.totalorder %s18, 1
      %p204 = scmp.ne.s32.totalorder %s199, %s201
      %p205 = scmp.eq.s32.totalorder %s18, 0
      %p206 = por %p204, %p205
      %p207 = scmp.ne.s32.totalorder %s199, %s201
      %p208 = scmp.eq.s32.totalorder %s23, 1
      %p209 = por %p207, %p208
      %p210 = scmp.ne.s32.totalorder %s201, %s202
      %p211 = scmp.eq.s32.totalorder %s23, 0
      %p212 = por %p210, %p211
      %p213 = scmp.ne.s32.totalorder %s201, %s202
      %p214 = scmp.eq.s32.totalorder %s24, 1
      %p215 = por %p213, %p214
      %p217 = scmp.ne.s32.totalorder %s202, %s216
      %p218 = scmp.eq.s32.totalorder %s24, 0
      %p219 = por %p217, %p218
      %s220 = ssub.s32 %s18, %s25
      %p221 = scmp.eq.s32.totalorder %s220, 0
      %s223 = sadd.s32 %s222, 1
      %s224 = scalar_select %p221, %s222, %s223
      %p227 = pneg %p221
      %p228 = scmp.eq.s32.totalorder %s18, 1
      %p229 = por %p227, %p228
      %p230 = scmp.ne.s32.totalorder %s222, %s225
      %p231 = scmp.eq.s32.totalorder %s18, 0
      %p232 = por %p230, %p231
      %p233 = scmp.ne.s32.totalorder %s222, %s225
      %p234 = scmp.eq.s32.totalorder %s23, 1
      %p235 = por %p233, %p234
      %p236 = scmp.ne.s32.totalorder %s225, %s226
      %p237 = scmp.eq.s32.totalorder %s23, 0
      %p238 = por %p236, %p237
      %p239 = scmp.ne.s32.totalorder %s225, %s226
      %p240 = scmp.eq.s32.totalorder %s24, 1
      %p241 = por %p239, %p240
      %p243 = scmp.ne.s32.totalorder %s226, %s242
      %p244 = scmp.eq.s32.totalorder %s24, 0
      %p245 = por %p243, %p244
      %p246 = scmp.le.s32.totalorder 1, %s18
      %p247 = scmp.lt.s32.totalorder %s18, 3
      %p248 = pnand %p246, %p247
      %p249 = pneg %p248
      // Predicated region
      $region9: #{net_forward.1} parent=5 // pred_check
        _
      $region10: #{net_forward.1} parent=5 // pred_check_branch
        %251 = sbr.rel (%p248) target = $region12
      $region11: #{net_forward.1} parent=5 // pred_region
        %s252 = ssub.s32 %s18, 1
        // Predicated region
        $region13: #{net_forward.1} parent=11 // pred_check
          %p253 = pneg %p65
        $region14: #{net_forward.1} parent=11 // pred_check_branch
          %255 = sbr.rel (%p253) target = $region16
        $region15: #{net_forward.1} parent=11 // pred_region
          _
        $region16: #{net_forward.1} parent=11 // pred_fallthru
          _
        // Predicated region
        $region17: #{net_forward.1} parent=11 // pred_check
          %p256 = pneg %p86
        $region18: #{net_forward.1} parent=11 // pred_check_branch
          %258 = sbr.rel (%p256) target = $region20
        $region19: #{net_forward.1} parent=11 // pred_region
          _
        $region20: #{net_forward.1} parent=11 // pred_fallthru
          _
        // Predicated region
        $region21: #{net_forward.1} parent=11 // pred_check
          %p259 = pneg %p107
        $region22: #{net_forward.1} parent=11 // pred_check_branch
          %261 = sbr.rel (%p259) target = $region24
        $region23: #{net_forward.1} parent=11 // pred_region
          _
        $region24: #{net_forward.1} parent=11 // pred_fallthru
          _
        // Predicated region
        $region25: #{net_forward.1} parent=11 // pred_check
          %p262 = pneg %p128
        $region26: #{net_forward.1} parent=11 // pred_check_branch
          %264 = sbr.rel (%p262) target = $region28
        $region27: #{net_forward.1} parent=11 // pred_region
          _
        $region28: #{net_forward.1} parent=11 // pred_fallthru
          _
        // Predicated region
        $region29: #{net_forward.1} parent=11 // pred_check
          %p265 = pneg %p149
        $region30: #{net_forward.1} parent=11 // pred_check_branch
          %267 = sbr.rel (%p265) target = $region32
        $region31: #{net_forward.1} parent=11 // pred_region
          _
        $region32: #{net_forward.1} parent=11 // pred_fallthru
          _
        // Predicated region
        $region33: #{net_forward.1} parent=11 // pred_check
          %p268 = pneg %p170
        $region34: #{net_forward.1} parent=11 // pred_check_branch
          %270 = sbr.rel (%p268) target = $region36
        $region35: #{net_forward.1} parent=11 // pred_region
          _
        $region36: #{net_forward.1} parent=11 // pred_fallthru
          _
        // Predicated region
        $region37: #{net_forward.1} parent=11 // pred_check
          %p271 = pneg %p191
        $region38: #{net_forward.1} parent=11 // pred_check_branch
          %273 = sbr.rel (%p271) target = $region40
        $region39: #{net_forward.1} parent=11 // pred_region
          _
        $region40: #{net_forward.1} parent=11 // pred_fallthru
          _
        // Predicated region
        $region41: #{net_forward.1} parent=11 // pred_check
          %p274 = pneg %p212
        $region42: #{net_forward.1} parent=11 // pred_check_branch
          %276 = sbr.rel (%p274) target = $region44
        $region43: #{net_forward.1} parent=11 // pred_region
          _
        $region44: #{net_forward.1} parent=11 // pred_fallthru
          _
      $region12: #{net_forward.1} parent=5 // pred_fallthru
        _
      %p277 = scmp.lt.s32.totalorder %s18, 2
      // Predicated region
      $region45: #{net_forward.1} parent=5 // pred_check
        %p278 = pneg %p277
      $region46: #{net_forward.1} parent=5 // pred_check_branch
        %280 = sbr.rel (%p278) target = $region48
      $region47: #{net_forward.1} parent=5 // pred_region
        // Predicated region
        $region49: #{net_forward.1} parent=47 // pred_check
          %p281 = pneg %p38
        $region50: #{net_forward.1} parent=47 // pred_check_branch
          %283 = sbr.rel (%p281) target = $region52
        $region51: #{net_forward.1} parent=47 // pred_region
          %p284 = scmp.lt.s32.totalorder %s18, 1
          %s285 = scalar_select %p284, %s18, 1
          %s286 = smul.addr %s285, 80
          %s287 = smul.addr %s286, 8
          %s288 = scalar_lea.vmem %s0, %s287
        $region52: #{net_forward.1} parent=47 // pred_fallthru
          _
      $region48: #{net_forward.1} parent=5 // pred_fallthru
        _
      %p289 = scmp.le.s32.totalorder 1, %s18
      %p290 = scmp.lt.s32.totalorder %s18, 3
      %p291 = pnand %p289, %p290
      %p292 = pneg %p291
      // Predicated region
      $region53: #{net_forward.1} parent=5 // pred_check
        _
      $region54: #{net_forward.1} parent=5 // pred_check_branch
        %294 = sbr.rel (%p291) target = $region56
      $region55: #{net_forward.1} parent=5 // pred_region
        %s295 = ssub.s32 %s18, 1
        %p296 = scmp.lt.s32.totalorder %s23, 1
        %s297 = scalar_select %p296, %s23, 1
        %s298 = smul.addr %s297, 80
        %s299 = smul.addr %s298, 8
        %s300 = scalar_lea.vmem %s0, %s299
        %p301 = pneg %p44
        %p302 = pneg %p41
        %p303 = pneg %p65
        %p304 = pneg %p62
        %p305 = pneg %p86
        %p306 = pneg %p83
        %p307 = pneg %p107
        %p308 = pneg %p104
        %p309 = pneg %p128
        %p310 = pneg %p125
        %p311 = pneg %p149
        %p312 = pneg %p146
        %p313 = pneg %p170
        %p314 = pneg %p167
        %p315 = pneg %p191
        %p316 = pneg %p188
        %p317 = pneg %p212
        %p318 = pneg %p209
        %p319 = pneg %p238
        %p320 = pneg %p235
        %s321 = sand.u32 %s225, 1
        %s322 = scalar_lea.sflag [#allocation3], %s321
        %s323 = sand.u32 %s225, 1
        %s324 = scalar_lea.vmem [#allocation2], %s323
        %p325 = scmp.lt.s32.totalorder %s23, 1
        %s326 = scalar_select %p325, %s23, 1
        %s327 = smul.addr %s326, 80
        %s328 = smul.addr %s327, 8
        %s329 = scalar_lea.vmem %s0, %s328
        %v330 = vld [vmem:[%s1] sm:$0xff]
        %v331 = vld [vmem:[%s1 + $0x8] sm:$0x3]
        %v332 = vld [vmem:[%s329] sm:$0xff]
        %v333 = vld [vmem:[%s329 + $0x8] sm:$0xff]
        %v334 = vld [vmem:[%s329 + $0x10] sm:$0xff]
        %v335 = vld [vmem:[%s329 + $0x18] sm:$0xff]
        %v336 = vld [vmem:[%s329 + $0x20] sm:$0xff]
        %v337 = vld [vmem:[%s329 + $0x28] sm:$0xff]
        %v338 = vld [vmem:[%s329 + $0x30] sm:$0xff]
        %v339 = vld [vmem:[%s329 + $0x38] sm:$0xff]
        %v340 = vld [vmem:[%s329 + $0x40] sm:$0xff]
        %v341 = vld [vmem:[%s329 + $0x48] sm:$0xff]
        %v342 = vld [vmem:[%s329 + $0x50] sm:$0xff]
        %v343 = vld [vmem:[%s329 + $0x58] sm:$0xff]
        %v344 = vld [vmem:[%s329 + $0x60] sm:$0xff]
        %v345 = vld [vmem:[%s329 + $0x68] sm:$0xff]
        %v346 = vld [vmem:[%s329 + $0x70] sm:$0xff]
        %v347 = vld [vmem:[%s329 + $0x78] sm:$0xff]
        %v348 = vld [vmem:[%s329 + $0x80] sm:$0xff]
        %v349 = vld [vmem:[%s329 + $0x88] sm:$0xff]
        %v350 = vld [vmem:[%s329 + $0x90] sm:$0xff]
        %v351 = vld [vmem:[%s329 + $0x98] sm:$0xff]
        %v352 = vld [vmem:[%s329 + $0xa0] sm:$0xff]
        %v353 = vld [vmem:[%s329 + $0xa8] sm:$0xff]
        %v354 = vld [vmem:[%s329 + $0xb0] sm:$0xff]
        %v355 = vld [vmem:[%s329 + $0xb8] sm:$0xff]
        %v356 = vld [vmem:[%s329 + $0xc0] sm:$0xff]
        %v357 = vld [vmem:[%s329 + $0xc8] sm:$0xff]
        %v358 = vld [vmem:[%s329 + $0xd0] sm:$0xff]
        %v359 = vld [vmem:[%s329 + $0xd8] sm:$0xff]
        %v360 = vld [vmem:[%s329 + $0xe0] sm:$0xff]
        %v361 = vld [vmem:[%s329 + $0xe8] sm:$0xff]
        %v362 = vld [vmem:[%s329 + $0xf0] sm:$0xff]
        %v363 = vld [vmem:[%s329 + $0xf8] sm:$0xff]
        %v364 = vld [vmem:[%s329 + $0x100] sm:$0xff]
        %v365 = vld [vmem:[%s329 + $0x108] sm:$0xff]
        %v366 = vld [vmem:[%s329 + $0x110] sm:$0xff]
        %v367 = vld [vmem:[%s329 + $0x118] sm:$0xff]
        %v368 = vld [vmem:[%s329 + $0x120] sm:$0xff]
        %v369 = vld [vmem:[%s329 + $0x128] sm:$0xff]
        %v370 = vld [vmem:[%s329 + $0x130] sm:$0xff]
        %v371 = vld [vmem:[%s329 + $0x138] sm:$0xff]
        %v372 = vld [vmem:[%s329 + $0x140] sm:$0xff]
        %v373 = vld [vmem:[%s329 + $0x148] sm:$0xff]
        %v374 = vld [vmem:[%s329 + $0x150] sm:$0xff]
        %v375 = vld [vmem:[%s329 + $0x158] sm:$0xff]
        %v376 = vld [vmem:[%s329 + $0x160] sm:$0xff]
        %v377 = vld [vmem:[%s329 + $0x168] sm:$0xff]
        %v378 = vld [vmem:[%s329 + $0x170] sm:$0xff]
        %v379 = vld [vmem:[%s329 + $0x178] sm:$0xff]
        %v380 = vld [vmem:[%s329 + $0x180] sm:$0xff]
        %v381 = vld [vmem:[%s329 + $0x188] sm:$0xff]
        %v382 = vld [vmem:[%s329 + $0x190] sm:$0xff]
        %v383 = vld [vmem:[%s329 + $0x198] sm:$0xff]
        %v384 = vld [vmem:[%s329 + $0x1a0] sm:$0xff]
        %v385 = vld [vmem:[%s329 + $0x1a8] sm:$0xff]
        %v386 = vld [vmem:[%s329 + $0x1b0] sm:$0xff]
        %v387 = vld [vmem:[%s329 + $0x1b8] sm:$0xff]
        %v388 = vld [vmem:[%s329 + $0x1c0] sm:$0xff]
        %v389 = vld [vmem:[%s329 + $0x1c8] sm:$0xff]
        %v390 = vld [vmem:[%s329 + $0x1d0] sm:$0xff]
        %v391 = vld [vmem:[%s329 + $0x1d8] sm:$0xff]
        %v392 = vld [vmem:[%s329 + $0x1e0] sm:$0xff]
        %v393 = vld [vmem:[%s329 + $0x1e8] sm:$0xff]
        %v394 = vld [vmem:[%s329 + $0x1f0] sm:$0xff]
        %v395 = vld [vmem:[%s329 + $0x1f8] sm:$0xff]
        %v396 = vld [vmem:[%s329 + $0x200] sm:$0xff]
        %v397 = vld [vmem:[%s329 + $0x208] sm:$0xff]
        %v398 = vld [vmem:[%s329 + $0x210] sm:$0xff]
        %v399 = vld [vmem:[%s329 + $0x218] sm:$0xff]
        %v400 = vld [vmem:[%s329 + $0x220] sm:$0xff]
        %v401 = vld [vmem:[%s329 + $0x228] sm:$0xff]
        %v402 = vld [vmem:[%s329 + $0x230] sm:$0xff]
        %v403 = vld [vmem:[%s329 + $0x238] sm:$0xff]
        %v404 = vld [vmem:[%s329 + $0x240] sm:$0x7]
        %v405 = vld [vmem:[%s329 + $0x248] sm:$0x7]
        %v406 = vld [vmem:[%s329 + $0x250] sm:$0x7]
        %v407 = vld [vmem:[%s329 + $0x258] sm:$0x7]
        %v408 = vld [vmem:[%s329 + $0x260] sm:$0x7]
        %v409 = vld [vmem:[%s329 + $0x268] sm:$0x7]
        %v410 = vld [vmem:[%s329 + $0x270] sm:$0x7]
        %v411 = vld [vmem:[%s329 + $0x278] sm:$0x7]
        %vm412 = vcmask 613376
        %v414 = vsel %vm412, %v330, 0
        %v417 = vsel %vm412, %v331, 0
        %vm419 = vcmask 1042432
        %v421 = vsel %vm419, %v404, 0
        %v424 = vsel %vm419, %v405, 0
        %v427 = vsel %vm419, %v406, 0
        %v430 = vsel %vm419, %v407, 0
        %v433 = vsel %vm419, %v408, 0
        %v436 = vsel %vm419, %v409, 0
        %v439 = vsel %vm419, %v410, 0
        %v442 = vsel %vm419, %v411, 0
        %444 = vmatprep.subr.mxu0 %v333
        %445 = vmatpush1.msra.mxu0 %v332
        %446 = vmatprep.subr.mxu0 %v341
        %447 = vmatpush1.msra.mxu0 %v340
        %448 = vmatprep.subr.mxu0 %v349
        %449 = vmatpush1.msra.mxu0 %v348
        %450 = vmatprep.subr.mxu0 %v357
        %451 = vmatpush1.msra.mxu0 %v356
        %452 = vmatprep.subr.mxu0 %v365
        %453 = vmatpush1.msra.mxu0 %v364
        %454 = vmatprep.subr.mxu0 %v373
        %455 = vmatpush1.msra.mxu0 %v372
        %456 = vmatprep.subr.mxu0 %v381
        %457 = vmatpush1.msra.mxu0 %v380
        %458 = vmatprep.subr.mxu0 %v389
        %459 = vmatpush1.msra.mxu0 %v388
        %460 = vmatprep.subr.mxu0 %v397
        %461 = vmatpush1.msra.mxu0 %v396
        %462 = vmatprep.subr.mxu0 %v424
        %463 = vmatpush1.msra.mxu0 %v421
        %464 = vmatprep.subr.mxu0 0.0
        %465 = vmatpush1.msra.mxu0 0.0
        %466 = vmatprep.subr.mxu0 0.0
        %467 = vmatpush1.msra.mxu0 0.0
        %468 = vmatprep.subr.mxu0 0.0
        %469 = vmatpush1.msra.mxu0 0.0
        %470 = vmatprep.subr.mxu0 0.0
        %471 = vmatpush1.msra.mxu0 0.0
        %472 = vmatprep.subr.mxu0 0.0
        %473 = vmatpush1.msra.mxu0 0.0
        %474 = vmatprep.subr.mxu0 0.0
        %475 = vmatpush1.msra.mxu0 0.0
        %476 = vmatprep.subr.mxu0 0.0
        %477 = vmatpush1.msra.mxu0 0.0
        %478 = vmatprep.subr.mxu0 0.0
        %479 = vmatpush1.msra.mxu0 0.0
        %480 = vmatprep.subr.mxu0 0.0
        %481 = vmatpush1.msra.mxu0 0.0
        %482 = vmatprep.subr.mxu0 0.0
        %483 = vmatpush1.msra.mxu0 0.0
        %484 = vmatprep.subr.mxu0 0.0
        %485 = vmatpush1.msra.mxu0 0.0
        %486 = vmatprep.subr.mxu0 0.0
        %487 = vmatpush1.msra.mxu0 0.0
        %488 = vmatprep.subr.mxu0 0.0
        %489 = vmatpush1.msra.mxu0 0.0
        %490 = vmatprep.subr.mxu0 0.0
        %491 = vmatpush1.msra.mxu0 0.0
        %492 = vmatprep.subr.mxu0 0.0
        %493 = vmatpush1.msra.mxu0 0.0
        %494 = vmatprep.subr.mxu0 0.0
        %495 = vmatpush1.msra.mxu0 0.0
        %496 = vmatprep.subr.mxu0 0.0
        %497 = vmatpush1.msra.mxu0 0.0
        %498 = vmatprep.subr.mxu0 0.0
        %499 = vmatpush1.msra.mxu0 0.0
        %500 = vmatprep.subr.mxu0 0.0
        %501 = vmatpush1.msra.mxu0 0.0
        %502 = vmatprep.subr.mxu0 0.0
        %503 = vmatpush1.msra.mxu0 0.0
        %504 = vmatprep.subr.mxu0 0.0
        %505 = vmatpush1.msra.mxu0 0.0
        %506 = vmatprep.subr.mxu0 0.0
        %507 = vmatpush1.msra.mxu0 0.0
        %508 = vmatprep.mubr.f32.mxu0 0.0
        %509 = vmatmul.mubr.f32.gmra.mrb[0].mxu0 %v414
        %v510 = vpop.f32.mrb[0].mxu0
        %v511 = vadd.f32 0.0, %v510
        %v512 = vpop.f32.mrb[0].mxu0
        %v513 = vadd.f32 0.0, %v512
        %514 = vmatprep.mubr.f32.mxu0 0.0
        %515 = vmatmul.mubr.f32.gmra.mrb[0].mxu0 %v417
        %v516 = vpop.f32.mrb[0].mxu0
        %v517 = vadd.f32 0.0, %v516
        %v518 = vpop.f32.mrb[0].mxu0
        %v519 = vadd.f32 0.0, %v518
        %520 = vdwg.mxu0
        %521 = vmatprep.subr.mxu0 %v335
        %522 = vmatpush1.msra.mxu0 %v334
        %523 = vmatprep.subr.mxu0 %v343
        %524 = vmatpush1.msra.mxu0 %v342
        %525 = vmatprep.subr.mxu0 %v351
        %526 = vmatpush1.msra.mxu0 %v350
        %527 = vmatprep.subr.mxu0 %v359
        %528 = vmatpush1.msra.mxu0 %v358
        %529 = vmatprep.subr.mxu0 %v367
        %530 = vmatpush1.msra.mxu0 %v366
        %531 = vmatprep.subr.mxu0 %v375
        %532 = vmatpush1.msra.mxu0 %v374
        %533 = vmatprep.subr.mxu0 %v383
        %534 = vmatpush1.msra.mxu0 %v382
        %535 = vmatprep.subr.mxu0 %v391
        %536 = vmatpush1.msra.mxu0 %v390
        %537 = vmatprep.subr.mxu0 %v399
        %538 = vmatpush1.msra.mxu0 %v398
        %539 = vmatprep.subr.mxu0 %v430
        %540 = vmatpush1.msra.mxu0 %v427
        %541 = vmatprep.subr.mxu0 0.0
        %542 = vmatpush1.msra.mxu0 0.0
        %543 = vmatprep.subr.mxu0 0.0
        %544 = vmatpush1.msra.mxu0 0.0
        %545 = vmatprep.subr.mxu0 0.0
        %546 = vmatpush1.msra.mxu0 0.0
        %547 = vmatprep.subr.mxu0 0.0
        %548 = vmatpush1.msra.mxu0 0.0
        %549 = vmatprep.subr.mxu0 0.0
        %550 = vmatpush1.msra.mxu0 0.0
        %551 = vmatprep.subr.mxu0 0.0
        %552 = vmatpush1.msra.mxu0 0.0
        %553 = vmatprep.subr.mxu0 0.0
        %554 = vmatpush1.msra.mxu0 0.0
        %555 = vmatprep.subr.mxu0 0.0
        %556 = vmatpush1.msra.mxu0 0.0
        %557 = vmatprep.subr.mxu0 0.0
        %558 = vmatpush1.msra.mxu0 0.0
        %559 = vmatprep.subr.mxu0 0.0
        %560 = vmatpush1.msra.mxu0 0.0
        %561 = vmatprep.subr.mxu0 0.0
        %562 = vmatpush1.msra.mxu0 0.0
        %563 = vmatprep.subr.mxu0 0.0
        %564 = vmatpush1.msra.mxu0 0.0
        %565 = vmatprep.subr.mxu0 0.0
        %566 = vmatpush1.msra.mxu0 0.0
        %567 = vmatprep.subr.mxu0 0.0
        %568 = vmatpush1.msra.mxu0 0.0
        %569 = vmatprep.subr.mxu0 0.0
        %570 = vmatpush1.msra.mxu0 0.0
        %571 = vmatprep.subr.mxu0 0.0
        %572 = vmatpush1.msra.mxu0 0.0
        %573 = vmatprep.subr.mxu0 0.0
        %574 = vmatpush1.msra.mxu0 0.0
        %575 = vmatprep.subr.mxu0 0.0
        %576 = vmatpush1.msra.mxu0 0.0
        %577 = vmatprep.subr.mxu0 0.0
        %578 = vmatpush1.msra.mxu0 0.0
        %579 = vmatprep.subr.mxu0 0.0
        %580 = vmatpush1.msra.mxu0 0.0
        %581 = vmatprep.subr.mxu0 0.0
        %582 = vmatpush1.msra.mxu0 0.0
        %583 = vmatprep.subr.mxu0 0.0
        %584 = vmatpush1.msra.mxu0 0.0
        %585 = vmatprep.mubr.f32.mxu0 0.0
        %586 = vmatmul.mubr.f32.gmra.mrb[0].mxu0 %v414
        %v587 = vpop.f32.mrb[0].mxu0
        %v588 = vadd.f32 0.0, %v587
        %v589 = vpop.f32.mrb[0].mxu0
        %v590 = vadd.f32 0.0, %v589
        %591 = vmatprep.mubr.f32.mxu0 0.0
        %592 = vmatmul.mubr.f32.gmra.mrb[0].mxu0 %v417
        %v593 = vpop.f32.mrb[0].mxu0
        %v594 = vadd.f32 0.0, %v593
        %v595 = vpop.f32.mrb[0].mxu0
        %v596 = vadd.f32 0.0, %v595
        %597 = vdwg.mxu0
        %598 = vmatprep.subr.mxu0 %v337
        %599 = vmatpush1.msra.mxu0 %v336
        %600 = vmatprep.subr.mxu0 %v345
        %601 = vmatpush1.msra.mxu0 %v344
        %602 = vmatprep.subr.mxu0 %v353
        %603 = vmatpush1.msra.mxu0 %v352
        %604 = vmatprep.subr.mxu0 %v361
        %605 = vmatpush1.msra.mxu0 %v360
        %606 = vmatprep.subr.mxu0 %v369
        %607 = vmatpush1.msra.mxu0 %v368
        %608 = vmatprep.subr.mxu0 %v377
        %609 = vmatpush1.msra.mxu0 %v376
        %610 = vmatprep.subr.mxu0 %v385
        %611 = vmatpush1.msra.mxu0 %v384
        %612 = vmatprep.subr.mxu0 %v393
        %613 = vmatpush1.msra.mxu0 %v392
        %614 = vmatprep.subr.mxu0 %v401
        %615 = vmatpush1.msra.mxu0 %v400
        %616 = vmatprep.subr.mxu0 %v436
        %617 = vmatpush1.msra.mxu0 %v433
        %618 = vmatprep.subr.mxu0 0.0
        %619 = vmatpush1.msra.mxu0 0.0
        %620 = vmatprep.subr.mxu0 0.0
        %621 = vmatpush1.msra.mxu0 0.0
        %622 = vmatprep.subr.mxu0 0.0
        %623 = vmatpush1.msra.mxu0 0.0
        %624 = vmatprep.subr.mxu0 0.0
        %625 = vmatpush1.msra.mxu0 0.0
        %626 = vmatprep.subr.mxu0 0.0
        %627 = vmatpush1.msra.mxu0 0.0
        %628 = vmatprep.subr.mxu0 0.0
        %629 = vmatpush1.msra.mxu0 0.0
        %630 = vmatprep.subr.mxu0 0.0
        %631 = vmatpush1.msra.mxu0 0.0
        %632 = vmatprep.subr.mxu0 0.0
        %633 = vmatpush1.msra.mxu0 0.0
        %634 = vmatprep.subr.mxu0 0.0
        %635 = vmatpush1.msra.mxu0 0.0
        %636 = vmatprep.subr.mxu0 0.0
        %637 = vmatpush1.msra.mxu0 0.0
        %638 = vmatprep.subr.mxu0 0.0
        %639 = vmatpush1.msra.mxu0 0.0
        %640 = vmatprep.subr.mxu0 0.0
        %641 = vmatpush1.msra.mxu0 0.0
        %642 = vmatprep.subr.mxu0 0.0
        %643 = vmatpush1.msra.mxu0 0.0
        %644 = vmatprep.subr.mxu0 0.0
        %645 = vmatpush1.msra.mxu0 0.0
        %646 = vmatprep.subr.mxu0 0.0
        %647 = vmatpush1.msra.mxu0 0.0
        %648 = vmatprep.subr.mxu0 0.0
        %649 = vmatpush1.msra.mxu0 0.0
        %650 = vmatprep.subr.mxu0 0.0
        %651 = vmatpush1.msra.mxu0 0.0
        %652 = vmatprep.subr.mxu0 0.0
        %653 = vmatpush1.msra.mxu0 0.0
        %654 = vmatprep.subr.mxu0 0.0
        %655 = vmatpush1.msra.mxu0 0.0
        %656 = vmatprep.subr.mxu0 0.0
        %657 = vmatpush1.msra.mxu0 0.0
        %658 = vmatprep.subr.mxu0 0.0
        %659 = vmatpush1.msra.mxu0 0.0
        %660 = vmatprep.subr.mxu0 0.0
        %661 = vmatpush1.msra.mxu0 0.0
        %662 = vmatprep.mubr.f32.mxu0 0.0
        %663 = vmatmul.mubr.f32.gmra.mrb[0].mxu0 %v414
        %v664 = vpop.f32.mrb[0].mxu0
        %v665 = vadd.f32 0.0, %v664
        %v666 = vpop.f32.mrb[0].mxu0
        %v667 = vadd.f32 0.0, %v666
        %668 = vmatprep.mubr.f32.mxu0 0.0
        %669 = vmatmul.mubr.f32.gmra.mrb[0].mxu0 %v417
        %v670 = vpop.f32.mrb[0].mxu0
        %v671 = vadd.f32 0.0, %v670
        %v672 = vpop.f32.mrb[0].mxu0
        %v673 = vadd.f32 0.0, %v672
        %674 = vdwg.mxu0
        %675 = vmatprep.subr.mxu0 %v339
        %676 = vmatpush1.msra.mxu0 %v338
        %677 = vmatprep.subr.mxu0 %v347
        %678 = vmatpush1.msra.mxu0 %v346
        %679 = vmatprep.subr.mxu0 %v355
        %680 = vmatpush1.msra.mxu0 %v354
        %681 = vmatprep.subr.mxu0 %v363
        %682 = vmatpush1.msra.mxu0 %v362
        %683 = vmatprep.subr.mxu0 %v371
        %684 = vmatpush1.msra.mxu0 %v370
        %685 = vmatprep.subr.mxu0 %v379
        %686 = vmatpush1.msra.mxu0 %v378
        %687 = vmatprep.subr.mxu0 %v387
        %688 = vmatpush1.msra.mxu0 %v386
        %689 = vmatprep.subr.mxu0 %v395
        %690 = vmatpush1.msra.mxu0 %v394
        %691 = vmatprep.subr.mxu0 %v403
        %692 = vmatpush1.msra.mxu0 %v402
        %693 = vmatprep.subr.mxu0 %v442
        %694 = vmatpush1.msra.mxu0 %v439
        %695 = vmatprep.subr.mxu0 0.0
        %696 = vmatpush1.msra.mxu0 0.0
        %697 = vmatprep.subr.mxu0 0.0
        %698 = vmatpush1.msra.mxu0 0.0
        %699 = vmatprep.subr.mxu0 0.0
        %700 = vmatpush1.msra.mxu0 0.0
        %701 = vmatprep.subr.mxu0 0.0
        %702 = vmatpush1.msra.mxu0 0.0
        %703 = vmatprep.subr.mxu0 0.0
        %704 = vmatpush1.msra.mxu0 0.0
        %705 = vmatprep.subr.mxu0 0.0
        %706 = vmatpush1.msra.mxu0 0.0
        %707 = vmatprep.subr.mxu0 0.0
        %708 = vmatpush1.msra.mxu0 0.0
        %709 = vmatprep.subr.mxu0 0.0
        %710 = vmatpush1.msra.mxu0 0.0
        %711 = vmatprep.subr.mxu0 0.0
        %712 = vmatpush1.msra.mxu0 0.0
        %713 = vmatprep.subr.mxu0 0.0
        %714 = vmatpush1.msra.mxu0 0.0
        %715 = vmatprep.subr.mxu0 0.0
        %716 = vmatpush1.msra.mxu0 0.0
        %717 = vmatprep.subr.mxu0 0.0
        %718 = vmatpush1.msra.mxu0 0.0
        %719 = vmatprep.subr.mxu0 0.0
        %720 = vmatpush1.msra.mxu0 0.0
        %721 = vmatprep.subr.mxu0 0.0
        %722 = vmatpush1.msra.mxu0 0.0
        %723 = vmatprep.subr.mxu0 0.0
        %724 = vmatpush1.msra.mxu0 0.0
        %725 = vmatprep.subr.mxu0 0.0
        %726 = vmatpush1.msra.mxu0 0.0
        %727 = vmatprep.subr.mxu0 0.0
        %728 = vmatpush1.msra.mxu0 0.0
        %729 = vmatprep.subr.mxu0 0.0
        %730 = vmatpush1.msra.mxu0 0.0
        %731 = vmatprep.subr.mxu0 0.0
        %732 = vmatpush1.msra.mxu0 0.0
        %733 = vmatprep.subr.mxu0 0.0
        %734 = vmatpush1.msra.mxu0 0.0
        %735 = vmatprep.subr.mxu0 0.0
        %736 = vmatpush1.msra.mxu0 0.0
        %737 = vmatprep.subr.mxu0 0.0
        %738 = vmatpush1.msra.mxu0 0.0
        %739 = vmatprep.mubr.f32.mxu0 0.0
        %740 = vmatmul.mubr.f32.gmra.mrb[0].mxu0 %v414
        %v741 = vpop.f32.mrb[0].mxu0
        %v742 = vadd.f32 0.0, %v741
        %v743 = vpop.f32.mrb[0].mxu0
        %v744 = vadd.f32 0.0, %v743
        %745 = vmatprep.mubr.f32.mxu0 0.0
        %746 = vmatmul.mubr.f32.gmra.mrb[0].mxu0 %v417
        %v747 = vpop.f32.mrb[0].mxu0
        %v748 = vadd.f32 0.0, %v747
        %v749 = vpop.f32.mrb[0].mxu0
        %v750 = vadd.f32 0.0, %v749
        %751 = vdwg.mxu0
        %v752 = vmax.f32 %v511, %v588
        %v753 = vmax.f32 %v513, %v590
        %v754 = vmax.f32 %v517, %v594
        %v755 = vmax.f32 %v519, %v596
        %v756 = vmax.f32 %v665, %v742
        %v757 = vmax.f32 %v667, %v744
        %v758 = vmax.f32 %v671, %v748
        %v759 = vmax.f32 %v673, %v750
        %v760 = vmax.f32 %v752, %v756
        %v761 = vmax.f32 %v753, %v757
        %v762 = vmax.f32 %v754, %v758
        %v763 = vmax.f32 %v755, %v759
        %v764 = vld [vmem:[%s2] sm:$0xff]
        %v765 = vld [vmem:[%s2 + $0x8] sm:$0x3]
        %767 = vset.pattern.permute.xlu0 0
        %768 = vperm.xlu0 %767, %v764
        %v769 = vpop.permute.xlu0 %768
        %772 = vset.pattern.permute.xlu0 0
        %773 = vperm.xlu0 %772, %v765
        %v774 = vpop.permute.xlu0 %773
        %v776 = vadd.f32 %v760, %v769
        %v777 = vadd.f32 %v761, %v769
        %v778 = vadd.f32 %v762, %v774
        %v779 = vadd.f32 %v763, %v774
        %v780 = vmax.f32 %v776, 0.0
        %v781 = vmax.f32 %v777, 0.0
        %v782 = vmax.f32 %v778, 0.0
        %v783 = vmax.f32 %v779, 0.0
        %v784 = vld [vmem:[%s3] sm:$0xff]
        %v785 = vld [vmem:[%s3 + $0x8] sm:$0xff]
        %v786 = vld [vmem:[%s3 + $0x10] sm:$0xf]
        %s787 = scalar_lea.vmem %s3, 24
        %v788 = vld [vmem:[%s787] sm:$0xff]
        %v789 = vld [vmem:[%s787 + $0x8] sm:$0xff]
        %v790 = vld [vmem:[%s787 + $0x10] sm:$0xf]
        %795 = vrot.lane.b32.xlu0 %v780, 127
        %v796 = vpop.permute.xlu0 %795
        %797 = vrot.lane.b32.xlu0 %v781, 127
        %v798 = vpop.permute.xlu0 %797
        %799 = vrot.lane.b32.xlu0 %v782, 127
        %v800 = vpop.permute.xlu0 %799
        %801 = vrot.lane.b32.xlu0 %v783, 127
        %v802 = vpop.permute.xlu0 %801
        %vm803 = vcmask 1039360
        %v804 = vsel %vm803, %v796, %v798
        %v805 = vsel %vm803, %v800, %v802
        %v811 = vsel %vm803, %v798, %v796
        %v812 = vsel %vm803, %v802, %v800
        %vm813 = vcmask 80896
        %v815 = vsel %vm813, %v788, 0
        %v818 = vsel %vm813, %v789, 0
        %v821 = vsel %vm813, %v790, 0
        %vm823 = vcmask 1041408
        %v824 = vsel %vm823, %v805, 0
        %v827 = vsel %vm823, %v812, 0
        %829 = vmatprep.subr.mxu0 %v811
        %830 = vmatpush1.msra.mxu0 %v804
        %831 = vmatprep.subr.mxu0 %v827
        %832 = vmatpush1.msra.mxu0 %v824
        %833 = vmatprep.subr.mxu0 0.0
        %834 = vmatpush1.msra.mxu0 0.0
        %835 = vmatprep.subr.mxu0 0.0
        %836 = vmatpush1.msra.mxu0 0.0
        %837 = vmatprep.subr.mxu0 0.0
        %838 = vmatpush1.msra.mxu0 0.0
        %839 = vmatprep.subr.mxu0 0.0
        %840 = vmatpush1.msra.mxu0 0.0
        %841 = vmatprep.subr.mxu0 0.0
        %842 = vmatpush1.msra.mxu0 0.0
        %843 = vmatprep.subr.mxu0 0.0
        %844 = vmatpush1.msra.mxu0 0.0
        %845 = vmatprep.subr.mxu0 0.0
        %846 = vmatpush1.msra.mxu0 0.0
        %847 = vmatprep.subr.mxu0 0.0
        %848 = vmatpush1.msra.mxu0 0.0
        %849 = vmatprep.subr.mxu0 0.0
        %850 = vmatpush1.msra.mxu0 0.0
        %851 = vmatprep.subr.mxu0 0.0
        %852 = vmatpush1.msra.mxu0 0.0
        %853 = vmatprep.subr.mxu0 0.0
        %854 = vmatpush1.msra.mxu0 0.0
        %855 = vmatprep.subr.mxu0 0.0
        %856 = vmatpush1.msra.mxu0 0.0
        %857 = vmatprep.subr.mxu0 0.0
        %858 = vmatpush1.msra.mxu0 0.0
        %859 = vmatprep.subr.mxu0 0.0
        %860 = vmatpush1.msra.mxu0 0.0
        %861 = vmatprep.subr.mxu0 0.0
        %862 = vmatpush1.msra.mxu0 0.0
        %863 = vmatprep.subr.mxu0 0.0
        %864 = vmatpush1.msra.mxu0 0.0
        %865 = vmatprep.subr.mxu0 0.0
        %866 = vmatpush1.msra.mxu0 0.0
        %867 = vmatprep.subr.mxu0 0.0
        %868 = vmatpush1.msra.mxu0 0.0
        %869 = vmatprep.subr.mxu0 0.0
        %870 = vmatpush1.msra.mxu0 0.0
        %871 = vmatprep.subr.mxu0 0.0
        %872 = vmatpush1.msra.mxu0 0.0
        %873 = vmatprep.subr.mxu0 0.0
        %874 = vmatpush1.msra.mxu0 0.0
        %875 = vmatprep.subr.mxu0 0.0
        %876 = vmatpush1.msra.mxu0 0.0
        %877 = vmatprep.subr.mxu0 0.0
        %878 = vmatpush1.msra.mxu0 0.0
        %879 = vmatprep.subr.mxu0 0.0
        %880 = vmatpush1.msra.mxu0 0.0
        %881 = vmatprep.subr.mxu0 0.0
        %882 = vmatpush1.msra.mxu0 0.0
        %883 = vmatprep.subr.mxu0 0.0
        %884 = vmatpush1.msra.mxu0 0.0
        %885 = vmatprep.subr.mxu0 0.0
        %886 = vmatpush1.msra.mxu0 0.0
        %887 = vmatprep.subr.mxu0 0.0
        %888 = vmatpush1.msra.mxu0 0.0
        %889 = vmatprep.subr.mxu0 0.0
        %890 = vmatpush1.msra.mxu0 0.0
        %891 = vmatprep.subr.mxu0 0.0
        %892 = vmatpush1.msra.mxu0 0.0
        %893 = vmatprep.mubr.f32.mxu0 0.0
        %894 = vmatmul.mubr.f32.gmra.mrb[0].mxu0 %v815
        %v895 = vpop.f32.mrb[0].mxu0
        %v896 = vadd.f32 0.0, %v895
        %v897 = vpop.f32.mrb[0].mxu0
        %v898 = vadd.f32 0.0, %v897
        %899 = vmatprep.mubr.f32.mxu0 0.0
        %900 = vmatmul.mubr.f32.gmra.mrb[0].mxu0 %v818
        %v901 = vpop.f32.mrb[0].mxu0
        %v902 = vadd.f32 0.0, %v901
        %v903 = vpop.f32.mrb[0].mxu0
        %v904 = vadd.f32 0.0, %v903
        %905 = vmatprep.mubr.f32.mxu0 0.0
        %906 = vmatmul.mubr.f32.gmra.mrb[0].mxu0 %v821
        %v907 = vpop.f32.mrb[0].mxu0
        %v908 = vadd.f32 0.0, %v907
        %v909 = vpop.f32.mrb[0].mxu0
        %v910 = vadd.f32 0.0, %v909
        %911 = vdwg.mxu0
        %v913 = vsel %vm813, %v784, 0
        %v916 = vsel %vm813, %v785, 0
        %v919 = vsel %vm813, %v786, 0
        %v921 = vsel %vm823, %v782, 0
        %v923 = vsel %vm823, %v783, 0
        %925 = vmatprep.subr.mxu0 %v781
        %926 = vmatpush1.msra.mxu0 %v780
        %927 = vmatprep.subr.mxu0 %v923
        %928 = vmatpush1.msra.mxu0 %v921
        %929 = vmatprep.subr.mxu0 0.0
        %930 = vmatpush1.msra.mxu0 0.0
        %931 = vmatprep.subr.mxu0 0.0
        %932 = vmatpush1.msra.mxu0 0.0
        %933 = vmatprep.subr.mxu0 0.0
        %934 = vmatpush1.msra.mxu0 0.0
        %935 = vmatprep.subr.mxu0 0.0
        %936 = vmatpush1.msra.mxu0 0.0
        %937 = vmatprep.subr.mxu0 0.0
        %938 = vmatpush1.msra.mxu0 0.0
        %939 = vmatprep.subr.mxu0 0.0
        %940 = vmatpush1.msra.mxu0 0.0
        %941 = vmatprep.subr.mxu0 0.0
        %942 = vmatpush1.msra.mxu0 0.0
        %943 = vmatprep.subr.mxu0 0.0
        %944 = vmatpush1.msra.mxu0 0.0
        %945 = vmatprep.subr.mxu0 0.0
        %946 = vmatpush1.msra.mxu0 0.0
        %947 = vmatprep.subr.mxu0 0.0
        %948 = vmatpush1.msra.mxu0 0.0
        %949 = vmatprep.subr.mxu0 0.0
        %950 = vmatpush1.msra.mxu0 0.0
        %951 = vmatprep.subr.mxu0 0.0
        %952 = vmatpush1.msra.mxu0 0.0
        %953 = vmatprep.subr.mxu0 0.0
        %954 = vmatpush1.msra.mxu0 0.0
        %955 = vmatprep.subr.mxu0 0.0
        %956 = vmatpush1.msra.mxu0 0.0
        %957 = vmatprep.subr.mxu0 0.0
        %958 = vmatpush1.msra.mxu0 0.0
        %959 = vmatprep.subr.mxu0 0.0
        %960 = vmatpush1.msra.mxu0 0.0
        %961 = vmatprep.subr.mxu0 0.0
        %962 = vmatpush1.msra.mxu0 0.0
        %963 = vmatprep.subr.mxu0 0.0
        %964 = vmatpush1.msra.mxu0 0.0
        %965 = vmatprep.subr.mxu0 0.0
        %966 = vmatpush1.msra.mxu0 0.0
        %967 = vmatprep.subr.mxu0 0.0
        %968 = vmatpush1.msra.mxu0 0.0
        %969 = vmatprep.subr.mxu0 0.0
        %970 = vmatpush1.msra.mxu0 0.0
        %971 = vmatprep.subr.mxu0 0.0
        %972 = vmatpush1.msra.mxu0 0.0
        %973 = vmatprep.subr.mxu0 0.0
        %974 = vmatpush1.msra.mxu0 0.0
        %975 = vmatprep.subr.mxu0 0.0
        %976 = vmatpush1.msra.mxu0 0.0
        %977 = vmatprep.subr.mxu0 0.0
        %978 = vmatpush1.msra.mxu0 0.0
        %979 = vmatprep.subr.mxu0 0.0
        %980 = vmatpush1.msra.mxu0 0.0
        %981 = vmatprep.subr.mxu0 0.0
        %982 = vmatpush1.msra.mxu0 0.0
        %983 = vmatprep.subr.mxu0 0.0
        %984 = vmatpush1.msra.mxu0 0.0
        %985 = vmatprep.subr.mxu0 0.0
        %986 = vmatpush1.msra.mxu0 0.0
        %987 = vmatprep.subr.mxu0 0.0
        %988 = vmatpush1.msra.mxu0 0.0
        %989 = vmatprep.mubr.f32.mxu0 0.0
        %990 = vmatmul.mubr.f32.gmra.mrb[0].mxu0 %v913
        %v991 = vpop.f32.mrb[0].mxu0
        %v992 = vadd.f32 %v896, %v991
        %v993 = vpop.f32.mrb[0].mxu0
        %v994 = vadd.f32 %v898, %v993
        %995 = vmatprep.mubr.f32.mxu0 0.0
        %996 = vmatmul.mubr.f32.gmra.mrb[0].mxu0 %v916
        %v997 = vpop.f32.mrb[0].mxu0
        %v998 = vadd.f32 %v902, %v997
        %v999 = vpop.f32.mrb[0].mxu0
        %v1000 = vadd.f32 %v904, %v999
        %1001 = vmatprep.mubr.f32.mxu0 0.0
        %1002 = vmatmul.mubr.f32.gmra.mrb[0].mxu0 %v919
        %v1003 = vpop.f32.mrb[0].mxu0
        %v1004 = vadd.f32 %v908, %v1003
        %v1005 = vpop.f32.mrb[0].mxu0
        %v1006 = vadd.f32 %v910, %v1005
        %1007 = vdwg.mxu0
        %s1008 = scalar_lea.vmem %s3, 48
        %v1009 = vld [vmem:[%s1008] sm:$0xff]
        %v1010 = vld [vmem:[%s1008 + $0x8] sm:$0xff]
        %v1011 = vld [vmem:[%s1008 + $0x10] sm:$0xf]
        %1012 = vrot.lane.b32.xlu0 %v780, 126
        %v1013 = vpop.permute.xlu0 %1012
        %1014 = vrot.lane.b32.xlu0 %v781, 126
        %v1015 = vpop.permute.xlu0 %1014
        %1016 = vrot.lane.b32.xlu0 %v782, 126
        %v1017 = vpop.permute.xlu0 %1016
        %1018 = vrot.lane.b32.xlu0 %v783, 126
        %v1019 = vpop.permute.xlu0 %1018
        %vm1020 = vcmask 1031168
        %v1021 = vsel %vm1020, %v1013, %v1015
        %v1022 = vsel %vm1020, %v1017, %v1019
        %v1028 = vsel %vm1020, %v1015, %v1013
        %v1029 = vsel %vm1020, %v1019, %v1017
        %v1031 = vsel %vm813, %v1009, 0
        %v1034 = vsel %vm813, %v1010, 0
        %v1037 = vsel %vm813, %v1011, 0
        %v1039 = vsel %vm823, %v1022, 0
        %v1042 = vsel %vm823, %v1029, 0
        %1044 = vmatprep.subr.mxu0 %v1028
        %1045 = vmatpush1.msra.mxu0 %v1021
        %1046 = vmatprep.subr.mxu0 %v1042
        %1047 = vmatpush1.msra.mxu0 %v1039
        %1048 = vmatprep.subr.mxu0 0.0
        %1049 = vmatpush1.msra.mxu0 0.0
        %1050 = vmatprep.subr.mxu0 0.0
        %1051 = vmatpush1.msra.mxu0 0.0
        %1052 = vmatprep.subr.mxu0 0.0
        %1053 = vmatpush1.msra.mxu0 0.0
        %1054 = vmatprep.subr.mxu0 0.0
        %1055 = vmatpush1.msra.mxu0 0.0
        %1056 = vmatprep.subr.mxu0 0.0
        %1057 = vmatpush1.msra.mxu0 0.0
        %1058 = vmatprep.subr.mxu0 0.0
        %1059 = vmatpush1.msra.mxu0 0.0
        %1060 = vmatprep.subr.mxu0 0.0
        %1061 = vmatpush1.msra.mxu0 0.0
        %1062 = vmatprep.subr.mxu0 0.0
        %1063 = vmatpush1.msra.mxu0 0.0
        %1064 = vmatprep.subr.mxu0 0.0
        %1065 = vmatpush1.msra.mxu0 0.0
        %1066 = vmatprep.subr.mxu0 0.0
        %1067 = vmatpush1.msra.mxu0 0.0
        %1068 = vmatprep.subr.mxu0 0.0
        %1069 = vmatpush1.msra.mxu0 0.0
        %1070 = vmatprep.subr.mxu0 0.0
        %1071 = vmatpush1.msra.mxu0 0.0
        %1072 = vmatprep.subr.mxu0 0.0
        %1073 = vmatpush1.msra.mxu0 0.0
        %1074 = vmatprep.subr.mxu0 0.0
        %1075 = vmatpush1.msra.mxu0 0.0
        %1076 = vmatprep.subr.mxu0 0.0
        %1077 = vmatpush1.msra.mxu0 0.0
        %1078 = vmatprep.subr.mxu0 0.0
        %1079 = vmatpush1.msra.mxu0 0.0
        %1080 = vmatprep.subr.mxu0 0.0
        %1081 = vmatpush1.msra.mxu0 0.0
        %1082 = vmatprep.subr.mxu0 0.0
        %1083 = vmatpush1.msra.mxu0 0.0
        %1084 = vmatprep.subr.mxu0 0.0
        %1085 = vmatpush1.msra.mxu0 0.0
        %1086 = vmatprep.subr.mxu0 0.0
        %1087 = vmatpush1.msra.mxu0 0.0
        %1088 = vmatprep.subr.mxu0 0.0
        %1089 = vmatpush1.msra.mxu0 0.0
        %1090 = vmatprep.subr.mxu0 0.0
        %1091 = vmatpush1.msra.mxu0 0.0
        %1092 = vmatprep.subr.mxu0 0.0
        %1093 = vmatpush1.msra.mxu0 0.0
        %1094 = vmatprep.subr.mxu0 0.0
        %1095 = vmatpush1.msra.mxu0 0.0
        %1096 = vmatprep.subr.mxu0 0.0
        %1097 = vmatpush1.msra.mxu0 0.0
        %1098 = vmatprep.subr.mxu0 0.0
        %1099 = vmatpush1.msra.mxu0 0.0
        %1100 = vmatprep.subr.mxu0 0.0
        %1101 = vmatpush1.msra.mxu0 0.0
        %1102 = vmatprep.subr.mxu0 0.0
        %1103 = vmatpush1.msra.mxu0 0.0
        %1104 = vmatprep.subr.mxu0 0.0
        %1105 = vmatpush1.msra.mxu0 0.0
        %1106 = vmatprep.subr.mxu0 0.0
        %1107 = vmatpush1.msra.mxu0 0.0
        %1108 = vmatprep.mubr.f32.mxu0 0.0
        %1109 = vmatmul.mubr.f32.gmra.mrb[0].mxu0 %v1031
        %v1110 = vpop.f32.mrb[0].mxu0
        %v1111 = vadd.f32 0.0, %v1110
        %v1112 = vpop.f32.mrb[0].mxu0
        %v1113 = vadd.f32 0.0, %v1112
        %1114 = vmatprep.mubr.f32.mxu0 0.0
        %1115 = vmatmul.mubr.f32.gmra.mrb[0].mxu0 %v1034
        %v1116 = vpop.f32.mrb[0].mxu0
        %v1117 = vadd.f32 0.0, %v1116
        %v1118 = vpop.f32.mrb[0].mxu0
        %v1119 = vadd.f32 0.0, %v1118
        %1120 = vmatprep.mubr.f32.mxu0 0.0
        %1121 = vmatmul.mubr.f32.gmra.mrb[0].mxu0 %v1037
        %v1122 = vpop.f32.mrb[0].mxu0
        %v1123 = vadd.f32 0.0, %v1122
        %v1124 = vpop.f32.mrb[0].mxu0
        %v1125 = vadd.f32 0.0, %v1124
        %1126 = vdwg.mxu0
        %v1127 = vadd.f32 %v992, %v1111
        %v1128 = vadd.f32 %v994, %v1113
        %v1129 = vadd.f32 %v998, %v1117
        %v1130 = vadd.f32 %v1000, %v1119
        %v1131 = vadd.f32 %v1004, %v1123
        %v1132 = vadd.f32 %v1006, %v1125
        %s1133 = scalar_lea.vmem %s3, 72
        %v1134 = vld [vmem:[%s1133] sm:$0xff]
        %v1135 = vld [vmem:[%s1133 + $0x8] sm:$0xff]
        %v1136 = vld [vmem:[%s1133 + $0x10] sm:$0xf]
        %1137 = vrot.lane.b32.xlu0 %v780, 125
        %v1138 = vpop.permute.xlu0 %1137
        %1139 = vrot.lane.b32.xlu0 %v781, 125
        %v1140 = vpop.permute.xlu0 %1139
        %1141 = vrot.lane.b32.xlu0 %v782, 125
        %v1142 = vpop.permute.xlu0 %1141
        %1143 = vrot.lane.b32.xlu0 %v783, 125
        %v1144 = vpop.permute.xlu0 %1143
        %vm1145 = vcmask 1022976
        %v1146 = vsel %vm1145, %v1138, %v1140
        %v1147 = vsel %vm1145, %v1142, %v1144
        %v1153 = vsel %vm1145, %v1140, %v1138
        %v1154 = vsel %vm1145, %v1144, %v1142
        %v1156 = vsel %vm813, %v1134, 0
        %v1159 = vsel %vm813, %v1135, 0
        %v1162 = vsel %vm813, %v1136, 0
        %v1164 = vsel %vm823, %v1147, 0
        %v1167 = vsel %vm823, %v1154, 0
        %1169 = vmatprep.subr.mxu0 %v1153
        %1170 = vmatpush1.msra.mxu0 %v1146
        %1171 = vmatprep.subr.mxu0 %v1167
        %1172 = vmatpush1.msra.mxu0 %v1164
        %1173 = vmatprep.subr.mxu0 0.0
        %1174 = vmatpush1.msra.mxu0 0.0
        %1175 = vmatprep.subr.mxu0 0.0
        %1176 = vmatpush1.msra.mxu0 0.0
        %1177 = vmatprep.subr.mxu0 0.0
        %1178 = vmatpush1.msra.mxu0 0.0
        %1179 = vmatprep.subr.mxu0 0.0
        %1180 = vmatpush1.msra.mxu0 0.0
        %1181 = vmatprep.subr.mxu0 0.0
        %1182 = vmatpush1.msra.mxu0 0.0
        %1183 = vmatprep.subr.mxu0 0.0
        %1184 = vmatpush1.msra.mxu0 0.0
        %1185 = vmatprep.subr.mxu0 0.0
        %1186 = vmatpush1.msra.mxu0 0.0
        %1187 = vmatprep.subr.mxu0 0.0
        %1188 = vmatpush1.msra.mxu0 0.0
        %1189 = vmatprep.subr.mxu0 0.0
        %1190 = vmatpush1.msra.mxu0 0.0
        %1191 = vmatprep.subr.mxu0 0.0
        %1192 = vmatpush1.msra.mxu0 0.0
        %1193 = vmatprep.subr.mxu0 0.0
        %1194 = vmatpush1.msra.mxu0 0.0
        %1195 = vmatprep.subr.mxu0 0.0
        %1196 = vmatpush1.msra.mxu0 0.0
        %1197 = vmatprep.subr.mxu0 0.0
        %1198 = vmatpush1.msra.mxu0 0.0
        %1199 = vmatprep.subr.mxu0 0.0
        %1200 = vmatpush1.msra.mxu0 0.0
        %1201 = vmatprep.subr.mxu0 0.0
        %1202 = vmatpush1.msra.mxu0 0.0
        %1203 = vmatprep.subr.mxu0 0.0
        %1204 = vmatpush1.msra.mxu0 0.0
        %1205 = vmatprep.subr.mxu0 0.0
        %1206 = vmatpush1.msra.mxu0 0.0
        %1207 = vmatprep.subr.mxu0 0.0
        %1208 = vmatpush1.msra.mxu0 0.0
        %1209 = vmatprep.subr.mxu0 0.0
        %1210 = vmatpush1.msra.mxu0 0.0
        %1211 = vmatprep.subr.mxu0 0.0
        %1212 = vmatpush1.msra.mxu0 0.0
        %1213 = vmatprep.subr.mxu0 0.0
        %1214 = vmatpush1.msra.mxu0 0.0
        %1215 = vmatprep.subr.mxu0 0.0
        %1216 = vmatpush1.msra.mxu0 0.0
        %1217 = vmatprep.subr.mxu0 0.0
        %1218 = vmatpush1.msra.mxu0 0.0
        %1219 = vmatprep.subr.mxu0 0.0
        %1220 = vmatpush1.msra.mxu0 0.0
        %1221 = vmatprep.subr.mxu0 0.0
        %1222 = vmatpush1.msra.mxu0 0.0
        %1223 = vmatprep.subr.mxu0 0.0
        %1224 = vmatpush1.msra.mxu0 0.0
        %1225 = vmatprep.subr.mxu0 0.0
        %1226 = vmatpush1.msra.mxu0 0.0
        %1227 = vmatprep.subr.mxu0 0.0
        %1228 = vmatpush1.msra.mxu0 0.0
        %1229 = vmatprep.subr.mxu0 0.0
        %1230 = vmatpush1.msra.mxu0 0.0
        %1231 = vmatprep.subr.mxu0 0.0
        %1232 = vmatpush1.msra.mxu0 0.0
        %1233 = vmatprep.mubr.f32.mxu0 0.0
        %1234 = vmatmul.mubr.f32.gmra.mrb[0].mxu0 %v1156
        %v1235 = vpop.f32.mrb[0].mxu0
        %v1236 = vadd.f32 0.0, %v1235
        %v1237 = vpop.f32.mrb[0].mxu0
        %v1238 = vadd.f32 0.0, %v1237
        %1239 = vmatprep.mubr.f32.mxu0 0.0
        %1240 = vmatmul.mubr.f32.gmra.mrb[0].mxu0 %v1159
        %v1241 = vpop.f32.mrb[0].mxu0
        %v1242 = vadd.f32 0.0, %v1241
        %v1243 = vpop.f32.mrb[0].mxu0
        %v1244 = vadd.f32 0.0, %v1243
        %1245 = vmatprep.mubr.f32.mxu0 0.0
        %1246 = vmatmul.mubr.f32.gmra.mrb[0].mxu0 %v1162
        %v1247 = vpop.f32.mrb[0].mxu0
        %v1248 = vadd.f32 0.0, %v1247
        %v1249 = vpop.f32.mrb[0].mxu0
        %v1250 = vadd.f32 0.0, %v1249
        %1251 = vdwg.mxu0
        %v1252 = vadd.f32 %v1127, %v1236
        %v1253 = vadd.f32 %v1128, %v1238
        %v1254 = vadd.f32 %v1129, %v1242
        %v1255 = vadd.f32 %v1130, %v1244
        %v1256 = vadd.f32 %v1131, %v1248
        %v1257 = vadd.f32 %v1132, %v1250
        %s1258 = scalar_lea.vmem %s3, 96
        %v1259 = vld [vmem:[%s1258] sm:$0xff]
        %v1260 = vld [vmem:[%s1258 + $0x8] sm:$0xff]
        %v1261 = vld [vmem:[%s1258 + $0x10] sm:$0xf]
        %1262 = vrot.lane.b32.xlu0 %v780, 124
        %v1263 = vpop.permute.xlu0 %1262
        %1264 = vrot.lane.b32.xlu0 %v781, 124
        %v1265 = vpop.permute.xlu0 %1264
        %1266 = vrot.lane.b32.xlu0 %v782, 124
        %v1267 = vpop.permute.xlu0 %1266
        %1268 = vrot.lane.b32.xlu0 %v783, 124
        %v1269 = vpop.permute.xlu0 %1268
        %vm1270 = vcmask 1014784
        %v1271 = vsel %vm1270, %v1263, %v1265
        %v1272 = vsel %vm1270, %v1267, %v1269
        %v1278 = vsel %vm1270, %v1265, %v1263
        %v1279 = vsel %vm1270, %v1269, %v1267
        %v1281 = vsel %vm813, %v1259, 0
        %v1284 = vsel %vm813, %v1260, 0
        %v1287 = vsel %vm813, %v1261, 0
        %v1289 = vsel %vm823, %v1272, 0
        %v1292 = vsel %vm823, %v1279, 0
        %1294 = vmatprep.subr.mxu0 %v1278
        %1295 = vmatpush1.msra.mxu0 %v1271
        %1296 = vmatprep.subr.mxu0 %v1292
        %1297 = vmatpush1.msra.mxu0 %v1289
        %1298 = vmatprep.subr.mxu0 0.0
        %1299 = vmatpush1.msra.mxu0 0.0
        %1300 = vmatprep.subr.mxu0 0.0
        %1301 = vmatpush1.msra.mxu0 0.0
        %1302 = vmatprep.subr.mxu0 0.0
        %1303 = vmatpush1.msra.mxu0 0.0
        %1304 = vmatprep.subr.mxu0 0.0
        %1305 = vmatpush1.msra.mxu0 0.0
        %1306 = vmatprep.subr.mxu0 0.0
        %1307 = vmatpush1.msra.mxu0 0.0
        %1308 = vmatprep.subr.mxu0 0.0
        %1309 = vmatpush1.msra.mxu0 0.0
        %1310 = vmatprep.subr.mxu0 0.0
        %1311 = vmatpush1.msra.mxu0 0.0
        %1312 = vmatprep.subr.mxu0 0.0
        %1313 = vmatpush1.msra.mxu0 0.0
        %1314 = vmatprep.subr.mxu0 0.0
        %1315 = vmatpush1.msra.mxu0 0.0
        %1316 = vmatprep.subr.mxu0 0.0
        %1317 = vmatpush1.msra.mxu0 0.0
        %1318 = vmatprep.subr.mxu0 0.0
        %1319 = vmatpush1.msra.mxu0 0.0
        %1320 = vmatprep.subr.mxu0 0.0
        %1321 = vmatpush1.msra.mxu0 0.0
        %1322 = vmatprep.subr.mxu0 0.0
        %1323 = vmatpush1.msra.mxu0 0.0
        %1324 = vmatprep.subr.mxu0 0.0
        %1325 = vmatpush1.msra.mxu0 0.0
        %1326 = vmatprep.subr.mxu0 0.0
        %1327 = vmatpush1.msra.mxu0 0.0
        %1328 = vmatprep.subr.mxu0 0.0
        %1329 = vmatpush1.msra.mxu0 0.0
        %1330 = vmatprep.subr.mxu0 0.0
        %1331 = vmatpush1.msra.mxu0 0.0
        %1332 = vmatprep.subr.mxu0 0.0
        %1333 = vmatpush1.msra.mxu0 0.0
        %1334 = vmatprep.subr.mxu0 0.0
        %1335 = vmatpush1.msra.mxu0 0.0
        %1336 = vmatprep.subr.mxu0 0.0
        %1337 = vmatpush1.msra.mxu0 0.0
        %1338 = vmatprep.subr.mxu0 0.0
        %1339 = vmatpush1.msra.mxu0 0.0
        %1340 = vmatprep.subr.mxu0 0.0
        %1341 = vmatpush1.msra.mxu0 0.0
        %1342 = vmatprep.subr.mxu0 0.0
        %1343 = vmatpush1.msra.mxu0 0.0
        %1344 = vmatprep.subr.mxu0 0.0
        %1345 = vmatpush1.msra.mxu0 0.0
        %1346 = vmatprep.subr.mxu0 0.0
        %1347 = vmatpush1.msra.mxu0 0.0
        %1348 = vmatprep.subr.mxu0 0.0
        %1349 = vmatpush1.msra.mxu0 0.0
        %1350 = vmatprep.subr.mxu0 0.0
        %1351 = vmatpush1.msra.mxu0 0.0
        %1352 = vmatprep.subr.mxu0 0.0
        %1353 = vmatpush1.msra.mxu0 0.0
        %1354 = vmatprep.subr.mxu0 0.0
        %1355 = vmatpush1.msra.mxu0 0.0
        %1356 = vmatprep.subr.mxu0 0.0
        %1357 = vmatpush1.msra.mxu0 0.0
        %1358 = vmatprep.mubr.f32.mxu0 0.0
        %1359 = vmatmul.mubr.f32.gmra.mrb[0].mxu0 %v1281
        %v1360 = vpop.f32.mrb[0].mxu0
        %v1361 = vadd.f32 0.0, %v1360
        %v1362 = vpop.f32.mrb[0].mxu0
        %v1363 = vadd.f32 0.0, %v1362
        %1364 = vmatprep.mubr.f32.mxu0 0.0
        %1365 = vmatmul.mubr.f32.gmra.mrb[0].mxu0 %v1284
        %v1366 = vpop.f32.mrb[0].mxu0
        %v1367 = vadd.f32 0.0, %v1366
        %v1368 = vpop.f32.mrb[0].mxu0
        %v1369 = vadd.f32 0.0, %v1368
        %1370 = vmatprep.mubr.f32.mxu0 0.0
        %1371 = vmatmul.mubr.f32.gmra.mrb[0].mxu0 %v1287
        %v1372 = vpop.f32.mrb[0].mxu0
        %v1373 = vadd.f32 0.0, %v1372
        %v1374 = vpop.f32.mrb[0].mxu0
        %v1375 = vadd.f32 0.0, %v1374
        %1376 = vdwg.mxu0
        %v1377 = vadd.f32 %v1252, %v1361
        %v1378 = vadd.f32 %v1253, %v1363
        %v1379 = vadd.f32 %v1254, %v1367
        %v1380 = vadd.f32 %v1255, %v1369
        %v1381 = vadd.f32 %v1256, %v1373
        %v1382 = vadd.f32 %v1257, %v1375
        %s1383 = scalar_lea.vmem %s3, 120
        %v1384 = vld [vmem:[%s1383] sm:$0xff]
        %v1385 = vld [vmem:[%s1383 + $0x8] sm:$0xff]
        %v1386 = vld [vmem:[%s1383 + $0x10] sm:$0xf]
        %1387 = vrot.lane.b32.xlu0 %v780, 112
        %v1388 = vpop.permute.xlu0 %1387
        %1389 = vrot.lane.b32.xlu0 %v781, 112
        %v1390 = vpop.permute.xlu0 %1389
        %1391 = vrot.lane.b32.xlu0 %v782, 112
        %v1392 = vpop.permute.xlu0 %1391
        %1393 = vrot.lane.b32.xlu0 %v783, 112
        %v1394 = vpop.permute.xlu0 %1393
        %vm1395 = vcmask 916480
        %v1396 = vsel %vm1395, %v1388, %v1390
        %v1397 = vsel %vm1395, %v1392, %v1394
        %v1403 = vsel %vm1395, %v1390, %v1388
        %v1404 = vsel %vm1395, %v1394, %v1392
        %v1406 = vsel %vm813, %v1384, 0
        %v1409 = vsel %vm813, %v1385, 0
        %v1412 = vsel %vm813, %v1386, 0
        %v1414 = vsel %vm823, %v1397, 0
        %v1417 = vsel %vm823, %v1404, 0
        %1419 = vmatprep.subr.mxu0 %v1403
        %1420 = vmatpush1.msra.mxu0 %v1396
        %1421 = vmatprep.subr.mxu0 %v1417
        %1422 = vmatpush1.msra.mxu0 %v1414
        %1423 = vmatprep.subr.mxu0 0.0
        %1424 = vmatpush1.msra.mxu0 0.0
        %1425 = vmatprep.subr.mxu0 0.0
        %1426 = vmatpush1.msra.mxu0 0.0
        %1427 = vmatprep.subr.mxu0 0.0
        %1428 = vmatpush1.msra.mxu0 0.0
        %1429 = vmatprep.subr.mxu0 0.0
        %1430 = vmatpush1.msra.mxu0 0.0
        %1431 = vmatprep.subr.mxu0 0.0
        %1432 = vmatpush1.msra.mxu0 0.0
        %1433 = vmatprep.subr.mxu0 0.0
        %1434 = vmatpush1.msra.mxu0 0.0
        %1435 = vmatprep.subr.mxu0 0.0
        %1436 = vmatpush1.msra.mxu0 0.0
        %1437 = vmatprep.subr.mxu0 0.0
        %1438 = vmatpush1.msra.mxu0 0.0
        %1439 = vmatprep.subr.mxu0 0.0
        %1440 = vmatpush1.msra.mxu0 0.0
        %1441 = vmatprep.subr.mxu0 0.0
        %1442 = vmatpush1.msra.mxu0 0.0
        %1443 = vmatprep.subr.mxu0 0.0
        %1444 = vmatpush1.msra.mxu0 0.0
        %1445 = vmatprep.subr.mxu0 0.0
        %1446 = vmatpush1.msra.mxu0 0.0
        %1447 = vmatprep.subr.mxu0 0.0
        %1448 = vmatpush1.msra.mxu0 0.0
        %1449 = vmatprep.subr.mxu0 0.0
        %1450 = vmatpush1.msra.mxu0 0.0
        %1451 = vmatprep.subr.mxu0 0.0
        %1452 = vmatpush1.msra.mxu0 0.0
        %1453 = vmatprep.subr.mxu0 0.0
        %1454 = vmatpush1.msra.mxu0 0.0
        %1455 = vmatprep.subr.mxu0 0.0
        %1456 = vmatpush1.msra.mxu0 0.0
        %1457 = vmatprep.subr.mxu0 0.0
        %1458 = vmatpush1.msra.mxu0 0.0
        %1459 = vmatprep.subr.mxu0 0.0
        %1460 = vmatpush1.msra.mxu0 0.0
        %1461 = vmatprep.subr.mxu0 0.0
        %1462 = vmatpush1.msra.mxu0 0.0
        %1463 = vmatprep.subr.mxu0 0.0
        %1464 = vmatpush1.msra.mxu0 0.0
        %1465 = vmatprep.subr.mxu0 0.0
        %1466 = vmatpush1.msra.mxu0 0.0
        %1467 = vmatprep.subr.mxu0 0.0
        %1468 = vmatpush1.msra.mxu0 0.0
        %1469 = vmatprep.subr.mxu0 0.0
        %1470 = vmatpush1.msra.mxu0 0.0
        %1471 = vmatprep.subr.mxu0 0.0
        %1472 = vmatpush1.msra.mxu0 0.0
        %1473 = vmatprep.subr.mxu0 0.0
        %1474 = vmatpush1.msra.mxu0 0.0
        %1475 = vmatprep.subr.mxu0 0.0
        %1476 = vmatpush1.msra.mxu0 0.0
        %1477 = vmatprep.subr.mxu0 0.0
        %1478 = vmatpush1.msra.mxu0 0.0
        %1479 = vmatprep.subr.mxu0 0.0
        %1480 = vmatpush1.msra.mxu0 0.0
        %1481 = vmatprep.subr.mxu0 0.0
        %1482 = vmatpush1.msra.mxu0 0.0
        %1483 = vmatprep.mubr.f32.mxu0 0.0
        %1484 = vmatmul.mubr.f32.gmra.mrb[0].mxu0 %v1406
        %v1485 = vpop.f32.mrb[0].mxu0
        %v1486 = vadd.f32 0.0, %v1485
        %v1487 = vpop.f32.mrb[0].mxu0
        %v1488 = vadd.f32 0.0, %v1487
        %1489 = vmatprep.mubr.f32.mxu0 0.0
        %1490 = vmatmul.mubr.f32.gmra.mrb[0].mxu0 %v1409
        %v1491 = vpop.f32.mrb[0].mxu0
        %v1492 = vadd.f32 0.0, %v1491
        %v1493 = vpop.f32.mrb[0].mxu0
        %v1494 = vadd.f32 0.0, %v1493
        %1495 = vmatprep.mubr.f32.mxu0 0.0
        %1496 = vmatmul.mubr.f32.gmra.mrb[0].mxu0 %v1412
        %v1497 = vpop.f32.mrb[0].mxu0
        %v1498 = vadd.f32 0.0, %v1497
        %v1499 = vpop.f32.mrb[0].mxu0
        %v1500 = vadd.f32 0.0, %v1499
        %1501 = vdwg.mxu0
        %v1502 = vadd.f32 %v1377, %v1486
        %v1503 = vadd.f32 %v1378, %v1488
        %v1504 = vadd.f32 %v1379, %v1492
        %v1505 = vadd.f32 %v1380, %v1494
        %v1506 = vadd.f32 %v1381, %v1498
        %v1507 = vadd.f32 %v1382, %v1500
        %s1508 = scalar_lea.vmem %s3, 144
        %v1509 = vld [vmem:[%s1508] sm:$0xff]
        %v1510 = vld [vmem:[%s1508 + $0x8] sm:$0xff]
        %v1511 = vld [vmem:[%s1508 + $0x10] sm:$0xf]
        %1512 = vrot.lane.b32.xlu0 %v780, 111
        %v1513 = vpop.permute.xlu0 %1512
        %1514 = vrot.lane.b32.xlu0 %v781, 111
        %v1515 = vpop.permute.xlu0 %1514
        %1516 = vrot.lane.b32.xlu0 %v782, 111
        %v1517 = vpop.permute.xlu0 %1516
        %1518 = vrot.lane.b32.xlu0 %v783, 111
        %v1519 = vpop.permute.xlu0 %1518
        %vm1520 = vcmask 908288
        %v1521 = vsel %vm1520, %v1513, %v1515
        %v1522 = vsel %vm1520, %v1517, %v1519
        %v1528 = vsel %vm1520, %v1515, %v1513
        %v1529 = vsel %vm1520, %v1519, %v1517
        %v1531 = vsel %vm813, %v1509, 0
        %v1534 = vsel %vm813, %v1510, 0
        %v1537 = vsel %vm813, %v1511, 0
        %v1539 = vsel %vm823, %v1522, 0
        %v1542 = vsel %vm823, %v1529, 0
        %1544 = vmatprep.subr.mxu0 %v1528
        %1545 = vmatpush1.msra.mxu0 %v1521
        %1546 = vmatprep.subr.mxu0 %v1542
        %1547 = vmatpush1.msra.mxu0 %v1539
        %1548 = vmatprep.subr.mxu0 0.0
        %1549 = vmatpush1.msra.mxu0 0.0
        %1550 = vmatprep.subr.mxu0 0.0
        %1551 = vmatpush1.msra.mxu0 0.0
        %1552 = vmatprep.subr.mxu0 0.0
        %1553 = vmatpush1.msra.mxu0 0.0
        %1554 = vmatprep.subr.mxu0 0.0
        %1555 = vmatpush1.msra.mxu0 0.0
        %1556 = vmatprep.subr.mxu0 0.0
        %1557 = vmatpush1.msra.mxu0 0.0
        %1558 = vmatprep.subr.mxu0 0.0
        %1559 = vmatpush1.msra.mxu0 0.0
        %1560 = vmatprep.subr.mxu0 0.0
        %1561 = vmatpush1.msra.mxu0 0.0
        %1562 = vmatprep.subr.mxu0 0.0
        %1563 = vmatpush1.msra.mxu0 0.0
        %1564 = vmatprep.subr.mxu0 0.0
        %1565 = vmatpush1.msra.mxu0 0.0
        %1566 = vmatprep.subr.mxu0 0.0
        %1567 = vmatpush1.msra.mxu0 0.0
        %1568 = vmatprep.subr.mxu0 0.0
        %1569 = vmatpush1.msra.mxu0 0.0
        %1570 = vmatprep.subr.mxu0 0.0
        %1571 = vmatpush1.msra.mxu0 0.0
        %1572 = vmatprep.subr.mxu0 0.0
        %1573 = vmatpush1.msra.mxu0 0.0
        %1574 = vmatprep.subr.mxu0 0.0
        %1575 = vmatpush1.msra.mxu0 0.0
        %1576 = vmatprep.subr.mxu0 0.0
        %1577 = vmatpush1.msra.mxu0 0.0
        %1578 = vmatprep.subr.mxu0 0.0
        %1579 = vmatpush1.msra.mxu0 0.0
        %1580 = vmatprep.subr.mxu0 0.0
        %1581 = vmatpush1.msra.mxu0 0.0
        %1582 = vmatprep.subr.mxu0 0.0
        %1583 = vmatpush1.msra.mxu0 0.0
        %1584 = vmatprep.subr.mxu0 0.0
        %1585 = vmatpush1.msra.mxu0 0.0
        %1586 = vmatprep.subr.mxu0 0.0
        %1587 = vmatpush1.msra.mxu0 0.0
        %1588 = vmatprep.subr.mxu0 0.0
        %1589 = vmatpush1.msra.mxu0 0.0
        %1590 = vmatprep.subr.mxu0 0.0
        %1591 = vmatpush1.msra.mxu0 0.0
        %1592 = vmatprep.subr.mxu0 0.0
        %1593 = vmatpush1.msra.mxu0 0.0
        %1594 = vmatprep.subr.mxu0 0.0
        %1595 = vmatpush1.msra.mxu0 0.0
        %1596 = vmatprep.subr.mxu0 0.0
        %1597 = vmatpush1.msra.mxu0 0.0
        %1598 = vmatprep.subr.mxu0 0.0
        %1599 = vmatpush1.msra.mxu0 0.0
        %1600 = vmatprep.subr.mxu0 0.0
        %1601 = vmatpush1.msra.mxu0 0.0
        %1602 = vmatprep.subr.mxu0 0.0
        %1603 = vmatpush1.msra.mxu0 0.0
        %1604 = vmatprep.subr.mxu0 0.0
        %1605 = vmatpush1.msra.mxu0 0.0
        %1606 = vmatprep.subr.mxu0 0.0
        %1607 = vmatpush1.msra.mxu0 0.0
        %1608 = vmatprep.mubr.f32.mxu0 0.0
        %1609 = vmatmul.mubr.f32.gmra.mrb[0].mxu0 %v1531
        %v1610 = vpop.f32.mrb[0].mxu0
        %v1611 = vadd.f32 0.0, %v1610
        %v1612 = vpop.f32.mrb[0].mxu0
        %v1613 = vadd.f32 0.0, %v1612
        %1614 = vmatprep.mubr.f32.mxu0 0.0
        %1615 = vmatmul.mubr.f32.gmra.mrb[0].mxu0 %v1534
        %v1616 = vpop.f32.mrb[0].mxu0
        %v1617 = vadd.f32 0.0, %v1616
        %v1618 = vpop.f32.mrb[0].mxu0
        %v1619 = vadd.f32 0.0, %v1618
        %1620 = vmatprep.mubr.f32.mxu0 0.0
        %1621 = vmatmul.mubr.f32.gmra.mrb[0].mxu0 %v1537
        %v1622 = vpop.f32.mrb[0].mxu0
        %v1623 = vadd.f32 0.0, %v1622
        %v1624 = vpop.f32.mrb[0].mxu0
        %v1625 = vadd.f32 0.0, %v1624
        %1626 = vdwg.mxu0
        %v1627 = vadd.f32 %v1502, %v1611
        %v1628 = vadd.f32 %v1503, %v1613
        %v1629 = vadd.f32 %v1504, %v1617
        %v1630 = vadd.f32 %v1505, %v1619
        %v1631 = vadd.f32 %v1506, %v1623
        %v1632 = vadd.f32 %v1507, %v1625
        %s1633 = scalar_lea.vmem %s3, 168
        %v1634 = vld [vmem:[%s1633] sm:$0xff]
        %v1635 = vld [vmem:[%s1633 + $0x8] sm:$0xff]
        %v1636 = vld [vmem:[%s1633 + $0x10] sm:$0xf]
        %1637 = vrot.lane.b32.xlu0 %v780, 110
        %v1638 = vpop.permute.xlu0 %1637
        %1639 = vrot.lane.b32.xlu0 %v781, 110
        %v1640 = vpop.permute.xlu0 %1639
        %1641 = vrot.lane.b32.xlu0 %v782, 110
        %v1642 = vpop.permute.xlu0 %1641
        %1643 = vrot.lane.b32.xlu0 %v783, 110
        %v1644 = vpop.permute.xlu0 %1643
        %vm1645 = vcmask 900096
        %v1646 = vsel %vm1645, %v1638, %v1640
        %v1647 = vsel %vm1645, %v1642, %v1644
        %v1653 = vsel %vm1645, %v1640, %v1638
        %v1654 = vsel %vm1645, %v1644, %v1642
        %v1656 = vsel %vm813, %v1634, 0
        %v1659 = vsel %vm813, %v1635, 0
        %v1662 = vsel %vm813, %v1636, 0
        %v1664 = vsel %vm823, %v1647, 0
        %v1667 = vsel %vm823, %v1654, 0
        %1669 = vmatprep.subr.mxu0 %v1653
        %1670 = vmatpush1.msra.mxu0 %v1646
        %1671 = vmatprep.subr.mxu0 %v1667
        %1672 = vmatpush1.msra.mxu0 %v1664
        %1673 = vmatprep.subr.mxu0 0.0
        %1674 = vmatpush1.msra.mxu0 0.0
        %1675 = vmatprep.subr.mxu0 0.0
        %1676 = vmatpush1.msra.mxu0 0.0
        %1677 = vmatprep.subr.mxu0 0.0
        %1678 = vmatpush1.msra.mxu0 0.0
        %1679 = vmatprep.subr.mxu0 0.0
        %1680 = vmatpush1.msra.mxu0 0.0
        %1681 = vmatprep.subr.mxu0 0.0
        %1682 = vmatpush1.msra.mxu0 0.0
        %1683 = vmatprep.subr.mxu0 0.0
        %1684 = vmatpush1.msra.mxu0 0.0
        %1685 = vmatprep.subr.mxu0 0.0
        %1686 = vmatpush1.msra.mxu0 0.0
        %1687 = vmatprep.subr.mxu0 0.0
        %1688 = vmatpush1.msra.mxu0 0.0
        %1689 = vmatprep.subr.mxu0 0.0
        %1690 = vmatpush1.msra.mxu0 0.0
        %1691 = vmatprep.subr.mxu0 0.0
        %1692 = vmatpush1.msra.mxu0 0.0
        %1693 = vmatprep.subr.mxu0 0.0
        %1694 = vmatpush1.msra.mxu0 0.0
        %1695 = vmatprep.subr.mxu0 0.0
        %1696 = vmatpush1.msra.mxu0 0.0
        %1697 = vmatprep.subr.mxu0 0.0
        %1698 = vmatpush1.msra.mxu0 0.0
        %1699 = vmatprep.subr.mxu0 0.0
        %1700 = vmatpush1.msra.mxu0 0.0
        %1701 = vmatprep.subr.mxu0 0.0
        %1702 = vmatpush1.msra.mxu0 0.0
        %1703 = vmatprep.subr.mxu0 0.0
        %1704 = vmatpush1.msra.mxu0 0.0
        %1705 = vmatprep.subr.mxu0 0.0
        %1706 = vmatpush1.msra.mxu0 0.0
        %1707 = vmatprep.subr.mxu0 0.0
        %1708 = vmatpush1.msra.mxu0 0.0
        %1709 = vmatprep.subr.mxu0 0.0
        %1710 = vmatpush1.msra.mxu0 0.0
        %1711 = vmatprep.subr.mxu0 0.0
        %1712 = vmatpush1.msra.mxu0 0.0
        %1713 = vmatprep.subr.mxu0 0.0
        %1714 = vmatpush1.msra.mxu0 0.0
        %1715 = vmatprep.subr.mxu0 0.0
        %1716 = vmatpush1.msra.mxu0 0.0
        %1717 = vmatprep.subr.mxu0 0.0
        %1718 = vmatpush1.msra.mxu0 0.0
        %1719 = vmatprep.subr.mxu0 0.0
        %1720 = vmatpush1.msra.mxu0 0.0
        %1721 = vmatprep.subr.mxu0 0.0
        %1722 = vmatpush1.msra.mxu0 0.0
        %1723 = vmatprep.subr.mxu0 0.0
        %1724 = vmatpush1.msra.mxu0 0.0
        %1725 = vmatprep.subr.mxu0 0.0
        %1726 = vmatpush1.msra.mxu0 0.0
        %1727 = vmatprep.subr.mxu0 0.0
        %1728 = vmatpush1.msra.mxu0 0.0
        %1729 = vmatprep.subr.mxu0 0.0
        %1730 = vmatpush1.msra.mxu0 0.0
        %1731 = vmatprep.subr.mxu0 0.0
        %1732 = vmatpush1.msra.mxu0 0.0
        %1733 = vmatprep.mubr.f32.mxu0 0.0
        %1734 = vmatmul.mubr.f32.gmra.mrb[0].mxu0 %v1656
        %v1735 = vpop.f32.mrb[0].mxu0
        %v1736 = vadd.f32 0.0, %v1735
        %v1737 = vpop.f32.mrb[0].mxu0
        %v1738 = vadd.f32 0.0, %v1737
        %1739 = vmatprep.mubr.f32.mxu0 0.0
        %1740 = vmatmul.mubr.f32.gmra.mrb[0].mxu0 %v1659
        %v1741 = vpop.f32.mrb[0].mxu0
        %v1742 = vadd.f32 0.0, %v1741
        %v1743 = vpop.f32.mrb[0].mxu0
        %v1744 = vadd.f32 0.0, %v1743
        %1745 = vmatprep.mubr.f32.mxu0 0.0
        %1746 = vmatmul.mubr.f32.gmra.mrb[0].mxu0 %v1662
        %v1747 = vpop.f32.mrb[0].mxu0
        %v1748 = vadd.f32 0.0, %v1747
        %v1749 = vpop.f32.mrb[0].mxu0
        %v1750 = vadd.f32 0.0, %v1749
        %1751 = vdwg.mxu0
        %v1752 = vadd.f32 %v1627, %v1736
        %v1753 = vadd.f32 %v1628, %v1738
        %v1754 = vadd.f32 %v1629, %v1742
        %v1755 = vadd.f32 %v1630, %v1744
        %v1756 = vadd.f32 %v1631, %v1748
        %v1757 = vadd.f32 %v1632, %v1750
        %s1758 = scalar_lea.vmem %s3, 192
        %v1759 = vld [vmem:[%s1758] sm:$0xff]
        %v1760 = vld [vmem:[%s1758 + $0x8] sm:$0xff]
        %v1761 = vld [vmem:[%s1758 + $0x10] sm:$0xf]
        %1762 = vrot.lane.b32.xlu0 %v780, 109
        %v1763 = vpop.permute.xlu0 %1762
        %1764 = vrot.lane.b32.xlu0 %v781, 109
        %v1765 = vpop.permute.xlu0 %1764
        %1766 = vrot.lane.b32.xlu0 %v782, 109
        %v1767 = vpop.permute.xlu0 %1766
        %1768 = vrot.lane.b32.xlu0 %v783, 109
        %v1769 = vpop.permute.xlu0 %1768
        %vm1770 = vcmask 891904
        %v1771 = vsel %vm1770, %v1763, %v1765
        %v1772 = vsel %vm1770, %v1767, %v1769
        %v1778 = vsel %vm1770, %v1765, %v1763
        %v1779 = vsel %vm1770, %v1769, %v1767
        %v1781 = vsel %vm813, %v1759, 0
        %v1784 = vsel %vm813, %v1760, 0
        %v1787 = vsel %vm813, %v1761, 0
        %v1789 = vsel %vm823, %v1772, 0
        %v1792 = vsel %vm823, %v1779, 0
        %1794 = vmatprep.subr.mxu0 %v1778
        %1795 = vmatpush1.msra.mxu0 %v1771
        %1796 = vmatprep.subr.mxu0 %v1792
        %1797 = vmatpush1.msra.mxu0 %v1789
        %1798 = vmatprep.subr.mxu0 0.0
        %1799 = vmatpush1.msra.mxu0 0.0
        %1800 = vmatprep.subr.mxu0 0.0
        %1801 = vmatpush1.msra.mxu0 0.0
        %1802 = vmatprep.subr.mxu0 0.0
        %1803 = vmatpush1.msra.mxu0 0.0
        %1804 = vmatprep.subr.mxu0 0.0
        %1805 = vmatpush1.msra.mxu0 0.0
        %1806 = vmatprep.subr.mxu0 0.0
        %1807 = vmatpush1.msra.mxu0 0.0
        %1808 = vmatprep.subr.mxu0 0.0
        %1809 = vmatpush1.msra.mxu0 0.0
        %1810 = vmatprep.subr.mxu0 0.0
        %1811 = vmatpush1.msra.mxu0 0.0
        %1812 = vmatprep.subr.mxu0 0.0
        %1813 = vmatpush1.msra.mxu0 0.0
        %1814 = vmatprep.subr.mxu0 0.0
        %1815 = vmatpush1.msra.mxu0 0.0
        %1816 = vmatprep.subr.mxu0 0.0
        %1817 = vmatpush1.msra.mxu0 0.0
        %1818 = vmatprep.subr.mxu0 0.0
        %1819 = vmatpush1.msra.mxu0 0.0
        %1820 = vmatprep.subr.mxu0 0.0
        %1821 = vmatpush1.msra.mxu0 0.0
        %1822 = vmatprep.subr.mxu0 0.0
        %1823 = vmatpush1.msra.mxu0 0.0
        %1824 = vmatprep.subr.mxu0 0.0
        %1825 = vmatpush1.msra.mxu0 0.0
        %1826 = vmatprep.subr.mxu0 0.0
        %1827 = vmatpush1.msra.mxu0 0.0
        %1828 = vmatprep.subr.mxu0 0.0
        %1829 = vmatpush1.msra.mxu0 0.0
        %1830 = vmatprep.subr.mxu0 0.0
        %1831 = vmatpush1.msra.mxu0 0.0
        %1832 = vmatprep.subr.mxu0 0.0
        %1833 = vmatpush1.msra.mxu0 0.0
        %1834 = vmatprep.subr.mxu0 0.0
        %1835 = vmatpush1.msra.mxu0 0.0
        %1836 = vmatprep.subr.mxu0 0.0
        %1837 = vmatpush1.msra.mxu0 0.0
        %1838 = vmatprep.subr.mxu0 0.0
        %1839 = vmatpush1.msra.mxu0 0.0
        %1840 = vmatprep.subr.mxu0 0.0
        %1841 = vmatpush1.msra.mxu0 0.0
        %1842 = vmatprep.subr.mxu0 0.0
        %1843 = vmatpush1.msra.mxu0 0.0
        %1844 = vmatprep.subr.mxu0 0.0
        %1845 = vmatpush1.msra.mxu0 0.0
        %1846 = vmatprep.subr.mxu0 0.0
        %1847 = vmatpush1.msra.mxu0 0.0
        %1848 = vmatprep.subr.mxu0 0.0
        %1849 = vmatpush1.msra.mxu0 0.0
        %1850 = vmatprep.subr.mxu0 0.0
        %1851 = vmatpush1.msra.mxu0 0.0
        %1852 = vmatprep.subr.mxu0 0.0
        %1853 = vmatpush1.msra.mxu0 0.0
        %1854 = vmatprep.subr.mxu0 0.0
        %1855 = vmatpush1.msra.mxu0 0.0
        %1856 = vmatprep.subr.mxu0 0.0
        %1857 = vmatpush1.msra.mxu0 0.0
        %1858 = vmatprep.mubr.f32.mxu0 0.0
        %1859 = vmatmul.mubr.f32.gmra.mrb[0].mxu0 %v1781
        %v1860 = vpop.f32.mrb[0].mxu0
        %v1861 = vadd.f32 0.0, %v1860
        %v1862 = vpop.f32.mrb[0].mxu0
        %v1863 = vadd.f32 0.0, %v1862
        %1864 = vmatprep.mubr.f32.mxu0 0.0
        %1865 = vmatmul.mubr.f32.gmra.mrb[0].mxu0 %v1784
        %v1866 = vpop.f32.mrb[0].mxu0
        %v1867 = vadd.f32 0.0, %v1866
        %v1868 = vpop.f32.mrb[0].mxu0
        %v1869 = vadd.f32 0.0, %v1868
        %1870 = vmatprep.mubr.f32.mxu0 0.0
        %1871 = vmatmul.mubr.f32.gmra.mrb[0].mxu0 %v1787
        %v1872 = vpop.f32.mrb[0].mxu0
        %v1873 = vadd.f32 0.0, %v1872
        %v1874 = vpop.f32.mrb[0].mxu0
        %v1875 = vadd.f32 0.0, %v1874
        %1876 = vdwg.mxu0
        %v1877 = vadd.f32 %v1752, %v1861
        %v1878 = vadd.f32 %v1753, %v1863
        %v1879 = vadd.f32 %v1754, %v1867
        %v1880 = vadd.f32 %v1755, %v1869
        %v1881 = vadd.f32 %v1756, %v1873
        %v1882 = vadd.f32 %v1757, %v1875
        %s1883 = scalar_lea.vmem %s3, 216
        %v1884 = vld [vmem:[%s1883] sm:$0xff]
        %v1885 = vld [vmem:[%s1883 + $0x8] sm:$0xff]
        %v1886 = vld [vmem:[%s1883 + $0x10] sm:$0xf]
        %1887 = vrot.lane.b32.xlu0 %v780, 108
        %v1888 = vpop.permute.xlu0 %1887
        %1889 = vrot.lane.b32.xlu0 %v781, 108
        %v1890 = vpop.permute.xlu0 %1889
        %1891 = vrot.lane.b32.xlu0 %v782, 108
        %v1892 = vpop.permute.xlu0 %1891
        %1893 = vrot.lane.b32.xlu0 %v783, 108
        %v1894 = vpop.permute.xlu0 %1893
        %vm1895 = vcmask 883712
        %v1896 = vsel %vm1895, %v1888, %v1890
        %v1897 = vsel %vm1895, %v1892, %v1894
        %v1903 = vsel %vm1895, %v1890, %v1888
        %v1904 = vsel %vm1895, %v1894, %v1892
        %v1906 = vsel %vm813, %v1884, 0
        %v1909 = vsel %vm813, %v1885, 0
        %v1912 = vsel %vm813, %v1886, 0
        %v1914 = vsel %vm823, %v1897, 0
        %v1917 = vsel %vm823, %v1904, 0
        %1919 = vmatprep.subr.mxu0 %v1903
        %1920 = vmatpush1.msra.mxu0 %v1896
        %1921 = vmatprep.subr.mxu0 %v1917
        %1922 = vmatpush1.msra.mxu0 %v1914
        %1923 = vmatprep.subr.mxu0 0.0
        %1924 = vmatpush1.msra.mxu0 0.0
        %1925 = vmatprep.subr.mxu0 0.0
        %1926 = vmatpush1.msra.mxu0 0.0
        %1927 = vmatprep.subr.mxu0 0.0
        %1928 = vmatpush1.msra.mxu0 0.0
        %1929 = vmatprep.subr.mxu0 0.0
        %1930 = vmatpush1.msra.mxu0 0.0
        %1931 = vmatprep.subr.mxu0 0.0
        %1932 = vmatpush1.msra.mxu0 0.0
        %1933 = vmatprep.subr.mxu0 0.0
        %1934 = vmatpush1.msra.mxu0 0.0
        %1935 = vmatprep.subr.mxu0 0.0
        %1936 = vmatpush1.msra.mxu0 0.0
        %1937 = vmatprep.subr.mxu0 0.0
        %1938 = vmatpush1.msra.mxu0 0.0
        %1939 = vmatprep.subr.mxu0 0.0
        %1940 = vmatpush1.msra.mxu0 0.0
        %1941 = vmatprep.subr.mxu0 0.0
        %1942 = vmatpush1.msra.mxu0 0.0
        %1943 = vmatprep.subr.mxu0 0.0
        %1944 = vmatpush1.msra.mxu0 0.0
        %1945 = vmatprep.subr.mxu0 0.0
        %1946 = vmatpush1.msra.mxu0 0.0
        %1947 = vmatprep.subr.mxu0 0.0
        %1948 = vmatpush1.msra.mxu0 0.0
        %1949 = vmatprep.subr.mxu0 0.0
        %1950 = vmatpush1.msra.mxu0 0.0
        %1951 = vmatprep.subr.mxu0 0.0
        %1952 = vmatpush1.msra.mxu0 0.0
        %1953 = vmatprep.subr.mxu0 0.0
        %1954 = vmatpush1.msra.mxu0 0.0
        %1955 = vmatprep.subr.mxu0 0.0
        %1956 = vmatpush1.msra.mxu0 0.0
        %1957 = vmatprep.subr.mxu0 0.0
        %1958 = vmatpush1.msra.mxu0 0.0
        %1959 = vmatprep.subr.mxu0 0.0
        %1960 = vmatpush1.msra.mxu0 0.0
        %1961 = vmatprep.subr.mxu0 0.0
        %1962 = vmatpush1.msra.mxu0 0.0
        %1963 = vmatprep.subr.mxu0 0.0
        %1964 = vmatpush1.msra.mxu0 0.0
        %1965 = vmatprep.subr.mxu0 0.0
        %1966 = vmatpush1.msra.mxu0 0.0
        %1967 = vmatprep.subr.mxu0 0.0
        %1968 = vmatpush1.msra.mxu0 0.0
        %1969 = vmatprep.subr.mxu0 0.0
        %1970 = vmatpush1.msra.mxu0 0.0
        %1971 = vmatprep.subr.mxu0 0.0
        %1972 = vmatpush1.msra.mxu0 0.0
        %1973 = vmatprep.subr.mxu0 0.0
        %1974 = vmatpush1.msra.mxu0 0.0
        %1975 = vmatprep.subr.mxu0 0.0
        %1976 = vmatpush1.msra.mxu0 0.0
        %1977 = vmatprep.subr.mxu0 0.0
        %1978 = vmatpush1.msra.mxu0 0.0
        %1979 = vmatprep.subr.mxu0 0.0
        %1980 = vmatpush1.msra.mxu0 0.0
        %1981 = vmatprep.subr.mxu0 0.0
        %1982 = vmatpush1.msra.mxu0 0.0
        %1983 = vmatprep.mubr.f32.mxu0 0.0
        %1984 = vmatmul.mubr.f32.gmra.mrb[0].mxu0 %v1906
        %v1985 = vpop.f32.mrb[0].mxu0
        %v1986 = vadd.f32 0.0, %v1985
        %v1987 = vpop.f32.mrb[0].mxu0
        %v1988 = vadd.f32 0.0, %v1987
        %1989 = vmatprep.mubr.f32.mxu0 0.0
        %1990 = vmatmul.mubr.f32.gmra.mrb[0].mxu0 %v1909
        %v1991 = vpop.f32.mrb[0].mxu0
        %v1992 = vadd.f32 0.0, %v1991
        %v1993 = vpop.f32.mrb[0].mxu0
        %v1994 = vadd.f32 0.0, %v1993
        %1995 = vmatprep.mubr.f32.mxu0 0.0
        %1996 = vmatmul.mubr.f32.gmra.mrb[0].mxu0 %v1912
        %v1997 = vpop.f32.mrb[0].mxu0
        %v1998 = vadd.f32 0.0, %v1997
        %v1999 = vpop.f32.mrb[0].mxu0
        %v2000 = vadd.f32 0.0, %v1999
        %2001 = vdwg.mxu0
        %v2002 = vadd.f32 %v1877, %v1986
        %v2003 = vadd.f32 %v1878, %v1988
        %v2004 = vadd.f32 %v1879, %v1992
        %v2005 = vadd.f32 %v1880, %v1994
        %v2006 = vadd.f32 %v1881, %v1998
        %v2007 = vadd.f32 %v1882, %v2000
        %s2008 = scalar_lea.vmem %s3, 240
        %v2009 = vld [vmem:[%s2008] sm:$0xff]
        %v2010 = vld [vmem:[%s2008 + $0x8] sm:$0xff]
        %v2011 = vld [vmem:[%s2008 + $0x10] sm:$0xf]
        %2012 = vrot.lane.b32.xlu0 %v780, 96
        %v2013 = vpop.permute.xlu0 %2012
        %2014 = vrot.lane.b32.xlu0 %v781, 96
        %v2015 = vpop.permute.xlu0 %2014
        %2016 = vrot.lane.b32.xlu0 %v782, 96
        %v2017 = vpop.permute.xlu0 %2016
        %2018 = vrot.lane.b32.xlu0 %v783, 96
        %v2019 = vpop.permute.xlu0 %2018
        %vm2020 = vcmask 785408
        %v2021 = vsel %vm2020, %v2013, %v2015
        %v2022 = vsel %vm2020, %v2017, %v2019
        %v2028 = vsel %vm2020, %v2015, %v2013
        %v2029 = vsel %vm2020, %v2019, %v2017
        %v2031 = vsel %vm813, %v2009, 0
        %v2034 = vsel %vm813, %v2010, 0
        %v2037 = vsel %vm813, %v2011, 0
        %v2039 = vsel %vm823, %v2022, 0
        %v2042 = vsel %vm823, %v2029, 0
        %2044 = vmatprep.subr.mxu0 %v2028
        %2045 = vmatpush1.msra.mxu0 %v2021
        %2046 = vmatprep.subr.mxu0 %v2042
        %2047 = vmatpush1.msra.mxu0 %v2039
        %2048 = vmatprep.subr.mxu0 0.0
        %2049 = vmatpush1.msra.mxu0 0.0
        %2050 = vmatprep.subr.mxu0 0.0
        %2051 = vmatpush1.msra.mxu0 0.0
        %2052 = vmatprep.subr.mxu0 0.0
        %2053 = vmatpush1.msra.mxu0 0.0
        %2054 = vmatprep.subr.mxu0 0.0
        %2055 = vmatpush1.msra.mxu0 0.0
        %2056 = vmatprep.subr.mxu0 0.0
        %2057 = vmatpush1.msra.mxu0 0.0
        %2058 = vmatprep.subr.mxu0 0.0
        %2059 = vmatpush1.msra.mxu0 0.0
        %2060 = vmatprep.subr.mxu0 0.0
        %2061 = vmatpush1.msra.mxu0 0.0
        %2062 = vmatprep.subr.mxu0 0.0
        %2063 = vmatpush1.msra.mxu0 0.0
        %2064 = vmatprep.subr.mxu0 0.0
        %2065 = vmatpush1.msra.mxu0 0.0
        %2066 = vmatprep.subr.mxu0 0.0
        %2067 = vmatpush1.msra.mxu0 0.0
        %2068 = vmatprep.subr.mxu0 0.0
        %2069 = vmatpush1.msra.mxu0 0.0
        %2070 = vmatprep.subr.mxu0 0.0
        %2071 = vmatpush1.msra.mxu0 0.0
        %2072 = vmatprep.subr.mxu0 0.0
        %2073 = vmatpush1.msra.mxu0 0.0
        %2074 = vmatprep.subr.mxu0 0.0
        %2075 = vmatpush1.msra.mxu0 0.0
        %2076 = vmatprep.subr.mxu0 0.0
        %2077 = vmatpush1.msra.mxu0 0.0
        %2078 = vmatprep.subr.mxu0 0.0
        %2079 = vmatpush1.msra.mxu0 0.0
        %2080 = vmatprep.subr.mxu0 0.0
        %2081 = vmatpush1.msra.mxu0 0.0
        %2082 = vmatprep.subr.mxu0 0.0
        %2083 = vmatpush1.msra.mxu0 0.0
        %2084 = vmatprep.subr.mxu0 0.0
        %2085 = vmatpush1.msra.mxu0 0.0
        %2086 = vmatprep.subr.mxu0 0.0
        %2087 = vmatpush1.msra.mxu0 0.0
        %2088 = vmatprep.subr.mxu0 0.0
        %2089 = vmatpush1.msra.mxu0 0.0
        %2090 = vmatprep.subr.mxu0 0.0
        %2091 = vmatpush1.msra.mxu0 0.0
        %2092 = vmatprep.subr.mxu0 0.0
        %2093 = vmatpush1.msra.mxu0 0.0
        %2094 = vmatprep.subr.mxu0 0.0
        %2095 = vmatpush1.msra.mxu0 0.0
        %2096 = vmatprep.subr.mxu0 0.0
        %2097 = vmatpush1.msra.mxu0 0.0
        %2098 = vmatprep.subr.mxu0 0.0
        %2099 = vmatpush1.msra.mxu0 0.0
        %2100 = vmatprep.subr.mxu0 0.0
        %2101 = vmatpush1.msra.mxu0 0.0
        %2102 = vmatprep.subr.mxu0 0.0
        %2103 = vmatpush1.msra.mxu0 0.0
        %2104 = vmatprep.subr.mxu0 0.0
        %2105 = vmatpush1.msra.mxu0 0.0
        %2106 = vmatprep.subr.mxu0 0.0
        %2107 = vmatpush1.msra.mxu0 0.0
        %2108 = vmatprep.mubr.f32.mxu0 0.0
        %2109 = vmatmul.mubr.f32.gmra.mrb[0].mxu0 %v2031
        %v2110 = vpop.f32.mrb[0].mxu0
        %v2111 = vadd.f32 0.0, %v2110
        %v2112 = vpop.f32.mrb[0].mxu0
        %v2113 = vadd.f32 0.0, %v2112
        %2114 = vmatprep.mubr.f32.mxu0 0.0
        %2115 = vmatmul.mubr.f32.gmra.mrb[0].mxu0 %v2034
        %v2116 = vpop.f32.mrb[0].mxu0
        %v2117 = vadd.f32 0.0, %v2116
        %v2118 = vpop.f32.mrb[0].mxu0
        %v2119 = vadd.f32 0.0, %v2118
        %2120 = vmatprep.mubr.f32.mxu0 0.0
        %2121 = vmatmul.mubr.f32.gmra.mrb[0].mxu0 %v2037
        %v2122 = vpop.f32.mrb[0].mxu0
        %v2123 = vadd.f32 0.0, %v2122
        %v2124 = vpop.f32.mrb[0].mxu0
        %v2125 = vadd.f32 0.0, %v2124
        %2126 = vdwg.mxu0
        %v2127 = vadd.f32 %v2002, %v2111
        %v2128 = vadd.f32 %v2003, %v2113
        %v2129 = vadd.f32 %v2004, %v2117
        %v2130 = vadd.f32 %v2005, %v2119
        %v2131 = vadd.f32 %v2006, %v2123
        %v2132 = vadd.f32 %v2007, %v2125
        %s2133 = scalar_lea.vmem %s3, 264
        %v2134 = vld [vmem:[%s2133] sm:$0xff]
        %v2135 = vld [vmem:[%s2133 + $0x8] sm:$0xff]
        %v2136 = vld [vmem:[%s2133 + $0x10] sm:$0xf]
        %2137 = vrot.lane.b32.xlu0 %v780, 95
        %v2138 = vpop.permute.xlu0 %2137
        %2139 = vrot.lane.b32.xlu0 %v781, 95
        %v2140 = vpop.permute.xlu0 %2139
        %2141 = vrot.lane.b32.xlu0 %v782, 95
        %v2142 = vpop.permute.xlu0 %2141
        %2143 = vrot.lane.b32.xlu0 %v783, 95
        %v2144 = vpop.permute.xlu0 %2143
        %vm2145 = vcmask 777216
        %v2146 = vsel %vm2145, %v2138, %v2140
        %v2147 = vsel %vm2145, %v2142, %v2144
        %v2153 = vsel %vm2145, %v2140, %v2138
        %v2154 = vsel %vm2145, %v2144, %v2142
        %v2156 = vsel %vm813, %v2134, 0
        %v2159 = vsel %vm813, %v2135, 0
        %v2162 = vsel %vm813, %v2136, 0
        %v2164 = vsel %vm823, %v2147, 0
        %v2167 = vsel %vm823, %v2154, 0
        %2169 = vmatprep.subr.mxu0 %v2153
        %2170 = vmatpush1.msra.mxu0 %v2146
        %2171 = vmatprep.subr.mxu0 %v2167
        %2172 = vmatpush1.msra.mxu0 %v2164
        %2173 = vmatprep.subr.mxu0 0.0
        %2174 = vmatpush1.msra.mxu0 0.0
        %2175 = vmatprep.subr.mxu0 0.0
        %2176 = vmatpush1.msra.mxu0 0.0
        %2177 = vmatprep.subr.mxu0 0.0
        %2178 = vmatpush1.msra.mxu0 0.0
        %2179 = vmatprep.subr.mxu0 0.0
        %2180 = vmatpush1.msra.mxu0 0.0
        %2181 = vmatprep.subr.mxu0 0.0
        %2182 = vmatpush1.msra.mxu0 0.0
        %2183 = vmatprep.subr.mxu0 0.0
        %2184 = vmatpush1.msra.mxu0 0.0
        %2185 = vmatprep.subr.mxu0 0.0
        %2186 = vmatpush1.msra.mxu0 0.0
        %2187 = vmatprep.subr.mxu0 0.0
        %2188 = vmatpush1.msra.mxu0 0.0
        %2189 = vmatprep.subr.mxu0 0.0
        %2190 = vmatpush1.msra.mxu0 0.0
        %2191 = vmatprep.subr.mxu0 0.0
        %2192 = vmatpush1.msra.mxu0 0.0
        %2193 = vmatprep.subr.mxu0 0.0
        %2194 = vmatpush1.msra.mxu0 0.0
        %2195 = vmatprep.subr.mxu0 0.0
        %2196 = vmatpush1.msra.mxu0 0.0
        %2197 = vmatprep.subr.mxu0 0.0
        %2198 = vmatpush1.msra.mxu0 0.0
        %2199 = vmatprep.subr.mxu0 0.0
        %2200 = vmatpush1.msra.mxu0 0.0
        %2201 = vmatprep.subr.mxu0 0.0
        %2202 = vmatpush1.msra.mxu0 0.0
        %2203 = vmatprep.subr.mxu0 0.0
        %2204 = vmatpush1.msra.mxu0 0.0
        %2205 = vmatprep.subr.mxu0 0.0
        %2206 = vmatpush1.msra.mxu0 0.0
        %2207 = vmatprep.subr.mxu0 0.0
        %2208 = vmatpush1.msra.mxu0 0.0
        %2209 = vmatprep.subr.mxu0 0.0
        %2210 = vmatpush1.msra.mxu0 0.0
        %2211 = vmatprep.subr.mxu0 0.0
        %2212 = vmatpush1.msra.mxu0 0.0
        %2213 = vmatprep.subr.mxu0 0.0
        %2214 = vmatpush1.msra.mxu0 0.0
        %2215 = vmatprep.subr.mxu0 0.0
        %2216 = vmatpush1.msra.mxu0 0.0
        %2217 = vmatprep.subr.mxu0 0.0
        %2218 = vmatpush1.msra.mxu0 0.0
        %2219 = vmatprep.subr.mxu0 0.0
        %2220 = vmatpush1.msra.mxu0 0.0
        %2221 = vmatprep.subr.mxu0 0.0
        %2222 = vmatpush1.msra.mxu0 0.0
        %2223 = vmatprep.subr.mxu0 0.0
        %2224 = vmatpush1.msra.mxu0 0.0
        %2225 = vmatprep.subr.mxu0 0.0
        %2226 = vmatpush1.msra.mxu0 0.0
        %2227 = vmatprep.subr.mxu0 0.0
        %2228 = vmatpush1.msra.mxu0 0.0
        %2229 = vmatprep.subr.mxu0 0.0
        %2230 = vmatpush1.msra.mxu0 0.0
        %2231 = vmatprep.subr.mxu0 0.0
        %2232 = vmatpush1.msra.mxu0 0.0
        %2233 = vmatprep.mubr.f32.mxu0 0.0
        %2234 = vmatmul.mubr.f32.gmra.mrb[0].mxu0 %v2156
        %v2235 = vpop.f32.mrb[0].mxu0
        %v2236 = vadd.f32 0.0, %v2235
        %v2237 = vpop.f32.mrb[0].mxu0
        %v2238 = vadd.f32 0.0, %v2237
        %2239 = vmatprep.mubr.f32.mxu0 0.0
        %2240 = vmatmul.mubr.f32.gmra.mrb[0].mxu0 %v2159
        %v2241 = vpop.f32.mrb[0].mxu0
        %v2242 = vadd.f32 0.0, %v2241
        %v2243 = vpop.f32.mrb[0].mxu0
        %v2244 = vadd.f32 0.0, %v2243
        %2245 = vmatprep.mubr.f32.mxu0 0.0
        %2246 = vmatmul.mubr.f32.gmra.mrb[0].mxu0 %v2162
        %v2247 = vpop.f32.mrb[0].mxu0
        %v2248 = vadd.f32 0.0, %v2247
        %v2249 = vpop.f32.mrb[0].mxu0
        %v2250 = vadd.f32 0.0, %v2249
        %2251 = vdwg.mxu0
        %v2252 = vadd.f32 %v2127, %v2236
        %v2253 = vadd.f32 %v2128, %v2238
        %v2254 = vadd.f32 %v2129, %v2242
        %v2255 = vadd.f32 %v2130, %v2244
        %v2256 = vadd.f32 %v2131, %v2248
        %v2257 = vadd.f32 %v2132, %v2250
        %s2258 = scalar_lea.vmem %s3, 288
        %v2259 = vld [vmem:[%s2258] sm:$0xff]
        %v2260 = vld [vmem:[%s2258 + $0x8] sm:$0xff]
        %v2261 = vld [vmem:[%s2258 + $0x10] sm:$0xf]
        %2262 = vrot.lane.b32.xlu0 %v780, 94
        %v2263 = vpop.permute.xlu0 %2262
        %2264 = vrot.lane.b32.xlu0 %v781, 94
        %v2265 = vpop.permute.xlu0 %2264
        %2266 = vrot.lane.b32.xlu0 %v782, 94
        %v2267 = vpop.permute.xlu0 %2266
        %2268 = vrot.lane.b32.xlu0 %v783, 94
        %v2269 = vpop.permute.xlu0 %2268
        %vm2270 = vcmask 769024
        %v2271 = vsel %vm2270, %v2263, %v2265
        %v2272 = vsel %vm2270, %v2267, %v2269
        %v2278 = vsel %vm2270, %v2265, %v2263
        %v2279 = vsel %vm2270, %v2269, %v2267
        %v2281 = vsel %vm813, %v2259, 0
        %v2284 = vsel %vm813, %v2260, 0
        %v2287 = vsel %vm813, %v2261, 0
        %v2289 = vsel %vm823, %v2272, 0
        %v2292 = vsel %vm823, %v2279, 0
        %2294 = vmatprep.subr.mxu0 %v2278
        %2295 = vmatpush1.msra.mxu0 %v2271
        %2296 = vmatprep.subr.mxu0 %v2292
        %2297 = vmatpush1.msra.mxu0 %v2289
        %2298 = vmatprep.subr.mxu0 0.0
        %2299 = vmatpush1.msra.mxu0 0.0
        %2300 = vmatprep.subr.mxu0 0.0
        %2301 = vmatpush1.msra.mxu0 0.0
        %2302 = vmatprep.subr.mxu0 0.0
        %2303 = vmatpush1.msra.mxu0 0.0
        %2304 = vmatprep.subr.mxu0 0.0
        %2305 = vmatpush1.msra.mxu0 0.0
        %2306 = vmatprep.subr.mxu0 0.0
        %2307 = vmatpush1.msra.mxu0 0.0
        %2308 = vmatprep.subr.mxu0 0.0
        %2309 = vmatpush1.msra.mxu0 0.0
        %2310 = vmatprep.subr.mxu0 0.0
        %2311 = vmatpush1.msra.mxu0 0.0
        %2312 = vmatprep.subr.mxu0 0.0
        %2313 = vmatpush1.msra.mxu0 0.0
        %2314 = vmatprep.subr.mxu0 0.0
        %2315 = vmatpush1.msra.mxu0 0.0
        %2316 = vmatprep.subr.mxu0 0.0
        %2317 = vmatpush1.msra.mxu0 0.0
        %2318 = vmatprep.subr.mxu0 0.0
        %2319 = vmatpush1.msra.mxu0 0.0
        %2320 = vmatprep.subr.mxu0 0.0
        %2321 = vmatpush1.msra.mxu0 0.0
        %2322 = vmatprep.subr.mxu0 0.0
        %2323 = vmatpush1.msra.mxu0 0.0
        %2324 = vmatprep.subr.mxu0 0.0
        %2325 = vmatpush1.msra.mxu0 0.0
        %2326 = vmatprep.subr.mxu0 0.0
        %2327 = vmatpush1.msra.mxu0 0.0
        %2328 = vmatprep.subr.mxu0 0.0
        %2329 = vmatpush1.msra.mxu0 0.0
        %2330 = vmatprep.subr.mxu0 0.0
        %2331 = vmatpush1.msra.mxu0 0.0
        %2332 = vmatprep.subr.mxu0 0.0
        %2333 = vmatpush1.msra.mxu0 0.0
        %2334 = vmatprep.subr.mxu0 0.0
        %2335 = vmatpush1.msra.mxu0 0.0
        %2336 = vmatprep.subr.mxu0 0.0
        %2337 = vmatpush1.msra.mxu0 0.0
        %2338 = vmatprep.subr.mxu0 0.0
        %2339 = vmatpush1.msra.mxu0 0.0
        %2340 = vmatprep.subr.mxu0 0.0
        %2341 = vmatpush1.msra.mxu0 0.0
        %2342 = vmatprep.subr.mxu0 0.0
        %2343 = vmatpush1.msra.mxu0 0.0
        %2344 = vmatprep.subr.mxu0 0.0
        %2345 = vmatpush1.msra.mxu0 0.0
        %2346 = vmatprep.subr.mxu0 0.0
        %2347 = vmatpush1.msra.mxu0 0.0
        %2348 = vmatprep.subr.mxu0 0.0
        %2349 = vmatpush1.msra.mxu0 0.0
        %2350 = vmatprep.subr.mxu0 0.0
        %2351 = vmatpush1.msra.mxu0 0.0
        %2352 = vmatprep.subr.mxu0 0.0
        %2353 = vmatpush1.msra.mxu0 0.0
        %2354 = vmatprep.subr.mxu0 0.0
        %2355 = vmatpush1.msra.mxu0 0.0
        %2356 = vmatprep.subr.mxu0 0.0
        %2357 = vmatpush1.msra.mxu0 0.0
        %2358 = vmatprep.mubr.f32.mxu0 0.0
        %2359 = vmatmul.mubr.f32.gmra.mrb[0].mxu0 %v2281
        %v2360 = vpop.f32.mrb[0].mxu0
        %v2361 = vadd.f32 0.0, %v2360
        %v2362 = vpop.f32.mrb[0].mxu0
        %v2363 = vadd.f32 0.0, %v2362
        %2364 = vmatprep.mubr.f32.mxu0 0.0
        %2365 = vmatmul.mubr.f32.gmra.mrb[0].mxu0 %v2284
        %v2366 = vpop.f32.mrb[0].mxu0
        %v2367 = vadd.f32 0.0, %v2366
        %v2368 = vpop.f32.mrb[0].mxu0
        %v2369 = vadd.f32 0.0, %v2368
        %2370 = vmatprep.mubr.f32.mxu0 0.0
        %2371 = vmatmul.mubr.f32.gmra.mrb[0].mxu0 %v2287
        %v2372 = vpop.f32.mrb[0].mxu0
        %v2373 = vadd.f32 0.0, %v2372
        %v2374 = vpop.f32.mrb[0].mxu0
        %v2375 = vadd.f32 0.0, %v2374
        %2376 = vdwg.mxu0
        %v2377 = vadd.f32 %v2252, %v2361
        %v2378 = vadd.f32 %v2253, %v2363
        %v2379 = vadd.f32 %v2254, %v2367
        %v2380 = vadd.f32 %v2255, %v2369
        %v2381 = vadd.f32 %v2256, %v2373
        %v2382 = vadd.f32 %v2257, %v2375
        %s2383 = scalar_lea.vmem %s3, 312
        %v2384 = vld [vmem:[%s2383] sm:$0xff]
        %v2385 = vld [vmem:[%s2383 + $0x8] sm:$0xff]
        %v2386 = vld [vmem:[%s2383 + $0x10] sm:$0xf]
        %2387 = vrot.lane.b32.xlu0 %v780, 93
        %v2388 = vpop.permute.xlu0 %2387
        %2389 = vrot.lane.b32.xlu0 %v781, 93
        %v2390 = vpop.permute.xlu0 %2389
        %2391 = vrot.lane.b32.xlu0 %v782, 93
        %v2392 = vpop.permute.xlu0 %2391
        %2393 = vrot.lane.b32.xlu0 %v783, 93
        %v2394 = vpop.permute.xlu0 %2393
        %vm2395 = vcmask 760832
        %v2396 = vsel %vm2395, %v2388, %v2390
        %v2397 = vsel %vm2395, %v2392, %v2394
        %v2403 = vsel %vm2395, %v2390, %v2388
        %v2404 = vsel %vm2395, %v2394, %v2392
        %v2406 = vsel %vm813, %v2384, 0
        %v2409 = vsel %vm813, %v2385, 0
        %v2412 = vsel %vm813, %v2386, 0
        %v2414 = vsel %vm823, %v2397, 0
        %v2417 = vsel %vm823, %v2404, 0
        %2419 = vmatprep.subr.mxu0 %v2403
        %2420 = vmatpush1.msra.mxu0 %v2396
        %2421 = vmatprep.subr.mxu0 %v2417
        %2422 = vmatpush1.msra.mxu0 %v2414
        %2423 = vmatprep.subr.mxu0 0.0
        %2424 = vmatpush1.msra.mxu0 0.0
        %2425 = vmatprep.subr.mxu0 0.0
        %2426 = vmatpush1.msra.mxu0 0.0
        %2427 = vmatprep.subr.mxu0 0.0
        %2428 = vmatpush1.msra.mxu0 0.0
        %2429 = vmatprep.subr.mxu0 0.0
        %2430 = vmatpush1.msra.mxu0 0.0
        %2431 = vmatprep.subr.mxu0 0.0
        %2432 = vmatpush1.msra.mxu0 0.0
        %2433 = vmatprep.subr.mxu0 0.0
        %2434 = vmatpush1.msra.mxu0 0.0
        %2435 = vmatprep.subr.mxu0 0.0
        %2436 = vmatpush1.msra.mxu0 0.0
        %2437 = vmatprep.subr.mxu0 0.0
        %2438 = vmatpush1.msra.mxu0 0.0
        %2439 = vmatprep.subr.mxu0 0.0
        %2440 = vmatpush1.msra.mxu0 0.0
        %2441 = vmatprep.subr.mxu0 0.0
        %2442 = vmatpush1.msra.mxu0 0.0
        %2443 = vmatprep.subr.mxu0 0.0
        %2444 = vmatpush1.msra.mxu0 0.0
        %2445 = vmatprep.subr.mxu0 0.0
        %2446 = vmatpush1.msra.mxu0 0.0
        %2447 = vmatprep.subr.mxu0 0.0
        %2448 = vmatpush1.msra.mxu0 0.0
        %2449 = vmatprep.subr.mxu0 0.0
        %2450 = vmatpush1.msra.mxu0 0.0
        %2451 = vmatprep.subr.mxu0 0.0
        %2452 = vmatpush1.msra.mxu0 0.0
        %2453 = vmatprep.subr.mxu0 0.0
        %2454 = vmatpush1.msra.mxu0 0.0
        %2455 = vmatprep.subr.mxu0 0.0
        %2456 = vmatpush1.msra.mxu0 0.0
        %2457 = vmatprep.subr.mxu0 0.0
        %2458 = vmatpush1.msra.mxu0 0.0
        %2459 = vmatprep.subr.mxu0 0.0
        %2460 = vmatpush1.msra.mxu0 0.0
        %2461 = vmatprep.subr.mxu0 0.0
        %2462 = vmatpush1.msra.mxu0 0.0
        %2463 = vmatprep.subr.mxu0 0.0
        %2464 = vmatpush1.msra.mxu0 0.0
        %2465 = vmatprep.subr.mxu0 0.0
        %2466 = vmatpush1.msra.mxu0 0.0
        %2467 = vmatprep.subr.mxu0 0.0
        %2468 = vmatpush1.msra.mxu0 0.0
        %2469 = vmatprep.subr.mxu0 0.0
        %2470 = vmatpush1.msra.mxu0 0.0
        %2471 = vmatprep.subr.mxu0 0.0
        %2472 = vmatpush1.msra.mxu0 0.0
        %2473 = vmatprep.subr.mxu0 0.0
        %2474 = vmatpush1.msra.mxu0 0.0
        %2475 = vmatprep.subr.mxu0 0.0
        %2476 = vmatpush1.msra.mxu0 0.0
        %2477 = vmatprep.subr.mxu0 0.0
        %2478 = vmatpush1.msra.mxu0 0.0
        %2479 = vmatprep.subr.mxu0 0.0
        %2480 = vmatpush1.msra.mxu0 0.0
        %2481 = vmatprep.subr.mxu0 0.0
        %2482 = vmatpush1.msra.mxu0 0.0
        %2483 = vmatprep.mubr.f32.mxu0 0.0
        %2484 = vmatmul.mubr.f32.gmra.mrb[0].mxu0 %v2406
        %v2485 = vpop.f32.mrb[0].mxu0
        %v2486 = vadd.f32 0.0, %v2485
        %v2487 = vpop.f32.mrb[0].mxu0
        %v2488 = vadd.f32 0.0, %v2487
        %2489 = vmatprep.mubr.f32.mxu0 0.0
        %2490 = vmatmul.mubr.f32.gmra.mrb[0].mxu0 %v2409
        %v2491 = vpop.f32.mrb[0].mxu0
        %v2492 = vadd.f32 0.0, %v2491
        %v2493 = vpop.f32.mrb[0].mxu0
        %v2494 = vadd.f32 0.0, %v2493
        %2495 = vmatprep.mubr.f32.mxu0 0.0
        %2496 = vmatmul.mubr.f32.gmra.mrb[0].mxu0 %v2412
        %v2497 = vpop.f32.mrb[0].mxu0
        %v2498 = vadd.f32 0.0, %v2497
        %v2499 = vpop.f32.mrb[0].mxu0
        %v2500 = vadd.f32 0.0, %v2499
        %2501 = vdwg.mxu0
        %v2502 = vadd.f32 %v2377, %v2486
        %v2503 = vadd.f32 %v2378, %v2488
        %v2504 = vadd.f32 %v2379, %v2492
        %v2505 = vadd.f32 %v2380, %v2494
        %v2506 = vadd.f32 %v2381, %v2498
        %v2507 = vadd.f32 %v2382, %v2500
        %s2508 = scalar_lea.vmem %s3, 336
        %v2509 = vld [vmem:[%s2508] sm:$0xff]
        %v2510 = vld [vmem:[%s2508 + $0x8] sm:$0xff]
        %v2511 = vld [vmem:[%s2508 + $0x10] sm:$0xf]
        %2512 = vrot.lane.b32.xlu0 %v780, 92
        %v2513 = vpop.permute.xlu0 %2512
        %2514 = vrot.lane.b32.xlu0 %v781, 92
        %v2515 = vpop.permute.xlu0 %2514
        %2516 = vrot.lane.b32.xlu0 %v782, 92
        %v2517 = vpop.permute.xlu0 %2516
        %2518 = vrot.lane.b32.xlu0 %v783, 92
        %v2519 = vpop.permute.xlu0 %2518
        %vm2520 = vcmask 752640
        %v2521 = vsel %vm2520, %v2513, %v2515
        %v2522 = vsel %vm2520, %v2517, %v2519
        %v2528 = vsel %vm2520, %v2515, %v2513
        %v2529 = vsel %vm2520, %v2519, %v2517
        %v2531 = vsel %vm813, %v2509, 0
        %v2534 = vsel %vm813, %v2510, 0
        %v2537 = vsel %vm813, %v2511, 0
        %v2539 = vsel %vm823, %v2522, 0
        %v2542 = vsel %vm823, %v2529, 0
        %2544 = vmatprep.subr.mxu0 %v2528
        %2545 = vmatpush1.msra.mxu0 %v2521
        %2546 = vmatprep.subr.mxu0 %v2542
        %2547 = vmatpush1.msra.mxu0 %v2539
        %2548 = vmatprep.subr.mxu0 0.0
        %2549 = vmatpush1.msra.mxu0 0.0
        %2550 = vmatprep.subr.mxu0 0.0
        %2551 = vmatpush1.msra.mxu0 0.0
        %2552 = vmatprep.subr.mxu0 0.0
        %2553 = vmatpush1.msra.mxu0 0.0
        %2554 = vmatprep.subr.mxu0 0.0
        %2555 = vmatpush1.msra.mxu0 0.0
        %2556 = vmatprep.subr.mxu0 0.0
        %2557 = vmatpush1.msra.mxu0 0.0
        %2558 = vmatprep.subr.mxu0 0.0
        %2559 = vmatpush1.msra.mxu0 0.0
        %2560 = vmatprep.subr.mxu0 0.0
        %2561 = vmatpush1.msra.mxu0 0.0
        %2562 = vmatprep.subr.mxu0 0.0
        %2563 = vmatpush1.msra.mxu0 0.0
        %2564 = vmatprep.subr.mxu0 0.0
        %2565 = vmatpush1.msra.mxu0 0.0
        %2566 = vmatprep.subr.mxu0 0.0
        %2567 = vmatpush1.msra.mxu0 0.0
        %2568 = vmatprep.subr.mxu0 0.0
        %2569 = vmatpush1.msra.mxu0 0.0
        %2570 = vmatprep.subr.mxu0 0.0
        %2571 = vmatpush1.msra.mxu0 0.0
        %2572 = vmatprep.subr.mxu0 0.0
        %2573 = vmatpush1.msra.mxu0 0.0
        %2574 = vmatprep.subr.mxu0 0.0
        %2575 = vmatpush1.msra.mxu0 0.0
        %2576 = vmatprep.subr.mxu0 0.0
        %2577 = vmatpush1.msra.mxu0 0.0
        %2578 = vmatprep.subr.mxu0 0.0
        %2579 = vmatpush1.msra.mxu0 0.0
        %2580 = vmatprep.subr.mxu0 0.0
        %2581 = vmatpush1.msra.mxu0 0.0
        %2582 = vmatprep.subr.mxu0 0.0
        %2583 = vmatpush1.msra.mxu0 0.0
        %2584 = vmatprep.subr.mxu0 0.0
        %2585 = vmatpush1.msra.mxu0 0.0
        %2586 = vmatprep.subr.mxu0 0.0
        %2587 = vmatpush1.msra.mxu0 0.0
        %2588 = vmatprep.subr.mxu0 0.0
        %2589 = vmatpush1.msra.mxu0 0.0
        %2590 = vmatprep.subr.mxu0 0.0
        %2591 = vmatpush1.msra.mxu0 0.0
        %2592 = vmatprep.subr.mxu0 0.0
        %2593 = vmatpush1.msra.mxu0 0.0
        %2594 = vmatprep.subr.mxu0 0.0
        %2595 = vmatpush1.msra.mxu0 0.0
        %2596 = vmatprep.subr.mxu0 0.0
        %2597 = vmatpush1.msra.mxu0 0.0
        %2598 = vmatprep.subr.mxu0 0.0
        %2599 = vmatpush1.msra.mxu0 0.0
        %2600 = vmatprep.subr.mxu0 0.0
        %2601 = vmatpush1.msra.mxu0 0.0
        %2602 = vmatprep.subr.mxu0 0.0
        %2603 = vmatpush1.msra.mxu0 0.0
        %2604 = vmatprep.subr.mxu0 0.0
        %2605 = vmatpush1.msra.mxu0 0.0
        %2606 = vmatprep.subr.mxu0 0.0
        %2607 = vmatpush1.msra.mxu0 0.0
        %2608 = vmatprep.mubr.f32.mxu0 0.0
        %2609 = vmatmul.mubr.f32.gmra.mrb[0].mxu0 %v2531
        %v2610 = vpop.f32.mrb[0].mxu0
        %v2611 = vadd.f32 0.0, %v2610
        %v2612 = vpop.f32.mrb[0].mxu0
        %v2613 = vadd.f32 0.0, %v2612
        %2614 = vmatprep.mubr.f32.mxu0 0.0
        %2615 = vmatmul.mubr.f32.gmra.mrb[0].mxu0 %v2534
        %v2616 = vpop.f32.mrb[0].mxu0
        %v2617 = vadd.f32 0.0, %v2616
        %v2618 = vpop.f32.mrb[0].mxu0
        %v2619 = vadd.f32 0.0, %v2618
        %2620 = vmatprep.mubr.f32.mxu0 0.0
        %2621 = vmatmul.mubr.f32.gmra.mrb[0].mxu0 %v2537
        %v2622 = vpop.f32.mrb[0].mxu0
        %v2623 = vadd.f32 0.0, %v2622
        %v2624 = vpop.f32.mrb[0].mxu0
        %v2625 = vadd.f32 0.0, %v2624
        %2626 = vdwg.mxu0
        %v2627 = vadd.f32 %v2502, %v2611
        %v2628 = vadd.f32 %v2503, %v2613
        %v2629 = vadd.f32 %v2504, %v2617
        %v2630 = vadd.f32 %v2505, %v2619
        %v2631 = vadd.f32 %v2506, %v2623
        %v2632 = vadd.f32 %v2507, %v2625
        %s2633 = scalar_lea.vmem %s3, 360
        %v2634 = vld [vmem:[%s2633] sm:$0xff]
        %v2635 = vld [vmem:[%s2633 + $0x8] sm:$0xff]
        %v2636 = vld [vmem:[%s2633 + $0x10] sm:$0xf]
        %2637 = vrot.lane.b32.xlu0 %v780, 80
        %v2638 = vpop.permute.xlu0 %2637
        %2639 = vrot.lane.b32.xlu0 %v781, 80
        %v2640 = vpop.permute.xlu0 %2639
        %2641 = vrot.lane.b32.xlu0 %v782, 80
        %v2642 = vpop.permute.xlu0 %2641
        %2643 = vrot.lane.b32.xlu0 %v783, 80
        %v2644 = vpop.permute.xlu0 %2643
        %vm2645 = vcmask 654336
        %v2646 = vsel %vm2645, %v2638, %v2640
        %v2647 = vsel %vm2645, %v2642, %v2644
        %v2653 = vsel %vm2645, %v2640, %v2638
        %v2654 = vsel %vm2645, %v2644, %v2642
        %v2656 = vsel %vm813, %v2634, 0
        %v2659 = vsel %vm813, %v2635, 0
        %v2662 = vsel %vm813, %v2636, 0
        %v2664 = vsel %vm823, %v2647, 0
        %v2667 = vsel %vm823, %v2654, 0
        %2669 = vmatprep.subr.mxu0 %v2653
        %2670 = vmatpush1.msra.mxu0 %v2646
        %2671 = vmatprep.subr.mxu0 %v2667
        %2672 = vmatpush1.msra.mxu0 %v2664
        %2673 = vmatprep.subr.mxu0 0.0
        %2674 = vmatpush1.msra.mxu0 0.0
        %2675 = vmatprep.subr.mxu0 0.0
        %2676 = vmatpush1.msra.mxu0 0.0
        %2677 = vmatprep.subr.mxu0 0.0
        %2678 = vmatpush1.msra.mxu0 0.0
        %2679 = vmatprep.subr.mxu0 0.0
        %2680 = vmatpush1.msra.mxu0 0.0
        %2681 = vmatprep.subr.mxu0 0.0
        %2682 = vmatpush1.msra.mxu0 0.0
        %2683 = vmatprep.subr.mxu0 0.0
        %2684 = vmatpush1.msra.mxu0 0.0
        %2685 = vmatprep.subr.mxu0 0.0
        %2686 = vmatpush1.msra.mxu0 0.0
        %2687 = vmatprep.subr.mxu0 0.0
        %2688 = vmatpush1.msra.mxu0 0.0
        %2689 = vmatprep.subr.mxu0 0.0
        %2690 = vmatpush1.msra.mxu0 0.0
        %2691 = vmatprep.subr.mxu0 0.0
        %2692 = vmatpush1.msra.mxu0 0.0
        %2693 = vmatprep.subr.mxu0 0.0
        %2694 = vmatpush1.msra.mxu0 0.0
        %2695 = vmatprep.subr.mxu0 0.0
        %2696 = vmatpush1.msra.mxu0 0.0
        %2697 = vmatprep.subr.mxu0 0.0
        %2698 = vmatpush1.msra.mxu0 0.0
        %2699 = vmatprep.subr.mxu0 0.0
        %2700 = vmatpush1.msra.mxu0 0.0
        %2701 = vmatprep.subr.mxu0 0.0
        %2702 = vmatpush1.msra.mxu0 0.0
        %2703 = vmatprep.subr.mxu0 0.0
        %2704 = vmatpush1.msra.mxu0 0.0
        %2705 = vmatprep.subr.mxu0 0.0
        %2706 = vmatpush1.msra.mxu0 0.0
        %2707 = vmatprep.subr.mxu0 0.0
        %2708 = vmatpush1.msra.mxu0 0.0
        %2709 = vmatprep.subr.mxu0 0.0
        %2710 = vmatpush1.msra.mxu0 0.0
        %2711 = vmatprep.subr.mxu0 0.0
        %2712 = vmatpush1.msra.mxu0 0.0
        %2713 = vmatprep.subr.mxu0 0.0
        %2714 = vmatpush1.msra.mxu0 0.0
        %2715 = vmatprep.subr.mxu0 0.0
        %2716 = vmatpush1.msra.mxu0 0.0
        %2717 = vmatprep.subr.mxu0 0.0
        %2718 = vmatpush1.msra.mxu0 0.0
        %2719 = vmatprep.subr.mxu0 0.0
        %2720 = vmatpush1.msra.mxu0 0.0
        %2721 = vmatprep.subr.mxu0 0.0
        %2722 = vmatpush1.msra.mxu0 0.0
        %2723 = vmatprep.subr.mxu0 0.0
        %2724 = vmatpush1.msra.mxu0 0.0
        %2725 = vmatprep.subr.mxu0 0.0
        %2726 = vmatpush1.msra.mxu0 0.0
        %2727 = vmatprep.subr.mxu0 0.0
        %2728 = vmatpush1.msra.mxu0 0.0
        %2729 = vmatprep.subr.mxu0 0.0
        %2730 = vmatpush1.msra.mxu0 0.0
        %2731 = vmatprep.subr.mxu0 0.0
        %2732 = vmatpush1.msra.mxu0 0.0
        %2733 = vmatprep.mubr.f32.mxu0 0.0
        %2734 = vmatmul.mubr.f32.gmra.mrb[0].mxu0 %v2656
        %v2735 = vpop.f32.mrb[0].mxu0
        %v2736 = vadd.f32 0.0, %v2735
        %v2737 = vpop.f32.mrb[0].mxu0
        %v2738 = vadd.f32 0.0, %v2737
        %2739 = vmatprep.mubr.f32.mxu0 0.0
        %2740 = vmatmul.mubr.f32.gmra.mrb[0].mxu0 %v2659
        %v2741 = vpop.f32.mrb[0].mxu0
        %v2742 = vadd.f32 0.0, %v2741
        %v2743 = vpop.f32.mrb[0].mxu0
        %v2744 = vadd.f32 0.0, %v2743
        %2745 = vmatprep.mubr.f32.mxu0 0.0
        %2746 = vmatmul.mubr.f32.gmra.mrb[0].mxu0 %v2662
        %v2747 = vpop.f32.mrb[0].mxu0
        %v2748 = vadd.f32 0.0, %v2747
        %v2749 = vpop.f32.mrb[0].mxu0
        %v2750 = vadd.f32 0.0, %v2749
        %2751 = vdwg.mxu0
        %v2752 = vadd.f32 %v2627, %v2736
        %v2753 = vadd.f32 %v2628, %v2738
        %v2754 = vadd.f32 %v2629, %v2742
        %v2755 = vadd.f32 %v2630, %v2744
        %v2756 = vadd.f32 %v2631, %v2748
        %v2757 = vadd.f32 %v2632, %v2750
        %s2758 = scalar_lea.vmem %s3, 384
        %v2759 = vld [vmem:[%s2758] sm:$0xff]
        %v2760 = vld [vmem:[%s2758 + $0x8] sm:$0xff]
        %v2761 = vld [vmem:[%s2758 + $0x10] sm:$0xf]
        %2762 = vrot.lane.b32.xlu0 %v780, 79
        %v2763 = vpop.permute.xlu0 %2762
        %2764 = vrot.lane.b32.xlu0 %v781, 79
        %v2765 = vpop.permute.xlu0 %2764
        %2766 = vrot.lane.b32.xlu0 %v782, 79
        %v2767 = vpop.permute.xlu0 %2766
        %2768 = vrot.lane.b32.xlu0 %v783, 79
        %v2769 = vpop.permute.xlu0 %2768
        %vm2770 = vcmask 646144
        %v2771 = vsel %vm2770, %v2763, %v2765
        %v2772 = vsel %vm2770, %v2767, %v2769
        %v2778 = vsel %vm2770, %v2765, %v2763
        %v2779 = vsel %vm2770, %v2769, %v2767
        %v2781 = vsel %vm813, %v2759, 0
        %v2784 = vsel %vm813, %v2760, 0
        %v2787 = vsel %vm813, %v2761, 0
        %v2789 = vsel %vm823, %v2772, 0
        %v2792 = vsel %vm823, %v2779, 0
        %2794 = vmatprep.subr.mxu0 %v2778
        %2795 = vmatpush1.msra.mxu0 %v2771
        %2796 = vmatprep.subr.mxu0 %v2792
        %2797 = vmatpush1.msra.mxu0 %v2789
        %2798 = vmatprep.subr.mxu0 0.0
        %2799 = vmatpush1.msra.mxu0 0.0
        %2800 = vmatprep.subr.mxu0 0.0
        %2801 = vmatpush1.msra.mxu0 0.0
        %2802 = vmatprep.subr.mxu0 0.0
        %2803 = vmatpush1.msra.mxu0 0.0
        %2804 = vmatprep.subr.mxu0 0.0
        %2805 = vmatpush1.msra.mxu0 0.0
        %2806 = vmatprep.subr.mxu0 0.0
        %2807 = vmatpush1.msra.mxu0 0.0
        %2808 = vmatprep.subr.mxu0 0.0
        %2809 = vmatpush1.msra.mxu0 0.0
        %2810 = vmatprep.subr.mxu0 0.0
        %2811 = vmatpush1.msra.mxu0 0.0
        %2812 = vmatprep.subr.mxu0 0.0
        %2813 = vmatpush1.msra.mxu0 0.0
        %2814 = vmatprep.subr.mxu0 0.0
        %2815 = vmatpush1.msra.mxu0 0.0
        %2816 = vmatprep.subr.mxu0 0.0
        %2817 = vmatpush1.msra.mxu0 0.0
        %2818 = vmatprep.subr.mxu0 0.0
        %2819 = vmatpush1.msra.mxu0 0.0
        %2820 = vmatprep.subr.mxu0 0.0
        %2821 = vmatpush1.msra.mxu0 0.0
        %2822 = vmatprep.subr.mxu0 0.0
        %2823 = vmatpush1.msra.mxu0 0.0
        %2824 = vmatprep.subr.mxu0 0.0
        %2825 = vmatpush1.msra.mxu0 0.0
        %2826 = vmatprep.subr.mxu0 0.0
        %2827 = vmatpush1.msra.mxu0 0.0
        %2828 = vmatprep.subr.mxu0 0.0
        %2829 = vmatpush1.msra.mxu0 0.0
        %2830 = vmatprep.subr.mxu0 0.0
        %2831 = vmatpush1.msra.mxu0 0.0
        %2832 = vmatprep.subr.mxu0 0.0
        %2833 = vmatpush1.msra.mxu0 0.0
        %2834 = vmatprep.subr.mxu0 0.0
        %2835 = vmatpush1.msra.mxu0 0.0
        %2836 = vmatprep.subr.mxu0 0.0
        %2837 = vmatpush1.msra.mxu0 0.0
        %2838 = vmatprep.subr.mxu0 0.0
        %2839 = vmatpush1.msra.mxu0 0.0
        %2840 = vmatprep.subr.mxu0 0.0
        %2841 = vmatpush1.msra.mxu0 0.0
        %2842 = vmatprep.subr.mxu0 0.0
        %2843 = vmatpush1.msra.mxu0 0.0
        %2844 = vmatprep.subr.mxu0 0.0
        %2845 = vmatpush1.msra.mxu0 0.0
        %2846 = vmatprep.subr.mxu0 0.0
        %2847 = vmatpush1.msra.mxu0 0.0
        %2848 = vmatprep.subr.mxu0 0.0
        %2849 = vmatpush1.msra.mxu0 0.0
        %2850 = vmatprep.subr.mxu0 0.0
        %2851 = vmatpush1.msra.mxu0 0.0
        %2852 = vmatprep.subr.mxu0 0.0
        %2853 = vmatpush1.msra.mxu0 0.0
        %2854 = vmatprep.subr.mxu0 0.0
        %2855 = vmatpush1.msra.mxu0 0.0
        %2856 = vmatprep.subr.mxu0 0.0
        %2857 = vmatpush1.msra.mxu0 0.0
        %2858 = vmatprep.mubr.f32.mxu0 0.0
        %2859 = vmatmul.mubr.f32.gmra.mrb[0].mxu0 %v2781
        %v2860 = vpop.f32.mrb[0].mxu0
        %v2861 = vadd.f32 0.0, %v2860
        %v2862 = vpop.f32.mrb[0].mxu0
        %v2863 = vadd.f32 0.0, %v2862
        %2864 = vmatprep.mubr.f32.mxu0 0.0
        %2865 = vmatmul.mubr.f32.gmra.mrb[0].mxu0 %v2784
        %v2866 = vpop.f32.mrb[0].mxu0
        %v2867 = vadd.f32 0.0, %v2866
        %v2868 = vpop.f32.mrb[0].mxu0
        %v2869 = vadd.f32 0.0, %v2868
        %2870 = vmatprep.mubr.f32.mxu0 0.0
        %2871 = vmatmul.mubr.f32.gmra.mrb[0].mxu0 %v2787
        %v2872 = vpop.f32.mrb[0].mxu0
        %v2873 = vadd.f32 0.0, %v2872
        %v2874 = vpop.f32.mrb[0].mxu0
        %v2875 = vadd.f32 0.0, %v2874
        %2876 = vdwg.mxu0
        %v2877 = vadd.f32 %v2752, %v2861
        %v2878 = vadd.f32 %v2753, %v2863
        %v2879 = vadd.f32 %v2754, %v2867
        %v2880 = vadd.f32 %v2755, %v2869
        %v2881 = vadd.f32 %v2756, %v2873
        %v2882 = vadd.f32 %v2757, %v2875
        %s2883 = scalar_lea.vmem %s3, 408
        %v2884 = vld [vmem:[%s2883] sm:$0xff]
        %v2885 = vld [vmem:[%s2883 + $0x8] sm:$0xff]
        %v2886 = vld [vmem:[%s2883 + $0x10] sm:$0xf]
        %2887 = vrot.lane.b32.xlu0 %v780, 78
        %v2888 = vpop.permute.xlu0 %2887
        %2889 = vrot.lane.b32.xlu0 %v781, 78
        %v2890 = vpop.permute.xlu0 %2889
        %2891 = vrot.lane.b32.xlu0 %v782, 78
        %v2892 = vpop.permute.xlu0 %2891
        %2893 = vrot.lane.b32.xlu0 %v783, 78
        %v2894 = vpop.permute.xlu0 %2893
        %vm2895 = vcmask 637952
        %v2896 = vsel %vm2895, %v2888, %v2890
        %v2897 = vsel %vm2895, %v2892, %v2894
        %v2903 = vsel %vm2895, %v2890, %v2888
        %v2904 = vsel %vm2895, %v2894, %v2892
        %v2906 = vsel %vm813, %v2884, 0
        %v2909 = vsel %vm813, %v2885, 0
        %v2912 = vsel %vm813, %v2886, 0
        %v2914 = vsel %vm823, %v2897, 0
        %v2917 = vsel %vm823, %v2904, 0
        %2919 = vmatprep.subr.mxu0 %v2903
        %2920 = vmatpush1.msra.mxu0 %v2896
        %2921 = vmatprep.subr.mxu0 %v2917
        %2922 = vmatpush1.msra.mxu0 %v2914
        %2923 = vmatprep.subr.mxu0 0.0
        %2924 = vmatpush1.msra.mxu0 0.0
        %2925 = vmatprep.subr.mxu0 0.0
        %2926 = vmatpush1.msra.mxu0 0.0
        %2927 = vmatprep.subr.mxu0 0.0
        %2928 = vmatpush1.msra.mxu0 0.0
        %2929 = vmatprep.subr.mxu0 0.0
        %2930 = vmatpush1.msra.mxu0 0.0
        %2931 = vmatprep.subr.mxu0 0.0
        %2932 = vmatpush1.msra.mxu0 0.0
        %2933 = vmatprep.subr.mxu0 0.0
        %2934 = vmatpush1.msra.mxu0 0.0
        %2935 = vmatprep.subr.mxu0 0.0
        %2936 = vmatpush1.msra.mxu0 0.0
        %2937 = vmatprep.subr.mxu0 0.0
        %2938 = vmatpush1.msra.mxu0 0.0
        %2939 = vmatprep.subr.mxu0 0.0
        %2940 = vmatpush1.msra.mxu0 0.0
        %2941 = vmatprep.subr.mxu0 0.0
        %2942 = vmatpush1.msra.mxu0 0.0
        %2943 = vmatprep.subr.mxu0 0.0
        %2944 = vmatpush1.msra.mxu0 0.0
        %2945 = vmatprep.subr.mxu0 0.0
        %2946 = vmatpush1.msra.mxu0 0.0
        %2947 = vmatprep.subr.mxu0 0.0
        %2948 = vmatpush1.msra.mxu0 0.0
        %2949 = vmatprep.subr.mxu0 0.0
        %2950 = vmatpush1.msra.mxu0 0.0
        %2951 = vmatprep.subr.mxu0 0.0
        %2952 = vmatpush1.msra.mxu0 0.0
        %2953 = vmatprep.subr.mxu0 0.0
        %2954 = vmatpush1.msra.mxu0 0.0
        %2955 = vmatprep.subr.mxu0 0.0
        %2956 = vmatpush1.msra.mxu0 0.0
        %2957 = vmatprep.subr.mxu0 0.0
        %2958 = vmatpush1.msra.mxu0 0.0
        %2959 = vmatprep.subr.mxu0 0.0
        %2960 = vmatpush1.msra.mxu0 0.0
        %2961 = vmatprep.subr.mxu0 0.0
        %2962 = vmatpush1.msra.mxu0 0.0
        %2963 = vmatprep.subr.mxu0 0.0
        %2964 = vmatpush1.msra.mxu0 0.0
        %2965 = vmatprep.subr.mxu0 0.0
        %2966 = vmatpush1.msra.mxu0 0.0
        %2967 = vmatprep.subr.mxu0 0.0
        %2968 = vmatpush1.msra.mxu0 0.0
        %2969 = vmatprep.subr.mxu0 0.0
        %2970 = vmatpush1.msra.mxu0 0.0
        %2971 = vmatprep.subr.mxu0 0.0
        %2972 = vmatpush1.msra.mxu0 0.0
        %2973 = vmatprep.subr.mxu0 0.0
        %2974 = vmatpush1.msra.mxu0 0.0
        %2975 = vmatprep.subr.mxu0 0.0
        %2976 = vmatpush1.msra.mxu0 0.0
        %2977 = vmatprep.subr.mxu0 0.0
        %2978 = vmatpush1.msra.mxu0 0.0
        %2979 = vmatprep.subr.mxu0 0.0
        %2980 = vmatpush1.msra.mxu0 0.0
        %2981 = vmatprep.subr.mxu0 0.0
        %2982 = vmatpush1.msra.mxu0 0.0
        %2983 = vmatprep.mubr.f32.mxu0 0.0
        %2984 = vmatmul.mubr.f32.gmra.mrb[0].mxu0 %v2906
        %v2985 = vpop.f32.mrb[0].mxu0
        %v2986 = vadd.f32 0.0, %v2985
        %v2987 = vpop.f32.mrb[0].mxu0
        %v2988 = vadd.f32 0.0, %v2987
        %2989 = vmatprep.mubr.f32.mxu0 0.0
        %2990 = vmatmul.mubr.f32.gmra.mrb[0].mxu0 %v2909
        %v2991 = vpop.f32.mrb[0].mxu0
        %v2992 = vadd.f32 0.0, %v2991
        %v2993 = vpop.f32.mrb[0].mxu0
        %v2994 = vadd.f32 0.0, %v2993
        %2995 = vmatprep.mubr.f32.mxu0 0.0
        %2996 = vmatmul.mubr.f32.gmra.mrb[0].mxu0 %v2912
        %v2997 = vpop.f32.mrb[0].mxu0
        %v2998 = vadd.f32 0.0, %v2997
        %v2999 = vpop.f32.mrb[0].mxu0
        %v3000 = vadd.f32 0.0, %v2999
        %3001 = vdwg.mxu0
        %v3002 = vadd.f32 %v2877, %v2986
        %v3003 = vadd.f32 %v2878, %v2988
        %v3004 = vadd.f32 %v2879, %v2992
        %v3005 = vadd.f32 %v2880, %v2994
        %v3006 = vadd.f32 %v2881, %v2998
        %v3007 = vadd.f32 %v2882, %v3000
        %s3008 = scalar_lea.vmem %s3, 432
        %v3009 = vld [vmem:[%s3008] sm:$0xff]
        %v3010 = vld [vmem:[%s3008 + $0x8] sm:$0xff]
        %v3011 = vld [vmem:[%s3008 + $0x10] sm:$0xf]
        %3012 = vrot.lane.b32.xlu0 %v780, 77
        %v3013 = vpop.permute.xlu0 %3012
        %3014 = vrot.lane.b32.xlu0 %v781, 77
        %v3015 = vpop.permute.xlu0 %3014
        %3016 = vrot.lane.b32.xlu0 %v782, 77
        %v3017 = vpop.permute.xlu0 %3016
        %3018 = vrot.lane.b32.xlu0 %v783, 77
        %v3019 = vpop.permute.xlu0 %3018
        %vm3020 = vcmask 629760
        %v3021 = vsel %vm3020, %v3013, %v3015
        %v3022 = vsel %vm3020, %v3017, %v3019
        %v3028 = vsel %vm3020, %v3015, %v3013
        %v3029 = vsel %vm3020, %v3019, %v3017
        %v3031 = vsel %vm813, %v3009, 0
        %v3034 = vsel %vm813, %v3010, 0
        %v3037 = vsel %vm813, %v3011, 0
        %v3039 = vsel %vm823, %v3022, 0
        %v3042 = vsel %vm823, %v3029, 0
        %3044 = vmatprep.subr.mxu0 %v3028
        %3045 = vmatpush1.msra.mxu0 %v3021
        %3046 = vmatprep.subr.mxu0 %v3042
        %3047 = vmatpush1.msra.mxu0 %v3039
        %3048 = vmatprep.subr.mxu0 0.0
        %3049 = vmatpush1.msra.mxu0 0.0
        %3050 = vmatprep.subr.mxu0 0.0
        %3051 = vmatpush1.msra.mxu0 0.0
        %3052 = vmatprep.subr.mxu0 0.0
        %3053 = vmatpush1.msra.mxu0 0.0
        %3054 = vmatprep.subr.mxu0 0.0
        %3055 = vmatpush1.msra.mxu0 0.0
        %3056 = vmatprep.subr.mxu0 0.0
        %3057 = vmatpush1.msra.mxu0 0.0
        %3058 = vmatprep.subr.mxu0 0.0
        %3059 = vmatpush1.msra.mxu0 0.0
        %3060 = vmatprep.subr.mxu0 0.0
        %3061 = vmatpush1.msra.mxu0 0.0
        %3062 = vmatprep.subr.mxu0 0.0
        %3063 = vmatpush1.msra.mxu0 0.0
        %3064 = vmatprep.subr.mxu0 0.0
        %3065 = vmatpush1.msra.mxu0 0.0
        %3066 = vmatprep.subr.mxu0 0.0
        %3067 = vmatpush1.msra.mxu0 0.0
        %3068 = vmatprep.subr.mxu0 0.0
        %3069 = vmatpush1.msra.mxu0 0.0
        %3070 = vmatprep.subr.mxu0 0.0
        %3071 = vmatpush1.msra.mxu0 0.0
        %3072 = vmatprep.subr.mxu0 0.0
        %3073 = vmatpush1.msra.mxu0 0.0
        %3074 = vmatprep.subr.mxu0 0.0
        %3075 = vmatpush1.msra.mxu0 0.0
        %3076 = vmatprep.subr.mxu0 0.0
        %3077 = vmatpush1.msra.mxu0 0.0
        %3078 = vmatprep.subr.mxu0 0.0
        %3079 = vmatpush1.msra.mxu0 0.0
        %3080 = vmatprep.subr.mxu0 0.0
        %3081 = vmatpush1.msra.mxu0 0.0
        %3082 = vmatprep.subr.mxu0 0.0
        %3083 = vmatpush1.msra.mxu0 0.0
        %3084 = vmatprep.subr.mxu0 0.0
        %3085 = vmatpush1.msra.mxu0 0.0
        %3086 = vmatprep.subr.mxu0 0.0
        %3087 = vmatpush1.msra.mxu0 0.0
        %3088 = vmatprep.subr.mxu0 0.0
        %3089 = vmatpush1.msra.mxu0 0.0
        %3090 = vmatprep.subr.mxu0 0.0
        %3091 = vmatpush1.msra.mxu0 0.0
        %3092 = vmatprep.subr.mxu0 0.0
        %3093 = vmatpush1.msra.mxu0 0.0
        %3094 = vmatprep.subr.mxu0 0.0
        %3095 = vmatpush1.msra.mxu0 0.0
        %3096 = vmatprep.subr.mxu0 0.0
        %3097 = vmatpush1.msra.mxu0 0.0
        %3098 = vmatprep.subr.mxu0 0.0
        %3099 = vmatpush1.msra.mxu0 0.0
        %3100 = vmatprep.subr.mxu0 0.0
        %3101 = vmatpush1.msra.mxu0 0.0
        %3102 = vmatprep.subr.mxu0 0.0
        %3103 = vmatpush1.msra.mxu0 0.0
        %3104 = vmatprep.subr.mxu0 0.0
        %3105 = vmatpush1.msra.mxu0 0.0
        %3106 = vmatprep.subr.mxu0 0.0
        %3107 = vmatpush1.msra.mxu0 0.0
        %3108 = vmatprep.mubr.f32.mxu0 0.0
        %3109 = vmatmul.mubr.f32.gmra.mrb[0].mxu0 %v3031
        %v3110 = vpop.f32.mrb[0].mxu0
        %v3111 = vadd.f32 0.0, %v3110
        %v3112 = vpop.f32.mrb[0].mxu0
        %v3113 = vadd.f32 0.0, %v3112
        %3114 = vmatprep.mubr.f32.mxu0 0.0
        %3115 = vmatmul.mubr.f32.gmra.mrb[0].mxu0 %v3034
        %v3116 = vpop.f32.mrb[0].mxu0
        %v3117 = vadd.f32 0.0, %v3116
        %v3118 = vpop.f32.mrb[0].mxu0
        %v3119 = vadd.f32 0.0, %v3118
        %3120 = vmatprep.mubr.f32.mxu0 0.0
        %3121 = vmatmul.mubr.f32.gmra.mrb[0].mxu0 %v3037
        %v3122 = vpop.f32.mrb[0].mxu0
        %v3123 = vadd.f32 0.0, %v3122
        %v3124 = vpop.f32.mrb[0].mxu0
        %v3125 = vadd.f32 0.0, %v3124
        %3126 = vdwg.mxu0
        %v3127 = vadd.f32 %v3002, %v3111
        %v3128 = vadd.f32 %v3003, %v3113
        %v3129 = vadd.f32 %v3004, %v3117
        %v3130 = vadd.f32 %v3005, %v3119
        %v3131 = vadd.f32 %v3006, %v3123
        %v3132 = vadd.f32 %v3007, %v3125
        %s3133 = scalar_lea.vmem %s3, 456
        %v3134 = vld [vmem:[%s3133] sm:$0xff]
        %v3135 = vld [vmem:[%s3133 + $0x8] sm:$0xff]
        %v3136 = vld [vmem:[%s3133 + $0x10] sm:$0xf]
        %3137 = vrot.lane.b32.xlu0 %v780, 76
        %v3138 = vpop.permute.xlu0 %3137
        %3139 = vrot.lane.b32.xlu0 %v781, 76
        %v3140 = vpop.permute.xlu0 %3139
        %3141 = vrot.lane.b32.xlu0 %v782, 76
        %v3142 = vpop.permute.xlu0 %3141
        %3143 = vrot.lane.b32.xlu0 %v783, 76
        %v3144 = vpop.permute.xlu0 %3143
        %vm3145 = vcmask 621568
        %v3146 = vsel %vm3145, %v3138, %v3140
        %v3147 = vsel %vm3145, %v3142, %v3144
        %v3153 = vsel %vm3145, %v3140, %v3138
        %v3154 = vsel %vm3145, %v3144, %v3142
        %v3156 = vsel %vm813, %v3134, 0
        %v3159 = vsel %vm813, %v3135, 0
        %v3162 = vsel %vm813, %v3136, 0
        %v3164 = vsel %vm823, %v3147, 0
        %v3167 = vsel %vm823, %v3154, 0
        %3169 = vmatprep.subr.mxu0 %v3153
        %3170 = vmatpush1.msra.mxu0 %v3146
        %3171 = vmatprep.subr.mxu0 %v3167
        %3172 = vmatpush1.msra.mxu0 %v3164
        %3173 = vmatprep.subr.mxu0 0.0
        %3174 = vmatpush1.msra.mxu0 0.0
        %3175 = vmatprep.subr.mxu0 0.0
        %3176 = vmatpush1.msra.mxu0 0.0
        %3177 = vmatprep.subr.mxu0 0.0
        %3178 = vmatpush1.msra.mxu0 0.0
        %3179 = vmatprep.subr.mxu0 0.0
        %3180 = vmatpush1.msra.mxu0 0.0
        %3181 = vmatprep.subr.mxu0 0.0
        %3182 = vmatpush1.msra.mxu0 0.0
        %3183 = vmatprep.subr.mxu0 0.0
        %3184 = vmatpush1.msra.mxu0 0.0
        %3185 = vmatprep.subr.mxu0 0.0
        %3186 = vmatpush1.msra.mxu0 0.0
        %3187 = vmatprep.subr.mxu0 0.0
        %3188 = vmatpush1.msra.mxu0 0.0
        %3189 = vmatprep.subr.mxu0 0.0
        %3190 = vmatpush1.msra.mxu0 0.0
        %3191 = vmatprep.subr.mxu0 0.0
        %3192 = vmatpush1.msra.mxu0 0.0
        %3193 = vmatprep.subr.mxu0 0.0
        %3194 = vmatpush1.msra.mxu0 0.0
        %3195 = vmatprep.subr.mxu0 0.0
        %3196 = vmatpush1.msra.mxu0 0.0
        %3197 = vmatprep.subr.mxu0 0.0
        %3198 = vmatpush1.msra.mxu0 0.0
        %3199 = vmatprep.subr.mxu0 0.0
        %3200 = vmatpush1.msra.mxu0 0.0
        %3201 = vmatprep.subr.mxu0 0.0
        %3202 = vmatpush1.msra.mxu0 0.0
        %3203 = vmatprep.subr.mxu0 0.0
        %3204 = vmatpush1.msra.mxu0 0.0
        %3205 = vmatprep.subr.mxu0 0.0
        %3206 = vmatpush1.msra.mxu0 0.0
        %3207 = vmatprep.subr.mxu0 0.0
        %3208 = vmatpush1.msra.mxu0 0.0
        %3209 = vmatprep.subr.mxu0 0.0
        %3210 = vmatpush1.msra.mxu0 0.0
        %3211 = vmatprep.subr.mxu0 0.0
        %3212 = vmatpush1.msra.mxu0 0.0
        %3213 = vmatprep.subr.mxu0 0.0
        %3214 = vmatpush1.msra.mxu0 0.0
        %3215 = vmatprep.subr.mxu0 0.0
        %3216 = vmatpush1.msra.mxu0 0.0
        %3217 = vmatprep.subr.mxu0 0.0
        %3218 = vmatpush1.msra.mxu0 0.0
        %3219 = vmatprep.subr.mxu0 0.0
        %3220 = vmatpush1.msra.mxu0 0.0
        %3221 = vmatprep.subr.mxu0 0.0
        %3222 = vmatpush1.msra.mxu0 0.0
        %3223 = vmatprep.subr.mxu0 0.0
        %3224 = vmatpush1.msra.mxu0 0.0
        %3225 = vmatprep.subr.mxu0 0.0
        %3226 = vmatpush1.msra.mxu0 0.0
        %3227 = vmatprep.subr.mxu0 0.0
        %3228 = vmatpush1.msra.mxu0 0.0
        %3229 = vmatprep.subr.mxu0 0.0
        %3230 = vmatpush1.msra.mxu0 0.0
        %3231 = vmatprep.subr.mxu0 0.0
        %3232 = vmatpush1.msra.mxu0 0.0
        %3233 = vmatprep.mubr.f32.mxu0 0.0
        %3234 = vmatmul.mubr.f32.gmra.mrb[0].mxu0 %v3156
        %v3235 = vpop.f32.mrb[0].mxu0
        %v3236 = vadd.f32 0.0, %v3235
        %v3237 = vpop.f32.mrb[0].mxu0
        %v3238 = vadd.f32 0.0, %v3237
        %3239 = vmatprep.mubr.f32.mxu0 0.0
        %3240 = vmatmul.mubr.f32.gmra.mrb[0].mxu0 %v3159
        %v3241 = vpop.f32.mrb[0].mxu0
        %v3242 = vadd.f32 0.0, %v3241
        %v3243 = vpop.f32.mrb[0].mxu0
        %v3244 = vadd.f32 0.0, %v3243
        %3245 = vmatprep.mubr.f32.mxu0 0.0
        %3246 = vmatmul.mubr.f32.gmra.mrb[0].mxu0 %v3162
        %v3247 = vpop.f32.mrb[0].mxu0
        %v3248 = vadd.f32 0.0, %v3247
        %v3249 = vpop.f32.mrb[0].mxu0
        %v3250 = vadd.f32 0.0, %v3249
        %3251 = vdwg.mxu0
        %v3252 = vadd.f32 %v3127, %v3236
        %v3253 = vadd.f32 %v3128, %v3238
        %v3254 = vadd.f32 %v3129, %v3242
        %v3255 = vadd.f32 %v3130, %v3244
        %v3256 = vadd.f32 %v3131, %v3248
        %v3257 = vadd.f32 %v3132, %v3250
        %s3258 = scalar_lea.vmem %s3, 480
        %v3259 = vld [vmem:[%s3258] sm:$0xff]
        %v3260 = vld [vmem:[%s3258 + $0x8] sm:$0xff]
        %v3261 = vld [vmem:[%s3258 + $0x10] sm:$0xf]
        %3262 = vrot.lane.b32.xlu0 %v780, 64
        %v3263 = vpop.permute.xlu0 %3262
        %3264 = vrot.lane.b32.xlu0 %v781, 64
        %v3265 = vpop.permute.xlu0 %3264
        %3266 = vrot.lane.b32.xlu0 %v782, 64
        %v3267 = vpop.permute.xlu0 %3266
        %3268 = vrot.lane.b32.xlu0 %v783, 64
        %v3269 = vpop.permute.xlu0 %3268
        %vm3270 = vcmask 523264
        %v3271 = vsel %vm3270, %v3263, %v3265
        %v3272 = vsel %vm3270, %v3267, %v3269
        %v3278 = vsel %vm3270, %v3265, %v3263
        %v3279 = vsel %vm3270, %v3269, %v3267
        %v3281 = vsel %vm813, %v3259, 0
        %v3284 = vsel %vm813, %v3260, 0
        %v3287 = vsel %vm813, %v3261, 0
        %v3289 = vsel %vm823, %v3272, 0
        %v3292 = vsel %vm823, %v3279, 0
        %3294 = vmatprep.subr.mxu0 %v3278
        %3295 = vmatpush1.msra.mxu0 %v3271
        %3296 = vmatprep.subr.mxu0 %v3292
        %3297 = vmatpush1.msra.mxu0 %v3289
        %3298 = vmatprep.subr.mxu0 0.0
        %3299 = vmatpush1.msra.mxu0 0.0
        %3300 = vmatprep.subr.mxu0 0.0
        %3301 = vmatpush1.msra.mxu0 0.0
        %3302 = vmatprep.subr.mxu0 0.0
        %3303 = vmatpush1.msra.mxu0 0.0
        %3304 = vmatprep.subr.mxu0 0.0
        %3305 = vmatpush1.msra.mxu0 0.0
        %3306 = vmatprep.subr.mxu0 0.0
        %3307 = vmatpush1.msra.mxu0 0.0
        %3308 = vmatprep.subr.mxu0 0.0
        %3309 = vmatpush1.msra.mxu0 0.0
        %3310 = vmatprep.subr.mxu0 0.0
        %3311 = vmatpush1.msra.mxu0 0.0
        %3312 = vmatprep.subr.mxu0 0.0
        %3313 = vmatpush1.msra.mxu0 0.0
        %3314 = vmatprep.subr.mxu0 0.0
        %3315 = vmatpush1.msra.mxu0 0.0
        %3316 = vmatprep.subr.mxu0 0.0
        %3317 = vmatpush1.msra.mxu0 0.0
        %3318 = vmatprep.subr.mxu0 0.0
        %3319 = vmatpush1.msra.mxu0 0.0
        %3320 = vmatprep.subr.mxu0 0.0
        %3321 = vmatpush1.msra.mxu0 0.0
        %3322 = vmatprep.subr.mxu0 0.0
        %3323 = vmatpush1.msra.mxu0 0.0
        %3324 = vmatprep.subr.mxu0 0.0
        %3325 = vmatpush1.msra.mxu0 0.0
        %3326 = vmatprep.subr.mxu0 0.0
        %3327 = vmatpush1.msra.mxu0 0.0
        %3328 = vmatprep.subr.mxu0 0.0
        %3329 = vmatpush1.msra.mxu0 0.0
        %3330 = vmatprep.subr.mxu0 0.0
        %3331 = vmatpush1.msra.mxu0 0.0
        %3332 = vmatprep.subr.mxu0 0.0
        %3333 = vmatpush1.msra.mxu0 0.0
        %3334 = vmatprep.subr.mxu0 0.0
        %3335 = vmatpush1.msra.mxu0 0.0
        %3336 = vmatprep.subr.mxu0 0.0
        %3337 = vmatpush1.msra.mxu0 0.0
        %3338 = vmatprep.subr.mxu0 0.0
        %3339 = vmatpush1.msra.mxu0 0.0
        %3340 = vmatprep.subr.mxu0 0.0
        %3341 = vmatpush1.msra.mxu0 0.0
        %3342 = vmatprep.subr.mxu0 0.0
        %3343 = vmatpush1.msra.mxu0 0.0
        %3344 = vmatprep.subr.mxu0 0.0
        %3345 = vmatpush1.msra.mxu0 0.0
        %3346 = vmatprep.subr.mxu0 0.0
        %3347 = vmatpush1.msra.mxu0 0.0
        %3348 = vmatprep.subr.mxu0 0.0
        %3349 = vmatpush1.msra.mxu0 0.0
        %3350 = vmatprep.subr.mxu0 0.0
        %3351 = vmatpush1.msra.mxu0 0.0
        %3352 = vmatprep.subr.mxu0 0.0
        %3353 = vmatpush1.msra.mxu0 0.0
        %3354 = vmatprep.subr.mxu0 0.0
        %3355 = vmatpush1.msra.mxu0 0.0
        %3356 = vmatprep.subr.mxu0 0.0
        %3357 = vmatpush1.msra.mxu0 0.0
        %3358 = vmatprep.mubr.f32.mxu0 0.0
        %3359 = vmatmul.mubr.f32.gmra.mrb[0].mxu0 %v3281
        %v3360 = vpop.f32.mrb[0].mxu0
        %v3361 = vadd.f32 0.0, %v3360
        %v3362 = vpop.f32.mrb[0].mxu0
        %v3363 = vadd.f32 0.0, %v3362
        %3364 = vmatprep.mubr.f32.mxu0 0.0
        %3365 = vmatmul.mubr.f32.gmra.mrb[0].mxu0 %v3284
        %v3366 = vpop.f32.mrb[0].mxu0
        %v3367 = vadd.f32 0.0, %v3366
        %v3368 = vpop.f32.mrb[0].mxu0
        %v3369 = vadd.f32 0.0, %v3368
        %3370 = vmatprep.mubr.f32.mxu0 0.0
        %3371 = vmatmul.mubr.f32.gmra.mrb[0].mxu0 %v3287
        %v3372 = vpop.f32.mrb[0].mxu0
        %v3373 = vadd.f32 0.0, %v3372
        %v3374 = vpop.f32.mrb[0].mxu0
        %v3375 = vadd.f32 0.0, %v3374
        %3376 = vdwg.mxu0
        %v3377 = vadd.f32 %v3252, %v3361
        %v3378 = vadd.f32 %v3253, %v3363
        %v3379 = vadd.f32 %v3254, %v3367
        %v3380 = vadd.f32 %v3255, %v3369
        %v3381 = vadd.f32 %v3256, %v3373
        %v3382 = vadd.f32 %v3257, %v3375
        %s3383 = scalar_lea.vmem %s3, 504
        %v3384 = vld [vmem:[%s3383] sm:$0xff]
        %v3385 = vld [vmem:[%s3383 + $0x8] sm:$0xff]
        %v3386 = vld [vmem:[%s3383 + $0x10] sm:$0xf]
        %3387 = vrot.lane.b32.xlu0 %v780, 63
        %v3388 = vpop.permute.xlu0 %3387
        %3389 = vrot.lane.b32.xlu0 %v781, 63
        %v3390 = vpop.permute.xlu0 %3389
        %3391 = vrot.lane.b32.xlu0 %v782, 63
        %v3392 = vpop.permute.xlu0 %3391
        %3393 = vrot.lane.b32.xlu0 %v783, 63
        %v3394 = vpop.permute.xlu0 %3393
        %vm3395 = vcmask 515072
        %v3396 = vsel %vm3395, %v3388, %v3390
        %v3397 = vsel %vm3395, %v3392, %v3394
        %v3403 = vsel %vm3395, %v3390, %v3388
        %v3404 = vsel %vm3395, %v3394, %v3392
        %v3406 = vsel %vm813, %v3384, 0
        %v3409 = vsel %vm813, %v3385, 0
        %v3412 = vsel %vm813, %v3386, 0
        %v3414 = vsel %vm823, %v3397, 0
        %v3417 = vsel %vm823, %v3404, 0
        %3419 = vmatprep.subr.mxu0 %v3403
        %3420 = vmatpush1.msra.mxu0 %v3396
        %3421 = vmatprep.subr.mxu0 %v3417
        %3422 = vmatpush1.msra.mxu0 %v3414
        %3423 = vmatprep.subr.mxu0 0.0
        %3424 = vmatpush1.msra.mxu0 0.0
        %3425 = vmatprep.subr.mxu0 0.0
        %3426 = vmatpush1.msra.mxu0 0.0
        %3427 = vmatprep.subr.mxu0 0.0
        %3428 = vmatpush1.msra.mxu0 0.0
        %3429 = vmatprep.subr.mxu0 0.0
        %3430 = vmatpush1.msra.mxu0 0.0
        %3431 = vmatprep.subr.mxu0 0.0
        %3432 = vmatpush1.msra.mxu0 0.0
        %3433 = vmatprep.subr.mxu0 0.0
        %3434 = vmatpush1.msra.mxu0 0.0
        %3435 = vmatprep.subr.mxu0 0.0
        %3436 = vmatpush1.msra.mxu0 0.0
        %3437 = vmatprep.subr.mxu0 0.0
        %3438 = vmatpush1.msra.mxu0 0.0
        %3439 = vmatprep.subr.mxu0 0.0
        %3440 = vmatpush1.msra.mxu0 0.0
        %3441 = vmatprep.subr.mxu0 0.0
        %3442 = vmatpush1.msra.mxu0 0.0
        %3443 = vmatprep.subr.mxu0 0.0
        %3444 = vmatpush1.msra.mxu0 0.0
        %3445 = vmatprep.subr.mxu0 0.0
        %3446 = vmatpush1.msra.mxu0 0.0
        %3447 = vmatprep.subr.mxu0 0.0
        %3448 = vmatpush1.msra.mxu0 0.0
        %3449 = vmatprep.subr.mxu0 0.0
        %3450 = vmatpush1.msra.mxu0 0.0
        %3451 = vmatprep.subr.mxu0 0.0
        %3452 = vmatpush1.msra.mxu0 0.0
        %3453 = vmatprep.subr.mxu0 0.0
        %3454 = vmatpush1.msra.mxu0 0.0
        %3455 = vmatprep.subr.mxu0 0.0
        %3456 = vmatpush1.msra.mxu0 0.0
        %3457 = vmatprep.subr.mxu0 0.0
        %3458 = vmatpush1.msra.mxu0 0.0
        %3459 = vmatprep.subr.mxu0 0.0
        %3460 = vmatpush1.msra.mxu0 0.0
        %3461 = vmatprep.subr.mxu0 0.0
        %3462 = vmatpush1.msra.mxu0 0.0
        %3463 = vmatprep.subr.mxu0 0.0
        %3464 = vmatpush1.msra.mxu0 0.0
        %3465 = vmatprep.subr.mxu0 0.0
        %3466 = vmatpush1.msra.mxu0 0.0
        %3467 = vmatprep.subr.mxu0 0.0
        %3468 = vmatpush1.msra.mxu0 0.0
        %3469 = vmatprep.subr.mxu0 0.0
        %3470 = vmatpush1.msra.mxu0 0.0
        %3471 = vmatprep.subr.mxu0 0.0
        %3472 = vmatpush1.msra.mxu0 0.0
        %3473 = vmatprep.subr.mxu0 0.0
        %3474 = vmatpush1.msra.mxu0 0.0
        %3475 = vmatprep.subr.mxu0 0.0
        %3476 = vmatpush1.msra.mxu0 0.0
        %3477 = vmatprep.subr.mxu0 0.0
        %3478 = vmatpush1.msra.mxu0 0.0
        %3479 = vmatprep.subr.mxu0 0.0
        %3480 = vmatpush1.msra.mxu0 0.0
        %3481 = vmatprep.subr.mxu0 0.0
        %3482 = vmatpush1.msra.mxu0 0.0
        %3483 = vmatprep.mubr.f32.mxu0 0.0
        %3484 = vmatmul.mubr.f32.gmra.mrb[0].mxu0 %v3406
        %v3485 = vpop.f32.mrb[0].mxu0
        %v3486 = vadd.f32 0.0, %v3485
        %v3487 = vpop.f32.mrb[0].mxu0
        %v3488 = vadd.f32 0.0, %v3487
        %3489 = vmatprep.mubr.f32.mxu0 0.0
        %3490 = vmatmul.mubr.f32.gmra.mrb[0].mxu0 %v3409
        %v3491 = vpop.f32.mrb[0].mxu0
        %v3492 = vadd.f32 0.0, %v3491
        %v3493 = vpop.f32.mrb[0].mxu0
        %v3494 = vadd.f32 0.0, %v3493
        %3495 = vmatprep.mubr.f32.mxu0 0.0
        %3496 = vmatmul.mubr.f32.gmra.mrb[0].mxu0 %v3412
        %v3497 = vpop.f32.mrb[0].mxu0
        %v3498 = vadd.f32 0.0, %v3497
        %v3499 = vpop.f32.mrb[0].mxu0
        %v3500 = vadd.f32 0.0, %v3499
        %3501 = vdwg.mxu0
        %v3502 = vadd.f32 %v3377, %v3486
        %v3503 = vadd.f32 %v3378, %v3488
        %v3504 = vadd.f32 %v3379, %v3492
        %v3505 = vadd.f32 %v3380, %v3494
        %v3506 = vadd.f32 %v3381, %v3498
        %v3507 = vadd.f32 %v3382, %v3500
        %s3508 = scalar_lea.vmem %s3, 528
        %v3509 = vld [vmem:[%s3508] sm:$0xff]
        %v3510 = vld [vmem:[%s3508 + $0x8] sm:$0xff]
        %v3511 = vld [vmem:[%s3508 + $0x10] sm:$0xf]
        %3512 = vrot.lane.b32.xlu0 %v780, 62
        %v3513 = vpop.permute.xlu0 %3512
        %3514 = vrot.lane.b32.xlu0 %v781, 62
        %v3515 = vpop.permute.xlu0 %3514
        %3516 = vrot.lane.b32.xlu0 %v782, 62
        %v3517 = vpop.permute.xlu0 %3516
        %3518 = vrot.lane.b32.xlu0 %v783, 62
        %v3519 = vpop.permute.xlu0 %3518
        %vm3520 = vcmask 506880
        %v3521 = vsel %vm3520, %v3513, %v3515
        %v3522 = vsel %vm3520, %v3517, %v3519
        %v3528 = vsel %vm3520, %v3515, %v3513
        %v3529 = vsel %vm3520, %v3519, %v3517
        %v3531 = vsel %vm813, %v3509, 0
        %v3534 = vsel %vm813, %v3510, 0
        %v3537 = vsel %vm813, %v3511, 0
        %v3539 = vsel %vm823, %v3522, 0
        %v3542 = vsel %vm823, %v3529, 0
        %3544 = vmatprep.subr.mxu0 %v3528
        %3545 = vmatpush1.msra.mxu0 %v3521
        %3546 = vmatprep.subr.mxu0 %v3542
        %3547 = vmatpush1.msra.mxu0 %v3539
        %3548 = vmatprep.subr.mxu0 0.0
        %3549 = vmatpush1.msra.mxu0 0.0
        %3550 = vmatprep.subr.mxu0 0.0
        %3551 = vmatpush1.msra.mxu0 0.0
        %3552 = vmatprep.subr.mxu0 0.0
        %3553 = vmatpush1.msra.mxu0 0.0
        %3554 = vmatprep.subr.mxu0 0.0
        %3555 = vmatpush1.msra.mxu0 0.0
        %3556 = vmatprep.subr.mxu0 0.0
        %3557 = vmatpush1.msra.mxu0 0.0
        %3558 = vmatprep.subr.mxu0 0.0
        %3559 = vmatpush1.msra.mxu0 0.0
        %3560 = vmatprep.subr.mxu0 0.0
        %3561 = vmatpush1.msra.mxu0 0.0
        %3562 = vmatprep.subr.mxu0 0.0
        %3563 = vmatpush1.msra.mxu0 0.0
        %3564 = vmatprep.subr.mxu0 0.0
        %3565 = vmatpush1.msra.mxu0 0.0
        %3566 = vmatprep.subr.mxu0 0.0
        %3567 = vmatpush1.msra.mxu0 0.0
        %3568 = vmatprep.subr.mxu0 0.0
        %3569 = vmatpush1.msra.mxu0 0.0
        %3570 = vmatprep.subr.mxu0 0.0
        %3571 = vmatpush1.msra.mxu0 0.0
        %3572 = vmatprep.subr.mxu0 0.0
        %3573 = vmatpush1.msra.mxu0 0.0
        %3574 = vmatprep.subr.mxu0 0.0
        %3575 = vmatpush1.msra.mxu0 0.0
        %3576 = vmatprep.subr.mxu0 0.0
        %3577 = vmatpush1.msra.mxu0 0.0
        %3578 = vmatprep.subr.mxu0 0.0
        %3579 = vmatpush1.msra.mxu0 0.0
        %3580 = vmatprep.subr.mxu0 0.0
        %3581 = vmatpush1.msra.mxu0 0.0
        %3582 = vmatprep.subr.mxu0 0.0
        %3583 = vmatpush1.msra.mxu0 0.0
        %3584 = vmatprep.subr.mxu0 0.0
        %3585 = vmatpush1.msra.mxu0 0.0
        %3586 = vmatprep.subr.mxu0 0.0
        %3587 = vmatpush1.msra.mxu0 0.0
        %3588 = vmatprep.subr.mxu0 0.0
        %3589 = vmatpush1.msra.mxu0 0.0
        %3590 = vmatprep.subr.mxu0 0.0
        %3591 = vmatpush1.msra.mxu0 0.0
        %3592 = vmatprep.subr.mxu0 0.0
        %3593 = vmatpush1.msra.mxu0 0.0
        %3594 = vmatprep.subr.mxu0 0.0
        %3595 = vmatpush1.msra.mxu0 0.0
        %3596 = vmatprep.subr.mxu0 0.0
        %3597 = vmatpush1.msra.mxu0 0.0
        %3598 = vmatprep.subr.mxu0 0.0
        %3599 = vmatpush1.msra.mxu0 0.0
        %3600 = vmatprep.subr.mxu0 0.0
        %3601 = vmatpush1.msra.mxu0 0.0
        %3602 = vmatprep.subr.mxu0 0.0
        %3603 = vmatpush1.msra.mxu0 0.0
        %3604 = vmatprep.subr.mxu0 0.0
        %3605 = vmatpush1.msra.mxu0 0.0
        %3606 = vmatprep.subr.mxu0 0.0
        %3607 = vmatpush1.msra.mxu0 0.0
        %3608 = vmatprep.mubr.f32.mxu0 0.0
        %3609 = vmatmul.mubr.f32.gmra.mrb[0].mxu0 %v3531
        %v3610 = vpop.f32.mrb[0].mxu0
        %v3611 = vadd.f32 0.0, %v3610
        %v3612 = vpop.f32.mrb[0].mxu0
        %v3613 = vadd.f32 0.0, %v3612
        %3614 = vmatprep.mubr.f32.mxu0 0.0
        %3615 = vmatmul.mubr.f32.gmra.mrb[0].mxu0 %v3534
        %v3616 = vpop.f32.mrb[0].mxu0
        %v3617 = vadd.f32 0.0, %v3616
        %v3618 = vpop.f32.mrb[0].mxu0
        %v3619 = vadd.f32 0.0, %v3618
        %3620 = vmatprep.mubr.f32.mxu0 0.0
        %3621 = vmatmul.mubr.f32.gmra.mrb[0].mxu0 %v3537
        %v3622 = vpop.f32.mrb[0].mxu0
        %v3623 = vadd.f32 0.0, %v3622
        %v3624 = vpop.f32.mrb[0].mxu0
        %v3625 = vadd.f32 0.0, %v3624
        %3626 = vdwg.mxu0
        %v3627 = vadd.f32 %v3502, %v3611
        %v3628 = vadd.f32 %v3503, %v3613
        %v3629 = vadd.f32 %v3504, %v3617
        %v3630 = vadd.f32 %v3505, %v3619
        %v3631 = vadd.f32 %v3506, %v3623
        %v3632 = vadd.f32 %v3507, %v3625
        %s3633 = scalar_lea.vmem %s3, 552
        %v3634 = vld [vmem:[%s3633] sm:$0xff]
        %v3635 = vld [vmem:[%s3633 + $0x8] sm:$0xff]
        %v3636 = vld [vmem:[%s3633 + $0x10] sm:$0xf]
        %3637 = vrot.lane.b32.xlu0 %v780, 61
        %v3638 = vpop.permute.xlu0 %3637
        %3639 = vrot.lane.b32.xlu0 %v781, 61
        %v3640 = vpop.permute.xlu0 %3639
        %3641 = vrot.lane.b32.xlu0 %v782, 61
        %v3642 = vpop.permute.xlu0 %3641
        %3643 = vrot.lane.b32.xlu0 %v783, 61
        %v3644 = vpop.permute.xlu0 %3643
        %vm3645 = vcmask 498688
        %v3646 = vsel %vm3645, %v3638, %v3640
        %v3647 = vsel %vm3645, %v3642, %v3644
        %v3653 = vsel %vm3645, %v3640, %v3638
        %v3654 = vsel %vm3645, %v3644, %v3642
        %v3656 = vsel %vm813, %v3634, 0
        %v3659 = vsel %vm813, %v3635, 0
        %v3662 = vsel %vm813, %v3636, 0
        %v3664 = vsel %vm823, %v3647, 0
        %v3667 = vsel %vm823, %v3654, 0
        %3669 = vmatprep.subr.mxu0 %v3653
        %3670 = vmatpush1.msra.mxu0 %v3646
        %3671 = vmatprep.subr.mxu0 %v3667
        %3672 = vmatpush1.msra.mxu0 %v3664
        %3673 = vmatprep.subr.mxu0 0.0
        %3674 = vmatpush1.msra.mxu0 0.0
        %3675 = vmatprep.subr.mxu0 0.0
        %3676 = vmatpush1.msra.mxu0 0.0
        %3677 = vmatprep.subr.mxu0 0.0
        %3678 = vmatpush1.msra.mxu0 0.0
        %3679 = vmatprep.subr.mxu0 0.0
        %3680 = vmatpush1.msra.mxu0 0.0
        %3681 = vmatprep.subr.mxu0 0.0
        %3682 = vmatpush1.msra.mxu0 0.0
        %3683 = vmatprep.subr.mxu0 0.0
        %3684 = vmatpush1.msra.mxu0 0.0
        %3685 = vmatprep.subr.mxu0 0.0
        %3686 = vmatpush1.msra.mxu0 0.0
        %3687 = vmatprep.subr.mxu0 0.0
        %3688 = vmatpush1.msra.mxu0 0.0
        %3689 = vmatprep.subr.mxu0 0.0
        %3690 = vmatpush1.msra.mxu0 0.0
        %3691 = vmatprep.subr.mxu0 0.0
        %3692 = vmatpush1.msra.mxu0 0.0
        %3693 = vmatprep.subr.mxu0 0.0
        %3694 = vmatpush1.msra.mxu0 0.0
        %3695 = vmatprep.subr.mxu0 0.0
        %3696 = vmatpush1.msra.mxu0 0.0
        %3697 = vmatprep.subr.mxu0 0.0
        %3698 = vmatpush1.msra.mxu0 0.0
        %3699 = vmatprep.subr.mxu0 0.0
        %3700 = vmatpush1.msra.mxu0 0.0
        %3701 = vmatprep.subr.mxu0 0.0
        %3702 = vmatpush1.msra.mxu0 0.0
        %3703 = vmatprep.subr.mxu0 0.0
        %3704 = vmatpush1.msra.mxu0 0.0
        %3705 = vmatprep.subr.mxu0 0.0
        %3706 = vmatpush1.msra.mxu0 0.0
        %3707 = vmatprep.subr.mxu0 0.0
        %3708 = vmatpush1.msra.mxu0 0.0
        %3709 = vmatprep.subr.mxu0 0.0
        %3710 = vmatpush1.msra.mxu0 0.0
        %3711 = vmatprep.subr.mxu0 0.0
        %3712 = vmatpush1.msra.mxu0 0.0
        %3713 = vmatprep.subr.mxu0 0.0
        %3714 = vmatpush1.msra.mxu0 0.0
        %3715 = vmatprep.subr.mxu0 0.0
        %3716 = vmatpush1.msra.mxu0 0.0
        %3717 = vmatprep.subr.mxu0 0.0
        %3718 = vmatpush1.msra.mxu0 0.0
        %3719 = vmatprep.subr.mxu0 0.0
        %3720 = vmatpush1.msra.mxu0 0.0
        %3721 = vmatprep.subr.mxu0 0.0
        %3722 = vmatpush1.msra.mxu0 0.0
        %3723 = vmatprep.subr.mxu0 0.0
        %3724 = vmatpush1.msra.mxu0 0.0
        %3725 = vmatprep.subr.mxu0 0.0
        %3726 = vmatpush1.msra.mxu0 0.0
        %3727 = vmatprep.subr.mxu0 0.0
        %3728 = vmatpush1.msra.mxu0 0.0
        %3729 = vmatprep.subr.mxu0 0.0
        %3730 = vmatpush1.msra.mxu0 0.0
        %3731 = vmatprep.subr.mxu0 0.0
        %3732 = vmatpush1.msra.mxu0 0.0
        %3733 = vmatprep.mubr.f32.mxu0 0.0
        %3734 = vmatmul.mubr.f32.gmra.mrb[0].mxu0 %v3656
        %v3735 = vpop.f32.mrb[0].mxu0
        %v3736 = vadd.f32 0.0, %v3735
        %v3737 = vpop.f32.mrb[0].mxu0
        %v3738 = vadd.f32 0.0, %v3737
        %3739 = vmatprep.mubr.f32.mxu0 0.0
        %3740 = vmatmul.mubr.f32.gmra.mrb[0].mxu0 %v3659
        %v3741 = vpop.f32.mrb[0].mxu0
        %v3742 = vadd.f32 0.0, %v3741
        %v3743 = vpop.f32.mrb[0].mxu0
        %v3744 = vadd.f32 0.0, %v3743
        %3745 = vmatprep.mubr.f32.mxu0 0.0
        %3746 = vmatmul.mubr.f32.gmra.mrb[0].mxu0 %v3662
        %v3747 = vpop.f32.mrb[0].mxu0
        %v3748 = vadd.f32 0.0, %v3747
        %v3749 = vpop.f32.mrb[0].mxu0
        %v3750 = vadd.f32 0.0, %v3749
        %3751 = vdwg.mxu0
        %v3752 = vadd.f32 %v3627, %v3736
        %v3753 = vadd.f32 %v3628, %v3738
        %v3754 = vadd.f32 %v3629, %v3742
        %v3755 = vadd.f32 %v3630, %v3744
        %v3756 = vadd.f32 %v3631, %v3748
        %v3757 = vadd.f32 %v3632, %v3750
        %s3758 = scalar_lea.vmem %s3, 576
        %v3759 = vld [vmem:[%s3758] sm:$0xff]
        %v3760 = vld [vmem:[%s3758 + $0x8] sm:$0xff]
        %v3761 = vld [vmem:[%s3758 + $0x10] sm:$0xf]
        %3762 = vrot.lane.b32.xlu0 %v780, 60
        %v3763 = vpop.permute.xlu0 %3762
        %3764 = vrot.lane.b32.xlu0 %v781, 60
        %v3765 = vpop.permute.xlu0 %3764
        %3766 = vrot.lane.b32.xlu0 %v782, 60
        %v3767 = vpop.permute.xlu0 %3766
        %3768 = vrot.lane.b32.xlu0 %v783, 60
        %v3769 = vpop.permute.xlu0 %3768
        %vm3770 = vcmask 490496
        %v3771 = vsel %vm3770, %v3763, %v3765
        %v3772 = vsel %vm3770, %v3767, %v3769
        %v3778 = vsel %vm3770, %v3765, %v3763
        %v3779 = vsel %vm3770, %v3769, %v3767
        %v3781 = vsel %vm813, %v3759, 0
        %v3784 = vsel %vm813, %v3760, 0
        %v3787 = vsel %vm813, %v3761, 0
        %v3789 = vsel %vm823, %v3772, 0
        %v3792 = vsel %vm823, %v3779, 0
        %3794 = vmatprep.subr.mxu0 %v3778
        %3795 = vmatpush1.msra.mxu0 %v3771
        %3796 = vmatprep.subr.mxu0 %v3792
        %3797 = vmatpush1.msra.mxu0 %v3789
        %3798 = vmatprep.subr.mxu0 0.0
        %3799 = vmatpush1.msra.mxu0 0.0
        %3800 = vmatprep.subr.mxu0 0.0
        %3801 = vmatpush1.msra.mxu0 0.0
        %3802 = vmatprep.subr.mxu0 0.0
        %3803 = vmatpush1.msra.mxu0 0.0
        %3804 = vmatprep.subr.mxu0 0.0
        %3805 = vmatpush1.msra.mxu0 0.0
        %3806 = vmatprep.subr.mxu0 0.0
        %3807 = vmatpush1.msra.mxu0 0.0
        %3808 = vmatprep.subr.mxu0 0.0
        %3809 = vmatpush1.msra.mxu0 0.0
        %3810 = vmatprep.subr.mxu0 0.0
        %3811 = vmatpush1.msra.mxu0 0.0
        %3812 = vmatprep.subr.mxu0 0.0
        %3813 = vmatpush1.msra.mxu0 0.0
        %3814 = vmatprep.subr.mxu0 0.0
        %3815 = vmatpush1.msra.mxu0 0.0
        %3816 = vmatprep.subr.mxu0 0.0
        %3817 = vmatpush1.msra.mxu0 0.0
        %3818 = vmatprep.subr.mxu0 0.0
        %3819 = vmatpush1.msra.mxu0 0.0
        %3820 = vmatprep.subr.mxu0 0.0
        %3821 = vmatpush1.msra.mxu0 0.0
        %3822 = vmatprep.subr.mxu0 0.0
        %3823 = vmatpush1.msra.mxu0 0.0
        %3824 = vmatprep.subr.mxu0 0.0
        %3825 = vmatpush1.msra.mxu0 0.0
        %3826 = vmatprep.subr.mxu0 0.0
        %3827 = vmatpush1.msra.mxu0 0.0
        %3828 = vmatprep.subr.mxu0 0.0
        %3829 = vmatpush1.msra.mxu0 0.0
        %3830 = vmatprep.subr.mxu0 0.0
        %3831 = vmatpush1.msra.mxu0 0.0
        %3832 = vmatprep.subr.mxu0 0.0
        %3833 = vmatpush1.msra.mxu0 0.0
        %3834 = vmatprep.subr.mxu0 0.0
        %3835 = vmatpush1.msra.mxu0 0.0
        %3836 = vmatprep.subr.mxu0 0.0
        %3837 = vmatpush1.msra.mxu0 0.0
        %3838 = vmatprep.subr.mxu0 0.0
        %3839 = vmatpush1.msra.mxu0 0.0
        %3840 = vmatprep.subr.mxu0 0.0
        %3841 = vmatpush1.msra.mxu0 0.0
        %3842 = vmatprep.subr.mxu0 0.0
        %3843 = vmatpush1.msra.mxu0 0.0
        %3844 = vmatprep.subr.mxu0 0.0
        %3845 = vmatpush1.msra.mxu0 0.0
        %3846 = vmatprep.subr.mxu0 0.0
        %3847 = vmatpush1.msra.mxu0 0.0
        %3848 = vmatprep.subr.mxu0 0.0
        %3849 = vmatpush1.msra.mxu0 0.0
        %3850 = vmatprep.subr.mxu0 0.0
        %3851 = vmatpush1.msra.mxu0 0.0
        %3852 = vmatprep.subr.mxu0 0.0
        %3853 = vmatpush1.msra.mxu0 0.0
        %3854 = vmatprep.subr.mxu0 0.0
        %3855 = vmatpush1.msra.mxu0 0.0
        %3856 = vmatprep.subr.mxu0 0.0
        %3857 = vmatpush1.msra.mxu0 0.0
        %3858 = vmatprep.mubr.f32.mxu0 0.0
        %3859 = vmatmul.mubr.f32.gmra.mrb[0].mxu0 %v3781
        %v3860 = vpop.f32.mrb[0].mxu0
        %v3861 = vadd.f32 0.0, %v3860
        %v3862 = vpop.f32.mrb[0].mxu0
        %v3863 = vadd.f32 0.0, %v3862
        %3864 = vmatprep.mubr.f32.mxu0 0.0
        %3865 = vmatmul.mubr.f32.gmra.mrb[0].mxu0 %v3784
        %v3866 = vpop.f32.mrb[0].mxu0
        %v3867 = vadd.f32 0.0, %v3866
        %v3868 = vpop.f32.mrb[0].mxu0
        %v3869 = vadd.f32 0.0, %v3868
        %3870 = vmatprep.mubr.f32.mxu0 0.0
        %3871 = vmatmul.mubr.f32.gmra.mrb[0].mxu0 %v3787
        %v3872 = vpop.f32.mrb[0].mxu0
        %v3873 = vadd.f32 0.0, %v3872
        %v3874 = vpop.f32.mrb[0].mxu0
        %v3875 = vadd.f32 0.0, %v3874
        %3876 = vdwg.mxu0
        %v3877 = vadd.f32 %v3752, %v3861
        %v3878 = vadd.f32 %v3753, %v3863
        %v3879 = vadd.f32 %v3754, %v3867
        %v3880 = vadd.f32 %v3755, %v3869
        %v3881 = vadd.f32 %v3756, %v3873
        %v3882 = vadd.f32 %v3757, %v3875
        %v3883 = vld [vmem:[%s4] sm:$0xff]
        %v3884 = vld [vmem:[%s4 + $0x8] sm:$0xff]
        %v3885 = vld [vmem:[%s4 + $0x10] sm:$0xf]
        %3887 = vset.pattern.permute.xlu0 0
        %3888 = vperm.xlu0 %3887, %v3883
        %v3889 = vpop.permute.xlu0 %3888
        %3892 = vset.pattern.permute.xlu0 0
        %3893 = vperm.xlu0 %3892, %v3884
        %v3894 = vpop.permute.xlu0 %3893
        %3897 = vset.pattern.permute.xlu0 0
        %3898 = vperm.xlu0 %3897, %v3885
        %v3899 = vpop.permute.xlu0 %3898
        %v3901 = vadd.f32 %v3877, %v3889
        %v3902 = vadd.f32 %v3878, %v3889
        %v3903 = vadd.f32 %v3879, %v3894
        %v3904 = vadd.f32 %v3880, %v3894
        %v3905 = vadd.f32 %v3881, %v3899
        %v3906 = vadd.f32 %v3882, %v3899
        %3913 = vrot.lane.b32.xlu0 %v3901, 127
        %v3914 = vpop.permute.xlu0 %3913
        %3915 = vrot.lane.b32.xlu0 %v3902, 127
        %v3916 = vpop.permute.xlu0 %3915
        %3917 = vrot.lane.b32.xlu0 %v3903, 127
        %v3918 = vpop.permute.xlu0 %3917
        %3919 = vrot.lane.b32.xlu0 %v3904, 127
        %v3920 = vpop.permute.xlu0 %3919
        %3921 = vrot.lane.b32.xlu0 %v3905, 127
        %v3922 = vpop.permute.xlu0 %3921
        %3923 = vrot.lane.b32.xlu0 %v3906, 127
        %v3924 = vpop.permute.xlu0 %3923
        %v3925 = vsel %vm803, %v3914, %v3916
        %v3926 = vsel %vm803, %v3918, %v3920
        %v3927 = vsel %vm803, %v3922, %v3924
        %v3937 = vsel %vm803, %v3916, %v3914
        %v3938 = vsel %vm803, %v3920, %v3918
        %v3939 = vsel %vm803, %v3924, %v3922
        %v3940 = vmax.f32 %v3901, %v3925
        %v3941 = vmax.f32 %v3902, %v3937
        %v3942 = vmax.f32 %v3903, %v3926
        %v3943 = vmax.f32 %v3904, %v3938
        %v3944 = vmax.f32 %v3905, %v3927
        %v3945 = vmax.f32 %v3906, %v3939
        %3946 = vrot.lane.b32.xlu0 %v3901, 112
        %v3947 = vpop.permute.xlu0 %3946
        %3948 = vrot.lane.b32.xlu0 %v3902, 112
        %v3949 = vpop.permute.xlu0 %3948
        %3950 = vrot.lane.b32.xlu0 %v3903, 112
        %v3951 = vpop.permute.xlu0 %3950
        %3952 = vrot.lane.b32.xlu0 %v3904, 112
        %v3953 = vpop.permute.xlu0 %3952
        %3954 = vrot.lane.b32.xlu0 %v3905, 112
        %v3955 = vpop.permute.xlu0 %3954
        %3956 = vrot.lane.b32.xlu0 %v3906, 112
        %v3957 = vpop.permute.xlu0 %3956
        %v3958 = vsel %vm1395, %v3947, %v3949
        %v3959 = vsel %vm1395, %v3951, %v3953
        %v3960 = vsel %vm1395, %v3955, %v3957
        %v3970 = vsel %vm1395, %v3949, %v3947
        %v3971 = vsel %vm1395, %v3953, %v3951
        %v3972 = vsel %vm1395, %v3957, %v3955
        %3973 = vrot.lane.b32.xlu0 %v3901, 111
        %v3974 = vpop.permute.xlu0 %3973
        %3975 = vrot.lane.b32.xlu0 %v3902, 111
        %v3976 = vpop.permute.xlu0 %3975
        %3977 = vrot.lane.b32.xlu0 %v3903, 111
        %v3978 = vpop.permute.xlu0 %3977
        %3979 = vrot.lane.b32.xlu0 %v3904, 111
        %v3980 = vpop.permute.xlu0 %3979
        %3981 = vrot.lane.b32.xlu0 %v3905, 111
        %v3982 = vpop.permute.xlu0 %3981
        %3983 = vrot.lane.b32.xlu0 %v3906, 111
        %v3984 = vpop.permute.xlu0 %3983
        %v3985 = vsel %vm1520, %v3974, %v3976
        %v3986 = vsel %vm1520, %v3978, %v3980
        %v3987 = vsel %vm1520, %v3982, %v3984
        %v3997 = vsel %vm1520, %v3976, %v3974
        %v3998 = vsel %vm1520, %v3980, %v3978
        %v3999 = vsel %vm1520, %v3984, %v3982
        %v4000 = vmax.f32 %v3958, %v3985
        %v4001 = vmax.f32 %v3970, %v3997
        %v4002 = vmax.f32 %v3959, %v3986
        %v4003 = vmax.f32 %v3971, %v3998
        %v4004 = vmax.f32 %v3960, %v3987
        %v4005 = vmax.f32 %v3972, %v3999
        %v4006 = vmax.f32 %v3940, %v4000
        %v4007 = vmax.f32 %v3941, %v4001
        %v4008 = vmax.f32 %v3942, %v4002
        %v4009 = vmax.f32 %v3943, %v4003
        %v4010 = vmax.f32 %v3944, %v4004
        %v4011 = vmax.f32 %v3945, %v4005
        %v4012 = vmax.f32 %v4006, 0.0
        %v4013 = vmax.f32 %v4007, 0.0
        %v4014 = vmax.f32 %v4008, 0.0
        %v4015 = vmax.f32 %v4009, 0.0
        %v4016 = vmax.f32 %v4010, 0.0
        %v4017 = vmax.f32 %v4011, 0.0
        %v4020 = vrot.slane %v4012, 1
        %v4021 = vrot.slane %v4013, 1
        %v4024 = vrot.slane %v4012, 2
        %v4025 = vrot.slane %v4013, 2
        %v4028 = vrot.slane %v4012, 3
        %v4029 = vrot.slane %v4013, 3
        %v4032 = vrot.slane %v4012, 4
        %v4033 = vrot.slane %v4013, 4
        %v4036 = vrot.slane %v4012, 5
        %v4037 = vrot.slane %v4013, 5
        %v4040 = vrot.slane %v4012, 6
        %v4041 = vrot.slane %v4013, 6
        %v4044 = vrot.slane %v4012, 7
        %v4045 = vrot.slane %v4013, 7
        %v4050 = vrot.slane %v4014, 1
        %v4051 = vrot.slane %v4015, 1
        %v4054 = vrot.slane %v4014, 2
        %v4055 = vrot.slane %v4015, 2
        %v4058 = vrot.slane %v4014, 3
        %v4059 = vrot.slane %v4015, 3
        %v4062 = vrot.slane %v4014, 4
        %v4063 = vrot.slane %v4015, 4
        %v4066 = vrot.slane %v4014, 5
        %v4067 = vrot.slane %v4015, 5
        %v4070 = vrot.slane %v4014, 6
        %v4071 = vrot.slane %v4015, 6
        %v4074 = vrot.slane %v4014, 7
        %v4075 = vrot.slane %v4015, 7
        %v4080 = vrot.slane %v4016, 1
        %v4081 = vrot.slane %v4017, 1
        %v4084 = vrot.slane %v4016, 2
        %v4085 = vrot.slane %v4017, 2
        %v4088 = vrot.slane %v4016, 3
        %v4089 = vrot.slane %v4017, 3
        %v4092 = vld [vmem:[%s5] sm:$0xff]
        %v4093 = vld [vmem:[%s5 + $0x8] sm:$0xff]
        %v4094 = vld [vmem:[%s5 + $0x10] sm:$0xff]
        %v4095 = vld [vmem:[%s5 + $0x18] sm:$0xff]
        %v4096 = vld [vmem:[%s5 + $0x20] sm:$0xff]
        %v4097 = vld [vmem:[%s5 + $0x28] sm:$0xff]
        %v4098 = vld [vmem:[%s5 + $0x30] sm:$0xff]
        %v4099 = vld [vmem:[%s5 + $0x38] sm:$0xff]
        %v4100 = vld [vmem:[%s5 + $0x40] sm:$0xff]
        %v4101 = vld [vmem:[%s5 + $0x48] sm:$0xff]
        %v4102 = vld [vmem:[%s5 + $0x50] sm:$0xff]
        %v4103 = vld [vmem:[%s5 + $0x58] sm:$0xff]
        %v4104 = vld [vmem:[%s5 + $0x60] sm:$0xff]
        %v4105 = vld [vmem:[%s5 + $0x68] sm:$0xff]
        %v4106 = vld [vmem:[%s5 + $0x70] sm:$0xff]
        %v4107 = vld [vmem:[%s5 + $0x78] sm:$0xff]
        %v4108 = vld [vmem:[%s5 + $0x80] sm:$0xff]
        %v4109 = vld [vmem:[%s5 + $0x88] sm:$0xff]
        %v4110 = vld [vmem:[%s5 + $0x90] sm:$0xff]
        %v4111 = vld [vmem:[%s5 + $0x98] sm:$0xff]
        %v4112 = vld [vmem:[%s5 + $0xa0] sm:$0xff]
        %v4113 = vld [vmem:[%s5 + $0xa8] sm:$0xff]
        %v4114 = vld [vmem:[%s5 + $0xb0] sm:$0xff]
        %v4115 = vld [vmem:[%s5 + $0xb8] sm:$0xff]
        %v4116 = vld [vmem:[%s5 + $0xc0] sm:$0xff]
        %v4117 = vld [vmem:[%s5 + $0xc8] sm:$0xff]
        %v4118 = vld [vmem:[%s5 + $0xd0] sm:$0xff]
        %v4119 = vld [vmem:[%s5 + $0xd8] sm:$0xff]
        %v4120 = vld [vmem:[%s5 + $0xe0] sm:$0xff]
        %v4121 = vld [vmem:[%s5 + $0xe8] sm:$0xff]
        %v4122 = vld [vmem:[%s5 + $0xf0] sm:$0xff]
        %v4123 = vld [vmem:[%s5 + $0xf8] sm:$0xff]
        %v4124 = vld [vmem:[%s5 + $0x100] sm:$0xff]
        %v4125 = vld [vmem:[%s5 + $0x108] sm:$0xff]
        %v4126 = vld [vmem:[%s5 + $0x110] sm:$0xff]
        %v4127 = vld [vmem:[%s5 + $0x118] sm:$0xff]
        %v4128 = vld [vmem:[%s5 + $0x120] sm:$0xff]
        %v4129 = vld [vmem:[%s5 + $0x128] sm:$0xff]
        %v4130 = vld [vmem:[%s5 + $0x130] sm:$0xff]
        %v4131 = vld [vmem:[%s5 + $0x138] sm:$0xff]
        %v4132 = vld [vmem:[%s5 + $0x140] sm:$0xff]
        %v4133 = vld [vmem:[%s5 + $0x148] sm:$0xff]
        %v4134 = vld [vmem:[%s5 + $0x150] sm:$0xff]
        %v4135 = vld [vmem:[%s5 + $0x158] sm:$0xff]
        %v4136 = vld [vmem:[%s5 + $0x160] sm:$0xff]
        %v4137 = vld [vmem:[%s5 + $0x168] sm:$0xff]
        %v4138 = vld [vmem:[%s5 + $0x170] sm:$0xff]
        %v4139 = vld [vmem:[%s5 + $0x178] sm:$0xff]
        %v4140 = vld [vmem:[%s5 + $0x180] sm:$0xff]
        %v4141 = vld [vmem:[%s5 + $0x188] sm:$0xff]
        %v4142 = vld [vmem:[%s5 + $0x190] sm:$0xff]
        %v4143 = vld [vmem:[%s5 + $0x198] sm:$0xff]
        %v4144 = vld [vmem:[%s5 + $0x1a0] sm:$0xff]
        %v4145 = vld [vmem:[%s5 + $0x1a8] sm:$0xff]
        %v4146 = vld [vmem:[%s5 + $0x1b0] sm:$0xff]
        %v4147 = vld [vmem:[%s5 + $0x1b8] sm:$0xff]
        %v4148 = vld [vmem:[%s5 + $0x1c0] sm:$0xff]
        %v4149 = vld [vmem:[%s5 + $0x1c8] sm:$0xff]
        %v4150 = vld [vmem:[%s5 + $0x1d0] sm:$0xff]
        %v4151 = vld [vmem:[%s5 + $0x1d8] sm:$0xff]
        %v4152 = vld [vmem:[%s5 + $0x1e0] sm:$0xff]
        %v4153 = vld [vmem:[%s5 + $0x1e8] sm:$0xff]
        %v4154 = vld [vmem:[%s5 + $0x1f0] sm:$0xff]
        %v4155 = vld [vmem:[%s5 + $0x1f8] sm:$0xff]
        %v4156 = vld [vmem:[%s5 + $0x200] sm:$0xff]
        %v4157 = vld [vmem:[%s5 + $0x208] sm:$0xff]
        %v4158 = vld [vmem:[%s5 + $0x210] sm:$0xff]
        %v4159 = vld [vmem:[%s5 + $0x218] sm:$0xff]
        %v4160 = vld [vmem:[%s5 + $0x220] sm:$0xff]
        %v4161 = vld [vmem:[%s5 + $0x228] sm:$0xff]
        %v4162 = vld [vmem:[%s5 + $0x230] sm:$0xff]
        %v4163 = vld [vmem:[%s5 + $0x238] sm:$0xff]
        %v4164 = vld [vmem:[%s5 + $0x240] sm:$0xff]
        %v4165 = vld [vmem:[%s5 + $0x248] sm:$0xff]
        %v4166 = vld [vmem:[%s5 + $0x250] sm:$0xff]
        %v4167 = vld [vmem:[%s5 + $0x258] sm:$0xff]
        %v4168 = vld [vmem:[%s5 + $0x260] sm:$0xff]
        %v4169 = vld [vmem:[%s5 + $0x268] sm:$0xff]
        %v4170 = vld [vmem:[%s5 + $0x270] sm:$0xff]
        %v4171 = vld [vmem:[%s5 + $0x278] sm:$0xff]
        %v4172 = vld [vmem:[%s5 + $0x280] sm:$0xff]
        %v4173 = vld [vmem:[%s5 + $0x288] sm:$0xff]
        %v4174 = vld [vmem:[%s5 + $0x290] sm:$0xff]
        %v4175 = vld [vmem:[%s5 + $0x298] sm:$0xff]
        %v4176 = vld [vmem:[%s5 + $0x2a0] sm:$0xff]
        %v4177 = vld [vmem:[%s5 + $0x2a8] sm:$0xff]
        %v4178 = vld [vmem:[%s5 + $0x2b0] sm:$0xff]
        %v4179 = vld [vmem:[%s5 + $0x2b8] sm:$0xff]
        %v4180 = vld [vmem:[%s5 + $0x2c0] sm:$0xff]
        %v4181 = vld [vmem:[%s5 + $0x2c8] sm:$0xff]
        %v4182 = vld [vmem:[%s5 + $0x2d0] sm:$0xff]
        %v4183 = vld [vmem:[%s5 + $0x2d8] sm:$0xff]
        %v4184 = vld [vmem:[%s5 + $0x2e0] sm:$0xff]
        %v4185 = vld [vmem:[%s5 + $0x2e8] sm:$0xff]
        %v4186 = vld [vmem:[%s5 + $0x2f0] sm:$0xff]
        %v4187 = vld [vmem:[%s5 + $0x2f8] sm:$0xff]
        %v4188 = vld [vmem:[%s5 + $0x300] sm:$0xff]
        %v4189 = vld [vmem:[%s5 + $0x308] sm:$0xff]
        %v4190 = vld [vmem:[%s5 + $0x310] sm:$0xff]
        %v4191 = vld [vmem:[%s5 + $0x318] sm:$0xff]
        %v4192 = vld [vmem:[%s5 + $0x320] sm:$0xff]
        %v4193 = vld [vmem:[%s5 + $0x328] sm:$0xff]
        %v4194 = vld [vmem:[%s5 + $0x330] sm:$0xff]
        %v4195 = vld [vmem:[%s5 + $0x338] sm:$0xff]
        %v4196 = vld [vmem:[%s5 + $0x340] sm:$0xff]
        %v4197 = vld [vmem:[%s5 + $0x348] sm:$0xff]
        %v4198 = vld [vmem:[%s5 + $0x350] sm:$0xff]
        %v4199 = vld [vmem:[%s5 + $0x358] sm:$0xff]
        %v4200 = vld [vmem:[%s5 + $0x360] sm:$0xff]
        %v4201 = vld [vmem:[%s5 + $0x368] sm:$0xff]
        %v4202 = vld [vmem:[%s5 + $0x370] sm:$0xff]
        %v4203 = vld [vmem:[%s5 + $0x378] sm:$0xff]
        %v4204 = vld [vmem:[%s5 + $0x380] sm:$0xff]
        %v4205 = vld [vmem:[%s5 + $0x388] sm:$0xff]
        %v4206 = vld [vmem:[%s5 + $0x390] sm:$0xff]
        %v4207 = vld [vmem:[%s5 + $0x398] sm:$0xff]
        %v4208 = vld [vmem:[%s5 + $0x3a0] sm:$0xff]
        %v4209 = vld [vmem:[%s5 + $0x3a8] sm:$0xff]
        %v4210 = vld [vmem:[%s5 + $0x3b0] sm:$0xff]
        %v4211 = vld [vmem:[%s5 + $0x3b8] sm:$0xff]
        %v4212 = vld [vmem:[%s5 + $0x3c0] sm:$0xff]
        %v4213 = vld [vmem:[%s5 + $0x3c8] sm:$0xff]
        %v4214 = vld [vmem:[%s5 + $0x3d0] sm:$0xff]
        %v4215 = vld [vmem:[%s5 + $0x3d8] sm:$0xff]
        %v4216 = vld [vmem:[%s5 + $0x3e0] sm:$0xff]
        %v4217 = vld [vmem:[%s5 + $0x3e8] sm:$0xff]
        %v4218 = vld [vmem:[%s5 + $0x3f0] sm:$0xff]
        %v4219 = vld [vmem:[%s5 + $0x3f8] sm:$0xff]
        %v4220 = vld [vmem:[%s5 + $0x400] sm:$0xff]
        %v4221 = vld [vmem:[%s5 + $0x408] sm:$0xff]
        %v4222 = vld [vmem:[%s5 + $0x410] sm:$0xff]
        %v4223 = vld [vmem:[%s5 + $0x418] sm:$0xff]
        %v4224 = vld [vmem:[%s5 + $0x420] sm:$0xff]
        %v4225 = vld [vmem:[%s5 + $0x428] sm:$0xff]
        %v4226 = vld [vmem:[%s5 + $0x430] sm:$0xff]
        %v4227 = vld [vmem:[%s5 + $0x438] sm:$0xff]
        %v4228 = vld [vmem:[%s5 + $0x440] sm:$0xff]
        %v4229 = vld [vmem:[%s5 + $0x448] sm:$0xff]
        %v4230 = vld [vmem:[%s5 + $0x450] sm:$0xff]
        %v4231 = vld [vmem:[%s5 + $0x458] sm:$0xff]
        %v4232 = vld [vmem:[%s5 + $0x460] sm:$0xff]
        %v4233 = vld [vmem:[%s5 + $0x468] sm:$0xff]
        %v4234 = vld [vmem:[%s5 + $0x470] sm:$0xff]
        %v4235 = vld [vmem:[%s5 + $0x478] sm:$0xff]
        %v4236 = vld [vmem:[%s5 + $0x480] sm:$0xff]
        %v4237 = vld [vmem:[%s5 + $0x488] sm:$0xff]
        %v4238 = vld [vmem:[%s5 + $0x490] sm:$0xff]
        %v4239 = vld [vmem:[%s5 + $0x498] sm:$0xff]
        %v4240 = vld [vmem:[%s5 + $0x4a0] sm:$0xff]
        %v4241 = vld [vmem:[%s5 + $0x4a8] sm:$0xff]
        %v4242 = vld [vmem:[%s5 + $0x4b0] sm:$0xff]
        %v4243 = vld [vmem:[%s5 + $0x4b8] sm:$0xff]
        %v4244 = vld [vmem:[%s5 + $0x4c0] sm:$0xff]
        %v4245 = vld [vmem:[%s5 + $0x4c8] sm:$0xff]
        %v4246 = vld [vmem:[%s5 + $0x4d0] sm:$0xff]
        %v4247 = vld [vmem:[%s5 + $0x4d8] sm:$0xff]
        %v4248 = vld [vmem:[%s5 + $0x4e0] sm:$0xff]
        %v4249 = vld [vmem:[%s5 + $0x4e8] sm:$0xff]
        %v4250 = vld [vmem:[%s5 + $0x4f0] sm:$0xff]
        %v4251 = vld [vmem:[%s5 + $0x4f8] sm:$0xff]
        %v4252 = vld [vmem:[%s5 + $0x500] sm:$0xff]
        %v4253 = vld [vmem:[%s5 + $0x508] sm:$0xff]
        %v4254 = vld [vmem:[%s5 + $0x510] sm:$0xff]
        %v4255 = vld [vmem:[%s5 + $0x518] sm:$0xff]
        %v4256 = vld [vmem:[%s5 + $0x520] sm:$0xff]
        %v4257 = vld [vmem:[%s5 + $0x528] sm:$0xff]
        %v4258 = vld [vmem:[%s5 + $0x530] sm:$0xff]
        %v4259 = vld [vmem:[%s5 + $0x538] sm:$0xff]
        %v4260 = vld [vmem:[%s5 + $0x540] sm:$0xff]
        %v4261 = vld [vmem:[%s5 + $0x548] sm:$0xff]
        %v4262 = vld [vmem:[%s5 + $0x550] sm:$0xff]
        %v4263 = vld [vmem:[%s5 + $0x558] sm:$0xff]
        %v4264 = vld [vmem:[%s5 + $0x560] sm:$0xff]
        %v4265 = vld [vmem:[%s5 + $0x568] sm:$0xff]
        %v4266 = vld [vmem:[%s5 + $0x570] sm:$0xff]
        %v4267 = vld [vmem:[%s5 + $0x578] sm:$0xff]
        %v4268 = vld [vmem:[%s5 + $0x580] sm:$0xff]
        %v4269 = vld [vmem:[%s5 + $0x588] sm:$0xff]
        %v4270 = vld [vmem:[%s5 + $0x590] sm:$0xff]
        %v4271 = vld [vmem:[%s5 + $0x598] sm:$0xff]
        %v4272 = vld [vmem:[%s5 + $0x5a0] sm:$0xff]
        %v4273 = vld [vmem:[%s5 + $0x5a8] sm:$0xff]
        %v4274 = vld [vmem:[%s5 + $0x5b0] sm:$0xff]
        %v4275 = vld [vmem:[%s5 + $0x5b8] sm:$0xff]
        %v4276 = vld [vmem:[%s5 + $0x5c0] sm:$0xff]
        %v4277 = vld [vmem:[%s5 + $0x5c8] sm:$0xff]
        %v4278 = vld [vmem:[%s5 + $0x5d0] sm:$0xff]
        %v4279 = vld [vmem:[%s5 + $0x5d8] sm:$0xff]
        %v4280 = vld [vmem:[%s5 + $0x5e0] sm:$0xff]
        %v4281 = vld [vmem:[%s5 + $0x5e8] sm:$0xff]
        %v4282 = vld [vmem:[%s5 + $0x5f0] sm:$0xff]
        %v4283 = vld [vmem:[%s5 + $0x5f8] sm:$0xff]
        %v4284 = vld [vmem:[%s5 + $0x600] sm:$0xff]
        %v4285 = vld [vmem:[%s5 + $0x608] sm:$0xff]
        %v4286 = vld [vmem:[%s5 + $0x610] sm:$0xff]
        %v4287 = vld [vmem:[%s5 + $0x618] sm:$0xff]
        %v4288 = vld [vmem:[%s5 + $0x620] sm:$0xff]
        %v4289 = vld [vmem:[%s5 + $0x628] sm:$0xff]
        %v4290 = vld [vmem:[%s5 + $0x630] sm:$0xff]
        %v4291 = vld [vmem:[%s5 + $0x638] sm:$0xff]
        %v4292 = vld [vmem:[%s5 + $0x640] sm:$0xff]
        %v4293 = vld [vmem:[%s5 + $0x648] sm:$0xff]
        %v4294 = vld [vmem:[%s5 + $0x650] sm:$0xff]
        %v4295 = vld [vmem:[%s5 + $0x658] sm:$0xff]
        %v4296 = vld [vmem:[%s5 + $0x660] sm:$0xff]
        %v4297 = vld [vmem:[%s5 + $0x668] sm:$0xff]
        %v4298 = vld [vmem:[%s5 + $0x670] sm:$0xff]
        %v4299 = vld [vmem:[%s5 + $0x678] sm:$0xff]
        %v4300 = vld [vmem:[%s5 + $0x680] sm:$0xff]
        %v4301 = vld [vmem:[%s5 + $0x688] sm:$0xff]
        %v4302 = vld [vmem:[%s5 + $0x690] sm:$0xff]
        %v4303 = vld [vmem:[%s5 + $0x698] sm:$0xff]
        %v4304 = vld [vmem:[%s5 + $0x6a0] sm:$0xff]
        %v4305 = vld [vmem:[%s5 + $0x6a8] sm:$0xff]
        %v4306 = vld [vmem:[%s5 + $0x6b0] sm:$0xff]
        %v4307 = vld [vmem:[%s5 + $0x6b8] sm:$0xff]
        %v4308 = vld [vmem:[%s5 + $0x6c0] sm:$0xff]
        %v4309 = vld [vmem:[%s5 + $0x6c8] sm:$0xff]
        %v4310 = vld [vmem:[%s5 + $0x6d0] sm:$0xff]
        %v4311 = vld [vmem:[%s5 + $0x6d8] sm:$0xff]
        %v4312 = vld [vmem:[%s5 + $0x6e0] sm:$0xff]
        %v4313 = vld [vmem:[%s5 + $0x6e8] sm:$0xff]
        %v4314 = vld [vmem:[%s5 + $0x6f0] sm:$0xff]
        %v4315 = vld [vmem:[%s5 + $0x6f8] sm:$0xff]
        %v4316 = vld [vmem:[%s5 + $0x700] sm:$0xff]
        %v4317 = vld [vmem:[%s5 + $0x708] sm:$0xff]
        %v4318 = vld [vmem:[%s5 + $0x710] sm:$0xff]
        %v4319 = vld [vmem:[%s5 + $0x718] sm:$0xff]
        %v4320 = vld [vmem:[%s5 + $0x720] sm:$0xff]
        %v4321 = vld [vmem:[%s5 + $0x728] sm:$0xff]
        %v4322 = vld [vmem:[%s5 + $0x730] sm:$0xff]
        %v4323 = vld [vmem:[%s5 + $0x738] sm:$0xff]
        %v4324 = vld [vmem:[%s5 + $0x740] sm:$0xff]
        %v4325 = vld [vmem:[%s5 + $0x748] sm:$0xff]
        %v4326 = vld [vmem:[%s5 + $0x750] sm:$0xff]
        %v4327 = vld [vmem:[%s5 + $0x758] sm:$0xff]
        %v4328 = vld [vmem:[%s5 + $0x760] sm:$0xff]
        %v4329 = vld [vmem:[%s5 + $0x768] sm:$0xff]
        %v4330 = vld [vmem:[%s5 + $0x770] sm:$0xff]
        %v4331 = vld [vmem:[%s5 + $0x778] sm:$0xff]
        %v4332 = vld [vmem:[%s5 + $0x780] sm:$0xff]
        %v4333 = vld [vmem:[%s5 + $0x788] sm:$0xff]
        %v4334 = vld [vmem:[%s5 + $0x790] sm:$0xff]
        %v4335 = vld [vmem:[%s5 + $0x798] sm:$0xff]
        %v4336 = vld [vmem:[%s5 + $0x7a0] sm:$0xff]
        %v4337 = vld [vmem:[%s5 + $0x7a8] sm:$0xff]
        %v4338 = vld [vmem:[%s5 + $0x7b0] sm:$0xff]
        %v4339 = vld [vmem:[%s5 + $0x7b8] sm:$0xff]
        %v4340 = vld [vmem:[%s5 + $0x7c0] sm:$0xff]
        %v4341 = vld [vmem:[%s5 + $0x7c8] sm:$0xff]
        %v4342 = vld [vmem:[%s5 + $0x7d0] sm:$0xff]
        %v4343 = vld [vmem:[%s5 + $0x7d8] sm:$0xff]
        %v4344 = vld [vmem:[%s5 + $0x7e0] sm:$0xff]
        %v4345 = vld [vmem:[%s5 + $0x7e8] sm:$0xff]
        %v4346 = vld [vmem:[%s5 + $0x7f0] sm:$0xff]
        %v4347 = vld [vmem:[%s5 + $0x7f8] sm:$0xff]
        %v4348 = vld [vmem:[%s5 + $0x800] sm:$0xff]
        %v4349 = vld [vmem:[%s5 + $0x808] sm:$0xff]
        %v4350 = vld [vmem:[%s5 + $0x810] sm:$0xff]
        %v4351 = vld [vmem:[%s5 + $0x818] sm:$0xff]
        %v4352 = vld [vmem:[%s5 + $0x820] sm:$0xff]
        %v4353 = vld [vmem:[%s5 + $0x828] sm:$0xff]
        %v4354 = vld [vmem:[%s5 + $0x830] sm:$0xff]
        %v4355 = vld [vmem:[%s5 + $0x838] sm:$0xff]
        %v4356 = vld [vmem:[%s5 + $0x840] sm:$0xff]
        %v4357 = vld [vmem:[%s5 + $0x848] sm:$0xff]
        %v4358 = vld [vmem:[%s5 + $0x850] sm:$0xff]
        %v4359 = vld [vmem:[%s5 + $0x858] sm:$0xff]
        %v4360 = vld [vmem:[%s5 + $0x860] sm:$0xff]
        %v4361 = vld [vmem:[%s5 + $0x868] sm:$0xff]
        %v4362 = vld [vmem:[%s5 + $0x870] sm:$0xff]
        %v4363 = vld [vmem:[%s5 + $0x878] sm:$0xff]
        %v4364 = vld [vmem:[%s5 + $0x880] sm:$0xff]
        %v4365 = vld [vmem:[%s5 + $0x888] sm:$0xff]
        %v4366 = vld [vmem:[%s5 + $0x890] sm:$0xff]
        %v4367 = vld [vmem:[%s5 + $0x898] sm:$0xff]
        %v4368 = vld [vmem:[%s5 + $0x8a0] sm:$0xff]
        %v4369 = vld [vmem:[%s5 + $0x8a8] sm:$0xff]
        %v4370 = vld [vmem:[%s5 + $0x8b0] sm:$0xff]
        %v4371 = vld [vmem:[%s5 + $0x8b8] sm:$0xff]
        %v4372 = vld [vmem:[%s5 + $0x8c0] sm:$0xff]
        %v4373 = vld [vmem:[%s5 + $0x8c8] sm:$0xff]
        %v4374 = vld [vmem:[%s5 + $0x8d0] sm:$0xff]
        %v4375 = vld [vmem:[%s5 + $0x8d8] sm:$0xff]
        %v4376 = vld [vmem:[%s5 + $0x8e0] sm:$0xff]
        %v4377 = vld [vmem:[%s5 + $0x8e8] sm:$0xff]
        %v4378 = vld [vmem:[%s5 + $0x8f0] sm:$0xff]
        %v4379 = vld [vmem:[%s5 + $0x8f8] sm:$0xff]
        %v4380 = vld [vmem:[%s5 + $0x900] sm:$0xff]
        %v4381 = vld [vmem:[%s5 + $0x908] sm:$0xff]
        %v4382 = vld [vmem:[%s5 + $0x910] sm:$0xff]
        %v4383 = vld [vmem:[%s5 + $0x918] sm:$0xff]
        %v4384 = vld [vmem:[%s5 + $0x920] sm:$0xff]
        %v4385 = vld [vmem:[%s5 + $0x928] sm:$0xff]
        %v4386 = vld [vmem:[%s5 + $0x930] sm:$0xff]
        %v4387 = vld [vmem:[%s5 + $0x938] sm:$0xff]
        %v4388 = vld [vmem:[%s5 + $0x940] sm:$0xff]
        %v4389 = vld [vmem:[%s5 + $0x948] sm:$0xff]
        %v4390 = vld [vmem:[%s5 + $0x950] sm:$0xff]
        %v4391 = vld [vmem:[%s5 + $0x958] sm:$0xff]
        %v4392 = vld [vmem:[%s5 + $0x960] sm:$0xff]
        %v4393 = vld [vmem:[%s5 + $0x968] sm:$0xff]
        %v4394 = vld [vmem:[%s5 + $0x970] sm:$0xff]
        %v4395 = vld [vmem:[%s5 + $0x978] sm:$0xff]
        %v4396 = vld [vmem:[%s5 + $0x980] sm:$0xff]
        %v4397 = vld [vmem:[%s5 + $0x988] sm:$0xff]
        %v4398 = vld [vmem:[%s5 + $0x990] sm:$0xff]
        %v4399 = vld [vmem:[%s5 + $0x998] sm:$0xff]
        %v4400 = vld [vmem:[%s5 + $0x9a0] sm:$0xff]
        %v4401 = vld [vmem:[%s5 + $0x9a8] sm:$0xff]
        %v4402 = vld [vmem:[%s5 + $0x9b0] sm:$0xff]
        %v4403 = vld [vmem:[%s5 + $0x9b8] sm:$0xff]
        %v4404 = vld [vmem:[%s5 + $0x9c0] sm:$0xff]
        %v4405 = vld [vmem:[%s5 + $0x9c8] sm:$0xff]
        %v4406 = vld [vmem:[%s5 + $0x9d0] sm:$0xff]
        %v4407 = vld [vmem:[%s5 + $0x9d8] sm:$0xff]
        %v4408 = vld [vmem:[%s5 + $0x9e0] sm:$0xff]
        %v4409 = vld [vmem:[%s5 + $0x9e8] sm:$0xff]
        %v4410 = vld [vmem:[%s5 + $0x9f0] sm:$0xff]
        %v4411 = vld [vmem:[%s5 + $0x9f8] sm:$0xff]
        %v4412 = vld [vmem:[%s5 + $0xa00] sm:$0xff]
        %v4413 = vld [vmem:[%s5 + $0xa08] sm:$0xff]
        %v4414 = vld [vmem:[%s5 + $0xa10] sm:$0xff]
        %v4415 = vld [vmem:[%s5 + $0xa18] sm:$0xff]
        %v4416 = vld [vmem:[%s5 + $0xa20] sm:$0xff]
        %v4417 = vld [vmem:[%s5 + $0xa28] sm:$0xff]
        %v4418 = vld [vmem:[%s5 + $0xa30] sm:$0xff]
        %v4419 = vld [vmem:[%s5 + $0xa38] sm:$0xff]
        %v4420 = vld [vmem:[%s5 + $0xa40] sm:$0xff]
        %v4421 = vld [vmem:[%s5 + $0xa48] sm:$0xff]
        %v4422 = vld [vmem:[%s5 + $0xa50] sm:$0xff]
        %v4423 = vld [vmem:[%s5 + $0xa58] sm:$0xff]
        %v4424 = vld [vmem:[%s5 + $0xa60] sm:$0xff]
        %v4425 = vld [vmem:[%s5 + $0xa68] sm:$0xff]
        %v4426 = vld [vmem:[%s5 + $0xa70] sm:$0xff]
        %v4427 = vld [vmem:[%s5 + $0xa78] sm:$0xff]
        %v4428 = vld [vmem:[%s5 + $0xa80] sm:$0xff]
        %v4429 = vld [vmem:[%s5 + $0xa88] sm:$0xff]
        %v4430 = vld [vmem:[%s5 + $0xa90] sm:$0xff]
        %v4431 = vld [vmem:[%s5 + $0xa98] sm:$0xff]
        %v4432 = vld [vmem:[%s5 + $0xaa0] sm:$0xff]
        %v4433 = vld [vmem:[%s5 + $0xaa8] sm:$0xff]
        %v4434 = vld [vmem:[%s5 + $0xab0] sm:$0xff]
        %v4435 = vld [vmem:[%s5 + $0xab8] sm:$0xff]
        %v4436 = vld [vmem:[%s5 + $0xac0] sm:$0xff]
        %v4437 = vld [vmem:[%s5 + $0xac8] sm:$0xff]
        %v4438 = vld [vmem:[%s5 + $0xad0] sm:$0xff]
        %v4439 = vld [vmem:[%s5 + $0xad8] sm:$0xff]
        %v4440 = vld [vmem:[%s5 + $0xae0] sm:$0xff]
        %v4441 = vld [vmem:[%s5 + $0xae8] sm:$0xff]
        %v4442 = vld [vmem:[%s5 + $0xaf0] sm:$0xff]
        %v4443 = vld [vmem:[%s5 + $0xaf8] sm:$0xff]
        %v4444 = vld [vmem:[%s5 + $0xb00] sm:$0xff]
        %v4445 = vld [vmem:[%s5 + $0xb08] sm:$0xff]
        %v4446 = vld [vmem:[%s5 + $0xb10] sm:$0xff]
        %v4447 = vld [vmem:[%s5 + $0xb18] sm:$0xff]
        %v4448 = vld [vmem:[%s5 + $0xb20] sm:$0xff]
        %v4449 = vld [vmem:[%s5 + $0xb28] sm:$0xff]
        %v4450 = vld [vmem:[%s5 + $0xb30] sm:$0xff]
        %v4451 = vld [vmem:[%s5 + $0xb38] sm:$0xff]
        %v4452 = vld [vmem:[%s5 + $0xb40] sm:$0xff]
        %v4453 = vld [vmem:[%s5 + $0xb48] sm:$0xff]
        %v4454 = vld [vmem:[%s5 + $0xb50] sm:$0xff]
        %v4455 = vld [vmem:[%s5 + $0xb58] sm:$0xff]
        %v4456 = vld [vmem:[%s5 + $0xb60] sm:$0xff]
        %v4457 = vld [vmem:[%s5 + $0xb68] sm:$0xff]
        %v4458 = vld [vmem:[%s5 + $0xb70] sm:$0xff]
        %v4459 = vld [vmem:[%s5 + $0xb78] sm:$0xff]
        %v4460 = vld [vmem:[%s5 + $0xb80] sm:$0xff]
        %v4461 = vld [vmem:[%s5 + $0xb88] sm:$0xff]
        %v4462 = vld [vmem:[%s5 + $0xb90] sm:$0xff]
        %v4463 = vld [vmem:[%s5 + $0xb98] sm:$0xff]
        %v4464 = vld [vmem:[%s5 + $0xba0] sm:$0xff]
        %v4465 = vld [vmem:[%s5 + $0xba8] sm:$0xff]
        %v4466 = vld [vmem:[%s5 + $0xbb0] sm:$0xff]
        %v4467 = vld [vmem:[%s5 + $0xbb8] sm:$0xff]
        %v4468 = vld [vmem:[%s5 + $0xbc0] sm:$0xff]
        %v4469 = vld [vmem:[%s5 + $0xbc8] sm:$0xff]
        %v4470 = vld [vmem:[%s5 + $0xbd0] sm:$0xff]
        %v4471 = vld [vmem:[%s5 + $0xbd8] sm:$0xff]
        %v4472 = vld [vmem:[%s5 + $0xbe0] sm:$0xff]
        %v4473 = vld [vmem:[%s5 + $0xbe8] sm:$0xff]
        %v4474 = vld [vmem:[%s5 + $0xbf0] sm:$0xff]
        %v4475 = vld [vmem:[%s5 + $0xbf8] sm:$0xff]
        %v4476 = vld [vmem:[%s5 + $0xc00] sm:$0xff]
        %v4477 = vld [vmem:[%s5 + $0xc08] sm:$0xff]
        %v4478 = vld [vmem:[%s5 + $0xc10] sm:$0xff]
        %v4479 = vld [vmem:[%s5 + $0xc18] sm:$0xff]
        %v4480 = vld [vmem:[%s5 + $0xc20] sm:$0xff]
        %v4481 = vld [vmem:[%s5 + $0xc28] sm:$0xff]
        %v4482 = vld [vmem:[%s5 + $0xc30] sm:$0xff]
        %v4483 = vld [vmem:[%s5 + $0xc38] sm:$0xff]
        %v4484 = vld [vmem:[%s5 + $0xc40] sm:$0xff]
        %v4485 = vld [vmem:[%s5 + $0xc48] sm:$0xff]
        %v4486 = vld [vmem:[%s5 + $0xc50] sm:$0xff]
        %v4487 = vld [vmem:[%s5 + $0xc58] sm:$0xff]
        %v4488 = vld [vmem:[%s5 + $0xc60] sm:$0xff]
        %v4489 = vld [vmem:[%s5 + $0xc68] sm:$0xff]
        %v4490 = vld [vmem:[%s5 + $0xc70] sm:$0xff]
        %v4491 = vld [vmem:[%s5 + $0xc78] sm:$0xff]
        %v4492 = vld [vmem:[%s5 + $0xc80] sm:$0xff]
        %v4493 = vld [vmem:[%s5 + $0xc88] sm:$0xff]
        %v4494 = vld [vmem:[%s5 + $0xc90] sm:$0xff]
        %v4495 = vld [vmem:[%s5 + $0xc98] sm:$0xff]
        %v4496 = vld [vmem:[%s5 + $0xca0] sm:$0xff]
        %v4497 = vld [vmem:[%s5 + $0xca8] sm:$0xff]
        %v4498 = vld [vmem:[%s5 + $0xcb0] sm:$0xff]
        %v4499 = vld [vmem:[%s5 + $0xcb8] sm:$0xff]
        %v4500 = vld [vmem:[%s5 + $0xcc0] sm:$0xff]
        %v4501 = vld [vmem:[%s5 + $0xcc8] sm:$0xff]
        %v4502 = vld [vmem:[%s5 + $0xcd0] sm:$0xff]
        %v4503 = vld [vmem:[%s5 + $0xcd8] sm:$0xff]
        %v4504 = vld [vmem:[%s5 + $0xce0] sm:$0xff]
        %v4505 = vld [vmem:[%s5 + $0xce8] sm:$0xff]
        %v4506 = vld [vmem:[%s5 + $0xcf0] sm:$0xff]
        %v4507 = vld [vmem:[%s5 + $0xcf8] sm:$0xff]
        %v4508 = vld [vmem:[%s5 + $0xd00] sm:$0xff]
        %v4509 = vld [vmem:[%s5 + $0xd08] sm:$0xff]
        %v4510 = vld [vmem:[%s5 + $0xd10] sm:$0xff]
        %v4511 = vld [vmem:[%s5 + $0xd18] sm:$0xff]
        %v4512 = vld [vmem:[%s5 + $0xd20] sm:$0xff]
        %v4513 = vld [vmem:[%s5 + $0xd28] sm:$0xff]
        %v4514 = vld [vmem:[%s5 + $0xd30] sm:$0xff]
        %v4515 = vld [vmem:[%s5 + $0xd38] sm:$0xff]
        %v4516 = vld [vmem:[%s5 + $0xd40] sm:$0xff]
        %v4517 = vld [vmem:[%s5 + $0xd48] sm:$0xff]
        %v4518 = vld [vmem:[%s5 + $0xd50] sm:$0xff]
        %v4519 = vld [vmem:[%s5 + $0xd58] sm:$0xff]
        %v4520 = vld [vmem:[%s5 + $0xd60] sm:$0xff]
        %v4521 = vld [vmem:[%s5 + $0xd68] sm:$0xff]
        %v4522 = vld [vmem:[%s5 + $0xd70] sm:$0xff]
        %v4523 = vld [vmem:[%s5 + $0xd78] sm:$0xff]
        %v4524 = vld [vmem:[%s5 + $0xd80] sm:$0xff]
        %v4525 = vld [vmem:[%s5 + $0xd88] sm:$0xff]
        %v4526 = vld [vmem:[%s5 + $0xd90] sm:$0xff]
        %v4527 = vld [vmem:[%s5 + $0xd98] sm:$0xff]
        %v4528 = vld [vmem:[%s5 + $0xda0] sm:$0xff]
        %v4529 = vld [vmem:[%s5 + $0xda8] sm:$0xff]
        %v4530 = vld [vmem:[%s5 + $0xdb0] sm:$0xff]
        %v4531 = vld [vmem:[%s5 + $0xdb8] sm:$0xff]
        %v4532 = vld [vmem:[%s5 + $0xdc0] sm:$0xff]
        %v4533 = vld [vmem:[%s5 + $0xdc8] sm:$0xff]
        %v4534 = vld [vmem:[%s5 + $0xdd0] sm:$0xff]
        %v4535 = vld [vmem:[%s5 + $0xdd8] sm:$0xff]
        %v4536 = vld [vmem:[%s5 + $0xde0] sm:$0xff]
        %v4537 = vld [vmem:[%s5 + $0xde8] sm:$0xff]
        %v4538 = vld [vmem:[%s5 + $0xdf0] sm:$0xff]
        %v4539 = vld [vmem:[%s5 + $0xdf8] sm:$0xff]
        %v4540 = vld [vmem:[%s5 + $0xe00] sm:$0xff]
        %v4541 = vld [vmem:[%s5 + $0xe08] sm:$0xff]
        %v4542 = vld [vmem:[%s5 + $0xe10] sm:$0xff]
        %v4543 = vld [vmem:[%s5 + $0xe18] sm:$0xff]
        %v4544 = vld [vmem:[%s5 + $0xe20] sm:$0xff]
        %v4545 = vld [vmem:[%s5 + $0xe28] sm:$0xff]
        %v4546 = vld [vmem:[%s5 + $0xe30] sm:$0xff]
        %v4547 = vld [vmem:[%s5 + $0xe38] sm:$0xff]
        %v4548 = vld [vmem:[%s5 + $0xe40] sm:$0xff]
        %v4549 = vld [vmem:[%s5 + $0xe48] sm:$0xff]
        %v4550 = vld [vmem:[%s5 + $0xe50] sm:$0xff]
        %v4551 = vld [vmem:[%s5 + $0xe58] sm:$0xff]
        %v4552 = vld [vmem:[%s5 + $0xe60] sm:$0xff]
        %v4553 = vld [vmem:[%s5 + $0xe68] sm:$0xff]
        %v4554 = vld [vmem:[%s5 + $0xe70] sm:$0xff]
        %v4555 = vld [vmem:[%s5 + $0xe78] sm:$0xff]
        %v4556 = vld [vmem:[%s5 + $0xe80] sm:$0xff]
        %v4557 = vld [vmem:[%s5 + $0xe88] sm:$0xff]
        %v4558 = vld [vmem:[%s5 + $0xe90] sm:$0xff]
        %v4559 = vld [vmem:[%s5 + $0xe98] sm:$0xff]
        %v4560 = vld [vmem:[%s5 + $0xea0] sm:$0xff]
        %v4561 = vld [vmem:[%s5 + $0xea8] sm:$0xff]
        %v4562 = vld [vmem:[%s5 + $0xeb0] sm:$0xff]
        %v4563 = vld [vmem:[%s5 + $0xeb8] sm:$0xff]
        %v4564 = vld [vmem:[%s5 + $0xec0] sm:$0xff]
        %v4565 = vld [vmem:[%s5 + $0xec8] sm:$0xff]
        %v4566 = vld [vmem:[%s5 + $0xed0] sm:$0xff]
        %v4567 = vld [vmem:[%s5 + $0xed8] sm:$0xff]
        %v4568 = vld [vmem:[%s5 + $0xee0] sm:$0xff]
        %v4569 = vld [vmem:[%s5 + $0xee8] sm:$0xff]
        %v4570 = vld [vmem:[%s5 + $0xef0] sm:$0xff]
        %v4571 = vld [vmem:[%s5 + $0xef8] sm:$0xff]
        %v4572 = vld [vmem:[%s5 + $0xf00] sm:$0xff]
        %v4573 = vld [vmem:[%s5 + $0xf08] sm:$0xff]
        %v4574 = vld [vmem:[%s5 + $0xf10] sm:$0xff]
        %v4575 = vld [vmem:[%s5 + $0xf18] sm:$0xff]
        %v4576 = vld [vmem:[%s5 + $0xf20] sm:$0xff]
        %v4577 = vld [vmem:[%s5 + $0xf28] sm:$0xff]
        %v4578 = vld [vmem:[%s5 + $0xf30] sm:$0xff]
        %v4579 = vld [vmem:[%s5 + $0xf38] sm:$0xff]
        %v4580 = vld [vmem:[%s5 + $0xf40] sm:$0xff]
        %v4581 = vld [vmem:[%s5 + $0xf48] sm:$0xff]
        %v4582 = vld [vmem:[%s5 + $0xf50] sm:$0xff]
        %v4583 = vld [vmem:[%s5 + $0xf58] sm:$0xff]
        %v4584 = vld [vmem:[%s5 + $0xf60] sm:$0xff]
        %v4585 = vld [vmem:[%s5 + $0xf68] sm:$0xff]
        %v4586 = vld [vmem:[%s5 + $0xf70] sm:$0xff]
        %v4587 = vld [vmem:[%s5 + $0xf78] sm:$0xff]
        %v4588 = vld [vmem:[%s5 + $0xf80] sm:$0xff]
        %v4589 = vld [vmem:[%s5 + $0xf88] sm:$0xff]
        %v4590 = vld [vmem:[%s5 + $0xf90] sm:$0xff]
        %v4591 = vld [vmem:[%s5 + $0xf98] sm:$0xff]
        %v4592 = vld [vmem:[%s5 + $0xfa0] sm:$0xff]
        %v4593 = vld [vmem:[%s5 + $0xfa8] sm:$0xff]
        %v4594 = vld [vmem:[%s5 + $0xfb0] sm:$0xff]
        %v4595 = vld [vmem:[%s5 + $0xfb8] sm:$0xff]
        %v4596 = vld [vmem:[%s5 + $0xfc0] sm:$0xff]
        %v4597 = vld [vmem:[%s5 + $0xfc8] sm:$0xff]
        %v4598 = vld [vmem:[%s5 + $0xfd0] sm:$0xff]
        %v4599 = vld [vmem:[%s5 + $0xfd8] sm:$0xff]
        %v4600 = vld [vmem:[%s5 + $0xfe0] sm:$0xff]
        %v4601 = vld [vmem:[%s5 + $0xfe8] sm:$0xff]
        %v4602 = vld [vmem:[%s5 + $0xff0] sm:$0xff]
        %v4603 = vld [vmem:[%s5 + $0xff8] sm:$0xff]
        %v4604 = vld [vmem:[%s5 + $0x1000] sm:$0xff]
        %v4605 = vld [vmem:[%s5 + $0x1008] sm:$0xff]
        %v4606 = vld [vmem:[%s5 + $0x1010] sm:$0xff]
        %v4607 = vld [vmem:[%s5 + $0x1018] sm:$0xff]
        %v4608 = vld [vmem:[%s5 + $0x1020] sm:$0xff]
        %v4609 = vld [vmem:[%s5 + $0x1028] sm:$0xff]
        %v4610 = vld [vmem:[%s5 + $0x1030] sm:$0xff]
        %v4611 = vld [vmem:[%s5 + $0x1038] sm:$0xff]
        %v4612 = vld [vmem:[%s5 + $0x1040] sm:$0xff]
        %v4613 = vld [vmem:[%s5 + $0x1048] sm:$0xff]
        %v4614 = vld [vmem:[%s5 + $0x1050] sm:$0xff]
        %v4615 = vld [vmem:[%s5 + $0x1058] sm:$0xff]
        %v4616 = vld [vmem:[%s5 + $0x1060] sm:$0xff]
        %v4617 = vld [vmem:[%s5 + $0x1068] sm:$0xff]
        %v4618 = vld [vmem:[%s5 + $0x1070] sm:$0xff]
        %v4619 = vld [vmem:[%s5 + $0x1078] sm:$0xff]
        %v4620 = vld [vmem:[%s5 + $0x1080] sm:$0xff]
        %v4621 = vld [vmem:[%s5 + $0x1088] sm:$0xff]
        %v4622 = vld [vmem:[%s5 + $0x1090] sm:$0xff]
        %v4623 = vld [vmem:[%s5 + $0x1098] sm:$0xff]
        %v4624 = vld [vmem:[%s5 + $0x10a0] sm:$0xff]
        %v4625 = vld [vmem:[%s5 + $0x10a8] sm:$0xff]
        %v4626 = vld [vmem:[%s5 + $0x10b0] sm:$0xff]
        %v4627 = vld [vmem:[%s5 + $0x10b8] sm:$0xff]
        %v4628 = vld [vmem:[%s5 + $0x10c0] sm:$0xff]
        %v4629 = vld [vmem:[%s5 + $0x10c8] sm:$0xff]
        %v4630 = vld [vmem:[%s5 + $0x10d0] sm:$0xff]
        %v4631 = vld [vmem:[%s5 + $0x10d8] sm:$0xff]
        %v4632 = vld [vmem:[%s5 + $0x10e0] sm:$0xff]
        %v4633 = vld [vmem:[%s5 + $0x10e8] sm:$0xff]
        %v4634 = vld [vmem:[%s5 + $0x10f0] sm:$0xff]
        %v4635 = vld [vmem:[%s5 + $0x10f8] sm:$0xff]
        %v4636 = vld [vmem:[%s5 + $0x1100] sm:$0xff]
        %v4637 = vld [vmem:[%s5 + $0x1108] sm:$0xff]
        %v4638 = vld [vmem:[%s5 + $0x1110] sm:$0xff]
        %v4639 = vld [vmem:[%s5 + $0x1118] sm:$0xff]
        %v4640 = vld [vmem:[%s5 + $0x1120] sm:$0xff]
        %v4641 = vld [vmem:[%s5 + $0x1128] sm:$0xff]
        %v4642 = vld [vmem:[%s5 + $0x1130] sm:$0xff]
        %v4643 = vld [vmem:[%s5 + $0x1138] sm:$0xff]
        %v4644 = vld [vmem:[%s5 + $0x1140] sm:$0xff]
        %v4645 = vld [vmem:[%s5 + $0x1148] sm:$0xff]
        %v4646 = vld [vmem:[%s5 + $0x1150] sm:$0xff]
        %v4647 = vld [vmem:[%s5 + $0x1158] sm:$0xff]
        %v4648 = vld [vmem:[%s5 + $0x1160] sm:$0xff]
        %v4649 = vld [vmem:[%s5 + $0x1168] sm:$0xff]
        %v4650 = vld [vmem:[%s5 + $0x1170] sm:$0xff]
        %v4651 = vld [vmem:[%s5 + $0x1178] sm:$0xff]
        %v4652 = vld [vmem:[%s5 + $0x1180] sm:$0xff]
        %v4653 = vld [vmem:[%s5 + $0x1188] sm:$0xff]
        %v4654 = vld [vmem:[%s5 + $0x1190] sm:$0xff]
        %v4655 = vld [vmem:[%s5 + $0x1198] sm:$0xff]
        %v4656 = vld [vmem:[%s5 + $0x11a0] sm:$0xff]
        %v4657 = vld [vmem:[%s5 + $0x11a8] sm:$0xff]
        %v4658 = vld [vmem:[%s5 + $0x11b0] sm:$0xff]
        %v4659 = vld [vmem:[%s5 + $0x11b8] sm:$0xff]
        %v4660 = vld [vmem:[%s5 + $0x11c0] sm:$0xff]
        %v4661 = vld [vmem:[%s5 + $0x11c8] sm:$0xff]
        %v4662 = vld [vmem:[%s5 + $0x11d0] sm:$0xff]
        %v4663 = vld [vmem:[%s5 + $0x11d8] sm:$0xff]
        %v4664 = vld [vmem:[%s5 + $0x11e0] sm:$0xff]
        %v4665 = vld [vmem:[%s5 + $0x11e8] sm:$0xff]
        %v4666 = vld [vmem:[%s5 + $0x11f0] sm:$0xff]
        %v4667 = vld [vmem:[%s5 + $0x11f8] sm:$0xff]
        %v4668 = vld [vmem:[%s5 + $0x1200] sm:$0xff]
        %v4669 = vld [vmem:[%s5 + $0x1208] sm:$0xff]
        %v4670 = vld [vmem:[%s5 + $0x1210] sm:$0xff]
        %v4671 = vld [vmem:[%s5 + $0x1218] sm:$0xff]
        %v4672 = vld [vmem:[%s5 + $0x1220] sm:$0xff]
        %v4673 = vld [vmem:[%s5 + $0x1228] sm:$0xff]
        %v4674 = vld [vmem:[%s5 + $0x1230] sm:$0xff]
        %v4675 = vld [vmem:[%s5 + $0x1238] sm:$0xff]
        %v4676 = vld [vmem:[%s5 + $0x1240] sm:$0xff]
        %v4677 = vld [vmem:[%s5 + $0x1248] sm:$0xff]
        %v4678 = vld [vmem:[%s5 + $0x1250] sm:$0xff]
        %v4679 = vld [vmem:[%s5 + $0x1258] sm:$0xff]
        %v4680 = vld [vmem:[%s5 + $0x1260] sm:$0xff]
        %v4681 = vld [vmem:[%s5 + $0x1268] sm:$0xff]
        %v4682 = vld [vmem:[%s5 + $0x1270] sm:$0xff]
        %v4683 = vld [vmem:[%s5 + $0x1278] sm:$0xff]
        %v4684 = vld [vmem:[%s5 + $0x1280] sm:$0xff]
        %v4685 = vld [vmem:[%s5 + $0x1288] sm:$0xff]
        %v4686 = vld [vmem:[%s5 + $0x1290] sm:$0xff]
        %v4687 = vld [vmem:[%s5 + $0x1298] sm:$0xff]
        %v4688 = vld [vmem:[%s5 + $0x12a0] sm:$0xff]
        %v4689 = vld [vmem:[%s5 + $0x12a8] sm:$0xff]
        %v4690 = vld [vmem:[%s5 + $0x12b0] sm:$0xff]
        %v4691 = vld [vmem:[%s5 + $0x12b8] sm:$0xff]
        %v4692 = vld [vmem:[%s5 + $0x12c0] sm:$0xff]
        %v4693 = vld [vmem:[%s5 + $0x12c8] sm:$0xff]
        %v4694 = vld [vmem:[%s5 + $0x12d0] sm:$0xff]
        %v4695 = vld [vmem:[%s5 + $0x12d8] sm:$0xff]
        %v4696 = vld [vmem:[%s5 + $0x12e0] sm:$0xff]
        %v4697 = vld [vmem:[%s5 + $0x12e8] sm:$0xff]
        %v4698 = vld [vmem:[%s5 + $0x12f0] sm:$0xff]
        %v4699 = vld [vmem:[%s5 + $0x12f8] sm:$0xff]
        %v4700 = vld [vmem:[%s5 + $0x1300] sm:$0xff]
        %v4701 = vld [vmem:[%s5 + $0x1308] sm:$0xff]
        %v4702 = vld [vmem:[%s5 + $0x1310] sm:$0xff]
        %v4703 = vld [vmem:[%s5 + $0x1318] sm:$0xff]
        %v4704 = vld [vmem:[%s5 + $0x1320] sm:$0xff]
        %v4705 = vld [vmem:[%s5 + $0x1328] sm:$0xff]
        %v4706 = vld [vmem:[%s5 + $0x1330] sm:$0xff]
        %v4707 = vld [vmem:[%s5 + $0x1338] sm:$0xff]
        %v4708 = vld [vmem:[%s5 + $0x1340] sm:$0xff]
        %v4709 = vld [vmem:[%s5 + $0x1348] sm:$0xff]
        %v4710 = vld [vmem:[%s5 + $0x1350] sm:$0xff]
        %v4711 = vld [vmem:[%s5 + $0x1358] sm:$0xff]
        %v4712 = vld [vmem:[%s5 + $0x1360] sm:$0xff]
        %v4713 = vld [vmem:[%s5 + $0x1368] sm:$0xff]
        %v4714 = vld [vmem:[%s5 + $0x1370] sm:$0xff]
        %v4715 = vld [vmem:[%s5 + $0x1378] sm:$0xff]
        %v4716 = vld [vmem:[%s5 + $0x1380] sm:$0xff]
        %v4717 = vld [vmem:[%s5 + $0x1388] sm:$0xff]
        %v4718 = vld [vmem:[%s5 + $0x1390] sm:$0xff]
        %v4719 = vld [vmem:[%s5 + $0x1398] sm:$0xff]
        %v4720 = vld [vmem:[%s5 + $0x13a0] sm:$0xff]
        %v4721 = vld [vmem:[%s5 + $0x13a8] sm:$0xff]
        %v4722 = vld [vmem:[%s5 + $0x13b0] sm:$0xff]
        %v4723 = vld [vmem:[%s5 + $0x13b8] sm:$0xff]
        %v4724 = vld [vmem:[%s5 + $0x13c0] sm:$0xff]
        %v4725 = vld [vmem:[%s5 + $0x13c8] sm:$0xff]
        %v4726 = vld [vmem:[%s5 + $0x13d0] sm:$0xff]
        %v4727 = vld [vmem:[%s5 + $0x13d8] sm:$0xff]
        %v4728 = vld [vmem:[%s5 + $0x13e0] sm:$0xff]
        %v4729 = vld [vmem:[%s5 + $0x13e8] sm:$0xff]
        %v4730 = vld [vmem:[%s5 + $0x13f0] sm:$0xff]
        %v4731 = vld [vmem:[%s5 + $0x13f8] sm:$0xff]
        %v4732 = vld [vmem:[%s5 + $0x1400] sm:$0xff]
        %v4733 = vld [vmem:[%s5 + $0x1408] sm:$0xff]
        %v4734 = vld [vmem:[%s5 + $0x1410] sm:$0xff]
        %v4735 = vld [vmem:[%s5 + $0x1418] sm:$0xff]
        %v4736 = vld [vmem:[%s5 + $0x1420] sm:$0xff]
        %v4737 = vld [vmem:[%s5 + $0x1428] sm:$0xff]
        %v4738 = vld [vmem:[%s5 + $0x1430] sm:$0xff]
        %v4739 = vld [vmem:[%s5 + $0x1438] sm:$0xff]
        %v4740 = vld [vmem:[%s5 + $0x1440] sm:$0xff]
        %v4741 = vld [vmem:[%s5 + $0x1448] sm:$0xff]
        %v4742 = vld [vmem:[%s5 + $0x1450] sm:$0xff]
        %v4743 = vld [vmem:[%s5 + $0x1458] sm:$0xff]
        %v4744 = vld [vmem:[%s5 + $0x1460] sm:$0xff]
        %v4745 = vld [vmem:[%s5 + $0x1468] sm:$0xff]
        %v4746 = vld [vmem:[%s5 + $0x1470] sm:$0xff]
        %v4747 = vld [vmem:[%s5 + $0x1478] sm:$0xff]
        %v4748 = vld [vmem:[%s5 + $0x1480] sm:$0xff]
        %v4749 = vld [vmem:[%s5 + $0x1488] sm:$0xff]
        %v4750 = vld [vmem:[%s5 + $0x1490] sm:$0xff]
        %v4751 = vld [vmem:[%s5 + $0x1498] sm:$0xff]
        %v4752 = vld [vmem:[%s5 + $0x14a0] sm:$0xff]
        %v4753 = vld [vmem:[%s5 + $0x14a8] sm:$0xff]
        %v4754 = vld [vmem:[%s5 + $0x14b0] sm:$0xff]
        %v4755 = vld [vmem:[%s5 + $0x14b8] sm:$0xff]
        %v4756 = vld [vmem:[%s5 + $0x14c0] sm:$0xff]
        %v4757 = vld [vmem:[%s5 + $0x14c8] sm:$0xff]
        %v4758 = vld [vmem:[%s5 + $0x14d0] sm:$0xff]
        %v4759 = vld [vmem:[%s5 + $0x14d8] sm:$0xff]
        %v4760 = vld [vmem:[%s5 + $0x14e0] sm:$0xff]
        %v4761 = vld [vmem:[%s5 + $0x14e8] sm:$0xff]
        %v4762 = vld [vmem:[%s5 + $0x14f0] sm:$0xff]
        %v4763 = vld [vmem:[%s5 + $0x14f8] sm:$0xff]
        %v4764 = vld [vmem:[%s5 + $0x1500] sm:$0xff]
        %v4765 = vld [vmem:[%s5 + $0x1508] sm:$0xff]
        %v4766 = vld [vmem:[%s5 + $0x1510] sm:$0xff]
        %v4767 = vld [vmem:[%s5 + $0x1518] sm:$0xff]
        %v4768 = vld [vmem:[%s5 + $0x1520] sm:$0xff]
        %v4769 = vld [vmem:[%s5 + $0x1528] sm:$0xff]
        %v4770 = vld [vmem:[%s5 + $0x1530] sm:$0xff]
        %v4771 = vld [vmem:[%s5 + $0x1538] sm:$0xff]
        %v4772 = vld [vmem:[%s5 + $0x1540] sm:$0xff]
        %v4773 = vld [vmem:[%s5 + $0x1548] sm:$0xff]
        %v4774 = vld [vmem:[%s5 + $0x1550] sm:$0xff]
        %v4775 = vld [vmem:[%s5 + $0x1558] sm:$0xff]
        %v4776 = vld [vmem:[%s5 + $0x1560] sm:$0xff]
        %v4777 = vld [vmem:[%s5 + $0x1568] sm:$0xff]
        %v4778 = vld [vmem:[%s5 + $0x1570] sm:$0xff]
        %v4779 = vld [vmem:[%s5 + $0x1578] sm:$0xff]
        %v4780 = vld [vmem:[%s5 + $0x1580] sm:$0xff]
        %v4781 = vld [vmem:[%s5 + $0x1588] sm:$0xff]
        %v4782 = vld [vmem:[%s5 + $0x1590] sm:$0xff]
        %v4783 = vld [vmem:[%s5 + $0x1598] sm:$0xff]
        %v4784 = vld [vmem:[%s5 + $0x15a0] sm:$0xff]
        %v4785 = vld [vmem:[%s5 + $0x15a8] sm:$0xff]
        %v4786 = vld [vmem:[%s5 + $0x15b0] sm:$0xff]
        %v4787 = vld [vmem:[%s5 + $0x15b8] sm:$0xff]
        %v4788 = vld [vmem:[%s5 + $0x15c0] sm:$0xff]
        %v4789 = vld [vmem:[%s5 + $0x15c8] sm:$0xff]
        %v4790 = vld [vmem:[%s5 + $0x15d0] sm:$0xff]
        %v4791 = vld [vmem:[%s5 + $0x15d8] sm:$0xff]
        %v4792 = vld [vmem:[%s5 + $0x15e0] sm:$0xff]
        %v4793 = vld [vmem:[%s5 + $0x15e8] sm:$0xff]
        %v4794 = vld [vmem:[%s5 + $0x15f0] sm:$0xff]
        %v4795 = vld [vmem:[%s5 + $0x15f8] sm:$0xff]
        %v4796 = vld [vmem:[%s5 + $0x1600] sm:$0xff]
        %v4797 = vld [vmem:[%s5 + $0x1608] sm:$0xff]
        %v4798 = vld [vmem:[%s5 + $0x1610] sm:$0xff]
        %v4799 = vld [vmem:[%s5 + $0x1618] sm:$0xff]
        %v4800 = vld [vmem:[%s5 + $0x1620] sm:$0xff]
        %v4801 = vld [vmem:[%s5 + $0x1628] sm:$0xff]
        %v4802 = vld [vmem:[%s5 + $0x1630] sm:$0xff]
        %v4803 = vld [vmem:[%s5 + $0x1638] sm:$0xff]
        %v4804 = vld [vmem:[%s5 + $0x1640] sm:$0xff]
        %v4805 = vld [vmem:[%s5 + $0x1648] sm:$0xff]
        %v4806 = vld [vmem:[%s5 + $0x1650] sm:$0xff]
        %v4807 = vld [vmem:[%s5 + $0x1658] sm:$0xff]
        %v4808 = vld [vmem:[%s5 + $0x1660] sm:$0xff]
        %v4809 = vld [vmem:[%s5 + $0x1668] sm:$0xff]
        %v4810 = vld [vmem:[%s5 + $0x1670] sm:$0xff]
        %v4811 = vld [vmem:[%s5 + $0x1678] sm:$0xff]
        %v4812 = vld [vmem:[%s5 + $0x1680] sm:$0xff]
        %v4813 = vld [vmem:[%s5 + $0x1688] sm:$0xff]
        %v4814 = vld [vmem:[%s5 + $0x1690] sm:$0xff]
        %v4815 = vld [vmem:[%s5 + $0x1698] sm:$0xff]
        %v4816 = vld [vmem:[%s5 + $0x16a0] sm:$0xff]
        %v4817 = vld [vmem:[%s5 + $0x16a8] sm:$0xff]
        %v4818 = vld [vmem:[%s5 + $0x16b0] sm:$0xff]
        %v4819 = vld [vmem:[%s5 + $0x16b8] sm:$0xff]
        %v4820 = vld [vmem:[%s5 + $0x16c0] sm:$0xff]
        %v4821 = vld [vmem:[%s5 + $0x16c8] sm:$0xff]
        %v4822 = vld [vmem:[%s5 + $0x16d0] sm:$0xff]
        %v4823 = vld [vmem:[%s5 + $0x16d8] sm:$0xff]
        %v4824 = vld [vmem:[%s5 + $0x16e0] sm:$0xff]
        %v4825 = vld [vmem:[%s5 + $0x16e8] sm:$0xff]
        %v4826 = vld [vmem:[%s5 + $0x16f0] sm:$0xff]
        %v4827 = vld [vmem:[%s5 + $0x16f8] sm:$0xff]
        %v4828 = vld [vmem:[%s5 + $0x1700] sm:$0xff]
        %v4829 = vld [vmem:[%s5 + $0x1708] sm:$0xff]
        %v4830 = vld [vmem:[%s5 + $0x1710] sm:$0xff]
        %v4831 = vld [vmem:[%s5 + $0x1718] sm:$0xff]
        %v4832 = vld [vmem:[%s5 + $0x1720] sm:$0xff]
        %v4833 = vld [vmem:[%s5 + $0x1728] sm:$0xff]
        %v4834 = vld [vmem:[%s5 + $0x1730] sm:$0xff]
        %v4835 = vld [vmem:[%s5 + $0x1738] sm:$0xff]
        %v4836 = vld [vmem:[%s5 + $0x1740] sm:$0xff]
        %v4837 = vld [vmem:[%s5 + $0x1748] sm:$0xff]
        %v4838 = vld [vmem:[%s5 + $0x1750] sm:$0xff]
        %v4839 = vld [vmem:[%s5 + $0x1758] sm:$0xff]
        %v4840 = vld [vmem:[%s5 + $0x1760] sm:$0xff]
        %v4841 = vld [vmem:[%s5 + $0x1768] sm:$0xff]
        %v4842 = vld [vmem:[%s5 + $0x1770] sm:$0xff]
        %v4843 = vld [vmem:[%s5 + $0x1778] sm:$0xff]
        %v4844 = vld [vmem:[%s5 + $0x1780] sm:$0xff]
        %v4845 = vld [vmem:[%s5 + $0x1788] sm:$0xff]
        %v4846 = vld [vmem:[%s5 + $0x1790] sm:$0xff]
        %v4847 = vld [vmem:[%s5 + $0x1798] sm:$0xff]
        %v4848 = vld [vmem:[%s5 + $0x17a0] sm:$0xff]
        %v4849 = vld [vmem:[%s5 + $0x17a8] sm:$0xff]
        %v4850 = vld [vmem:[%s5 + $0x17b0] sm:$0xff]
        %v4851 = vld [vmem:[%s5 + $0x17b8] sm:$0xff]
        %v4852 = vld [vmem:[%s5 + $0x17c0] sm:$0xff]
        %v4853 = vld [vmem:[%s5 + $0x17c8] sm:$0xff]
        %v4854 = vld [vmem:[%s5 + $0x17d0] sm:$0xff]
        %v4855 = vld [vmem:[%s5 + $0x17d8] sm:$0xff]
        %v4856 = vld [vmem:[%s5 + $0x17e0] sm:$0xff]
        %v4857 = vld [vmem:[%s5 + $0x17e8] sm:$0xff]
        %v4858 = vld [vmem:[%s5 + $0x17f0] sm:$0xff]
        %v4859 = vld [vmem:[%s5 + $0x17f8] sm:$0xff]
        %v4860 = vld [vmem:[%s5 + $0x1800] sm:$0xff]
        %v4861 = vld [vmem:[%s5 + $0x1808] sm:$0xff]
        %v4862 = vld [vmem:[%s5 + $0x1810] sm:$0xff]
        %v4863 = vld [vmem:[%s5 + $0x1818] sm:$0xff]
        %v4864 = vld [vmem:[%s5 + $0x1820] sm:$0xff]
        %v4865 = vld [vmem:[%s5 + $0x1828] sm:$0xff]
        %v4866 = vld [vmem:[%s5 + $0x1830] sm:$0xff]
        %v4867 = vld [vmem:[%s5 + $0x1838] sm:$0xff]
        %v4868 = vld [vmem:[%s5 + $0x1840] sm:$0xff]
        %v4869 = vld [vmem:[%s5 + $0x1848] sm:$0xff]
        %v4870 = vld [vmem:[%s5 + $0x1850] sm:$0xff]
        %v4871 = vld [vmem:[%s5 + $0x1858] sm:$0xff]
        %v4872 = vld [vmem:[%s5 + $0x1860] sm:$0xff]
        %v4873 = vld [vmem:[%s5 + $0x1868] sm:$0xff]
        %v4874 = vld [vmem:[%s5 + $0x1870] sm:$0xff]
        %v4875 = vld [vmem:[%s5 + $0x1878] sm:$0xff]
        %v4876 = vld [vmem:[%s5 + $0x1880] sm:$0xff]
        %v4877 = vld [vmem:[%s5 + $0x1888] sm:$0xff]
        %v4878 = vld [vmem:[%s5 + $0x1890] sm:$0xff]
        %v4879 = vld [vmem:[%s5 + $0x1898] sm:$0xff]
        %v4880 = vld [vmem:[%s5 + $0x18a0] sm:$0xff]
        %v4881 = vld [vmem:[%s5 + $0x18a8] sm:$0xff]
        %v4882 = vld [vmem:[%s5 + $0x18b0] sm:$0xff]
        %v4883 = vld [vmem:[%s5 + $0x18b8] sm:$0xff]
        %v4884 = vld [vmem:[%s5 + $0x18c0] sm:$0xff]
        %v4885 = vld [vmem:[%s5 + $0x18c8] sm:$0xff]
        %v4886 = vld [vmem:[%s5 + $0x18d0] sm:$0xff]
        %v4887 = vld [vmem:[%s5 + $0x18d8] sm:$0xff]
        %v4888 = vld [vmem:[%s5 + $0x18e0] sm:$0xff]
        %v4889 = vld [vmem:[%s5 + $0x18e8] sm:$0xff]
        %v4890 = vld [vmem:[%s5 + $0x18f0] sm:$0xff]
        %v4891 = vld [vmem:[%s5 + $0x18f8] sm:$0xff]
        %v4892 = vld [vmem:[%s5 + $0x1900] sm:$0xff]
        %v4893 = vld [vmem:[%s5 + $0x1908] sm:$0xff]
        %v4894 = vld [vmem:[%s5 + $0x1910] sm:$0xff]
        %v4895 = vld [vmem:[%s5 + $0x1918] sm:$0xff]
        %v4896 = vld [vmem:[%s5 + $0x1920] sm:$0xff]
        %v4897 = vld [vmem:[%s5 + $0x1928] sm:$0xff]
        %v4898 = vld [vmem:[%s5 + $0x1930] sm:$0xff]
        %v4899 = vld [vmem:[%s5 + $0x1938] sm:$0xff]
        %v4900 = vld [vmem:[%s5 + $0x1940] sm:$0xff]
        %v4901 = vld [vmem:[%s5 + $0x1948] sm:$0xff]
        %v4902 = vld [vmem:[%s5 + $0x1950] sm:$0xff]
        %v4903 = vld [vmem:[%s5 + $0x1958] sm:$0xff]
        %v4904 = vld [vmem:[%s5 + $0x1960] sm:$0xff]
        %v4905 = vld [vmem:[%s5 + $0x1968] sm:$0xff]
        %v4906 = vld [vmem:[%s5 + $0x1970] sm:$0xff]
        %v4907 = vld [vmem:[%s5 + $0x1978] sm:$0xff]
        %v4908 = vld [vmem:[%s5 + $0x1980] sm:$0xff]
        %v4909 = vld [vmem:[%s5 + $0x1988] sm:$0xff]
        %v4910 = vld [vmem:[%s5 + $0x1990] sm:$0xff]
        %v4911 = vld [vmem:[%s5 + $0x1998] sm:$0xff]
        %v4912 = vld [vmem:[%s5 + $0x19a0] sm:$0xff]
        %v4913 = vld [vmem:[%s5 + $0x19a8] sm:$0xff]
        %v4914 = vld [vmem:[%s5 + $0x19b0] sm:$0xff]
        %v4915 = vld [vmem:[%s5 + $0x19b8] sm:$0xff]
        %v4916 = vld [vmem:[%s5 + $0x19c0] sm:$0xff]
        %v4917 = vld [vmem:[%s5 + $0x19c8] sm:$0xff]
        %v4918 = vld [vmem:[%s5 + $0x19d0] sm:$0xff]
        %v4919 = vld [vmem:[%s5 + $0x19d8] sm:$0xff]
        %v4920 = vld [vmem:[%s5 + $0x19e0] sm:$0xff]
        %v4921 = vld [vmem:[%s5 + $0x19e8] sm:$0xff]
        %v4922 = vld [vmem:[%s5 + $0x19f0] sm:$0xff]
        %v4923 = vld [vmem:[%s5 + $0x19f8] sm:$0xff]
        %v4924 = vld [vmem:[%s5 + $0x1a00] sm:$0xff]
        %v4925 = vld [vmem:[%s5 + $0x1a08] sm:$0xff]
        %v4926 = vld [vmem:[%s5 + $0x1a10] sm:$0xff]
        %v4927 = vld [vmem:[%s5 + $0x1a18] sm:$0xff]
        %v4928 = vld [vmem:[%s5 + $0x1a20] sm:$0xff]
        %v4929 = vld [vmem:[%s5 + $0x1a28] sm:$0xff]
        %v4930 = vld [vmem:[%s5 + $0x1a30] sm:$0xff]
        %v4931 = vld [vmem:[%s5 + $0x1a38] sm:$0xff]
        %v4932 = vld [vmem:[%s5 + $0x1a40] sm:$0xff]
        %v4933 = vld [vmem:[%s5 + $0x1a48] sm:$0xff]
        %v4934 = vld [vmem:[%s5 + $0x1a50] sm:$0xff]
        %v4935 = vld [vmem:[%s5 + $0x1a58] sm:$0xff]
        %v4936 = vld [vmem:[%s5 + $0x1a60] sm:$0xff]
        %v4937 = vld [vmem:[%s5 + $0x1a68] sm:$0xff]
        %v4938 = vld [vmem:[%s5 + $0x1a70] sm:$0xff]
        %v4939 = vld [vmem:[%s5 + $0x1a78] sm:$0xff]
        %v4940 = vld [vmem:[%s5 + $0x1a80] sm:$0xff]
        %v4941 = vld [vmem:[%s5 + $0x1a88] sm:$0xff]
        %v4942 = vld [vmem:[%s5 + $0x1a90] sm:$0xff]
        %v4943 = vld [vmem:[%s5 + $0x1a98] sm:$0xff]
        %v4944 = vld [vmem:[%s5 + $0x1aa0] sm:$0xff]
        %v4945 = vld [vmem:[%s5 + $0x1aa8] sm:$0xff]
        %v4946 = vld [vmem:[%s5 + $0x1ab0] sm:$0xff]
        %v4947 = vld [vmem:[%s5 + $0x1ab8] sm:$0xff]
        %v4948 = vld [vmem:[%s5 + $0x1ac0] sm:$0xff]
        %v4949 = vld [vmem:[%s5 + $0x1ac8] sm:$0xff]
        %v4950 = vld [vmem:[%s5 + $0x1ad0] sm:$0xff]
        %v4951 = vld [vmem:[%s5 + $0x1ad8] sm:$0xff]
        %v4952 = vld [vmem:[%s5 + $0x1ae0] sm:$0xff]
        %v4953 = vld [vmem:[%s5 + $0x1ae8] sm:$0xff]
        %v4954 = vld [vmem:[%s5 + $0x1af0] sm:$0xff]
        %v4955 = vld [vmem:[%s5 + $0x1af8] sm:$0xff]
        %v4956 = vld [vmem:[%s5 + $0x1b00] sm:$0xff]
        %v4957 = vld [vmem:[%s5 + $0x1b08] sm:$0xff]
        %v4958 = vld [vmem:[%s5 + $0x1b10] sm:$0xff]
        %v4959 = vld [vmem:[%s5 + $0x1b18] sm:$0xff]
        %v4960 = vld [vmem:[%s5 + $0x1b20] sm:$0xff]
        %v4961 = vld [vmem:[%s5 + $0x1b28] sm:$0xff]
        %v4962 = vld [vmem:[%s5 + $0x1b30] sm:$0xff]
        %v4963 = vld [vmem:[%s5 + $0x1b38] sm:$0xff]
        %v4964 = vld [vmem:[%s5 + $0x1b40] sm:$0xff]
        %v4965 = vld [vmem:[%s5 + $0x1b48] sm:$0xff]
        %v4966 = vld [vmem:[%s5 + $0x1b50] sm:$0xff]
        %v4967 = vld [vmem:[%s5 + $0x1b58] sm:$0xff]
        %v4968 = vld [vmem:[%s5 + $0x1b60] sm:$0xff]
        %v4969 = vld [vmem:[%s5 + $0x1b68] sm:$0xff]
        %v4970 = vld [vmem:[%s5 + $0x1b70] sm:$0xff]
        %v4971 = vld [vmem:[%s5 + $0x1b78] sm:$0xff]
        %v4972 = vld [vmem:[%s5 + $0x1b80] sm:$0xff]
        %v4973 = vld [vmem:[%s5 + $0x1b88] sm:$0xff]
        %v4974 = vld [vmem:[%s5 + $0x1b90] sm:$0xff]
        %v4975 = vld [vmem:[%s5 + $0x1b98] sm:$0xff]
        %v4976 = vld [vmem:[%s5 + $0x1ba0] sm:$0xff]
        %v4977 = vld [vmem:[%s5 + $0x1ba8] sm:$0xff]
        %v4978 = vld [vmem:[%s5 + $0x1bb0] sm:$0xff]
        %v4979 = vld [vmem:[%s5 + $0x1bb8] sm:$0xff]
        %v4980 = vld [vmem:[%s5 + $0x1bc0] sm:$0xff]
        %v4981 = vld [vmem:[%s5 + $0x1bc8] sm:$0xff]
        %v4982 = vld [vmem:[%s5 + $0x1bd0] sm:$0xff]
        %v4983 = vld [vmem:[%s5 + $0x1bd8] sm:$0xff]
        %v4984 = vld [vmem:[%s5 + $0x1be0] sm:$0xff]
        %v4985 = vld [vmem:[%s5 + $0x1be8] sm:$0xff]
        %v4986 = vld [vmem:[%s5 + $0x1bf0] sm:$0xff]
        %v4987 = vld [vmem:[%s5 + $0x1bf8] sm:$0xff]
        %v4988 = vld [vmem:[%s5 + $0x1c00] sm:$0xff]
        %v4989 = vld [vmem:[%s5 + $0x1c08] sm:$0xff]
        %v4990 = vld [vmem:[%s5 + $0x1c10] sm:$0xff]
        %v4991 = vld [vmem:[%s5 + $0x1c18] sm:$0xff]
        %v4992 = vld [vmem:[%s5 + $0x1c20] sm:$0xff]
        %v4993 = vld [vmem:[%s5 + $0x1c28] sm:$0xff]
        %v4994 = vld [vmem:[%s5 + $0x1c30] sm:$0xff]
        %v4995 = vld [vmem:[%s5 + $0x1c38] sm:$0xff]
        %v4996 = vld [vmem:[%s5 + $0x1c40] sm:$0xff]
        %v4997 = vld [vmem:[%s5 + $0x1c48] sm:$0xff]
        %v4998 = vld [vmem:[%s5 + $0x1c50] sm:$0xff]
        %v4999 = vld [vmem:[%s5 + $0x1c58] sm:$0xff]
        %v5000 = vld [vmem:[%s5 + $0x1c60] sm:$0xff]
        %v5001 = vld [vmem:[%s5 + $0x1c68] sm:$0xff]
        %v5002 = vld [vmem:[%s5 + $0x1c70] sm:$0xff]
        %v5003 = vld [vmem:[%s5 + $0x1c78] sm:$0xff]
        %v5004 = vld [vmem:[%s5 + $0x1c80] sm:$0xff]
        %v5005 = vld [vmem:[%s5 + $0x1c88] sm:$0xff]
        %v5006 = vld [vmem:[%s5 + $0x1c90] sm:$0xff]
        %v5007 = vld [vmem:[%s5 + $0x1c98] sm:$0xff]
        %v5008 = vld [vmem:[%s5 + $0x1ca0] sm:$0xff]
        %v5009 = vld [vmem:[%s5 + $0x1ca8] sm:$0xff]
        %v5010 = vld [vmem:[%s5 + $0x1cb0] sm:$0xff]
        %v5011 = vld [vmem:[%s5 + $0x1cb8] sm:$0xff]
        %v5012 = vld [vmem:[%s5 + $0x1cc0] sm:$0xff]
        %v5013 = vld [vmem:[%s5 + $0x1cc8] sm:$0xff]
        %v5014 = vld [vmem:[%s5 + $0x1cd0] sm:$0xff]
        %v5015 = vld [vmem:[%s5 + $0x1cd8] sm:$0xff]
        %v5016 = vld [vmem:[%s5 + $0x1ce0] sm:$0xff]
        %v5017 = vld [vmem:[%s5 + $0x1ce8] sm:$0xff]
        %v5018 = vld [vmem:[%s5 + $0x1cf0] sm:$0xff]
        %v5019 = vld [vmem:[%s5 + $0x1cf8] sm:$0xff]
        %v5020 = vld [vmem:[%s5 + $0x1d00] sm:$0xff]
        %v5021 = vld [vmem:[%s5 + $0x1d08] sm:$0xff]
        %v5022 = vld [vmem:[%s5 + $0x1d10] sm:$0xff]
        %v5023 = vld [vmem:[%s5 + $0x1d18] sm:$0xff]
        %v5024 = vld [vmem:[%s5 + $0x1d20] sm:$0xff]
        %v5025 = vld [vmem:[%s5 + $0x1d28] sm:$0xff]
        %v5026 = vld [vmem:[%s5 + $0x1d30] sm:$0xff]
        %v5027 = vld [vmem:[%s5 + $0x1d38] sm:$0xff]
        %v5028 = vld [vmem:[%s5 + $0x1d40] sm:$0xff]
        %v5029 = vld [vmem:[%s5 + $0x1d48] sm:$0xff]
        %v5030 = vld [vmem:[%s5 + $0x1d50] sm:$0xff]
        %v5031 = vld [vmem:[%s5 + $0x1d58] sm:$0xff]
        %v5032 = vld [vmem:[%s5 + $0x1d60] sm:$0xff]
        %v5033 = vld [vmem:[%s5 + $0x1d68] sm:$0xff]
        %v5034 = vld [vmem:[%s5 + $0x1d70] sm:$0xff]
        %v5035 = vld [vmem:[%s5 + $0x1d78] sm:$0xff]
        %v5036 = vld [vmem:[%s5 + $0x1d80] sm:$0xff]
        %v5037 = vld [vmem:[%s5 + $0x1d88] sm:$0xff]
        %v5038 = vld [vmem:[%s5 + $0x1d90] sm:$0xff]
        %v5039 = vld [vmem:[%s5 + $0x1d98] sm:$0xff]
        %v5040 = vld [vmem:[%s5 + $0x1da0] sm:$0xff]
        %v5041 = vld [vmem:[%s5 + $0x1da8] sm:$0xff]
        %v5042 = vld [vmem:[%s5 + $0x1db0] sm:$0xff]
        %v5043 = vld [vmem:[%s5 + $0x1db8] sm:$0xff]
        %v5044 = vld [vmem:[%s5 + $0x1dc0] sm:$0xff]
        %v5045 = vld [vmem:[%s5 + $0x1dc8] sm:$0xff]
        %v5046 = vld [vmem:[%s5 + $0x1dd0] sm:$0xff]
        %v5047 = vld [vmem:[%s5 + $0x1dd8] sm:$0xff]
        %v5048 = vld [vmem:[%s5 + $0x1de0] sm:$0xff]
        %v5049 = vld [vmem:[%s5 + $0x1de8] sm:$0xff]
        %v5050 = vld [vmem:[%s5 + $0x1df0] sm:$0xff]
        %v5051 = vld [vmem:[%s5 + $0x1df8] sm:$0xff]
        %v5052 = vld [vmem:[%s5 + $0x1e00] sm:$0xff]
        %v5053 = vld [vmem:[%s5 + $0x1e08] sm:$0xff]
        %v5054 = vld [vmem:[%s5 + $0x1e10] sm:$0xff]
        %v5055 = vld [vmem:[%s5 + $0x1e18] sm:$0xff]
        %v5056 = vld [vmem:[%s5 + $0x1e20] sm:$0xff]
        %v5057 = vld [vmem:[%s5 + $0x1e28] sm:$0xff]
        %v5058 = vld [vmem:[%s5 + $0x1e30] sm:$0xff]
        %v5059 = vld [vmem:[%s5 + $0x1e38] sm:$0xff]
        %v5060 = vld [vmem:[%s5 + $0x1e40] sm:$0xff]
        %v5061 = vld [vmem:[%s5 + $0x1e48] sm:$0xff]
        %v5062 = vld [vmem:[%s5 + $0x1e50] sm:$0xff]
        %v5063 = vld [vmem:[%s5 + $0x1e58] sm:$0xff]
        %v5064 = vld [vmem:[%s5 + $0x1e60] sm:$0xff]
        %v5065 = vld [vmem:[%s5 + $0x1e68] sm:$0xff]
        %v5066 = vld [vmem:[%s5 + $0x1e70] sm:$0xff]
        %v5067 = vld [vmem:[%s5 + $0x1e78] sm:$0xff]
        %v5068 = vld [vmem:[%s5 + $0x1e80] sm:$0xff]
        %v5069 = vld [vmem:[%s5 + $0x1e88] sm:$0xff]
        %v5070 = vld [vmem:[%s5 + $0x1e90] sm:$0xff]
        %v5071 = vld [vmem:[%s5 + $0x1e98] sm:$0xff]
        %v5072 = vld [vmem:[%s5 + $0x1ea0] sm:$0xff]
        %v5073 = vld [vmem:[%s5 + $0x1ea8] sm:$0xff]
        %v5074 = vld [vmem:[%s5 + $0x1eb0] sm:$0xff]
        %v5075 = vld [vmem:[%s5 + $0x1eb8] sm:$0xff]
        %v5076 = vld [vmem:[%s5 + $0x1ec0] sm:$0xff]
        %v5077 = vld [vmem:[%s5 + $0x1ec8] sm:$0xff]
        %v5078 = vld [vmem:[%s5 + $0x1ed0] sm:$0xff]
        %v5079 = vld [vmem:[%s5 + $0x1ed8] sm:$0xff]
        %v5080 = vld [vmem:[%s5 + $0x1ee0] sm:$0xff]
        %v5081 = vld [vmem:[%s5 + $0x1ee8] sm:$0xff]
        %v5082 = vld [vmem:[%s5 + $0x1ef0] sm:$0xff]
        %v5083 = vld [vmem:[%s5 + $0x1ef8] sm:$0xff]
        %v5084 = vld [vmem:[%s5 + $0x1f00] sm:$0xff]
        %v5085 = vld [vmem:[%s5 + $0x1f08] sm:$0xff]
        %v5086 = vld [vmem:[%s5 + $0x1f10] sm:$0xff]
        %v5087 = vld [vmem:[%s5 + $0x1f18] sm:$0xff]
        %v5088 = vld [vmem:[%s5 + $0x1f20] sm:$0xff]
        %v5089 = vld [vmem:[%s5 + $0x1f28] sm:$0xff]
        %v5090 = vld [vmem:[%s5 + $0x1f30] sm:$0xff]
        %v5091 = vld [vmem:[%s5 + $0x1f38] sm:$0xff]
        %v5092 = vld [vmem:[%s5 + $0x1f40] sm:$0xff]
        %v5093 = vld [vmem:[%s5 + $0x1f48] sm:$0xff]
        %v5094 = vld [vmem:[%s5 + $0x1f50] sm:$0xff]
        %v5095 = vld [vmem:[%s5 + $0x1f58] sm:$0xff]
        %v5096 = vld [vmem:[%s5 + $0x1f60] sm:$0xff]
        %v5097 = vld [vmem:[%s5 + $0x1f68] sm:$0xff]
        %v5098 = vld [vmem:[%s5 + $0x1f70] sm:$0xff]
        %v5099 = vld [vmem:[%s5 + $0x1f78] sm:$0xff]
        %v5100 = vld [vmem:[%s5 + $0x1f80] sm:$0xff]
        %v5101 = vld [vmem:[%s5 + $0x1f88] sm:$0xff]
        %v5102 = vld [vmem:[%s5 + $0x1f90] sm:$0xff]
        %v5103 = vld [vmem:[%s5 + $0x1f98] sm:$0xff]
        %v5104 = vld [vmem:[%s5 + $0x1fa0] sm:$0xff]
        %v5105 = vld [vmem:[%s5 + $0x1fa8] sm:$0xff]
        %v5106 = vld [vmem:[%s5 + $0x1fb0] sm:$0xff]
        %v5107 = vld [vmem:[%s5 + $0x1fb8] sm:$0xff]
        %v5108 = vld [vmem:[%s5 + $0x1fc0] sm:$0xff]
        %v5109 = vld [vmem:[%s5 + $0x1fc8] sm:$0xff]
        %v5110 = vld [vmem:[%s5 + $0x1fd0] sm:$0xff]
        %v5111 = vld [vmem:[%s5 + $0x1fd8] sm:$0xff]
        %v5112 = vld [vmem:[%s5 + $0x1fe0] sm:$0xff]
        %v5113 = vld [vmem:[%s5 + $0x1fe8] sm:$0xff]
        %v5114 = vld [vmem:[%s5 + $0x1ff0] sm:$0xff]
        %v5115 = vld [vmem:[%s5 + $0x1ff8] sm:$0xff]
        %v5116 = vld [vmem:[%s5 + $0x2000] sm:$0xff]
        %v5117 = vld [vmem:[%s5 + $0x2008] sm:$0xff]
        %v5118 = vld [vmem:[%s5 + $0x2010] sm:$0xff]
        %v5119 = vld [vmem:[%s5 + $0x2018] sm:$0xff]
        %v5120 = vld [vmem:[%s5 + $0x2020] sm:$0xff]
        %v5121 = vld [vmem:[%s5 + $0x2028] sm:$0xff]
        %v5122 = vld [vmem:[%s5 + $0x2030] sm:$0xff]
        %v5123 = vld [vmem:[%s5 + $0x2038] sm:$0xff]
        %v5124 = vld [vmem:[%s5 + $0x2040] sm:$0xff]
        %v5125 = vld [vmem:[%s5 + $0x2048] sm:$0xff]
        %v5126 = vld [vmem:[%s5 + $0x2050] sm:$0xff]
        %v5127 = vld [vmem:[%s5 + $0x2058] sm:$0xff]
        %v5128 = vld [vmem:[%s5 + $0x2060] sm:$0xff]
        %v5129 = vld [vmem:[%s5 + $0x2068] sm:$0xff]
        %v5130 = vld [vmem:[%s5 + $0x2070] sm:$0xff]
        %v5131 = vld [vmem:[%s5 + $0x2078] sm:$0xff]
        %v5132 = vld [vmem:[%s5 + $0x2080] sm:$0xff]
        %v5133 = vld [vmem:[%s5 + $0x2088] sm:$0xff]
        %v5134 = vld [vmem:[%s5 + $0x2090] sm:$0xff]
        %v5135 = vld [vmem:[%s5 + $0x2098] sm:$0xff]
        %v5136 = vld [vmem:[%s5 + $0x20a0] sm:$0xff]
        %v5137 = vld [vmem:[%s5 + $0x20a8] sm:$0xff]
        %v5138 = vld [vmem:[%s5 + $0x20b0] sm:$0xff]
        %v5139 = vld [vmem:[%s5 + $0x20b8] sm:$0xff]
        %v5140 = vld [vmem:[%s5 + $0x20c0] sm:$0xff]
        %v5141 = vld [vmem:[%s5 + $0x20c8] sm:$0xff]
        %v5142 = vld [vmem:[%s5 + $0x20d0] sm:$0xff]
        %v5143 = vld [vmem:[%s5 + $0x20d8] sm:$0xff]
        %v5144 = vld [vmem:[%s5 + $0x20e0] sm:$0xff]
        %v5145 = vld [vmem:[%s5 + $0x20e8] sm:$0xff]
        %v5146 = vld [vmem:[%s5 + $0x20f0] sm:$0xff]
        %v5147 = vld [vmem:[%s5 + $0x20f8] sm:$0xff]
        %v5148 = vld [vmem:[%s5 + $0x2100] sm:$0xff]
        %v5149 = vld [vmem:[%s5 + $0x2108] sm:$0xff]
        %v5150 = vld [vmem:[%s5 + $0x2110] sm:$0xff]
        %v5151 = vld [vmem:[%s5 + $0x2118] sm:$0xff]
        %v5152 = vld [vmem:[%s5 + $0x2120] sm:$0xff]
        %v5153 = vld [vmem:[%s5 + $0x2128] sm:$0xff]
        %v5154 = vld [vmem:[%s5 + $0x2130] sm:$0xff]
        %v5155 = vld [vmem:[%s5 + $0x2138] sm:$0xff]
        %v5156 = vld [vmem:[%s5 + $0x2140] sm:$0xff]
        %v5157 = vld [vmem:[%s5 + $0x2148] sm:$0xff]
        %v5158 = vld [vmem:[%s5 + $0x2150] sm:$0xff]
        %v5159 = vld [vmem:[%s5 + $0x2158] sm:$0xff]
        %v5160 = vld [vmem:[%s5 + $0x2160] sm:$0xff]
        %v5161 = vld [vmem:[%s5 + $0x2168] sm:$0xff]
        %v5162 = vld [vmem:[%s5 + $0x2170] sm:$0xff]
        %v5163 = vld [vmem:[%s5 + $0x2178] sm:$0xff]
        %v5164 = vld [vmem:[%s5 + $0x2180] sm:$0xff]
        %v5165 = vld [vmem:[%s5 + $0x2188] sm:$0xff]
        %v5166 = vld [vmem:[%s5 + $0x2190] sm:$0xff]
        %v5167 = vld [vmem:[%s5 + $0x2198] sm:$0xff]
        %v5168 = vld [vmem:[%s5 + $0x21a0] sm:$0xff]
        %v5169 = vld [vmem:[%s5 + $0x21a8] sm:$0xff]
        %v5170 = vld [vmem:[%s5 + $0x21b0] sm:$0xff]
        %v5171 = vld [vmem:[%s5 + $0x21b8] sm:$0xff]
        %v5172 = vld [vmem:[%s5 + $0x21c0] sm:$0xff]
        %v5173 = vld [vmem:[%s5 + $0x21c8] sm:$0xff]
        %v5174 = vld [vmem:[%s5 + $0x21d0] sm:$0xff]
        %v5175 = vld [vmem:[%s5 + $0x21d8] sm:$0xff]
        %v5176 = vld [vmem:[%s5 + $0x21e0] sm:$0xff]
        %v5177 = vld [vmem:[%s5 + $0x21e8] sm:$0xff]
        %v5178 = vld [vmem:[%s5 + $0x21f0] sm:$0xff]
        %v5179 = vld [vmem:[%s5 + $0x21f8] sm:$0xff]
        %v5180 = vld [vmem:[%s5 + $0x2200] sm:$0xff]
        %v5181 = vld [vmem:[%s5 + $0x2208] sm:$0xff]
        %v5182 = vld [vmem:[%s5 + $0x2210] sm:$0xff]
        %v5183 = vld [vmem:[%s5 + $0x2218] sm:$0xff]
        %v5184 = vld [vmem:[%s5 + $0x2220] sm:$0xff]
        %v5185 = vld [vmem:[%s5 + $0x2228] sm:$0xff]
        %v5186 = vld [vmem:[%s5 + $0x2230] sm:$0xff]
        %v5187 = vld [vmem:[%s5 + $0x2238] sm:$0xff]
        %v5188 = vld [vmem:[%s5 + $0x2240] sm:$0xff]
        %v5189 = vld [vmem:[%s5 + $0x2248] sm:$0xff]
        %v5190 = vld [vmem:[%s5 + $0x2250] sm:$0xff]
        %v5191 = vld [vmem:[%s5 + $0x2258] sm:$0xff]
        %v5192 = vld [vmem:[%s5 + $0x2260] sm:$0xff]
        %v5193 = vld [vmem:[%s5 + $0x2268] sm:$0xff]
        %v5194 = vld [vmem:[%s5 + $0x2270] sm:$0xff]
        %v5195 = vld [vmem:[%s5 + $0x2278] sm:$0xff]
        %v5196 = vld [vmem:[%s5 + $0x2280] sm:$0xff]
        %v5197 = vld [vmem:[%s5 + $0x2288] sm:$0xff]
        %v5198 = vld [vmem:[%s5 + $0x2290] sm:$0xff]
        %v5199 = vld [vmem:[%s5 + $0x2298] sm:$0xff]
        %v5200 = vld [vmem:[%s5 + $0x22a0] sm:$0xff]
        %v5201 = vld [vmem:[%s5 + $0x22a8] sm:$0xff]
        %v5202 = vld [vmem:[%s5 + $0x22b0] sm:$0xff]
        %v5203 = vld [vmem:[%s5 + $0x22b8] sm:$0xff]
        %v5204 = vld [vmem:[%s5 + $0x22c0] sm:$0xff]
        %v5205 = vld [vmem:[%s5 + $0x22c8] sm:$0xff]
        %v5206 = vld [vmem:[%s5 + $0x22d0] sm:$0xff]
        %v5207 = vld [vmem:[%s5 + $0x22d8] sm:$0xff]
        %v5208 = vld [vmem:[%s5 + $0x22e0] sm:$0xff]
        %v5209 = vld [vmem:[%s5 + $0x22e8] sm:$0xff]
        %v5210 = vld [vmem:[%s5 + $0x22f0] sm:$0xff]
        %v5211 = vld [vmem:[%s5 + $0x22f8] sm:$0xff]
        %v5212 = vld [vmem:[%s5 + $0x2300] sm:$0xff]
        %v5213 = vld [vmem:[%s5 + $0x2308] sm:$0xff]
        %v5214 = vld [vmem:[%s5 + $0x2310] sm:$0xff]
        %v5215 = vld [vmem:[%s5 + $0x2318] sm:$0xff]
        %v5216 = vld [vmem:[%s5 + $0x2320] sm:$0xff]
        %v5217 = vld [vmem:[%s5 + $0x2328] sm:$0xff]
        %v5218 = vld [vmem:[%s5 + $0x2330] sm:$0xff]
        %v5219 = vld [vmem:[%s5 + $0x2338] sm:$0xff]
        %v5220 = vld [vmem:[%s5 + $0x2340] sm:$0xff]
        %v5221 = vld [vmem:[%s5 + $0x2348] sm:$0xff]
        %v5222 = vld [vmem:[%s5 + $0x2350] sm:$0xff]
        %v5223 = vld [vmem:[%s5 + $0x2358] sm:$0xff]
        %v5224 = vld [vmem:[%s5 + $0x2360] sm:$0xff]
        %v5225 = vld [vmem:[%s5 + $0x2368] sm:$0xff]
        %v5226 = vld [vmem:[%s5 + $0x2370] sm:$0xff]
        %v5227 = vld [vmem:[%s5 + $0x2378] sm:$0xff]
        %v5228 = vld [vmem:[%s5 + $0x2380] sm:$0xff]
        %v5229 = vld [vmem:[%s5 + $0x2388] sm:$0xff]
        %v5230 = vld [vmem:[%s5 + $0x2390] sm:$0xff]
        %v5231 = vld [vmem:[%s5 + $0x2398] sm:$0xff]
        %v5232 = vld [vmem:[%s5 + $0x23a0] sm:$0xff]
        %v5233 = vld [vmem:[%s5 + $0x23a8] sm:$0xff]
        %v5234 = vld [vmem:[%s5 + $0x23b0] sm:$0xff]
        %v5235 = vld [vmem:[%s5 + $0x23b8] sm:$0xff]
        %v5236 = vld [vmem:[%s5 + $0x23c0] sm:$0xff]
        %v5237 = vld [vmem:[%s5 + $0x23c8] sm:$0xff]
        %v5238 = vld [vmem:[%s5 + $0x23d0] sm:$0xff]
        %v5239 = vld [vmem:[%s5 + $0x23d8] sm:$0xff]
        %v5240 = vld [vmem:[%s5 + $0x23e0] sm:$0xff]
        %v5241 = vld [vmem:[%s5 + $0x23e8] sm:$0xff]
        %v5242 = vld [vmem:[%s5 + $0x23f0] sm:$0xff]
        %v5243 = vld [vmem:[%s5 + $0x23f8] sm:$0xff]
        %v5244 = vld [vmem:[%s5 + $0x2400] sm:$0xff]
        %v5245 = vld [vmem:[%s5 + $0x2408] sm:$0xff]
        %v5246 = vld [vmem:[%s5 + $0x2410] sm:$0xff]
        %v5247 = vld [vmem:[%s5 + $0x2418] sm:$0xff]
        %v5248 = vld [vmem:[%s5 + $0x2420] sm:$0xff]
        %v5249 = vld [vmem:[%s5 + $0x2428] sm:$0xff]
        %v5250 = vld [vmem:[%s5 + $0x2430] sm:$0xff]
        %v5251 = vld [vmem:[%s5 + $0x2438] sm:$0xff]
        %v5252 = vld [vmem:[%s5 + $0x2440] sm:$0xff]
        %v5253 = vld [vmem:[%s5 + $0x2448] sm:$0xff]
        %v5254 = vld [vmem:[%s5 + $0x2450] sm:$0xff]
        %v5255 = vld [vmem:[%s5 + $0x2458] sm:$0xff]
        %v5256 = vld [vmem:[%s5 + $0x2460] sm:$0xff]
        %v5257 = vld [vmem:[%s5 + $0x2468] sm:$0xff]
        %v5258 = vld [vmem:[%s5 + $0x2470] sm:$0xff]
        %v5259 = vld [vmem:[%s5 + $0x2478] sm:$0xff]
        %v5260 = vld [vmem:[%s5 + $0x2480] sm:$0xff]
        %v5261 = vld [vmem:[%s5 + $0x2488] sm:$0xff]
        %v5262 = vld [vmem:[%s5 + $0x2490] sm:$0xff]
        %v5263 = vld [vmem:[%s5 + $0x2498] sm:$0xff]
        %v5264 = vld [vmem:[%s5 + $0x24a0] sm:$0xff]
        %v5265 = vld [vmem:[%s5 + $0x24a8] sm:$0xff]
        %v5266 = vld [vmem:[%s5 + $0x24b0] sm:$0xff]
        %v5267 = vld [vmem:[%s5 + $0x24b8] sm:$0xff]
        %v5268 = vld [vmem:[%s5 + $0x24c0] sm:$0xff]
        %v5269 = vld [vmem:[%s5 + $0x24c8] sm:$0xff]
        %v5270 = vld [vmem:[%s5 + $0x24d0] sm:$0xff]
        %v5271 = vld [vmem:[%s5 + $0x24d8] sm:$0xff]
        %v5272 = vld [vmem:[%s5 + $0x24e0] sm:$0xff]
        %v5273 = vld [vmem:[%s5 + $0x24e8] sm:$0xff]
        %v5274 = vld [vmem:[%s5 + $0x24f0] sm:$0xff]
        %v5275 = vld [vmem:[%s5 + $0x24f8] sm:$0xff]
        %v5276 = vld [vmem:[%s5 + $0x2500] sm:$0xff]
        %v5277 = vld [vmem:[%s5 + $0x2508] sm:$0xff]
        %v5278 = vld [vmem:[%s5 + $0x2510] sm:$0xff]
        %v5279 = vld [vmem:[%s5 + $0x2518] sm:$0xff]
        %v5280 = vld [vmem:[%s5 + $0x2520] sm:$0xff]
        %v5281 = vld [vmem:[%s5 + $0x2528] sm:$0xff]
        %v5282 = vld [vmem:[%s5 + $0x2530] sm:$0xff]
        %v5283 = vld [vmem:[%s5 + $0x2538] sm:$0xff]
        %v5284 = vld [vmem:[%s5 + $0x2540] sm:$0xff]
        %v5285 = vld [vmem:[%s5 + $0x2548] sm:$0xff]
        %v5286 = vld [vmem:[%s5 + $0x2550] sm:$0xff]
        %v5287 = vld [vmem:[%s5 + $0x2558] sm:$0xff]
        %v5288 = vld [vmem:[%s5 + $0x2560] sm:$0xff]
        %v5289 = vld [vmem:[%s5 + $0x2568] sm:$0xff]
        %v5290 = vld [vmem:[%s5 + $0x2570] sm:$0xff]
        %v5291 = vld [vmem:[%s5 + $0x2578] sm:$0xff]
        %v5292 = vld [vmem:[%s5 + $0x2580] sm:$0xff]
        %v5293 = vld [vmem:[%s5 + $0x2588] sm:$0xff]
        %v5294 = vld [vmem:[%s5 + $0x2590] sm:$0xff]
        %v5295 = vld [vmem:[%s5 + $0x2598] sm:$0xff]
        %v5296 = vld [vmem:[%s5 + $0x25a0] sm:$0xff]
        %v5297 = vld [vmem:[%s5 + $0x25a8] sm:$0xff]
        %v5298 = vld [vmem:[%s5 + $0x25b0] sm:$0xff]
        %v5299 = vld [vmem:[%s5 + $0x25b8] sm:$0xff]
        %v5300 = vld [vmem:[%s5 + $0x25c0] sm:$0xff]
        %v5301 = vld [vmem:[%s5 + $0x25c8] sm:$0xff]
        %v5302 = vld [vmem:[%s5 + $0x25d0] sm:$0xff]
        %v5303 = vld [vmem:[%s5 + $0x25d8] sm:$0xff]
        %v5304 = vld [vmem:[%s5 + $0x25e0] sm:$0xff]
        %v5305 = vld [vmem:[%s5 + $0x25e8] sm:$0xff]
        %v5306 = vld [vmem:[%s5 + $0x25f0] sm:$0xff]
        %v5307 = vld [vmem:[%s5 + $0x25f8] sm:$0xff]
        %v5308 = vld [vmem:[%s5 + $0x2600] sm:$0xff]
        %v5309 = vld [vmem:[%s5 + $0x2608] sm:$0xff]
        %v5310 = vld [vmem:[%s5 + $0x2610] sm:$0xff]
        %v5311 = vld [vmem:[%s5 + $0x2618] sm:$0xff]
        %v5312 = vld [vmem:[%s5 + $0x2620] sm:$0xff]
        %v5313 = vld [vmem:[%s5 + $0x2628] sm:$0xff]
        %v5314 = vld [vmem:[%s5 + $0x2630] sm:$0xff]
        %v5315 = vld [vmem:[%s5 + $0x2638] sm:$0xff]
        %v5316 = vld [vmem:[%s5 + $0x2640] sm:$0xff]
        %v5317 = vld [vmem:[%s5 + $0x2648] sm:$0xff]
        %v5318 = vld [vmem:[%s5 + $0x2650] sm:$0xff]
        %v5319 = vld [vmem:[%s5 + $0x2658] sm:$0xff]
        %v5320 = vld [vmem:[%s5 + $0x2660] sm:$0xff]
        %v5321 = vld [vmem:[%s5 + $0x2668] sm:$0xff]
        %v5322 = vld [vmem:[%s5 + $0x2670] sm:$0xff]
        %v5323 = vld [vmem:[%s5 + $0x2678] sm:$0xff]
        %v5324 = vld [vmem:[%s5 + $0x2680] sm:$0xff]
        %v5325 = vld [vmem:[%s5 + $0x2688] sm:$0xff]
        %v5326 = vld [vmem:[%s5 + $0x2690] sm:$0xff]
        %v5327 = vld [vmem:[%s5 + $0x2698] sm:$0xff]
        %v5328 = vld [vmem:[%s5 + $0x26a0] sm:$0xff]
        %v5329 = vld [vmem:[%s5 + $0x26a8] sm:$0xff]
        %v5330 = vld [vmem:[%s5 + $0x26b0] sm:$0xff]
        %v5331 = vld [vmem:[%s5 + $0x26b8] sm:$0xff]
        %v5332 = vld [vmem:[%s5 + $0x26c0] sm:$0xff]
        %v5333 = vld [vmem:[%s5 + $0x26c8] sm:$0xff]
        %v5334 = vld [vmem:[%s5 + $0x26d0] sm:$0xff]
        %v5335 = vld [vmem:[%s5 + $0x26d8] sm:$0xff]
        %v5336 = vld [vmem:[%s5 + $0x26e0] sm:$0xff]
        %v5337 = vld [vmem:[%s5 + $0x26e8] sm:$0xff]
        %v5338 = vld [vmem:[%s5 + $0x26f0] sm:$0xff]
        %v5339 = vld [vmem:[%s5 + $0x26f8] sm:$0xff]
        %v5340 = vld [vmem:[%s5 + $0x2700] sm:$0xff]
        %v5341 = vld [vmem:[%s5 + $0x2708] sm:$0xff]
        %v5342 = vld [vmem:[%s5 + $0x2710] sm:$0xff]
        %v5343 = vld [vmem:[%s5 + $0x2718] sm:$0xff]
        %v5344 = vld [vmem:[%s5 + $0x2720] sm:$0xff]
        %v5345 = vld [vmem:[%s5 + $0x2728] sm:$0xff]
        %v5346 = vld [vmem:[%s5 + $0x2730] sm:$0xff]
        %v5347 = vld [vmem:[%s5 + $0x2738] sm:$0xff]
        %v5348 = vld [vmem:[%s5 + $0x2740] sm:$0xff]
        %v5349 = vld [vmem:[%s5 + $0x2748] sm:$0xff]
        %v5350 = vld [vmem:[%s5 + $0x2750] sm:$0xff]
        %v5351 = vld [vmem:[%s5 + $0x2758] sm:$0xff]
        %v5352 = vld [vmem:[%s5 + $0x2760] sm:$0xff]
        %v5353 = vld [vmem:[%s5 + $0x2768] sm:$0xff]
        %v5354 = vld [vmem:[%s5 + $0x2770] sm:$0xff]
        %v5355 = vld [vmem:[%s5 + $0x2778] sm:$0xff]
        %v5356 = vld [vmem:[%s5 + $0x2780] sm:$0xff]
        %v5357 = vld [vmem:[%s5 + $0x2788] sm:$0xff]
        %v5358 = vld [vmem:[%s5 + $0x2790] sm:$0xff]
        %v5359 = vld [vmem:[%s5 + $0x2798] sm:$0xff]
        %v5360 = vld [vmem:[%s5 + $0x27a0] sm:$0xff]
        %v5361 = vld [vmem:[%s5 + $0x27a8] sm:$0xff]
        %v5362 = vld [vmem:[%s5 + $0x27b0] sm:$0xff]
        %v5363 = vld [vmem:[%s5 + $0x27b8] sm:$0xff]
        %v5364 = vld [vmem:[%s5 + $0x27c0] sm:$0xff]
        %v5365 = vld [vmem:[%s5 + $0x27c8] sm:$0xff]
        %v5366 = vld [vmem:[%s5 + $0x27d0] sm:$0xff]
        %v5367 = vld [vmem:[%s5 + $0x27d8] sm:$0xff]
        %v5368 = vld [vmem:[%s5 + $0x27e0] sm:$0xff]
        %v5369 = vld [vmem:[%s5 + $0x27e8] sm:$0xff]
        %v5370 = vld [vmem:[%s5 + $0x27f0] sm:$0xff]
        %v5371 = vld [vmem:[%s5 + $0x27f8] sm:$0xff]
        %v5372 = vld [vmem:[%s6] sm:$0x3]
        %v5374 = vlaneseq
        %v5375 = vshrl.u32 %v5374, 7
        %v5376 = vsub.s32 0, %v5375
        %v5377 = vrot.slane %v5372, %v5376
        %v5378 = vlaneseq
        %v5379 = vshrl.u32 %v5378, 7
        %v5380 = vsub.s32 1, %v5379
        %v5381 = vrot.slane %v5372, %v5380
        %5384 = vmatprep.subr.mxu0 %v4093
        %5385 = vmatpush1.msra.mxu0 %v4092
        %5386 = vmatprep.subr.mxu0 %v4095
        %5387 = vmatpush1.msra.mxu0 %v4094
        %5388 = vmatprep.subr.mxu0 %v4097
        %5389 = vmatpush1.msra.mxu0 %v4096
        %5390 = vmatprep.subr.mxu0 %v4099
        %5391 = vmatpush1.msra.mxu0 %v4098
        %5392 = vmatprep.subr.mxu0 %v4101
        %5393 = vmatpush1.msra.mxu0 %v4100
        %5394 = vmatprep.subr.mxu0 %v4103
        %5395 = vmatpush1.msra.mxu0 %v4102
        %5396 = vmatprep.subr.mxu0 %v4105
        %5397 = vmatpush1.msra.mxu0 %v4104
        %5398 = vmatprep.subr.mxu0 %v4107
        %5399 = vmatpush1.msra.mxu0 %v4106
        %5400 = vmatprep.subr.mxu0 %v4109
        %5401 = vmatpush1.msra.mxu0 %v4108
        %5402 = vmatprep.subr.mxu0 %v4111
        %5403 = vmatpush1.msra.mxu0 %v4110
        %5404 = vmatprep.subr.mxu0 %v4113
        %5405 = vmatpush1.msra.mxu0 %v4112
        %5406 = vmatprep.subr.mxu0 %v4115
        %5407 = vmatpush1.msra.mxu0 %v4114
        %5408 = vmatprep.subr.mxu0 %v4117
        %5409 = vmatpush1.msra.mxu0 %v4116
        %5410 = vmatprep.subr.mxu0 %v4119
        %5411 = vmatpush1.msra.mxu0 %v4118
        %5412 = vmatprep.subr.mxu0 %v4121
        %5413 = vmatpush1.msra.mxu0 %v4120
        %5414 = vmatprep.subr.mxu0 %v4123
        %5415 = vmatpush1.msra.mxu0 %v4122
        %5416 = vmatprep.subr.mxu0 %v4125
        %5417 = vmatpush1.msra.mxu0 %v4124
        %5418 = vmatprep.subr.mxu0 %v4127
        %5419 = vmatpush1.msra.mxu0 %v4126
        %5420 = vmatprep.subr.mxu0 %v4129
        %5421 = vmatpush1.msra.mxu0 %v4128
        %5422 = vmatprep.subr.mxu0 %v4131
        %5423 = vmatpush1.msra.mxu0 %v4130
        %5424 = vmatprep.subr.mxu0 %v4133
        %5425 = vmatpush1.msra.mxu0 %v4132
        %5426 = vmatprep.subr.mxu0 %v4135
        %5427 = vmatpush1.msra.mxu0 %v4134
        %5428 = vmatprep.subr.mxu0 %v4137
        %5429 = vmatpush1.msra.mxu0 %v4136
        %5430 = vmatprep.subr.mxu0 %v4139
        %5431 = vmatpush1.msra.mxu0 %v4138
        %5432 = vmatprep.subr.mxu0 %v4141
        %5433 = vmatpush1.msra.mxu0 %v4140
        %5434 = vmatprep.subr.mxu0 %v4143
        %5435 = vmatpush1.msra.mxu0 %v4142
        %5436 = vmatprep.subr.mxu0 %v4145
        %5437 = vmatpush1.msra.mxu0 %v4144
        %5438 = vmatprep.subr.mxu0 %v4147
        %5439 = vmatpush1.msra.mxu0 %v4146
        %5440 = vmatprep.subr.mxu0 %v4149
        %5441 = vmatpush1.msra.mxu0 %v4148
        %5442 = vmatprep.subr.mxu0 %v4151
        %5443 = vmatpush1.msra.mxu0 %v4150
        %5444 = vmatprep.subr.mxu0 %v4153
        %5445 = vmatpush1.msra.mxu0 %v4152
        %5446 = vmatprep.subr.mxu0 %v4155
        %5447 = vmatpush1.msra.mxu0 %v4154
        %5448 = vmatprep.mubr.f32.mxu0 %v4013
        %5449 = vmatmul.mubr.f32.gmra.mrb[0].mxu0 %v4012
        %v5450 = vpop.f32.mrb[0].mxu0
        %v5451 = vadd.f32 %v5377, %v5450
        %v5452 = vpop.f32.mrb[0].mxu0
        %v5453 = vadd.f32 %v5381, %v5452
        %5454 = vdwg.mxu0
        %5455 = vmatprep.subr.mxu0 %v4157
        %5456 = vmatpush1.msra.mxu0 %v4156
        %5457 = vmatprep.subr.mxu0 %v4159
        %5458 = vmatpush1.msra.mxu0 %v4158
        %5459 = vmatprep.subr.mxu0 %v4161
        %5460 = vmatpush1.msra.mxu0 %v4160
        %5461 = vmatprep.subr.mxu0 %v4163
        %5462 = vmatpush1.msra.mxu0 %v4162
        %5463 = vmatprep.subr.mxu0 %v4165
        %5464 = vmatpush1.msra.mxu0 %v4164
        %5465 = vmatprep.subr.mxu0 %v4167
        %5466 = vmatpush1.msra.mxu0 %v4166
        %5467 = vmatprep.subr.mxu0 %v4169
        %5468 = vmatpush1.msra.mxu0 %v4168
        %5469 = vmatprep.subr.mxu0 %v4171
        %5470 = vmatpush1.msra.mxu0 %v4170
        %5471 = vmatprep.subr.mxu0 %v4173
        %5472 = vmatpush1.msra.mxu0 %v4172
        %5473 = vmatprep.subr.mxu0 %v4175
        %5474 = vmatpush1.msra.mxu0 %v4174
        %5475 = vmatprep.subr.mxu0 %v4177
        %5476 = vmatpush1.msra.mxu0 %v4176
        %5477 = vmatprep.subr.mxu0 %v4179
        %5478 = vmatpush1.msra.mxu0 %v4178
        %5479 = vmatprep.subr.mxu0 %v4181
        %5480 = vmatpush1.msra.mxu0 %v4180
        %5481 = vmatprep.subr.mxu0 %v4183
        %5482 = vmatpush1.msra.mxu0 %v4182
        %5483 = vmatprep.subr.mxu0 %v4185
        %5484 = vmatpush1.msra.mxu0 %v4184
        %5485 = vmatprep.subr.mxu0 %v4187
        %5486 = vmatpush1.msra.mxu0 %v4186
        %5487 = vmatprep.subr.mxu0 %v4189
        %5488 = vmatpush1.msra.mxu0 %v4188
        %5489 = vmatprep.subr.mxu0 %v4191
        %5490 = vmatpush1.msra.mxu0 %v4190
        %5491 = vmatprep.subr.mxu0 %v4193
        %5492 = vmatpush1.msra.mxu0 %v4192
        %5493 = vmatprep.subr.mxu0 %v4195
        %5494 = vmatpush1.msra.mxu0 %v4194
        %5495 = vmatprep.subr.mxu0 %v4197
        %5496 = vmatpush1.msra.mxu0 %v4196
        %5497 = vmatprep.subr.mxu0 %v4199
        %5498 = vmatpush1.msra.mxu0 %v4198
        %5499 = vmatprep.subr.mxu0 %v4201
        %5500 = vmatpush1.msra.mxu0 %v4200
        %5501 = vmatprep.subr.mxu0 %v4203
        %5502 = vmatpush1.msra.mxu0 %v4202
        %5503 = vmatprep.subr.mxu0 %v4205
        %5504 = vmatpush1.msra.mxu0 %v4204
        %5505 = vmatprep.subr.mxu0 %v4207
        %5506 = vmatpush1.msra.mxu0 %v4206
        %5507 = vmatprep.subr.mxu0 %v4209
        %5508 = vmatpush1.msra.mxu0 %v4208
        %5509 = vmatprep.subr.mxu0 %v4211
        %5510 = vmatpush1.msra.mxu0 %v4210
        %5511 = vmatprep.subr.mxu0 %v4213
        %5512 = vmatpush1.msra.mxu0 %v4212
        %5513 = vmatprep.subr.mxu0 %v4215
        %5514 = vmatpush1.msra.mxu0 %v4214
        %5515 = vmatprep.subr.mxu0 %v4217
        %5516 = vmatpush1.msra.mxu0 %v4216
        %5517 = vmatprep.subr.mxu0 %v4219
        %5518 = vmatpush1.msra.mxu0 %v4218
        %5519 = vmatprep.mubr.f32.mxu0 %v4021
        %5520 = vmatmul.mubr.f32.gmra.mrb[0].mxu0 %v4020
        %v5521 = vpop.f32.mrb[0].mxu0
        %v5522 = vadd.f32 %v5451, %v5521
        %v5523 = vpop.f32.mrb[0].mxu0
        %v5524 = vadd.f32 %v5453, %v5523
        %5525 = vdwg.mxu0
        %5526 = vmatprep.subr.mxu0 %v4221
        %5527 = vmatpush1.msra.mxu0 %v4220
        %5528 = vmatprep.subr.mxu0 %v4223
        %5529 = vmatpush1.msra.mxu0 %v4222
        %5530 = vmatprep.subr.mxu0 %v4225
        %5531 = vmatpush1.msra.mxu0 %v4224
        %5532 = vmatprep.subr.mxu0 %v4227
        %5533 = vmatpush1.msra.mxu0 %v4226
        %5534 = vmatprep.subr.mxu0 %v4229
        %5535 = vmatpush1.msra.mxu0 %v4228
        %5536 = vmatprep.subr.mxu0 %v4231
        %5537 = vmatpush1.msra.mxu0 %v4230
        %5538 = vmatprep.subr.mxu0 %v4233
        %5539 = vmatpush1.msra.mxu0 %v4232
        %5540 = vmatprep.subr.mxu0 %v4235
        %5541 = vmatpush1.msra.mxu0 %v4234
        %5542 = vmatprep.subr.mxu0 %v4237
        %5543 = vmatpush1.msra.mxu0 %v4236
        %5544 = vmatprep.subr.mxu0 %v4239
        %5545 = vmatpush1.msra.mxu0 %v4238
        %5546 = vmatprep.subr.mxu0 %v4241
        %5547 = vmatpush1.msra.mxu0 %v4240
        %5548 = vmatprep.subr.mxu0 %v4243
        %5549 = vmatpush1.msra.mxu0 %v4242
        %5550 = vmatprep.subr.mxu0 %v4245
        %5551 = vmatpush1.msra.mxu0 %v4244
        %5552 = vmatprep.subr.mxu0 %v4247
        %5553 = vmatpush1.msra.mxu0 %v4246
        %5554 = vmatprep.subr.mxu0 %v4249
        %5555 = vmatpush1.msra.mxu0 %v4248
        %5556 = vmatprep.subr.mxu0 %v4251
        %5557 = vmatpush1.msra.mxu0 %v4250
        %5558 = vmatprep.subr.mxu0 %v4253
        %5559 = vmatpush1.msra.mxu0 %v4252
        %5560 = vmatprep.subr.mxu0 %v4255
        %5561 = vmatpush1.msra.mxu0 %v4254
        %5562 = vmatprep.subr.mxu0 %v4257
        %5563 = vmatpush1.msra.mxu0 %v4256
        %5564 = vmatprep.subr.mxu0 %v4259
        %5565 = vmatpush1.msra.mxu0 %v4258
        %5566 = vmatprep.subr.mxu0 %v4261
        %5567 = vmatpush1.msra.mxu0 %v4260
        %5568 = vmatprep.subr.mxu0 %v4263
        %5569 = vmatpush1.msra.mxu0 %v4262
        %5570 = vmatprep.subr.mxu0 %v4265
        %5571 = vmatpush1.msra.mxu0 %v4264
        %5572 = vmatprep.subr.mxu0 %v4267
        %5573 = vmatpush1.msra.mxu0 %v4266
        %5574 = vmatprep.subr.mxu0 %v4269
        %5575 = vmatpush1.msra.mxu0 %v4268
        %5576 = vmatprep.subr.mxu0 %v4271
        %5577 = vmatpush1.msra.mxu0 %v4270
        %5578 = vmatprep.subr.mxu0 %v4273
        %5579 = vmatpush1.msra.mxu0 %v4272
        %5580 = vmatprep.subr.mxu0 %v4275
        %5581 = vmatpush1.msra.mxu0 %v4274
        %5582 = vmatprep.subr.mxu0 %v4277
        %5583 = vmatpush1.msra.mxu0 %v4276
        %5584 = vmatprep.subr.mxu0 %v4279
        %5585 = vmatpush1.msra.mxu0 %v4278
        %5586 = vmatprep.subr.mxu0 %v4281
        %5587 = vmatpush1.msra.mxu0 %v4280
        %5588 = vmatprep.subr.mxu0 %v4283
        %5589 = vmatpush1.msra.mxu0 %v4282
        %5590 = vmatprep.mubr.f32.mxu0 %v4025
        %5591 = vmatmul.mubr.f32.gmra.mrb[0].mxu0 %v4024
        %v5592 = vpop.f32.mrb[0].mxu0
        %v5593 = vadd.f32 %v5522, %v5592
        %v5594 = vpop.f32.mrb[0].mxu0
        %v5595 = vadd.f32 %v5524, %v5594
        %5596 = vdwg.mxu0
        %5597 = vmatprep.subr.mxu0 %v4285
        %5598 = vmatpush1.msra.mxu0 %v4284
        %5599 = vmatprep.subr.mxu0 %v4287
        %5600 = vmatpush1.msra.mxu0 %v4286
        %5601 = vmatprep.subr.mxu0 %v4289
        %5602 = vmatpush1.msra.mxu0 %v4288
        %5603 = vmatprep.subr.mxu0 %v4291
        %5604 = vmatpush1.msra.mxu0 %v4290
        %5605 = vmatprep.subr.mxu0 %v4293
        %5606 = vmatpush1.msra.mxu0 %v4292
        %5607 = vmatprep.subr.mxu0 %v4295
        %5608 = vmatpush1.msra.mxu0 %v4294
        %5609 = vmatprep.subr.mxu0 %v4297
        %5610 = vmatpush1.msra.mxu0 %v4296
        %5611 = vmatprep.subr.mxu0 %v4299
        %5612 = vmatpush1.msra.mxu0 %v4298
        %5613 = vmatprep.subr.mxu0 %v4301
        %5614 = vmatpush1.msra.mxu0 %v4300
        %5615 = vmatprep.subr.mxu0 %v4303
        %5616 = vmatpush1.msra.mxu0 %v4302
        %5617 = vmatprep.subr.mxu0 %v4305
        %5618 = vmatpush1.msra.mxu0 %v4304
        %5619 = vmatprep.subr.mxu0 %v4307
        %5620 = vmatpush1.msra.mxu0 %v4306
        %5621 = vmatprep.subr.mxu0 %v4309
        %5622 = vmatpush1.msra.mxu0 %v4308
        %5623 = vmatprep.subr.mxu0 %v4311
        %5624 = vmatpush1.msra.mxu0 %v4310
        %5625 = vmatprep.subr.mxu0 %v4313
        %5626 = vmatpush1.msra.mxu0 %v4312
        %5627 = vmatprep.subr.mxu0 %v4315
        %5628 = vmatpush1.msra.mxu0 %v4314
        %5629 = vmatprep.subr.mxu0 %v4317
        %5630 = vmatpush1.msra.mxu0 %v4316
        %5631 = vmatprep.subr.mxu0 %v4319
        %5632 = vmatpush1.msra.mxu0 %v4318
        %5633 = vmatprep.subr.mxu0 %v4321
        %5634 = vmatpush1.msra.mxu0 %v4320
        %5635 = vmatprep.subr.mxu0 %v4323
        %5636 = vmatpush1.msra.mxu0 %v4322
        %5637 = vmatprep.subr.mxu0 %v4325
        %5638 = vmatpush1.msra.mxu0 %v4324
        %5639 = vmatprep.subr.mxu0 %v4327
        %5640 = vmatpush1.msra.mxu0 %v4326
        %5641 = vmatprep.subr.mxu0 %v4329
        %5642 = vmatpush1.msra.mxu0 %v4328
        %5643 = vmatprep.subr.mxu0 %v4331
        %5644 = vmatpush1.msra.mxu0 %v4330
        %5645 = vmatprep.subr.mxu0 %v4333
        %5646 = vmatpush1.msra.mxu0 %v4332
        %5647 = vmatprep.subr.mxu0 %v4335
        %5648 = vmatpush1.msra.mxu0 %v4334
        %5649 = vmatprep.subr.mxu0 %v4337
        %5650 = vmatpush1.msra.mxu0 %v4336
        %5651 = vmatprep.subr.mxu0 %v4339
        %5652 = vmatpush1.msra.mxu0 %v4338
        %5653 = vmatprep.subr.mxu0 %v4341
        %5654 = vmatpush1.msra.mxu0 %v4340
        %5655 = vmatprep.subr.mxu0 %v4343
        %5656 = vmatpush1.msra.mxu0 %v4342
        %5657 = vmatprep.subr.mxu0 %v4345
        %5658 = vmatpush1.msra.mxu0 %v4344
        %5659 = vmatprep.subr.mxu0 %v4347
        %5660 = vmatpush1.msra.mxu0 %v4346
        %5661 = vmatprep.mubr.f32.mxu0 %v4029
        %5662 = vmatmul.mubr.f32.gmra.mrb[0].mxu0 %v4028
        %v5663 = vpop.f32.mrb[0].mxu0
        %v5664 = vadd.f32 %v5593, %v5663
        %v5665 = vpop.f32.mrb[0].mxu0
        %v5666 = vadd.f32 %v5595, %v5665
        %5667 = vdwg.mxu0
        %5668 = vmatprep.subr.mxu0 %v4349
        %5669 = vmatpush1.msra.mxu0 %v4348
        %5670 = vmatprep.subr.mxu0 %v4351
        %5671 = vmatpush1.msra.mxu0 %v4350
        %5672 = vmatprep.subr.mxu0 %v4353
        %5673 = vmatpush1.msra.mxu0 %v4352
        %5674 = vmatprep.subr.mxu0 %v4355
        %5675 = vmatpush1.msra.mxu0 %v4354
        %5676 = vmatprep.subr.mxu0 %v4357
        %5677 = vmatpush1.msra.mxu0 %v4356
        %5678 = vmatprep.subr.mxu0 %v4359
        %5679 = vmatpush1.msra.mxu0 %v4358
        %5680 = vmatprep.subr.mxu0 %v4361
        %5681 = vmatpush1.msra.mxu0 %v4360
        %5682 = vmatprep.subr.mxu0 %v4363
        %5683 = vmatpush1.msra.mxu0 %v4362
        %5684 = vmatprep.subr.mxu0 %v4365
        %5685 = vmatpush1.msra.mxu0 %v4364
        %5686 = vmatprep.subr.mxu0 %v4367
        %5687 = vmatpush1.msra.mxu0 %v4366
        %5688 = vmatprep.subr.mxu0 %v4369
        %5689 = vmatpush1.msra.mxu0 %v4368
        %5690 = vmatprep.subr.mxu0 %v4371
        %5691 = vmatpush1.msra.mxu0 %v4370
        %5692 = vmatprep.subr.mxu0 %v4373
        %5693 = vmatpush1.msra.mxu0 %v4372
        %5694 = vmatprep.subr.mxu0 %v4375
        %5695 = vmatpush1.msra.mxu0 %v4374
        %5696 = vmatprep.subr.mxu0 %v4377
        %5697 = vmatpush1.msra.mxu0 %v4376
        %5698 = vmatprep.subr.mxu0 %v4379
        %5699 = vmatpush1.msra.mxu0 %v4378
        %5700 = vmatprep.subr.mxu0 %v4381
        %5701 = vmatpush1.msra.mxu0 %v4380
        %5702 = vmatprep.subr.mxu0 %v4383
        %5703 = vmatpush1.msra.mxu0 %v4382
        %5704 = vmatprep.subr.mxu0 %v4385
        %5705 = vmatpush1.msra.mxu0 %v4384
        %5706 = vmatprep.subr.mxu0 %v4387
        %5707 = vmatpush1.msra.mxu0 %v4386
        %5708 = vmatprep.subr.mxu0 %v4389
        %5709 = vmatpush1.msra.mxu0 %v4388
        %5710 = vmatprep.subr.mxu0 %v4391
        %5711 = vmatpush1.msra.mxu0 %v4390
        %5712 = vmatprep.subr.mxu0 %v4393
        %5713 = vmatpush1.msra.mxu0 %v4392
        %5714 = vmatprep.subr.mxu0 %v4395
        %5715 = vmatpush1.msra.mxu0 %v4394
        %5716 = vmatprep.subr.mxu0 %v4397
        %5717 = vmatpush1.msra.mxu0 %v4396
        %5718 = vmatprep.subr.mxu0 %v4399
        %5719 = vmatpush1.msra.mxu0 %v4398
        %5720 = vmatprep.subr.mxu0 %v4401
        %5721 = vmatpush1.msra.mxu0 %v4400
        %5722 = vmatprep.subr.mxu0 %v4403
        %5723 = vmatpush1.msra.mxu0 %v4402
        %5724 = vmatprep.subr.mxu0 %v4405
        %5725 = vmatpush1.msra.mxu0 %v4404
        %5726 = vmatprep.subr.mxu0 %v4407
        %5727 = vmatpush1.msra.mxu0 %v4406
        %5728 = vmatprep.subr.mxu0 %v4409
        %5729 = vmatpush1.msra.mxu0 %v4408
        %5730 = vmatprep.subr.mxu0 %v4411
        %5731 = vmatpush1.msra.mxu0 %v4410
        %5732 = vmatprep.mubr.f32.mxu0 %v4033
        %5733 = vmatmul.mubr.f32.gmra.mrb[0].mxu0 %v4032
        %v5734 = vpop.f32.mrb[0].mxu0
        %v5735 = vadd.f32 %v5664, %v5734
        %v5736 = vpop.f32.mrb[0].mxu0
        %v5737 = vadd.f32 %v5666, %v5736
        %5738 = vdwg.mxu0
        %5739 = vmatprep.subr.mxu0 %v4413
        %5740 = vmatpush1.msra.mxu0 %v4412
        %5741 = vmatprep.subr.mxu0 %v4415
        %5742 = vmatpush1.msra.mxu0 %v4414
        %5743 = vmatprep.subr.mxu0 %v4417
        %5744 = vmatpush1.msra.mxu0 %v4416
        %5745 = vmatprep.subr.mxu0 %v4419
        %5746 = vmatpush1.msra.mxu0 %v4418
        %5747 = vmatprep.subr.mxu0 %v4421
        %5748 = vmatpush1.msra.mxu0 %v4420
        %5749 = vmatprep.subr.mxu0 %v4423
        %5750 = vmatpush1.msra.mxu0 %v4422
        %5751 = vmatprep.subr.mxu0 %v4425
        %5752 = vmatpush1.msra.mxu0 %v4424
        %5753 = vmatprep.subr.mxu0 %v4427
        %5754 = vmatpush1.msra.mxu0 %v4426
        %5755 = vmatprep.subr.mxu0 %v4429
        %5756 = vmatpush1.msra.mxu0 %v4428
        %5757 = vmatprep.subr.mxu0 %v4431
        %5758 = vmatpush1.msra.mxu0 %v4430
        %5759 = vmatprep.subr.mxu0 %v4433
        %5760 = vmatpush1.msra.mxu0 %v4432
        %5761 = vmatprep.subr.mxu0 %v4435
        %5762 = vmatpush1.msra.mxu0 %v4434
        %5763 = vmatprep.subr.mxu0 %v4437
        %5764 = vmatpush1.msra.mxu0 %v4436
        %5765 = vmatprep.subr.mxu0 %v4439
        %5766 = vmatpush1.msra.mxu0 %v4438
        %5767 = vmatprep.subr.mxu0 %v4441
        %5768 = vmatpush1.msra.mxu0 %v4440
        %5769 = vmatprep.subr.mxu0 %v4443
        %5770 = vmatpush1.msra.mxu0 %v4442
        %5771 = vmatprep.subr.mxu0 %v4445
        %5772 = vmatpush1.msra.mxu0 %v4444
        %5773 = vmatprep.subr.mxu0 %v4447
        %5774 = vmatpush1.msra.mxu0 %v4446
        %5775 = vmatprep.subr.mxu0 %v4449
        %5776 = vmatpush1.msra.mxu0 %v4448
        %5777 = vmatprep.subr.mxu0 %v4451
        %5778 = vmatpush1.msra.mxu0 %v4450
        %5779 = vmatprep.subr.mxu0 %v4453
        %5780 = vmatpush1.msra.mxu0 %v4452
        %5781 = vmatprep.subr.mxu0 %v4455
        %5782 = vmatpush1.msra.mxu0 %v4454
        %5783 = vmatprep.subr.mxu0 %v4457
        %5784 = vmatpush1.msra.mxu0 %v4456
        %5785 = vmatprep.subr.mxu0 %v4459
        %5786 = vmatpush1.msra.mxu0 %v4458
        %5787 = vmatprep.subr.mxu0 %v4461
        %5788 = vmatpush1.msra.mxu0 %v4460
        %5789 = vmatprep.subr.mxu0 %v4463
        %5790 = vmatpush1.msra.mxu0 %v4462
        %5791 = vmatprep.subr.mxu0 %v4465
        %5792 = vmatpush1.msra.mxu0 %v4464
        %5793 = vmatprep.subr.mxu0 %v4467
        %5794 = vmatpush1.msra.mxu0 %v4466
        %5795 = vmatprep.subr.mxu0 %v4469
        %5796 = vmatpush1.msra.mxu0 %v4468
        %5797 = vmatprep.subr.mxu0 %v4471
        %5798 = vmatpush1.msra.mxu0 %v4470
        %5799 = vmatprep.subr.mxu0 %v4473
        %5800 = vmatpush1.msra.mxu0 %v4472
        %5801 = vmatprep.subr.mxu0 %v4475
        %5802 = vmatpush1.msra.mxu0 %v4474
        %5803 = vmatprep.mubr.f32.mxu0 %v4037
        %5804 = vmatmul.mubr.f32.gmra.mrb[0].mxu0 %v4036
        %v5805 = vpop.f32.mrb[0].mxu0
        %v5806 = vadd.f32 %v5735, %v5805
        %v5807 = vpop.f32.mrb[0].mxu0
        %v5808 = vadd.f32 %v5737, %v5807
        %5809 = vdwg.mxu0
        %5810 = vmatprep.subr.mxu0 %v4477
        %5811 = vmatpush1.msra.mxu0 %v4476
        %5812 = vmatprep.subr.mxu0 %v4479
        %5813 = vmatpush1.msra.mxu0 %v4478
        %5814 = vmatprep.subr.mxu0 %v4481
        %5815 = vmatpush1.msra.mxu0 %v4480
        %5816 = vmatprep.subr.mxu0 %v4483
        %5817 = vmatpush1.msra.mxu0 %v4482
        %5818 = vmatprep.subr.mxu0 %v4485
        %5819 = vmatpush1.msra.mxu0 %v4484
        %5820 = vmatprep.subr.mxu0 %v4487
        %5821 = vmatpush1.msra.mxu0 %v4486
        %5822 = vmatprep.subr.mxu0 %v4489
        %5823 = vmatpush1.msra.mxu0 %v4488
        %5824 = vmatprep.subr.mxu0 %v4491
        %5825 = vmatpush1.msra.mxu0 %v4490
        %5826 = vmatprep.subr.mxu0 %v4493
        %5827 = vmatpush1.msra.mxu0 %v4492
        %5828 = vmatprep.subr.mxu0 %v4495
        %5829 = vmatpush1.msra.mxu0 %v4494
        %5830 = vmatprep.subr.mxu0 %v4497
        %5831 = vmatpush1.msra.mxu0 %v4496
        %5832 = vmatprep.subr.mxu0 %v4499
        %5833 = vmatpush1.msra.mxu0 %v4498
        %5834 = vmatprep.subr.mxu0 %v4501
        %5835 = vmatpush1.msra.mxu0 %v4500
        %5836 = vmatprep.subr.mxu0 %v4503
        %5837 = vmatpush1.msra.mxu0 %v4502
        %5838 = vmatprep.subr.mxu0 %v4505
        %5839 = vmatpush1.msra.mxu0 %v4504
        %5840 = vmatprep.subr.mxu0 %v4507
        %5841 = vmatpush1.msra.mxu0 %v4506
        %5842 = vmatprep.subr.mxu0 %v4509
        %5843 = vmatpush1.msra.mxu0 %v4508
        %5844 = vmatprep.subr.mxu0 %v4511
        %5845 = vmatpush1.msra.mxu0 %v4510
        %5846 = vmatprep.subr.mxu0 %v4513
        %5847 = vmatpush1.msra.mxu0 %v4512
        %5848 = vmatprep.subr.mxu0 %v4515
        %5849 = vmatpush1.msra.mxu0 %v4514
        %5850 = vmatprep.subr.mxu0 %v4517
        %5851 = vmatpush1.msra.mxu0 %v4516
        %5852 = vmatprep.subr.mxu0 %v4519
        %5853 = vmatpush1.msra.mxu0 %v4518
        %5854 = vmatprep.subr.mxu0 %v4521
        %5855 = vmatpush1.msra.mxu0 %v4520
        %5856 = vmatprep.subr.mxu0 %v4523
        %5857 = vmatpush1.msra.mxu0 %v4522
        %5858 = vmatprep.subr.mxu0 %v4525
        %5859 = vmatpush1.msra.mxu0 %v4524
        %5860 = vmatprep.subr.mxu0 %v4527
        %5861 = vmatpush1.msra.mxu0 %v4526
        %5862 = vmatprep.subr.mxu0 %v4529
        %5863 = vmatpush1.msra.mxu0 %v4528
        %5864 = vmatprep.subr.mxu0 %v4531
        %5865 = vmatpush1.msra.mxu0 %v4530
        %5866 = vmatprep.subr.mxu0 %v4533
        %5867 = vmatpush1.msra.mxu0 %v4532
        %5868 = vmatprep.subr.mxu0 %v4535
        %5869 = vmatpush1.msra.mxu0 %v4534
        %5870 = vmatprep.subr.mxu0 %v4537
        %5871 = vmatpush1.msra.mxu0 %v4536
        %5872 = vmatprep.subr.mxu0 %v4539
        %5873 = vmatpush1.msra.mxu0 %v4538
        %5874 = vmatprep.mubr.f32.mxu0 %v4041
        %5875 = vmatmul.mubr.f32.gmra.mrb[0].mxu0 %v4040
        %v5876 = vpop.f32.mrb[0].mxu0
        %v5877 = vadd.f32 %v5806, %v5876
        %v5878 = vpop.f32.mrb[0].mxu0
        %v5879 = vadd.f32 %v5808, %v5878
        %5880 = vdwg.mxu0
        %5881 = vmatprep.subr.mxu0 %v4541
        %5882 = vmatpush1.msra.mxu0 %v4540
        %5883 = vmatprep.subr.mxu0 %v4543
        %5884 = vmatpush1.msra.mxu0 %v4542
        %5885 = vmatprep.subr.mxu0 %v4545
        %5886 = vmatpush1.msra.mxu0 %v4544
        %5887 = vmatprep.subr.mxu0 %v4547
        %5888 = vmatpush1.msra.mxu0 %v4546
        %5889 = vmatprep.subr.mxu0 %v4549
        %5890 = vmatpush1.msra.mxu0 %v4548
        %5891 = vmatprep.subr.mxu0 %v4551
        %5892 = vmatpush1.msra.mxu0 %v4550
        %5893 = vmatprep.subr.mxu0 %v4553
        %5894 = vmatpush1.msra.mxu0 %v4552
        %5895 = vmatprep.subr.mxu0 %v4555
        %5896 = vmatpush1.msra.mxu0 %v4554
        %5897 = vmatprep.subr.mxu0 %v4557
        %5898 = vmatpush1.msra.mxu0 %v4556
        %5899 = vmatprep.subr.mxu0 %v4559
        %5900 = vmatpush1.msra.mxu0 %v4558
        %5901 = vmatprep.subr.mxu0 %v4561
        %5902 = vmatpush1.msra.mxu0 %v4560
        %5903 = vmatprep.subr.mxu0 %v4563
        %5904 = vmatpush1.msra.mxu0 %v4562
        %5905 = vmatprep.subr.mxu0 %v4565
        %5906 = vmatpush1.msra.mxu0 %v4564
        %5907 = vmatprep.subr.mxu0 %v4567
        %5908 = vmatpush1.msra.mxu0 %v4566
        %5909 = vmatprep.subr.mxu0 %v4569
        %5910 = vmatpush1.msra.mxu0 %v4568
        %5911 = vmatprep.subr.mxu0 %v4571
        %5912 = vmatpush1.msra.mxu0 %v4570
        %5913 = vmatprep.subr.mxu0 %v4573
        %5914 = vmatpush1.msra.mxu0 %v4572
        %5915 = vmatprep.subr.mxu0 %v4575
        %5916 = vmatpush1.msra.mxu0 %v4574
        %5917 = vmatprep.subr.mxu0 %v4577
        %5918 = vmatpush1.msra.mxu0 %v4576
        %5919 = vmatprep.subr.mxu0 %v4579
        %5920 = vmatpush1.msra.mxu0 %v4578
        %5921 = vmatprep.subr.mxu0 %v4581
        %5922 = vmatpush1.msra.mxu0 %v4580
        %5923 = vmatprep.subr.mxu0 %v4583
        %5924 = vmatpush1.msra.mxu0 %v4582
        %5925 = vmatprep.subr.mxu0 %v4585
        %5926 = vmatpush1.msra.mxu0 %v4584
        %5927 = vmatprep.subr.mxu0 %v4587
        %5928 = vmatpush1.msra.mxu0 %v4586
        %5929 = vmatprep.subr.mxu0 %v4589
        %5930 = vmatpush1.msra.mxu0 %v4588
        %5931 = vmatprep.subr.mxu0 %v4591
        %5932 = vmatpush1.msra.mxu0 %v4590
        %5933 = vmatprep.subr.mxu0 %v4593
        %5934 = vmatpush1.msra.mxu0 %v4592
        %5935 = vmatprep.subr.mxu0 %v4595
        %5936 = vmatpush1.msra.mxu0 %v4594
        %5937 = vmatprep.subr.mxu0 %v4597
        %5938 = vmatpush1.msra.mxu0 %v4596
        %5939 = vmatprep.subr.mxu0 %v4599
        %5940 = vmatpush1.msra.mxu0 %v4598
        %5941 = vmatprep.subr.mxu0 %v4601
        %5942 = vmatpush1.msra.mxu0 %v4600
        %5943 = vmatprep.subr.mxu0 %v4603
        %5944 = vmatpush1.msra.mxu0 %v4602
        %5945 = vmatprep.mubr.f32.mxu0 %v4045
        %5946 = vmatmul.mubr.f32.gmra.mrb[0].mxu0 %v4044
        %v5947 = vpop.f32.mrb[0].mxu0
        %v5948 = vadd.f32 %v5877, %v5947
        %v5949 = vpop.f32.mrb[0].mxu0
        %v5950 = vadd.f32 %v5879, %v5949
        %5951 = vdwg.mxu0
        %5952 = vmatprep.subr.mxu0 %v4605
        %5953 = vmatpush1.msra.mxu0 %v4604
        %5954 = vmatprep.subr.mxu0 %v4607
        %5955 = vmatpush1.msra.mxu0 %v4606
        %5956 = vmatprep.subr.mxu0 %v4609
        %5957 = vmatpush1.msra.mxu0 %v4608
        %5958 = vmatprep.subr.mxu0 %v4611
        %5959 = vmatpush1.msra.mxu0 %v4610
        %5960 = vmatprep.subr.mxu0 %v4613
        %5961 = vmatpush1.msra.mxu0 %v4612
        %5962 = vmatprep.subr.mxu0 %v4615
        %5963 = vmatpush1.msra.mxu0 %v4614
        %5964 = vmatprep.subr.mxu0 %v4617
        %5965 = vmatpush1.msra.mxu0 %v4616
        %5966 = vmatprep.subr.mxu0 %v4619
        %5967 = vmatpush1.msra.mxu0 %v4618
        %5968 = vmatprep.subr.mxu0 %v4621
        %5969 = vmatpush1.msra.mxu0 %v4620
        %5970 = vmatprep.subr.mxu0 %v4623
        %5971 = vmatpush1.msra.mxu0 %v4622
        %5972 = vmatprep.subr.mxu0 %v4625
        %5973 = vmatpush1.msra.mxu0 %v4624
        %5974 = vmatprep.subr.mxu0 %v4627
        %5975 = vmatpush1.msra.mxu0 %v4626
        %5976 = vmatprep.subr.mxu0 %v4629
        %5977 = vmatpush1.msra.mxu0 %v4628
        %5978 = vmatprep.subr.mxu0 %v4631
        %5979 = vmatpush1.msra.mxu0 %v4630
        %5980 = vmatprep.subr.mxu0 %v4633
        %5981 = vmatpush1.msra.mxu0 %v4632
        %5982 = vmatprep.subr.mxu0 %v4635
        %5983 = vmatpush1.msra.mxu0 %v4634
        %5984 = vmatprep.subr.mxu0 %v4637
        %5985 = vmatpush1.msra.mxu0 %v4636
        %5986 = vmatprep.subr.mxu0 %v4639
        %5987 = vmatpush1.msra.mxu0 %v4638
        %5988 = vmatprep.subr.mxu0 %v4641
        %5989 = vmatpush1.msra.mxu0 %v4640
        %5990 = vmatprep.subr.mxu0 %v4643
        %5991 = vmatpush1.msra.mxu0 %v4642
        %5992 = vmatprep.subr.mxu0 %v4645
        %5993 = vmatpush1.msra.mxu0 %v4644
        %5994 = vmatprep.subr.mxu0 %v4647
        %5995 = vmatpush1.msra.mxu0 %v4646
        %5996 = vmatprep.subr.mxu0 %v4649
        %5997 = vmatpush1.msra.mxu0 %v4648
        %5998 = vmatprep.subr.mxu0 %v4651
        %5999 = vmatpush1.msra.mxu0 %v4650
        %6000 = vmatprep.subr.mxu0 %v4653
        %6001 = vmatpush1.msra.mxu0 %v4652
        %6002 = vmatprep.subr.mxu0 %v4655
        %6003 = vmatpush1.msra.mxu0 %v4654
        %6004 = vmatprep.subr.mxu0 %v4657
        %6005 = vmatpush1.msra.mxu0 %v4656
        %6006 = vmatprep.subr.mxu0 %v4659
        %6007 = vmatpush1.msra.mxu0 %v4658
        %6008 = vmatprep.subr.mxu0 %v4661
        %6009 = vmatpush1.msra.mxu0 %v4660
        %6010 = vmatprep.subr.mxu0 %v4663
        %6011 = vmatpush1.msra.mxu0 %v4662
        %6012 = vmatprep.subr.mxu0 %v4665
        %6013 = vmatpush1.msra.mxu0 %v4664
        %6014 = vmatprep.subr.mxu0 %v4667
        %6015 = vmatpush1.msra.mxu0 %v4666
        %6016 = vmatprep.mubr.f32.mxu0 %v4015
        %6017 = vmatmul.mubr.f32.gmra.mrb[0].mxu0 %v4014
        %v6018 = vpop.f32.mrb[0].mxu0
        %v6019 = vadd.f32 %v5948, %v6018
        %v6020 = vpop.f32.mrb[0].mxu0
        %v6021 = vadd.f32 %v5950, %v6020
        %6022 = vdwg.mxu0
        %6023 = vmatprep.subr.mxu0 %v4669
        %6024 = vmatpush1.msra.mxu0 %v4668
        %6025 = vmatprep.subr.mxu0 %v4671
        %6026 = vmatpush1.msra.mxu0 %v4670
        %6027 = vmatprep.subr.mxu0 %v4673
        %6028 = vmatpush1.msra.mxu0 %v4672
        %6029 = vmatprep.subr.mxu0 %v4675
        %6030 = vmatpush1.msra.mxu0 %v4674
        %6031 = vmatprep.subr.mxu0 %v4677
        %6032 = vmatpush1.msra.mxu0 %v4676
        %6033 = vmatprep.subr.mxu0 %v4679
        %6034 = vmatpush1.msra.mxu0 %v4678
        %6035 = vmatprep.subr.mxu0 %v4681
        %6036 = vmatpush1.msra.mxu0 %v4680
        %6037 = vmatprep.subr.mxu0 %v4683
        %6038 = vmatpush1.msra.mxu0 %v4682
        %6039 = vmatprep.subr.mxu0 %v4685
        %6040 = vmatpush1.msra.mxu0 %v4684
        %6041 = vmatprep.subr.mxu0 %v4687
        %6042 = vmatpush1.msra.mxu0 %v4686
        %6043 = vmatprep.subr.mxu0 %v4689
        %6044 = vmatpush1.msra.mxu0 %v4688
        %6045 = vmatprep.subr.mxu0 %v4691
        %6046 = vmatpush1.msra.mxu0 %v4690
        %6047 = vmatprep.subr.mxu0 %v4693
        %6048 = vmatpush1.msra.mxu0 %v4692
        %6049 = vmatprep.subr.mxu0 %v4695
        %6050 = vmatpush1.msra.mxu0 %v4694
        %6051 = vmatprep.subr.mxu0 %v4697
        %6052 = vmatpush1.msra.mxu0 %v4696
        %6053 = vmatprep.subr.mxu0 %v4699
        %6054 = vmatpush1.msra.mxu0 %v4698
        %6055 = vmatprep.subr.mxu0 %v4701
        %6056 = vmatpush1.msra.mxu0 %v4700
        %6057 = vmatprep.subr.mxu0 %v4703
        %6058 = vmatpush1.msra.mxu0 %v4702
        %6059 = vmatprep.subr.mxu0 %v4705
        %6060 = vmatpush1.msra.mxu0 %v4704
        %6061 = vmatprep.subr.mxu0 %v4707
        %6062 = vmatpush1.msra.mxu0 %v4706
        %6063 = vmatprep.subr.mxu0 %v4709
        %6064 = vmatpush1.msra.mxu0 %v4708
        %6065 = vmatprep.subr.mxu0 %v4711
        %6066 = vmatpush1.msra.mxu0 %v4710
        %6067 = vmatprep.subr.mxu0 %v4713
        %6068 = vmatpush1.msra.mxu0 %v4712
        %6069 = vmatprep.subr.mxu0 %v4715
        %6070 = vmatpush1.msra.mxu0 %v4714
        %6071 = vmatprep.subr.mxu0 %v4717
        %6072 = vmatpush1.msra.mxu0 %v4716
        %6073 = vmatprep.subr.mxu0 %v4719
        %6074 = vmatpush1.msra.mxu0 %v4718
        %6075 = vmatprep.subr.mxu0 %v4721
        %6076 = vmatpush1.msra.mxu0 %v4720
        %6077 = vmatprep.subr.mxu0 %v4723
        %6078 = vmatpush1.msra.mxu0 %v4722
        %6079 = vmatprep.subr.mxu0 %v4725
        %6080 = vmatpush1.msra.mxu0 %v4724
        %6081 = vmatprep.subr.mxu0 %v4727
        %6082 = vmatpush1.msra.mxu0 %v4726
        %6083 = vmatprep.subr.mxu0 %v4729
        %6084 = vmatpush1.msra.mxu0 %v4728
        %6085 = vmatprep.subr.mxu0 %v4731
        %6086 = vmatpush1.msra.mxu0 %v4730
        %6087 = vmatprep.mubr.f32.mxu0 %v4051
        %6088 = vmatmul.mubr.f32.gmra.mrb[0].mxu0 %v4050
        %v6089 = vpop.f32.mrb[0].mxu0
        %v6090 = vadd.f32 %v6019, %v6089
        %v6091 = vpop.f32.mrb[0].mxu0
        %v6092 = vadd.f32 %v6021, %v6091
        %6093 = vdwg.mxu0
        %6094 = vmatprep.subr.mxu0 %v4733
        %6095 = vmatpush1.msra.mxu0 %v4732
        %6096 = vmatprep.subr.mxu0 %v4735
        %6097 = vmatpush1.msra.mxu0 %v4734
        %6098 = vmatprep.subr.mxu0 %v4737
        %6099 = vmatpush1.msra.mxu0 %v4736
        %6100 = vmatprep.subr.mxu0 %v4739
        %6101 = vmatpush1.msra.mxu0 %v4738
        %6102 = vmatprep.subr.mxu0 %v4741
        %6103 = vmatpush1.msra.mxu0 %v4740
        %6104 = vmatprep.subr.mxu0 %v4743
        %6105 = vmatpush1.msra.mxu0 %v4742
        %6106 = vmatprep.subr.mxu0 %v4745
        %6107 = vmatpush1.msra.mxu0 %v4744
        %6108 = vmatprep.subr.mxu0 %v4747
        %6109 = vmatpush1.msra.mxu0 %v4746
        %6110 = vmatprep.subr.mxu0 %v4749
        %6111 = vmatpush1.msra.mxu0 %v4748
        %6112 = vmatprep.subr.mxu0 %v4751
        %6113 = vmatpush1.msra.mxu0 %v4750
        %6114 = vmatprep.subr.mxu0 %v4753
        %6115 = vmatpush1.msra.mxu0 %v4752
        %6116 = vmatprep.subr.mxu0 %v4755
        %6117 = vmatpush1.msra.mxu0 %v4754
        %6118 = vmatprep.subr.mxu0 %v4757
        %6119 = vmatpush1.msra.mxu0 %v4756
        %6120 = vmatprep.subr.mxu0 %v4759
        %6121 = vmatpush1.msra.mxu0 %v4758
        %6122 = vmatprep.subr.mxu0 %v4761
        %6123 = vmatpush1.msra.mxu0 %v4760
        %6124 = vmatprep.subr.mxu0 %v4763
        %6125 = vmatpush1.msra.mxu0 %v4762
        %6126 = vmatprep.subr.mxu0 %v4765
        %6127 = vmatpush1.msra.mxu0 %v4764
        %6128 = vmatprep.subr.mxu0 %v4767
        %6129 = vmatpush1.msra.mxu0 %v4766
        %6130 = vmatprep.subr.mxu0 %v4769
        %6131 = vmatpush1.msra.mxu0 %v4768
        %6132 = vmatprep.subr.mxu0 %v4771
        %6133 = vmatpush1.msra.mxu0 %v4770
        %6134 = vmatprep.subr.mxu0 %v4773
        %6135 = vmatpush1.msra.mxu0 %v4772
        %6136 = vmatprep.subr.mxu0 %v4775
        %6137 = vmatpush1.msra.mxu0 %v4774
        %6138 = vmatprep.subr.mxu0 %v4777
        %6139 = vmatpush1.msra.mxu0 %v4776
        %6140 = vmatprep.subr.mxu0 %v4779
        %6141 = vmatpush1.msra.mxu0 %v4778
        %6142 = vmatprep.subr.mxu0 %v4781
        %6143 = vmatpush1.msra.mxu0 %v4780
        %6144 = vmatprep.subr.mxu0 %v4783
        %6145 = vmatpush1.msra.mxu0 %v4782
        %6146 = vmatprep.subr.mxu0 %v4785
        %6147 = vmatpush1.msra.mxu0 %v4784
        %6148 = vmatprep.subr.mxu0 %v4787
        %6149 = vmatpush1.msra.mxu0 %v4786
        %6150 = vmatprep.subr.mxu0 %v4789
        %6151 = vmatpush1.msra.mxu0 %v4788
        %6152 = vmatprep.subr.mxu0 %v4791
        %6153 = vmatpush1.msra.mxu0 %v4790
        %6154 = vmatprep.subr.mxu0 %v4793
        %6155 = vmatpush1.msra.mxu0 %v4792
        %6156 = vmatprep.subr.mxu0 %v4795
        %6157 = vmatpush1.msra.mxu0 %v4794
        %6158 = vmatprep.mubr.f32.mxu0 %v4055
        %6159 = vmatmul.mubr.f32.gmra.mrb[0].mxu0 %v4054
        %v6160 = vpop.f32.mrb[0].mxu0
        %v6161 = vadd.f32 %v6090, %v6160
        %v6162 = vpop.f32.mrb[0].mxu0
        %v6163 = vadd.f32 %v6092, %v6162
        %6164 = vdwg.mxu0
        %6165 = vmatprep.subr.mxu0 %v4797
        %6166 = vmatpush1.msra.mxu0 %v4796
        %6167 = vmatprep.subr.mxu0 %v4799
        %6168 = vmatpush1.msra.mxu0 %v4798
        %6169 = vmatprep.subr.mxu0 %v4801
        %6170 = vmatpush1.msra.mxu0 %v4800
        %6171 = vmatprep.subr.mxu0 %v4803
        %6172 = vmatpush1.msra.mxu0 %v4802
        %6173 = vmatprep.subr.mxu0 %v4805
        %6174 = vmatpush1.msra.mxu0 %v4804
        %6175 = vmatprep.subr.mxu0 %v4807
        %6176 = vmatpush1.msra.mxu0 %v4806
        %6177 = vmatprep.subr.mxu0 %v4809
        %6178 = vmatpush1.msra.mxu0 %v4808
        %6179 = vmatprep.subr.mxu0 %v4811
        %6180 = vmatpush1.msra.mxu0 %v4810
        %6181 = vmatprep.subr.mxu0 %v4813
        %6182 = vmatpush1.msra.mxu0 %v4812
        %6183 = vmatprep.subr.mxu0 %v4815
        %6184 = vmatpush1.msra.mxu0 %v4814
        %6185 = vmatprep.subr.mxu0 %v4817
        %6186 = vmatpush1.msra.mxu0 %v4816
        %6187 = vmatprep.subr.mxu0 %v4819
        %6188 = vmatpush1.msra.mxu0 %v4818
        %6189 = vmatprep.subr.mxu0 %v4821
        %6190 = vmatpush1.msra.mxu0 %v4820
        %6191 = vmatprep.subr.mxu0 %v4823
        %6192 = vmatpush1.msra.mxu0 %v4822
        %6193 = vmatprep.subr.mxu0 %v4825
        %6194 = vmatpush1.msra.mxu0 %v4824
        %6195 = vmatprep.subr.mxu0 %v4827
        %6196 = vmatpush1.msra.mxu0 %v4826
        %6197 = vmatprep.subr.mxu0 %v4829
        %6198 = vmatpush1.msra.mxu0 %v4828
        %6199 = vmatprep.subr.mxu0 %v4831
        %6200 = vmatpush1.msra.mxu0 %v4830
        %6201 = vmatprep.subr.mxu0 %v4833
        %6202 = vmatpush1.msra.mxu0 %v4832
        %6203 = vmatprep.subr.mxu0 %v4835
        %6204 = vmatpush1.msra.mxu0 %v4834
        %6205 = vmatprep.subr.mxu0 %v4837
        %6206 = vmatpush1.msra.mxu0 %v4836
        %6207 = vmatprep.subr.mxu0 %v4839
        %6208 = vmatpush1.msra.mxu0 %v4838
        %6209 = vmatprep.subr.mxu0 %v4841
        %6210 = vmatpush1.msra.mxu0 %v4840
        %6211 = vmatprep.subr.mxu0 %v4843
        %6212 = vmatpush1.msra.mxu0 %v4842
        %6213 = vmatprep.subr.mxu0 %v4845
        %6214 = vmatpush1.msra.mxu0 %v4844
        %6215 = vmatprep.subr.mxu0 %v4847
        %6216 = vmatpush1.msra.mxu0 %v4846
        %6217 = vmatprep.subr.mxu0 %v4849
        %6218 = vmatpush1.msra.mxu0 %v4848
        %6219 = vmatprep.subr.mxu0 %v4851
        %6220 = vmatpush1.msra.mxu0 %v4850
        %6221 = vmatprep.subr.mxu0 %v4853
        %6222 = vmatpush1.msra.mxu0 %v4852
        %6223 = vmatprep.subr.mxu0 %v4855
        %6224 = vmatpush1.msra.mxu0 %v4854
        %6225 = vmatprep.subr.mxu0 %v4857
        %6226 = vmatpush1.msra.mxu0 %v4856
        %6227 = vmatprep.subr.mxu0 %v4859
        %6228 = vmatpush1.msra.mxu0 %v4858
        %6229 = vmatprep.mubr.f32.mxu0 %v4059
        %6230 = vmatmul.mubr.f32.gmra.mrb[0].mxu0 %v4058
        %v6231 = vpop.f32.mrb[0].mxu0
        %v6232 = vadd.f32 %v6161, %v6231
        %v6233 = vpop.f32.mrb[0].mxu0
        %v6234 = vadd.f32 %v6163, %v6233
        %6235 = vdwg.mxu0
        %6236 = vmatprep.subr.mxu0 %v4861
        %6237 = vmatpush1.msra.mxu0 %v4860
        %6238 = vmatprep.subr.mxu0 %v4863
        %6239 = vmatpush1.msra.mxu0 %v4862
        %6240 = vmatprep.subr.mxu0 %v4865
        %6241 = vmatpush1.msra.mxu0 %v4864
        %6242 = vmatprep.subr.mxu0 %v4867
        %6243 = vmatpush1.msra.mxu0 %v4866
        %6244 = vmatprep.subr.mxu0 %v4869
        %6245 = vmatpush1.msra.mxu0 %v4868
        %6246 = vmatprep.subr.mxu0 %v4871
        %6247 = vmatpush1.msra.mxu0 %v4870
        %6248 = vmatprep.subr.mxu0 %v4873
        %6249 = vmatpush1.msra.mxu0 %v4872
        %6250 = vmatprep.subr.mxu0 %v4875
        %6251 = vmatpush1.msra.mxu0 %v4874
        %6252 = vmatprep.subr.mxu0 %v4877
        %6253 = vmatpush1.msra.mxu0 %v4876
        %6254 = vmatprep.subr.mxu0 %v4879
        %6255 = vmatpush1.msra.mxu0 %v4878
        %6256 = vmatprep.subr.mxu0 %v4881
        %6257 = vmatpush1.msra.mxu0 %v4880
        %6258 = vmatprep.subr.mxu0 %v4883
        %6259 = vmatpush1.msra.mxu0 %v4882
        %6260 = vmatprep.subr.mxu0 %v4885
        %6261 = vmatpush1.msra.mxu0 %v4884
        %6262 = vmatprep.subr.mxu0 %v4887
        %6263 = vmatpush1.msra.mxu0 %v4886
        %6264 = vmatprep.subr.mxu0 %v4889
        %6265 = vmatpush1.msra.mxu0 %v4888
        %6266 = vmatprep.subr.mxu0 %v4891
        %6267 = vmatpush1.msra.mxu0 %v4890
        %6268 = vmatprep.subr.mxu0 %v4893
        %6269 = vmatpush1.msra.mxu0 %v4892
        %6270 = vmatprep.subr.mxu0 %v4895
        %6271 = vmatpush1.msra.mxu0 %v4894
        %6272 = vmatprep.subr.mxu0 %v4897
        %6273 = vmatpush1.msra.mxu0 %v4896
        %6274 = vmatprep.subr.mxu0 %v4899
        %6275 = vmatpush1.msra.mxu0 %v4898
        %6276 = vmatprep.subr.mxu0 %v4901
        %6277 = vmatpush1.msra.mxu0 %v4900
        %6278 = vmatprep.subr.mxu0 %v4903
        %6279 = vmatpush1.msra.mxu0 %v4902
        %6280 = vmatprep.subr.mxu0 %v4905
        %6281 = vmatpush1.msra.mxu0 %v4904
        %6282 = vmatprep.subr.mxu0 %v4907
        %6283 = vmatpush1.msra.mxu0 %v4906
        %6284 = vmatprep.subr.mxu0 %v4909
        %6285 = vmatpush1.msra.mxu0 %v4908
        %6286 = vmatprep.subr.mxu0 %v4911
        %6287 = vmatpush1.msra.mxu0 %v4910
        %6288 = vmatprep.subr.mxu0 %v4913
        %6289 = vmatpush1.msra.mxu0 %v4912
        %6290 = vmatprep.subr.mxu0 %v4915
        %6291 = vmatpush1.msra.mxu0 %v4914
        %6292 = vmatprep.subr.mxu0 %v4917
        %6293 = vmatpush1.msra.mxu0 %v4916
        %6294 = vmatprep.subr.mxu0 %v4919
        %6295 = vmatpush1.msra.mxu0 %v4918
        %6296 = vmatprep.subr.mxu0 %v4921
        %6297 = vmatpush1.msra.mxu0 %v4920
        %6298 = vmatprep.subr.mxu0 %v4923
        %6299 = vmatpush1.msra.mxu0 %v4922
        %6300 = vmatprep.mubr.f32.mxu0 %v4063
        %6301 = vmatmul.mubr.f32.gmra.mrb[0].mxu0 %v4062
        %v6302 = vpop.f32.mrb[0].mxu0
        %v6303 = vadd.f32 %v6232, %v6302
        %v6304 = vpop.f32.mrb[0].mxu0
        %v6305 = vadd.f32 %v6234, %v6304
        %6306 = vdwg.mxu0
        %6307 = vmatprep.subr.mxu0 %v4925
        %6308 = vmatpush1.msra.mxu0 %v4924
        %6309 = vmatprep.subr.mxu0 %v4927
        %6310 = vmatpush1.msra.mxu0 %v4926
        %6311 = vmatprep.subr.mxu0 %v4929
        %6312 = vmatpush1.msra.mxu0 %v4928
        %6313 = vmatprep.subr.mxu0 %v4931
        %6314 = vmatpush1.msra.mxu0 %v4930
        %6315 = vmatprep.subr.mxu0 %v4933
        %6316 = vmatpush1.msra.mxu0 %v4932
        %6317 = vmatprep.subr.mxu0 %v4935
        %6318 = vmatpush1.msra.mxu0 %v4934
        %6319 = vmatprep.subr.mxu0 %v4937
        %6320 = vmatpush1.msra.mxu0 %v4936
        %6321 = vmatprep.subr.mxu0 %v4939
        %6322 = vmatpush1.msra.mxu0 %v4938
        %6323 = vmatprep.subr.mxu0 %v4941
        %6324 = vmatpush1.msra.mxu0 %v4940
        %6325 = vmatprep.subr.mxu0 %v4943
        %6326 = vmatpush1.msra.mxu0 %v4942
        %6327 = vmatprep.subr.mxu0 %v4945
        %6328 = vmatpush1.msra.mxu0 %v4944
        %6329 = vmatprep.subr.mxu0 %v4947
        %6330 = vmatpush1.msra.mxu0 %v4946
        %6331 = vmatprep.subr.mxu0 %v4949
        %6332 = vmatpush1.msra.mxu0 %v4948
        %6333 = vmatprep.subr.mxu0 %v4951
        %6334 = vmatpush1.msra.mxu0 %v4950
        %6335 = vmatprep.subr.mxu0 %v4953
        %6336 = vmatpush1.msra.mxu0 %v4952
        %6337 = vmatprep.subr.mxu0 %v4955
        %6338 = vmatpush1.msra.mxu0 %v4954
        %6339 = vmatprep.subr.mxu0 %v4957
        %6340 = vmatpush1.msra.mxu0 %v4956
        %6341 = vmatprep.subr.mxu0 %v4959
        %6342 = vmatpush1.msra.mxu0 %v4958
        %6343 = vmatprep.subr.mxu0 %v4961
        %6344 = vmatpush1.msra.mxu0 %v4960
        %6345 = vmatprep.subr.mxu0 %v4963
        %6346 = vmatpush1.msra.mxu0 %v4962
        %6347 = vmatprep.subr.mxu0 %v4965
        %6348 = vmatpush1.msra.mxu0 %v4964
        %6349 = vmatprep.subr.mxu0 %v4967
        %6350 = vmatpush1.msra.mxu0 %v4966
        %6351 = vmatprep.subr.mxu0 %v4969
        %6352 = vmatpush1.msra.mxu0 %v4968
        %6353 = vmatprep.subr.mxu0 %v4971
        %6354 = vmatpush1.msra.mxu0 %v4970
        %6355 = vmatprep.subr.mxu0 %v4973
        %6356 = vmatpush1.msra.mxu0 %v4972
        %6357 = vmatprep.subr.mxu0 %v4975
        %6358 = vmatpush1.msra.mxu0 %v4974
        %6359 = vmatprep.subr.mxu0 %v4977
        %6360 = vmatpush1.msra.mxu0 %v4976
        %6361 = vmatprep.subr.mxu0 %v4979
        %6362 = vmatpush1.msra.mxu0 %v4978
        %6363 = vmatprep.subr.mxu0 %v4981
        %6364 = vmatpush1.msra.mxu0 %v4980
        %6365 = vmatprep.subr.mxu0 %v4983
        %6366 = vmatpush1.msra.mxu0 %v4982
        %6367 = vmatprep.subr.mxu0 %v4985
        %6368 = vmatpush1.msra.mxu0 %v4984
        %6369 = vmatprep.subr.mxu0 %v4987
        %6370 = vmatpush1.msra.mxu0 %v4986
        %6371 = vmatprep.mubr.f32.mxu0 %v4067
        %6372 = vmatmul.mubr.f32.gmra.mrb[0].mxu0 %v4066
        %v6373 = vpop.f32.mrb[0].mxu0
        %v6374 = vadd.f32 %v6303, %v6373
        %v6375 = vpop.f32.mrb[0].mxu0
        %v6376 = vadd.f32 %v6305, %v6375
        %6377 = vdwg.mxu0
        %6378 = vmatprep.subr.mxu0 %v4989
        %6379 = vmatpush1.msra.mxu0 %v4988
        %6380 = vmatprep.subr.mxu0 %v4991
        %6381 = vmatpush1.msra.mxu0 %v4990
        %6382 = vmatprep.subr.mxu0 %v4993
        %6383 = vmatpush1.msra.mxu0 %v4992
        %6384 = vmatprep.subr.mxu0 %v4995
        %6385 = vmatpush1.msra.mxu0 %v4994
        %6386 = vmatprep.subr.mxu0 %v4997
        %6387 = vmatpush1.msra.mxu0 %v4996
        %6388 = vmatprep.subr.mxu0 %v4999
        %6389 = vmatpush1.msra.mxu0 %v4998
        %6390 = vmatprep.subr.mxu0 %v5001
        %6391 = vmatpush1.msra.mxu0 %v5000
        %6392 = vmatprep.subr.mxu0 %v5003
        %6393 = vmatpush1.msra.mxu0 %v5002
        %6394 = vmatprep.subr.mxu0 %v5005
        %6395 = vmatpush1.msra.mxu0 %v5004
        %6396 = vmatprep.subr.mxu0 %v5007
        %6397 = vmatpush1.msra.mxu0 %v5006
        %6398 = vmatprep.subr.mxu0 %v5009
        %6399 = vmatpush1.msra.mxu0 %v5008
        %6400 = vmatprep.subr.mxu0 %v5011
        %6401 = vmatpush1.msra.mxu0 %v5010
        %6402 = vmatprep.subr.mxu0 %v5013
        %6403 = vmatpush1.msra.mxu0 %v5012
        %6404 = vmatprep.subr.mxu0 %v5015
        %6405 = vmatpush1.msra.mxu0 %v5014
        %6406 = vmatprep.subr.mxu0 %v5017
        %6407 = vmatpush1.msra.mxu0 %v5016
        %6408 = vmatprep.subr.mxu0 %v5019
        %6409 = vmatpush1.msra.mxu0 %v5018
        %6410 = vmatprep.subr.mxu0 %v5021
        %6411 = vmatpush1.msra.mxu0 %v5020
        %6412 = vmatprep.subr.mxu0 %v5023
        %6413 = vmatpush1.msra.mxu0 %v5022
        %6414 = vmatprep.subr.mxu0 %v5025
        %6415 = vmatpush1.msra.mxu0 %v5024
        %6416 = vmatprep.subr.mxu0 %v5027
        %6417 = vmatpush1.msra.mxu0 %v5026
        %6418 = vmatprep.subr.mxu0 %v5029
        %6419 = vmatpush1.msra.mxu0 %v5028
        %6420 = vmatprep.subr.mxu0 %v5031
        %6421 = vmatpush1.msra.mxu0 %v5030
        %6422 = vmatprep.subr.mxu0 %v5033
        %6423 = vmatpush1.msra.mxu0 %v5032
        %6424 = vmatprep.subr.mxu0 %v5035
        %6425 = vmatpush1.msra.mxu0 %v5034
        %6426 = vmatprep.subr.mxu0 %v5037
        %6427 = vmatpush1.msra.mxu0 %v5036
        %6428 = vmatprep.subr.mxu0 %v5039
        %6429 = vmatpush1.msra.mxu0 %v5038
        %6430 = vmatprep.subr.mxu0 %v5041
        %6431 = vmatpush1.msra.mxu0 %v5040
        %6432 = vmatprep.subr.mxu0 %v5043
        %6433 = vmatpush1.msra.mxu0 %v5042
        %6434 = vmatprep.subr.mxu0 %v5045
        %6435 = vmatpush1.msra.mxu0 %v5044
        %6436 = vmatprep.subr.mxu0 %v5047
        %6437 = vmatpush1.msra.mxu0 %v5046
        %6438 = vmatprep.subr.mxu0 %v5049
        %6439 = vmatpush1.msra.mxu0 %v5048
        %6440 = vmatprep.subr.mxu0 %v5051
        %6441 = vmatpush1.msra.mxu0 %v5050
        %6442 = vmatprep.mubr.f32.mxu0 %v4071
        %6443 = vmatmul.mubr.f32.gmra.mrb[0].mxu0 %v4070
        %v6444 = vpop.f32.mrb[0].mxu0
        %v6445 = vadd.f32 %v6374, %v6444
        %v6446 = vpop.f32.mrb[0].mxu0
        %v6447 = vadd.f32 %v6376, %v6446
        %6448 = vdwg.mxu0
        %6449 = vmatprep.subr.mxu0 %v5053
        %6450 = vmatpush1.msra.mxu0 %v5052
        %6451 = vmatprep.subr.mxu0 %v5055
        %6452 = vmatpush1.msra.mxu0 %v5054
        %6453 = vmatprep.subr.mxu0 %v5057
        %6454 = vmatpush1.msra.mxu0 %v5056
        %6455 = vmatprep.subr.mxu0 %v5059
        %6456 = vmatpush1.msra.mxu0 %v5058
        %6457 = vmatprep.subr.mxu0 %v5061
        %6458 = vmatpush1.msra.mxu0 %v5060
        %6459 = vmatprep.subr.mxu0 %v5063
        %6460 = vmatpush1.msra.mxu0 %v5062
        %6461 = vmatprep.subr.mxu0 %v5065
        %6462 = vmatpush1.msra.mxu0 %v5064
        %6463 = vmatprep.subr.mxu0 %v5067
        %6464 = vmatpush1.msra.mxu0 %v5066
        %6465 = vmatprep.subr.mxu0 %v5069
        %6466 = vmatpush1.msra.mxu0 %v5068
        %6467 = vmatprep.subr.mxu0 %v5071
        %6468 = vmatpush1.msra.mxu0 %v5070
        %6469 = vmatprep.subr.mxu0 %v5073
        %6470 = vmatpush1.msra.mxu0 %v5072
        %6471 = vmatprep.subr.mxu0 %v5075
        %6472 = vmatpush1.msra.mxu0 %v5074
        %6473 = vmatprep.subr.mxu0 %v5077
        %6474 = vmatpush1.msra.mxu0 %v5076
        %6475 = vmatprep.subr.mxu0 %v5079
        %6476 = vmatpush1.msra.mxu0 %v5078
        %6477 = vmatprep.subr.mxu0 %v5081
        %6478 = vmatpush1.msra.mxu0 %v5080
        %6479 = vmatprep.subr.mxu0 %v5083
        %6480 = vmatpush1.msra.mxu0 %v5082
        %6481 = vmatprep.subr.mxu0 %v5085
        %6482 = vmatpush1.msra.mxu0 %v5084
        %6483 = vmatprep.subr.mxu0 %v5087
        %6484 = vmatpush1.msra.mxu0 %v5086
        %6485 = vmatprep.subr.mxu0 %v5089
        %6486 = vmatpush1.msra.mxu0 %v5088
        %6487 = vmatprep.subr.mxu0 %v5091
        %6488 = vmatpush1.msra.mxu0 %v5090
        %6489 = vmatprep.subr.mxu0 %v5093
        %6490 = vmatpush1.msra.mxu0 %v5092
        %6491 = vmatprep.subr.mxu0 %v5095
        %6492 = vmatpush1.msra.mxu0 %v5094
        %6493 = vmatprep.subr.mxu0 %v5097
        %6494 = vmatpush1.msra.mxu0 %v5096
        %6495 = vmatprep.subr.mxu0 %v5099
        %6496 = vmatpush1.msra.mxu0 %v5098
        %6497 = vmatprep.subr.mxu0 %v5101
        %6498 = vmatpush1.msra.mxu0 %v5100
        %6499 = vmatprep.subr.mxu0 %v5103
        %6500 = vmatpush1.msra.mxu0 %v5102
        %6501 = vmatprep.subr.mxu0 %v5105
        %6502 = vmatpush1.msra.mxu0 %v5104
        %6503 = vmatprep.subr.mxu0 %v5107
        %6504 = vmatpush1.msra.mxu0 %v5106
        %6505 = vmatprep.subr.mxu0 %v5109
        %6506 = vmatpush1.msra.mxu0 %v5108
        %6507 = vmatprep.subr.mxu0 %v5111
        %6508 = vmatpush1.msra.mxu0 %v5110
        %6509 = vmatprep.subr.mxu0 %v5113
        %6510 = vmatpush1.msra.mxu0 %v5112
        %6511 = vmatprep.subr.mxu0 %v5115
        %6512 = vmatpush1.msra.mxu0 %v5114
        %6513 = vmatprep.mubr.f32.mxu0 %v4075
        %6514 = vmatmul.mubr.f32.gmra.mrb[0].mxu0 %v4074
        %v6515 = vpop.f32.mrb[0].mxu0
        %v6516 = vadd.f32 %v6445, %v6515
        %v6517 = vpop.f32.mrb[0].mxu0
        %v6518 = vadd.f32 %v6447, %v6517
        %6519 = vdwg.mxu0
        %6520 = vmatprep.subr.mxu0 %v5117
        %6521 = vmatpush1.msra.mxu0 %v5116
        %6522 = vmatprep.subr.mxu0 %v5119
        %6523 = vmatpush1.msra.mxu0 %v5118
        %6524 = vmatprep.subr.mxu0 %v5121
        %6525 = vmatpush1.msra.mxu0 %v5120
        %6526 = vmatprep.subr.mxu0 %v5123
        %6527 = vmatpush1.msra.mxu0 %v5122
        %6528 = vmatprep.subr.mxu0 %v5125
        %6529 = vmatpush1.msra.mxu0 %v5124
        %6530 = vmatprep.subr.mxu0 %v5127
        %6531 = vmatpush1.msra.mxu0 %v5126
        %6532 = vmatprep.subr.mxu0 %v5129
        %6533 = vmatpush1.msra.mxu0 %v5128
        %6534 = vmatprep.subr.mxu0 %v5131
        %6535 = vmatpush1.msra.mxu0 %v5130
        %6536 = vmatprep.subr.mxu0 %v5133
        %6537 = vmatpush1.msra.mxu0 %v5132
        %6538 = vmatprep.subr.mxu0 %v5135
        %6539 = vmatpush1.msra.mxu0 %v5134
        %6540 = vmatprep.subr.mxu0 %v5137
        %6541 = vmatpush1.msra.mxu0 %v5136
        %6542 = vmatprep.subr.mxu0 %v5139
        %6543 = vmatpush1.msra.mxu0 %v5138
        %6544 = vmatprep.subr.mxu0 %v5141
        %6545 = vmatpush1.msra.mxu0 %v5140
        %6546 = vmatprep.subr.mxu0 %v5143
        %6547 = vmatpush1.msra.mxu0 %v5142
        %6548 = vmatprep.subr.mxu0 %v5145
        %6549 = vmatpush1.msra.mxu0 %v5144
        %6550 = vmatprep.subr.mxu0 %v5147
        %6551 = vmatpush1.msra.mxu0 %v5146
        %6552 = vmatprep.subr.mxu0 %v5149
        %6553 = vmatpush1.msra.mxu0 %v5148
        %6554 = vmatprep.subr.mxu0 %v5151
        %6555 = vmatpush1.msra.mxu0 %v5150
        %6556 = vmatprep.subr.mxu0 %v5153
        %6557 = vmatpush1.msra.mxu0 %v5152
        %6558 = vmatprep.subr.mxu0 %v5155
        %6559 = vmatpush1.msra.mxu0 %v5154
        %6560 = vmatprep.subr.mxu0 %v5157
        %6561 = vmatpush1.msra.mxu0 %v5156
        %6562 = vmatprep.subr.mxu0 %v5159
        %6563 = vmatpush1.msra.mxu0 %v5158
        %6564 = vmatprep.subr.mxu0 %v5161
        %6565 = vmatpush1.msra.mxu0 %v5160
        %6566 = vmatprep.subr.mxu0 %v5163
        %6567 = vmatpush1.msra.mxu0 %v5162
        %6568 = vmatprep.subr.mxu0 %v5165
        %6569 = vmatpush1.msra.mxu0 %v5164
        %6570 = vmatprep.subr.mxu0 %v5167
        %6571 = vmatpush1.msra.mxu0 %v5166
        %6572 = vmatprep.subr.mxu0 %v5169
        %6573 = vmatpush1.msra.mxu0 %v5168
        %6574 = vmatprep.subr.mxu0 %v5171
        %6575 = vmatpush1.msra.mxu0 %v5170
        %6576 = vmatprep.subr.mxu0 %v5173
        %6577 = vmatpush1.msra.mxu0 %v5172
        %6578 = vmatprep.subr.mxu0 %v5175
        %6579 = vmatpush1.msra.mxu0 %v5174
        %6580 = vmatprep.subr.mxu0 %v5177
        %6581 = vmatpush1.msra.mxu0 %v5176
        %6582 = vmatprep.subr.mxu0 %v5179
        %6583 = vmatpush1.msra.mxu0 %v5178
        %6584 = vmatprep.mubr.f32.mxu0 %v4017
        %6585 = vmatmul.mubr.f32.gmra.mrb[0].mxu0 %v4016
        %v6586 = vpop.f32.mrb[0].mxu0
        %v6587 = vadd.f32 %v6516, %v6586
        %v6588 = vpop.f32.mrb[0].mxu0
        %v6589 = vadd.f32 %v6518, %v6588
        %6590 = vdwg.mxu0
        %6591 = vmatprep.subr.mxu0 %v5181
        %6592 = vmatpush1.msra.mxu0 %v5180
        %6593 = vmatprep.subr.mxu0 %v5183
        %6594 = vmatpush1.msra.mxu0 %v5182
        %6595 = vmatprep.subr.mxu0 %v5185
        %6596 = vmatpush1.msra.mxu0 %v5184
        %6597 = vmatprep.subr.mxu0 %v5187
        %6598 = vmatpush1.msra.mxu0 %v5186
        %6599 = vmatprep.subr.mxu0 %v5189
        %6600 = vmatpush1.msra.mxu0 %v5188
        %6601 = vmatprep.subr.mxu0 %v5191
        %6602 = vmatpush1.msra.mxu0 %v5190
        %6603 = vmatprep.subr.mxu0 %v5193
        %6604 = vmatpush1.msra.mxu0 %v5192
        %6605 = vmatprep.subr.mxu0 %v5195
        %6606 = vmatpush1.msra.mxu0 %v5194
        %6607 = vmatprep.subr.mxu0 %v5197
        %6608 = vmatpush1.msra.mxu0 %v5196
        %6609 = vmatprep.subr.mxu0 %v5199
        %6610 = vmatpush1.msra.mxu0 %v5198
        %6611 = vmatprep.subr.mxu0 %v5201
        %6612 = vmatpush1.msra.mxu0 %v5200
        %6613 = vmatprep.subr.mxu0 %v5203
        %6614 = vmatpush1.msra.mxu0 %v5202
        %6615 = vmatprep.subr.mxu0 %v5205
        %6616 = vmatpush1.msra.mxu0 %v5204
        %6617 = vmatprep.subr.mxu0 %v5207
        %6618 = vmatpush1.msra.mxu0 %v5206
        %6619 = vmatprep.subr.mxu0 %v5209
        %6620 = vmatpush1.msra.mxu0 %v5208
        %6621 = vmatprep.subr.mxu0 %v5211
        %6622 = vmatpush1.msra.mxu0 %v5210
        %6623 = vmatprep.subr.mxu0 %v5213
        %6624 = vmatpush1.msra.mxu0 %v5212
        %6625 = vmatprep.subr.mxu0 %v5215
        %6626 = vmatpush1.msra.mxu0 %v5214
        %6627 = vmatprep.subr.mxu0 %v5217
        %6628 = vmatpush1.msra.mxu0 %v5216
        %6629 = vmatprep.subr.mxu0 %v5219
        %6630 = vmatpush1.msra.mxu0 %v5218
        %6631 = vmatprep.subr.mxu0 %v5221
        %6632 = vmatpush1.msra.mxu0 %v5220
        %6633 = vmatprep.subr.mxu0 %v5223
        %6634 = vmatpush1.msra.mxu0 %v5222
        %6635 = vmatprep.subr.mxu0 %v5225
        %6636 = vmatpush1.msra.mxu0 %v5224
        %6637 = vmatprep.subr.mxu0 %v5227
        %6638 = vmatpush1.msra.mxu0 %v5226
        %6639 = vmatprep.subr.mxu0 %v5229
        %6640 = vmatpush1.msra.mxu0 %v5228
        %6641 = vmatprep.subr.mxu0 %v5231
        %6642 = vmatpush1.msra.mxu0 %v5230
        %6643 = vmatprep.subr.mxu0 %v5233
        %6644 = vmatpush1.msra.mxu0 %v5232
        %6645 = vmatprep.subr.mxu0 %v5235
        %6646 = vmatpush1.msra.mxu0 %v5234
        %6647 = vmatprep.subr.mxu0 %v5237
        %6648 = vmatpush1.msra.mxu0 %v5236
        %6649 = vmatprep.subr.mxu0 %v5239
        %6650 = vmatpush1.msra.mxu0 %v5238
        %6651 = vmatprep.subr.mxu0 %v5241
        %6652 = vmatpush1.msra.mxu0 %v5240
        %6653 = vmatprep.subr.mxu0 %v5243
        %6654 = vmatpush1.msra.mxu0 %v5242
        %6655 = vmatprep.mubr.f32.mxu0 %v4081
        %6656 = vmatmul.mubr.f32.gmra.mrb[0].mxu0 %v4080
        %v6657 = vpop.f32.mrb[0].mxu0
        %v6658 = vadd.f32 %v6587, %v6657
        %v6659 = vpop.f32.mrb[0].mxu0
        %v6660 = vadd.f32 %v6589, %v6659
        %6661 = vdwg.mxu0
        %6662 = vmatprep.subr.mxu0 %v5245
        %6663 = vmatpush1.msra.mxu0 %v5244
        %6664 = vmatprep.subr.mxu0 %v5247
        %6665 = vmatpush1.msra.mxu0 %v5246
        %6666 = vmatprep.subr.mxu0 %v5249
        %6667 = vmatpush1.msra.mxu0 %v5248
        %6668 = vmatprep.subr.mxu0 %v5251
        %6669 = vmatpush1.msra.mxu0 %v5250
        %6670 = vmatprep.subr.mxu0 %v5253
        %6671 = vmatpush1.msra.mxu0 %v5252
        %6672 = vmatprep.subr.mxu0 %v5255
        %6673 = vmatpush1.msra.mxu0 %v5254
        %6674 = vmatprep.subr.mxu0 %v5257
        %6675 = vmatpush1.msra.mxu0 %v5256
        %6676 = vmatprep.subr.mxu0 %v5259
        %6677 = vmatpush1.msra.mxu0 %v5258
        %6678 = vmatprep.subr.mxu0 %v5261
        %6679 = vmatpush1.msra.mxu0 %v5260
        %6680 = vmatprep.subr.mxu0 %v5263
        %6681 = vmatpush1.msra.mxu0 %v5262
        %6682 = vmatprep.subr.mxu0 %v5265
        %6683 = vmatpush1.msra.mxu0 %v5264
        %6684 = vmatprep.subr.mxu0 %v5267
        %6685 = vmatpush1.msra.mxu0 %v5266
        %6686 = vmatprep.subr.mxu0 %v5269
        %6687 = vmatpush1.msra.mxu0 %v5268
        %6688 = vmatprep.subr.mxu0 %v5271
        %6689 = vmatpush1.msra.mxu0 %v5270
        %6690 = vmatprep.subr.mxu0 %v5273
        %6691 = vmatpush1.msra.mxu0 %v5272
        %6692 = vmatprep.subr.mxu0 %v5275
        %6693 = vmatpush1.msra.mxu0 %v5274
        %6694 = vmatprep.subr.mxu0 %v5277
        %6695 = vmatpush1.msra.mxu0 %v5276
        %6696 = vmatprep.subr.mxu0 %v5279
        %6697 = vmatpush1.msra.mxu0 %v5278
        %6698 = vmatprep.subr.mxu0 %v5281
        %6699 = vmatpush1.msra.mxu0 %v5280
        %6700 = vmatprep.subr.mxu0 %v5283
        %6701 = vmatpush1.msra.mxu0 %v5282
        %6702 = vmatprep.subr.mxu0 %v5285
        %6703 = vmatpush1.msra.mxu0 %v5284
        %6704 = vmatprep.subr.mxu0 %v5287
        %6705 = vmatpush1.msra.mxu0 %v5286
        %6706 = vmatprep.subr.mxu0 %v5289
        %6707 = vmatpush1.msra.mxu0 %v5288
        %6708 = vmatprep.subr.mxu0 %v5291
        %6709 = vmatpush1.msra.mxu0 %v5290
        %6710 = vmatprep.subr.mxu0 %v5293
        %6711 = vmatpush1.msra.mxu0 %v5292
        %6712 = vmatprep.subr.mxu0 %v5295
        %6713 = vmatpush1.msra.mxu0 %v5294
        %6714 = vmatprep.subr.mxu0 %v5297
        %6715 = vmatpush1.msra.mxu0 %v5296
        %6716 = vmatprep.subr.mxu0 %v5299
        %6717 = vmatpush1.msra.mxu0 %v5298
        %6718 = vmatprep.subr.mxu0 %v5301
        %6719 = vmatpush1.msra.mxu0 %v5300
        %6720 = vmatprep.subr.mxu0 %v5303
        %6721 = vmatpush1.msra.mxu0 %v5302
        %6722 = vmatprep.subr.mxu0 %v5305
        %6723 = vmatpush1.msra.mxu0 %v5304
        %6724 = vmatprep.subr.mxu0 %v5307
        %6725 = vmatpush1.msra.mxu0 %v5306
        %6726 = vmatprep.mubr.f32.mxu0 %v4085
        %6727 = vmatmul.mubr.f32.gmra.mrb[0].mxu0 %v4084
        %v6728 = vpop.f32.mrb[0].mxu0
        %v6729 = vadd.f32 %v6658, %v6728
        %v6730 = vpop.f32.mrb[0].mxu0
        %v6731 = vadd.f32 %v6660, %v6730
        %6732 = vdwg.mxu0
        %6733 = vmatprep.subr.mxu0 %v5309
        %6734 = vmatpush1.msra.mxu0 %v5308
        %6735 = vmatprep.subr.mxu0 %v5311
        %6736 = vmatpush1.msra.mxu0 %v5310
        %6737 = vmatprep.subr.mxu0 %v5313
        %6738 = vmatpush1.msra.mxu0 %v5312
        %6739 = vmatprep.subr.mxu0 %v5315
        %6740 = vmatpush1.msra.mxu0 %v5314
        %6741 = vmatprep.subr.mxu0 %v5317
        %6742 = vmatpush1.msra.mxu0 %v5316
        %6743 = vmatprep.subr.mxu0 %v5319
        %6744 = vmatpush1.msra.mxu0 %v5318
        %6745 = vmatprep.subr.mxu0 %v5321
        %6746 = vmatpush1.msra.mxu0 %v5320
        %6747 = vmatprep.subr.mxu0 %v5323
        %6748 = vmatpush1.msra.mxu0 %v5322
        %6749 = vmatprep.subr.mxu0 %v5325
        %6750 = vmatpush1.msra.mxu0 %v5324
        %6751 = vmatprep.subr.mxu0 %v5327
        %6752 = vmatpush1.msra.mxu0 %v5326
        %6753 = vmatprep.subr.mxu0 %v5329
        %6754 = vmatpush1.msra.mxu0 %v5328
        %6755 = vmatprep.subr.mxu0 %v5331
        %6756 = vmatpush1.msra.mxu0 %v5330
        %6757 = vmatprep.subr.mxu0 %v5333
        %6758 = vmatpush1.msra.mxu0 %v5332
        %6759 = vmatprep.subr.mxu0 %v5335
        %6760 = vmatpush1.msra.mxu0 %v5334
        %6761 = vmatprep.subr.mxu0 %v5337
        %6762 = vmatpush1.msra.mxu0 %v5336
        %6763 = vmatprep.subr.mxu0 %v5339
        %6764 = vmatpush1.msra.mxu0 %v5338
        %6765 = vmatprep.subr.mxu0 %v5341
        %6766 = vmatpush1.msra.mxu0 %v5340
        %6767 = vmatprep.subr.mxu0 %v5343
        %6768 = vmatpush1.msra.mxu0 %v5342
        %6769 = vmatprep.subr.mxu0 %v5345
        %6770 = vmatpush1.msra.mxu0 %v5344
        %6771 = vmatprep.subr.mxu0 %v5347
        %6772 = vmatpush1.msra.mxu0 %v5346
        %6773 = vmatprep.subr.mxu0 %v5349
        %6774 = vmatpush1.msra.mxu0 %v5348
        %6775 = vmatprep.subr.mxu0 %v5351
        %6776 = vmatpush1.msra.mxu0 %v5350
        %6777 = vmatprep.subr.mxu0 %v5353
        %6778 = vmatpush1.msra.mxu0 %v5352
        %6779 = vmatprep.subr.mxu0 %v5355
        %6780 = vmatpush1.msra.mxu0 %v5354
        %6781 = vmatprep.subr.mxu0 %v5357
        %6782 = vmatpush1.msra.mxu0 %v5356
        %6783 = vmatprep.subr.mxu0 %v5359
        %6784 = vmatpush1.msra.mxu0 %v5358
        %6785 = vmatprep.subr.mxu0 %v5361
        %6786 = vmatpush1.msra.mxu0 %v5360
        %6787 = vmatprep.subr.mxu0 %v5363
        %6788 = vmatpush1.msra.mxu0 %v5362
        %6789 = vmatprep.subr.mxu0 %v5365
        %6790 = vmatpush1.msra.mxu0 %v5364
        %6791 = vmatprep.subr.mxu0 %v5367
        %6792 = vmatpush1.msra.mxu0 %v5366
        %6793 = vmatprep.subr.mxu0 %v5369
        %6794 = vmatpush1.msra.mxu0 %v5368
        %6795 = vmatprep.subr.mxu0 %v5371
        %6796 = vmatpush1.msra.mxu0 %v5370
        %6797 = vmatprep.mubr.f32.mxu0 %v4089
        %6798 = vmatmul.mubr.f32.gmra.mrb[0].mxu0 %v4088
        %v6799 = vpop.f32.mrb[0].mxu0
        %v6800 = vadd.f32 %v6729, %v6799
        %v6801 = vpop.f32.mrb[0].mxu0
        %v6802 = vadd.f32 %v6731, %v6801
        %6803 = vdwg.mxu0
        %v6804 = vmax.f32 %v6800, 0.0
        %v6805 = vmax.f32 %v6802, 0.0
        %v6806 = vld [vmem:[%s7] sm:$0xff]
        %v6807 = vld [vmem:[%s7 + $0x8] sm:$0xff]
        %v6808 = vld [vmem:[%s7 + $0x10] sm:$0xff]
        %v6809 = vld [vmem:[%s7 + $0x18] sm:$0xff]
        %v6810 = vld [vmem:[%s7 + $0x20] sm:$0xff]
        %v6811 = vld [vmem:[%s7 + $0x28] sm:$0xff]
        %v6812 = vld [vmem:[%s7 + $0x30] sm:$0xff]
        %v6813 = vld [vmem:[%s7 + $0x38] sm:$0xff]
        %v6814 = vld [vmem:[%s7 + $0x40] sm:$0xff]
        %v6815 = vld [vmem:[%s7 + $0x48] sm:$0xff]
        %v6816 = vld [vmem:[%s7 + $0x50] sm:$0xff]
        %v6817 = vld [vmem:[%s7 + $0x58] sm:$0xff]
        %v6818 = vld [vmem:[%s7 + $0x60] sm:$0xff]
        %v6819 = vld [vmem:[%s7 + $0x68] sm:$0xff]
        %v6820 = vld [vmem:[%s7 + $0x70] sm:$0xff]
        %v6821 = vld [vmem:[%s7 + $0x78] sm:$0xff]
        %v6822 = vld [vmem:[%s7 + $0x80] sm:$0xff]
        %v6823 = vld [vmem:[%s7 + $0x88] sm:$0xff]
        %v6824 = vld [vmem:[%s7 + $0x90] sm:$0xff]
        %v6825 = vld [vmem:[%s7 + $0x98] sm:$0xff]
        %v6826 = vld [vmem:[%s7 + $0xa0] sm:$0xff]
        %v6827 = vld [vmem:[%s7 + $0xa8] sm:$0xff]
        %v6828 = vld [vmem:[%s7 + $0xb0] sm:$0xff]
        %v6829 = vld [vmem:[%s7 + $0xb8] sm:$0xff]
        %v6830 = vld [vmem:[%s7 + $0xc0] sm:$0xff]
        %v6831 = vld [vmem:[%s7 + $0xc8] sm:$0xff]
        %v6832 = vld [vmem:[%s7 + $0xd0] sm:$0xff]
        %v6833 = vld [vmem:[%s7 + $0xd8] sm:$0xff]
        %v6834 = vld [vmem:[%s7 + $0xe0] sm:$0xff]
        %v6835 = vld [vmem:[%s7 + $0xe8] sm:$0xff]
        %v6836 = vld [vmem:[%s7 + $0xf0] sm:$0xff]
        %v6837 = vld [vmem:[%s7 + $0xf8] sm:$0xff]
        %v6838 = vld [vmem:[%s8] sm:$0x1]
        %6839 = vmatprep.subr.mxu0 0.0
        %6840 = vmatpush1.msra.mxu0 %v6806
        %6841 = vmatprep.subr.mxu0 0.0
        %6842 = vmatpush1.msra.mxu0 %v6807
        %6843 = vmatprep.subr.mxu0 0.0
        %6844 = vmatpush1.msra.mxu0 %v6808
        %6845 = vmatprep.subr.mxu0 0.0
        %6846 = vmatpush1.msra.mxu0 %v6809
        %6847 = vmatprep.subr.mxu0 0.0
        %6848 = vmatpush1.msra.mxu0 %v6810
        %6849 = vmatprep.subr.mxu0 0.0
        %6850 = vmatpush1.msra.mxu0 %v6811
        %6851 = vmatprep.subr.mxu0 0.0
        %6852 = vmatpush1.msra.mxu0 %v6812
        %6853 = vmatprep.subr.mxu0 0.0
        %6854 = vmatpush1.msra.mxu0 %v6813
        %6855 = vmatprep.subr.mxu0 0.0
        %6856 = vmatpush1.msra.mxu0 %v6814
        %6857 = vmatprep.subr.mxu0 0.0
        %6858 = vmatpush1.msra.mxu0 %v6815
        %6859 = vmatprep.subr.mxu0 0.0
        %6860 = vmatpush1.msra.mxu0 %v6816
        %6861 = vmatprep.subr.mxu0 0.0
        %6862 = vmatpush1.msra.mxu0 %v6817
        %6863 = vmatprep.subr.mxu0 0.0
        %6864 = vmatpush1.msra.mxu0 %v6818
        %6865 = vmatprep.subr.mxu0 0.0
        %6866 = vmatpush1.msra.mxu0 %v6819
        %6867 = vmatprep.subr.mxu0 0.0
        %6868 = vmatpush1.msra.mxu0 %v6820
        %6869 = vmatprep.subr.mxu0 0.0
        %6870 = vmatpush1.msra.mxu0 %v6821
        %6871 = vmatprep.subr.mxu0 0.0
        %6872 = vmatpush1.msra.mxu0 %v6822
        %6873 = vmatprep.subr.mxu0 0.0
        %6874 = vmatpush1.msra.mxu0 %v6823
        %6875 = vmatprep.subr.mxu0 0.0
        %6876 = vmatpush1.msra.mxu0 %v6824
        %6877 = vmatprep.subr.mxu0 0.0
        %6878 = vmatpush1.msra.mxu0 %v6825
        %6879 = vmatprep.subr.mxu0 0.0
        %6880 = vmatpush1.msra.mxu0 %v6826
        %6881 = vmatprep.subr.mxu0 0.0
        %6882 = vmatpush1.msra.mxu0 %v6827
        %6883 = vmatprep.subr.mxu0 0.0
        %6884 = vmatpush1.msra.mxu0 %v6828
        %6885 = vmatprep.subr.mxu0 0.0
        %6886 = vmatpush1.msra.mxu0 %v6829
        %6887 = vmatprep.subr.mxu0 0.0
        %6888 = vmatpush1.msra.mxu0 %v6830
        %6889 = vmatprep.subr.mxu0 0.0
        %6890 = vmatpush1.msra.mxu0 %v6831
        %6891 = vmatprep.subr.mxu0 0.0
        %6892 = vmatpush1.msra.mxu0 %v6832
        %6893 = vmatprep.subr.mxu0 0.0
        %6894 = vmatpush1.msra.mxu0 %v6833
        %6895 = vmatprep.subr.mxu0 0.0
        %6896 = vmatpush1.msra.mxu0 %v6834
        %6897 = vmatprep.subr.mxu0 0.0
        %6898 = vmatpush1.msra.mxu0 %v6835
        %6899 = vmatprep.subr.mxu0 0.0
        %6900 = vmatpush1.msra.mxu0 %v6836
        %6901 = vmatprep.subr.mxu0 0.0
        %6902 = vmatpush1.msra.mxu0 %v6837
        %6903 = vmatprep.mubr.f32.mxu0 %v6805
        %6904 = vmatmul.mubr.f32.gmra.mrb[0].mxu0 %v6804
        %v6905 = vpop.f32.mrb[0].mxu0
        %v6906 = vadd.f32 %v6838, %v6905
        %v6907 = vpop.f32.mrb[0].mxu0
        %6908 = vdwg.mxu0
        %vm6909 = vcmask 344064
        %v6910 = vsel %vm6909, %v6906, -inf
        %6911 = vmax.xlane.f32.xlu0 %v6910
        %v6912 = vpop.xlane.xlu0 %6911
        %v6913 = vsub.f32 %v6906, %v6912
        %v6914 = vmul.f32 %v6913, 1.442695
        %v6915 = vpow.pop %v6914
        %v6916 = vsel %vm6909, %v6915, 0.0
        %6917 = vadd.xlane.f32.xlu0 %v6916
        %v6918 = vpop.xlane.xlu0 %6917
        %v6919 = vlog2.pop %v6918
        %v6920 = vmul.f32 %v6919, 0.6931472
        %v6921 = vsub.f32 %v6913, %v6920
        %6922 = vst.msk [vmem:[%s324] sm:$0x1] %vm6909, %v6921
        %s6923 = sand.u32 %s225, 1
        %s6924 = scalar_lea.sflag [#allocation3], %s6923
        %s6925 = sand.u32 %s225, 1
        %s6926 = scalar_lea.vmem [#allocation2], %s6925
        // Predicated region
        $region57: #{net_forward.1} parent=55 // pred_check
          %p6927 = pneg %p235
        $region58: #{net_forward.1} parent=55 // pred_check_branch
          %6929 = sbr.rel (%p6927) target = $region60
        $region59: #{net_forward.1} parent=55 // pred_region
          %s6931 = ssub.s32 16, 16
          %6932 = vsyncadd %s6924, %s6931
          %s6933 = smul.addr %s23, 16
          %s6934 = scalar_lea.hbm %s9, %s6933
          %s6936 = sshll.u32 %s6926, 4
          %s6937 = int_to_ptr.vmem [resolvable:$true] %s6936
          %6939 = dma.vmem_to_hbm [thread:$0]  %s6937, 16, %s6934, %s6924
        $region60: #{net_forward.1} parent=55 // pred_fallthru
          _
      $region56: #{net_forward.1} parent=5 // pred_fallthru
        _
      %p6940 = scmp.le.s32.totalorder 2, %s18
      // Predicated region
      $region61: #{net_forward.1} parent=5 // pred_check
        %p6941 = pneg %p6940
      $region62: #{net_forward.1} parent=5 // pred_check_branch
        %6943 = sbr.rel (%p6941) target = $region64
      $region63: #{net_forward.1} parent=5 // pred_region
        %s6944 = ssub.s32 %s18, 2
        // Predicated region
        $region65: #{net_forward.1} parent=63 // pred_check
          %p6945 = pneg %p241
        $region66: #{net_forward.1} parent=63 // pred_check_branch
          %6947 = sbr.rel (%p6945) target = $region68
        $region67: #{net_forward.1} parent=63 // pred_region
          %s6948 = sand.u32 %s226, 1
          %s6949 = scalar_lea.sflag [#allocation3], %s6948
          %s6950 = sand.u32 %s226, 1
          %s6951 = scalar_lea.vmem [#allocation2], %s6950
          %6952 = dma.done %s6949, 16
        $region68: #{net_forward.1} parent=63 // pred_fallthru
          _
      $region64: #{net_forward.1} parent=5 // pred_fallthru
        _
    $region6: #{net_forward.1} parent=1 // loop_footer
      %s22 = sadd.s32 1, %s18
    $region7: #{net_forward.1} parent=1 // loop_footer_branch
      %17 = sbr.rel target = $region3
    $region8: #{net_forward.1} parent=1 // loop_exit
      _
    %6953 = vsyncpa [#allocation3], 1
    %s6954 = scalar_lea.sflag [#allocation3], 1
    %6955 = vsyncpa %s6954, 1

</llo_original>
